<compile_context>
chip_gen: v6e
topology: v6e:2x2x1
jax: 0.10.0
libtpu: 0.0.40
codegen_flags: <defaults>
</compile_context>

<pallas_src>
import functools

import jax
import jax.numpy as jnp
from jax import lax
from jax.experimental import pallas as pl
from jax.experimental.pallas import tpu as pltpu


# ----------------------------------------------------------------------------
# Kernel 1: conv1 (Cin=3) -- single fused im2col matmul + phase-max pool.
# ----------------------------------------------------------------------------
def _conv1_kernel(p_ref, w_ref, b_ref, o_ref):
    # p_ref: (4*TN, K) bf16 -- the 4 pool phases of TN output positions,
    #        stacked phase-major inside the block.
    # w_ref: (K, Cout) bf16;  b_ref: (1, Cout) f32;  o_ref: (TN, Cout) bf16.
    tn = o_ref.shape[0]
    z = jnp.dot(p_ref[...], w_ref[...], preferred_element_type=jnp.float32)
    zmax = jnp.maximum(jnp.maximum(z[0 * tn:1 * tn], z[1 * tn:2 * tn]),
                       jnp.maximum(z[2 * tn:3 * tn], z[3 * tn:4 * tn]))
    # bias add + ReLU hoisted after the phase max (exact).
    o_ref[...] = jnp.maximum(zmax + b_ref[...], 0.0).astype(o_ref.dtype)


def conv1_im2col_relu_pool(x_nhwc, w_oihw, b, *, tile_n=256):
    """x_nhwc: (B,H,W,Cin) bf16; w_oihw: (Cout,Cin,3,3) f32; b: (Cout,) f32."""
    B, H, W, Cin = x_nhwc.shape
    Cout = w_oihw.shape[0]
    Hh, Wh = H // 2, W // 2
    K0 = 9 * Cin
    K = 32 if K0 <= 32 else K0          # pad contraction dim (27 -> 32)
    N = B * Hh * Wh
    if N % tile_n != 0:
        tile_n = N
    nt = N // tile_n

    # --- glue (cheap: conv1 input is tiny): im2col + pool-phase grouping ----
    xp = jnp.pad(x_nhwc, ((0, 0), (1, 1), (1, 1), (0, 0)))
    cols = [xp[:, dy:dy + H, dx:dx + W, :] for dy in range(3) for dx in range(3)]
    patches = jnp.stack(cols, axis=3).reshape(B, H, W, K0)
    patches = jnp.pad(patches, ((0, 0), (0, 0), (0, 0), (0, K - K0)))
    phased = (patches.reshape(B, Hh, 2, Wh, 2, K)
              .transpose(2, 4, 0, 1, 3, 5)                  # (ry,rx,B,Hh,Wh,K)
              .reshape(4, N, K))
    # group the 4 phases of each N-tile contiguously: row = (tile, phase, n)
    phased = (phased.reshape(4, nt, tile_n, K)
              .transpose(1, 0, 2, 3)
              .reshape(nt * 4 * tile_n, K)
              .astype(jnp.bfloat16))
    w_flat = jnp.transpose(w_oihw, (2, 3, 1, 0)).reshape(K0, Cout)
    w_flat = jnp.pad(w_flat, ((0, K - K0), (0, 0))).astype(jnp.bfloat16)
    b2 = b.reshape(1, Cout).astype(jnp.float32)

    out = pl.pallas_call(
        _conv1_kernel,
        out_shape=jax.ShapeDtypeStruct((N, Cout), jnp.bfloat16),
        grid=(nt,),
        in_specs=[
            pl.BlockSpec((4 * tile_n, K), lambda i: (i, 0)),
            pl.BlockSpec((K, Cout), lambda i: (0, 0)),
            pl.BlockSpec((1, Cout), lambda i: (0, 0)),
        ],
        out_specs=pl.BlockSpec((tile_n, Cout), lambda i: (i, 0)),
        compiler_params=pltpu.CompilerParams(dimension_semantics=("parallel",)),
    )(phased, w_flat, b2)
    return out.reshape(B, Hh, Wh, Cout)


# ----------------------------------------------------------------------------
# Kernel 2: conv2 / conv3 -- in-kernel 9 shifted-tap matmuls (no im2col in
#           HBM) + bias + ReLU + fused 2x2 max-pool.
# ----------------------------------------------------------------------------
def _conv_tap_kernel(x_ref, w_ref, b_ref, sel_ref, o_ref, *, wide_m, wp):
    # x_ref  : (1, L, Cin)   bf16  row-flattened zero-padded image, plus one
    #                              extra pad row at each end so every tap slice
    #                              [dy*wp+dx : dy*wp+dx+wide_m] is in bounds.
    # w_ref  : (9, Cin, Cout) bf16 tap-major (dy*3+dx).
    # b_ref  : (1, Cout)      f32
    # sel_ref: (Hh*Wh, wide_m-wp-1) bf16 one-hot rows -> pooled positions.
    # o_ref  : (1, Hh*Wh, Cout) bf16
    xf = x_ref[0]                                   # (L, Cin)
    cout = w_ref.shape[2]
    acc = jnp.zeros((wide_m, cout), jnp.float32)
    for dy in range(3):
        for dx in range(3):
            s = dy * wp + dx
            acc = acc + jnp.dot(xf[s:s + wide_m, :], w_ref[dy * 3 + dx],
                                preferred_element_type=jnp.float32)
    z = jnp.maximum(acc + b_ref[...], 0.0)          # conv + bias + relu ("wide" grid)
    zc = jnp.maximum(z[:wide_m - 1], z[1:])         # max over adjacent columns
    zr = jnp.maximum(zc[:wide_m - wp - 1], zc[wp:]) # max over adjacent rows
    # one-hot selection matmul extracts the (Hh*Wh) pooled positions.
    o_ref[0] = jnp.dot(sel_ref[...], zr.astype(jnp.bfloat16),
                       preferred_element_type=jnp.float32).astype(o_ref.dtype)


def conv3x3_relu_pool_taps(x_nhwc, w_oihw, b):
    """x_nhwc: (B,H,W,Cin) bf16; w_oihw: (Cout,Cin,3,3) f32; b: (Cout,) f32."""
    B, H, W, Cin = x_nhwc.shape
    Cout = w_oihw.shape[0]
    Hp, Wp = H + 2, W + 2
    Hh, Wh = H // 2, W // 2
    M = H * Wp                      # "wide" conv grid: valid rows x padded width
    L = Hp * Wp + 2

    # glue: zero-pad + row-flatten only (~1.2x the activation, not 9x im2col).
    xp = jnp.pad(x_nhwc, ((0, 0), (1, 1), (1, 1), (0, 0)))
    xf = jnp.pad(xp.reshape(B, Hp * Wp, Cin), ((0, 0), (1, 1), (0, 0)))
    w_taps = (jnp.transpose(w_oihw, (2, 3, 1, 0))
              .reshape(9, Cin, Cout).astype(jnp.bfloat16))
    b2 = b.reshape(1, Cout).astype(jnp.float32)

    # one-hot selector: pooled (ip,jp) lives at wide-flat row 2*ip*Wp + 2*jp + 1.
    mzr = M - Wp - 1
    q = jnp.arange(Hh * Wh)
    tgt = 2 * (q // Wh) * Wp + 2 * (q % Wh) + 1
    sel = (tgt[:, None] == jnp.arange(mzr)[None, :]).astype(jnp.bfloat16)

    kernel = functools.partial(_conv_tap_kernel, wide_m=M, wp=Wp)
    out = pl.pallas_call(
        kernel,
        out_shape=jax.ShapeDtypeStruct((B, Hh * Wh, Cout), jnp.bfloat16),
        grid=(B,),
        in_specs=[
            pl.BlockSpec((1, L, Cin), lambda bi: (bi, 0, 0)),
            pl.BlockSpec((9, Cin, Cout), lambda bi: (0, 0, 0)),
            pl.BlockSpec((1, Cout), lambda bi: (0, 0)),
            pl.BlockSpec((Hh * Wh, mzr), lambda bi: (0, 0)),
        ],
        out_specs=pl.BlockSpec((1, Hh * Wh, Cout), lambda bi: (bi, 0, 0)),
        compiler_params=pltpu.CompilerParams(dimension_semantics=("parallel",)),
    )(xf, w_taps, b2, sel)
    return out.reshape(B, Hh, Wh, Cout)


# ----------------------------------------------------------------------------
# Kernel 3: LSTM cell (T=1, h0=c0=0) + fc1 + relu + fc2, fused.
#           Gate matmul (B,4096)@(4096,512) streamed/accumulated over K.
# ----------------------------------------------------------------------------
def lstm_head(feat, params, *, kc=2048):
    B, Kdim = feat.shape                       # (B, 4096)
    hid = params["fc1_w"].shape[1]             # 128
    fc1_dim = params["fc1_w"].shape[0]         # 512
    num_classes = params["fc2_w"].shape[0]     # 10
    if Kdim % kc != 0:
        kc = Kdim
    nk = Kdim // kc

    feat = feat.astype(jnp.bfloat16)
    wih_t = params["lstm_w_ih"].T.astype(jnp.bfloat16)               # (Kdim, 4*hid)
    bias = (params["lstm_b_ih"] + params["lstm_b_hh"]).reshape(1, 4 * hid)
    fc1w_t = params["fc1_w"].T.astype(jnp.bfloat16)                  # (hid, 512)
    fc1b = params["fc1_b"].reshape(1, fc1_dim)
    fc2w_t = params["fc2_w"].T.astype(jnp.bfloat16)                  # (512, classes)
    fc2b = params["fc2_b"].reshape(1, num_classes)

    def kernel(feat_ref, wih_ref, b_ref, fc1w_ref, fc1b_ref,
               fc2w_ref, fc2b_ref, out_ref, acc_ref):
        k = pl.program_id(0)

        @pl.when(k == 0)
        def _():
            acc_ref[...] = jnp.zeros_like(acc_ref)

        acc_ref[...] += jnp.dot(feat_ref[...], wih_ref[...],
                                preferred_element_type=jnp.float32)

        @pl.when(k == pl.num_programs(0) - 1)
        def _():
            # T=1, h0=c0=0: h0 @ W_hh == 0 and the forget gate hits c0 == 0,
            # so both drop out exactly.
            gates = acc_ref[...] + b_ref[...]
            i_g = jax.nn.sigmoid(gates[:, 0 * hid:1 * hid])
            g_g = jnp.tanh(gates[:, 2 * hid:3 * hid])
            o_g = jax.nn.sigmoid(gates[:, 3 * hid:4 * hid])
            h1 = o_g * jnp.tanh(i_g * g_g)
            z1 = jnp.maximum(
                jnp.dot(h1.astype(jnp.bfloat16), fc1w_ref[...],
                        preferred_element_type=jnp.float32) + fc1b_ref[...], 0.0)
            out_ref[...] = (jnp.dot(z1.astype(jnp.bfloat16), fc2w_ref[...],
                                    preferred_element_type=jnp.float32)
                            + fc2b_ref[...])

    return pl.pallas_call(
        kernel,
        out_shape=jax.ShapeDtypeStruct((B, num_classes), jnp.float32),
        grid=(nk,),
        in_specs=[
            pl.BlockSpec((B, kc), lambda k: (0, k)),
            pl.BlockSpec((kc, 4 * hid), lambda k: (k, 0)),
            pl.BlockSpec((1, 4 * hid), lambda k: (0, 0)),
            pl.BlockSpec((hid, fc1_dim), lambda k: (0, 0)),
            pl.BlockSpec((1, fc1_dim), lambda k: (0, 0)),
            pl.BlockSpec((fc1_dim, num_classes), lambda k: (0, 0)),
            pl.BlockSpec((1, num_classes), lambda k: (0, 0)),
        ],
        out_specs=pl.BlockSpec((B, num_classes), lambda k: (0, 0)),
        scratch_shapes=[pltpu.VMEM((B, 4 * hid), jnp.float32)],
        compiler_params=pltpu.CompilerParams(dimension_semantics=("arbitrary",)),
    )(feat, wih_t, bias, fc1w_t, fc1b, fc2w_t, fc2b)


# ----------------------------------------------------------------------------
# Full forward
# ----------------------------------------------------------------------------
def lstm_cnn_forward(x_nchw, params):
    # NCHW -> NHWC (channels on the lane axis); bf16 activations between layers.
    x = jnp.transpose(x_nchw, (0, 2, 3, 1)).astype(jnp.bfloat16)
    x = conv1_im2col_relu_pool(x, params["conv1_w"], params["conv1_b"])   # (B,16,16, 64)
    x = conv3x3_relu_pool_taps(x, params["conv2_w"], params["conv2_b"])   # (B, 8, 8,128)
    x = conv3x3_relu_pool_taps(x, params["conv3_w"], params["conv3_b"])   # (B, 4, 4,256)
    # PyTorch flattens NCHW: (B, C, H, W) -> (B, C*H*W)
    feat = jnp.transpose(x, (0, 3, 1, 2)).reshape(x.shape[0], -1)          # (B, 4096)
    return lstm_head(feat, params)


# ----------------------------------------------------------------------------
# Deterministic parameter init (PyTorch-style U(-1/sqrt(fan_in), 1/sqrt(fan_in)))
# ----------------------------------------------------------------------------
def init_params(key, num_classes=10, hid=128):
    ks = jax.random.split(key, 13)

    def u(k, shape, fan_in):
        bound = 1.0 / float(fan_in) ** 0.5
        return jax.random.uniform(k, shape, jnp.float32, -bound, bound)

    p = {}
    p["conv1_w"] = u(ks[0], (64, 3, 3, 3), 3 * 9)
    p["conv1_b"] = u(ks[1], (64,), 3 * 9)
    p["conv2_w"] = u(ks[2], (128, 64, 3, 3), 64 * 9)
    p["conv2_b"] = u(ks[3], (128,), 64 * 9)
    p["conv3_w"] = u(ks[4], (256, 128, 3, 3), 128 * 9)
    p["conv3_b"] = u(ks[5], (256,), 128 * 9)
    # W_hh (4*hid, hid) is mathematically unused here: T=1 and h0=0.
    p["lstm_w_ih"] = u(ks[6], (4 * hid, 256 * 4 * 4), hid)
    p["lstm_b_ih"] = u(ks[7], (4 * hid,), hid)
    p["lstm_b_hh"] = u(ks[8], (4 * hid,), hid)
    p["fc1_w"] = u(ks[9], (512, hid), hid)
    p["fc1_b"] = u(ks[10], (512,), hid)
    p["fc2_w"] = u(ks[11], (num_classes, 512), 512)
    p["fc2_b"] = u(ks[12], (512,), 512)[:num_classes] * 0 + u(ks[12], (num_classes,), 512)
    return p


# ----------------------------------------------------------------------------
# Pure-JAX f32 reference (mirrors the PyTorch forward) for a correctness check
# ----------------------------------------------------------------------------
def reference_forward(x_nchw, params, hid=128):
    x = x_nchw.astype(jnp.float32)
    for i in (1, 2, 3):
        w, b = params[f"conv{i}_w"], params[f"conv{i}_b"]
        x = lax.conv_general_dilated(x, w, (1, 1), "SAME",
                                     dimension_numbers=("NCHW", "OIHW", "NCHW"))
        x = jax.nn.relu(x + b[None, :, None, None])
        x = lax.reduce_window(x, -jnp.inf, lax.max,
                              (1, 1, 2, 2), (1, 1, 2, 2), "VALID")
    feat = x.reshape(x.shape[0], -1)
    gates = feat @ params["lstm_w_ih"].T + params["lstm_b_ih"] + params["lstm_b_hh"]
    i_g = jax.nn.sigmoid(gates[:, :hid])
    g_g = jnp.tanh(gates[:, 2 * hid:3 * hid])
    o_g = jax.nn.sigmoid(gates[:, 3 * hid:])
    h = o_g * jnp.tanh(i_g * g_g)
    z = jax.nn.relu(h @ params["fc1_w"].T + params["fc1_b"])
    return z @ params["fc2_w"].T + params["fc2_b"]


if __name__ == "__main__":
    root = jax.random.PRNGKey(0)
    k_params, k_x = jax.random.split(root)
    params = init_params(k_params)

    # Input must be (B, 3, 32, 32): the module hard-codes 256*4*4 after 3 pools.
    x = jax.random.normal(k_x, (2, 3, 32, 32), jnp.float32)

    out = jax.jit(lstm_cnn_forward)(x, params)
    out = jax.block_until_ready(out)
    assert out.shape == (2, 10), out.shape

    ref = reference_forward(x, params)
    err = float(jnp.max(jnp.abs(out - ref)))
    # bf16 MXU operands / bf16 inter-layer activations vs a pure-f32 reference.
    assert err < 5e-2, err

    print("KERNEL_OK")
</pallas_src>

<mosaic_0001>
module attributes {stable_mosaic.version = 11 : i64} {
  func.func @_conv1_kernel(%arg0: i32, %arg1: memref<1024x32xbf16, #tpu.memory_space<vmem>>, %arg2: memref<32x64xbf16, #tpu.memory_space<vmem>>, %arg3: memref<1x64xf32, #tpu.memory_space<vmem>>, %arg4: memref<256x64xbf16, #tpu.memory_space<vmem>>) attributes {dimension_semantics = [#tpu.dimension_semantics<parallel>], iteration_bounds = array<i64: 2>, scalar_prefetch = 0 : i64, scratch_operands = 0 : i64, tpu.core_type = #tpu.core_type<tc>, window_params = [{transform_indices = @transform_0, window_bounds = array<i64: 1024, 32>}, {pipeline_mode = #tpu.pipeline_mode<synchronous>, transform_indices = @transform_1, window_bounds = array<i64: 32, 64>}, {pipeline_mode = #tpu.pipeline_mode<synchronous>, transform_indices = @transform_2, window_bounds = array<i64: 1, 64>}, {transform_indices = @transform_3, window_bounds = array<i64: 256, 64>}]} {
    %c0 = arith.constant 0 : index
    %c0_0 = arith.constant 0 : index
    %0 = vector.load %arg1[%c0, %c0_0] : memref<1024x32xbf16, #tpu.memory_space<vmem>>, vector<1024x32xbf16>
    %c0_1 = arith.constant 0 : index
    %c0_2 = arith.constant 0 : index
    %1 = vector.load %arg2[%c0_1, %c0_2] : memref<32x64xbf16, #tpu.memory_space<vmem>>, vector<32x64xbf16>
    %cst = arith.constant dense<0.000000e+00> : vector<1024x64xf32>
    %2 = tpu.matmul %0, %1, %cst {dimension_numbers = #tpu.dot_dimension_numbers<[1], [0], [0], [1], [0, 0, 1, 1], [], []>} : vector<1024x32xbf16>, vector<32x64xbf16>, vector<1024x64xf32> -> vector<1024x64xf32>
    %3 = vector.extract_strided_slice %2 {offsets = [0, 0], sizes = [256, 64], strides = [1, 1]} : vector<1024x64xf32> to vector<256x64xf32>
    %4 = vector.extract_strided_slice %2 {offsets = [256, 0], sizes = [256, 64], strides = [1, 1]} : vector<1024x64xf32> to vector<256x64xf32>
    %5 = arith.maximumf %3, %4 : vector<256x64xf32>
    %6 = vector.extract_strided_slice %2 {offsets = [512, 0], sizes = [256, 64], strides = [1, 1]} : vector<1024x64xf32> to vector<256x64xf32>
    %7 = vector.extract_strided_slice %2 {offsets = [768, 0], sizes = [256, 64], strides = [1, 1]} : vector<1024x64xf32> to vector<256x64xf32>
    %8 = arith.maximumf %6, %7 : vector<256x64xf32>
    %9 = arith.maximumf %5, %8 : vector<256x64xf32>
    %c0_3 = arith.constant 0 : index
    %c0_4 = arith.constant 0 : index
    %10 = vector.load %arg3[%c0_3, %c0_4] : memref<1x64xf32, #tpu.memory_space<vmem>>, vector<1x64xf32>
    %11 = vector.broadcast %10 : vector<1x64xf32> to vector<256x64xf32>
    %12 = arith.addf %9, %11 : vector<256x64xf32>
    %cst_5 = arith.constant 0.000000e+00 : f32
    %13 = vector.broadcast %cst_5 : f32 to vector<256x64xf32>
    %14 = arith.maximumf %12, %13 : vector<256x64xf32>
    %15 = arith.truncf %14 : vector<256x64xf32> to vector<256x64xbf16>
    %c0_6 = arith.constant 0 : index
    %c0_7 = arith.constant 0 : index
    %16 = vector.load %arg4[%c0_6, %c0_7] : memref<256x64xbf16, #tpu.memory_space<vmem>>, vector<256x64xbf16>
    tpu.vector_store %arg4[%c0_6, %c0_7], %15 {strides = array<i32>} : memref<256x64xbf16, #tpu.memory_space<vmem>>, vector<256x64xbf16>,
    return
  }
  func.func @transform_0(%arg0: i32) -> (i32, i32) {
    %c0_i32 = arith.constant 0 : i32
    %c0_i32_0 = arith.constant 0 : i32
    return %arg0, %c0_i32 : i32, i32
  }
  func.func @transform_1(%arg0: i32) -> (i32, i32) {
    %c0_i32 = arith.constant 0 : i32
    %c0_i32_0 = arith.constant 0 : i32
    %c0_i32_1 = arith.constant 0 : i32
    return %c0_i32, %c0_i32_0 : i32, i32
  }
  func.func @transform_2(%arg0: i32) -> (i32, i32) {
    %c0_i32 = arith.constant 0 : i32
    %c0_i32_0 = arith.constant 0 : i32
    %c0_i32_1 = arith.constant 0 : i32
    return %c0_i32, %c0_i32_0 : i32, i32
  }
  func.func @transform_3(%arg0: i32) -> (i32, i32) {
    %c0_i32 = arith.constant 0 : i32
    %c0_i32_0 = arith.constant 0 : i32
    return %arg0, %c0_i32 : i32, i32
  }
}

module attributes {stable_mosaic.version = 11 : i64} {
  func.func @_conv_tap_kernel(%arg0: i32, %arg1: memref<1x326x64xbf16, #tpu.memory_space<vmem>>, %arg2: memref<9x64x128xbf16, #tpu.memory_space<vmem>>, %arg3: memref<1x128xf32, #tpu.memory_space<vmem>>, %arg4: memref<64x269xbf16, #tpu.memory_space<vmem>>, %arg5: memref<1x64x128xbf16, #tpu.memory_space<vmem>>) attributes {dimension_semantics = [#tpu.dimension_semantics<parallel>], iteration_bounds = array<i64: 2>, scalar_prefetch = 0 : i64, scratch_operands = 0 : i64, tpu.core_type = #tpu.core_type<tc>, window_params = [{transform_indices = @transform_0, window_bounds = array<i64: 1, 326, 64>}, {pipeline_mode = #tpu.pipeline_mode<synchronous>, transform_indices = @transform_1, window_bounds = array<i64: 9, 64, 128>}, {pipeline_mode = #tpu.pipeline_mode<synchronous>, transform_indices = @transform_2, window_bounds = array<i64: 1, 128>}, {pipeline_mode = #tpu.pipeline_mode<synchronous>, transform_indices = @transform_3, window_bounds = array<i64: 64, 269>}, {transform_indices = @transform_4, window_bounds = array<i64: 1, 64, 128>}]} {
    %c0 = arith.constant 0 : index
    %c0_0 = arith.constant 0 : index
    %c0_1 = arith.constant 0 : index
    %0 = vector.load %arg1[%c0, %c0_0, %c0_1] : memref<1x326x64xbf16, #tpu.memory_space<vmem>>, vector<1x326x64xbf16>
    %1 = vector.shape_cast %0 : vector<1x326x64xbf16> to vector<326x64xbf16>
    %cst = arith.constant 0.000000e+00 : f32
    %2 = vector.broadcast %cst : f32 to vector<288x128xf32>
    %3 = vector.extract_strided_slice %1 {offsets = [0, 0], sizes = [288, 64], strides = [1, 1]} : vector<326x64xbf16> to vector<288x64xbf16>
    %c0_2 = arith.constant 0 : index
    %c0_3 = arith.constant 0 : index
    %c0_4 = arith.constant 0 : index
    %4 = vector.load %arg2[%c0_2, %c0_3, %c0_4] : memref<9x64x128xbf16, #tpu.memory_space<vmem>>, vector<1x64x128xbf16>
    %5 = vector.shape_cast %4 : vector<1x64x128xbf16> to vector<64x128xbf16>
    %cst_5 = arith.constant dense<0.000000e+00> : vector<288x128xf32>
    %6 = tpu.matmul %3, %5, %cst_5 {dimension_numbers = #tpu.dot_dimension_numbers<[1], [0], [0], [1], [0, 0, 1, 1], [], []>} : vector<288x64xbf16>, vector<64x128xbf16>, vector<288x128xf32> -> vector<288x128xf32>
    %7 = arith.addf %2, %6 : vector<288x128xf32>
    %8 = vector.extract_strided_slice %1 {offsets = [1, 0], sizes = [288, 64], strides = [1, 1]} : vector<326x64xbf16> to vector<288x64xbf16>
    %c1 = arith.constant 1 : index
    %c0_6 = arith.constant 0 : index
    %c0_7 = arith.constant 0 : index
    %9 = vector.load %arg2[%c1, %c0_6, %c0_7] : memref<9x64x128xbf16, #tpu.memory_space<vmem>>, vector<1x64x128xbf16>
    %10 = vector.shape_cast %9 : vector<1x64x128xbf16> to vector<64x128xbf16>
    %cst_8 = arith.constant dense<0.000000e+00> : vector<288x128xf32>
    %11 = tpu.matmul %8, %10, %cst_8 {dimension_numbers = #tpu.dot_dimension_numbers<[1], [0], [0], [1], [0, 0, 1, 1], [], []>} : vector<288x64xbf16>, vector<64x128xbf16>, vector<288x128xf32> -> vector<288x128xf32>
    %12 = arith.addf %7, %11 : vector<288x128xf32>
    %13 = vector.extract_strided_slice %1 {offsets = [2, 0], sizes = [288, 64], strides = [1, 1]} : vector<326x64xbf16> to vector<288x64xbf16>
    %c2 = arith.constant 2 : index
    %c0_9 = arith.constant 0 : index
    %c0_10 = arith.constant 0 : index
    %14 = vector.load %arg2[%c2, %c0_9, %c0_10] : memref<9x64x128xbf16, #tpu.memory_space<vmem>>, vector<1x64x128xbf16>
    %15 = vector.shape_cast %14 : vector<1x64x128xbf16> to vector<64x128xbf16>
    %cst_11 = arith.constant dense<0.000000e+00> : vector<288x128xf32>
    %16 = tpu.matmul %13, %15, %cst_11 {dimension_numbers = #tpu.dot_dimension_numbers<[1], [0], [0], [1], [0, 0, 1, 1], [], []>} : vector<288x64xbf16>, vector<64x128xbf16>, vector<288x128xf32> -> vector<288x128xf32>
    %17 = arith.addf %12, %16 : vector<288x128xf32>
    %18 = vector.extract_strided_slice %1 {offsets = [18, 0], sizes = [288, 64], strides = [1, 1]} : vector<326x64xbf16> to vector<288x64xbf16>
    %c3 = arith.constant 3 : index
    %c0_12 = arith.constant 0 : index
    %c0_13 = arith.constant 0 : index
    %19 = vector.load %arg2[%c3, %c0_12, %c0_13] : memref<9x64x128xbf16, #tpu.memory_space<vmem>>, vector<1x64x128xbf16>
    %20 = vector.shape_cast %19 : vector<1x64x128xbf16> to vector<64x128xbf16>
    %cst_14 = arith.constant dense<0.000000e+00> : vector<288x128xf32>
    %21 = tpu.matmul %18, %20, %cst_14 {dimension_numbers = #tpu.dot_dimension_numbers<[1], [0], [0], [1], [0, 0, 1, 1], [], []>} : vector<288x64xbf16>, vector<64x128xbf16>, vector<288x128xf32> -> vector<288x128xf32>
    %22 = arith.addf %17, %21 : vector<288x128xf32>
    %23 = vector.extract_strided_slice %1 {offsets = [19, 0], sizes = [288, 64], strides = [1, 1]} : vector<326x64xbf16> to vector<288x64xbf16>
    %c4 = arith.constant 4 : index
    %c0_15 = arith.constant 0 : index
    %c0_16 = arith.constant 0 : index
    %24 = vector.load %arg2[%c4, %c0_15, %c0_16] : memref<9x64x128xbf16, #tpu.memory_space<vmem>>, vector<1x64x128xbf16>
    %25 = vector.shape_cast %24 : vector<1x64x128xbf16> to vector<64x128xbf16>
    %cst_17 = arith.constant dense<0.000000e+00> : vector<288x128xf32>
    %26 = tpu.matmul %23, %25, %cst_17 {dimension_numbers = #tpu.dot_dimension_numbers<[1], [0], [0], [1], [0, 0, 1, 1], [], []>} : vector<288x64xbf16>, vector<64x128xbf16>, vector<288x128xf32> -> vector<288x128xf32>
    %27 = arith.addf %22, %26 : vector<288x128xf32>
    %28 = vector.extract_strided_slice %1 {offsets = [20, 0], sizes = [288, 64], strides = [1, 1]} : vector<326x64xbf16> to vector<288x64xbf16>
    %c5 = arith.constant 5 : index
    %c0_18 = arith.constant 0 : index
    %c0_19 = arith.constant 0 : index
    %29 = vector.load %arg2[%c5, %c0_18, %c0_19] : memref<9x64x128xbf16, #tpu.memory_space<vmem>>, vector<1x64x128xbf16>
    %30 = vector.shape_cast %29 : vector<1x64x128xbf16> to vector<64x128xbf16>
    %cst_20 = arith.constant dense<0.000000e+00> : vector<288x128xf32>
    %31 = tpu.matmul %28, %30, %cst_20 {dimension_numbers = #tpu.dot_dimension_numbers<[1], [0], [0], [1], [0, 0, 1, 1], [], []>} : vector<288x64xbf16>, vector<64x128xbf16>, vector<288x128xf32> -> vector<288x128xf32>
    %32 = arith.addf %27, %31 : vector<288x128xf32>
    %33 = vector.extract_strided_slice %1 {offsets = [36, 0], sizes = [288, 64], strides = [1, 1]} : vector<326x64xbf16> to vector<288x64xbf16>
    %c6 = arith.constant 6 : index
    %c0_21 = arith.constant 0 : index
    %c0_22 = arith.constant 0 : index
    %34 = vector.load %arg2[%c6, %c0_21, %c0_22] : memref<9x64x128xbf16, #tpu.memory_space<vmem>>, vector<1x64x128xbf16>
    %35 = vector.shape_cast %34 : vector<1x64x128xbf16> to vector<64x128xbf16>
    %cst_23 = arith.constant dense<0.000000e+00> : vector<288x128xf32>
    %36 = tpu.matmul %33, %35, %cst_23 {dimension_numbers = #tpu.dot_dimension_numbers<[1], [0], [0], [1], [0, 0, 1, 1], [], []>} : vector<288x64xbf16>, vector<64x128xbf16>, vector<288x128xf32> -> vector<288x128xf32>
    %37 = arith.addf %32, %36 : vector<288x128xf32>
    %38 = vector.extract_strided_slice %1 {offsets = [37, 0], sizes = [288, 64], strides = [1, 1]} : vector<326x64xbf16> to vector<288x64xbf16>
    %c7 = arith.constant 7 : index
    %c0_24 = arith.constant 0 : index
    %c0_25 = arith.constant 0 : index
    %39 = vector.load %arg2[%c7, %c0_24, %c0_25] : memref<9x64x128xbf16, #tpu.memory_space<vmem>>, vector<1x64x128xbf16>
    %40 = vector.shape_cast %39 : vector<1x64x128xbf16> to vector<64x128xbf16>
    %cst_26 = arith.constant dense<0.000000e+00> : vector<288x128xf32>
    %41 = tpu.matmul %38, %40, %cst_26 {dimension_numbers = #tpu.dot_dimension_numbers<[1], [0], [0], [1], [0, 0, 1, 1], [], []>} : vector<288x64xbf16>, vector<64x128xbf16>, vector<288x128xf32> -> vector<288x128xf32>
    %42 = arith.addf %37, %41 : vector<288x128xf32>
    %43 = vector.extract_strided_slice %1 {offsets = [38, 0], sizes = [288, 64], strides = [1, 1]} : vector<326x64xbf16> to vector<288x64xbf16>
    %c8 = arith.constant 8 : index
    %c0_27 = arith.constant 0 : index
    %c0_28 = arith.constant 0 : index
    %44 = vector.load %arg2[%c8, %c0_27, %c0_28] : memref<9x64x128xbf16, #tpu.memory_space<vmem>>, vector<1x64x128xbf16>
    %45 = vector.shape_cast %44 : vector<1x64x128xbf16> to vector<64x128xbf16>
    %cst_29 = arith.constant dense<0.000000e+00> : vector<288x128xf32>
    %46 = tpu.matmul %43, %45, %cst_29 {dimension_numbers = #tpu.dot_dimension_numbers<[1], [0], [0], [1], [0, 0, 1, 1], [], []>} : vector<288x64xbf16>, vector<64x128xbf16>, vector<288x128xf32> -> vector<288x128xf32>
    %47 = arith.addf %42, %46 : vector<288x128xf32>
    %c0_30 = arith.constant 0 : index
    %c0_31 = arith.constant 0 : index
    %48 = vector.load %arg3[%c0_30, %c0_31] : memref<1x128xf32, #tpu.memory_space<vmem>>, vector<1x128xf32>
    %49 = vector.broadcast %48 : vector<1x128xf32> to vector<288x128xf32>
    %50 = arith.addf %47, %49 : vector<288x128xf32>
    %cst_32 = arith.constant 0.000000e+00 : f32
    %51 = vector.broadcast %cst_32 : f32 to vector<288x128xf32>
    %52 = arith.maximumf %50, %51 : vector<288x128xf32>
    %53 = vector.extract_strided_slice %52 {offsets = [0, 0], sizes = [287, 128], strides = [1, 1]} : vector<288x128xf32> to vector<287x128xf32>
    %54 = vector.extract_strided_slice %52 {offsets = [1, 0], sizes = [287, 128], strides = [1, 1]} : vector<288x128xf32> to vector<287x128xf32>
    %55 = arith.maximumf %53, %54 : vector<287x128xf32>
    %56 = vector.extract_strided_slice %55 {offsets = [0, 0], sizes = [269, 128], strides = [1, 1]} : vector<287x128xf32> to vector<269x128xf32>
    %57 = vector.extract_strided_slice %55 {offsets = [18, 0], sizes = [269, 128], strides = [1, 1]} : vector<287x128xf32> to vector<269x128xf32>
    %58 = arith.maximumf %56, %57 : vector<269x128xf32>
    %c0_33 = arith.constant 0 : index
    %c0_34 = arith.constant 0 : index
    %59 = vector.load %arg4[%c0_33, %c0_34] : memref<64x269xbf16, #tpu.memory_space<vmem>>, vector<64x269xbf16>
    %60 = arith.truncf %58 : vector<269x128xf32> to vector<269x128xbf16>
    %cst_35 = arith.constant dense<0.000000e+00> : vector<64x128xf32>
    %61 = tpu.matmul %59, %60, %cst_35 {dimension_numbers = #tpu.dot_dimension_numbers<[1], [0], [0], [1], [0, 0, 1, 1], [], []>} : vector<64x269xbf16>, vector<269x128xbf16>, vector<64x128xf32> -> vector<64x128xf32>
    %62 = arith.truncf %61 : vector<64x128xf32> to vector<64x128xbf16>
    %c0_36 = arith.constant 0 : index
    %c0_37 = arith.constant 0 : index
    %c0_38 = arith.constant 0 : index
    %63 = vector.load %arg5[%c0_36, %c0_37, %c0_38] : memref<1x64x128xbf16, #tpu.memory_space<vmem>>, vector<1x64x128xbf16>
    %64 = vector.shape_cast %63 : vector<1x64x128xbf16> to vector<64x128xbf16>
    %65 = vector.shape_cast %62 : vector<64x128xbf16> to vector<1x64x128xbf16>
    tpu.vector_store %arg5[%c0_36, %c0_37, %c0_38], %65 {strides = array<i32>} : memref<1x64x128xbf16, #tpu.memory_space<vmem>>, vector<1x64x128xbf16>,
    return
  }
  func.func @transform_0(%arg0: i32) -> (i32, i32, i32) {
    %c0_i32 = arith.constant 0 : i32
    %c0_i32_0 = arith.constant 0 : i32
    %c0_i32_1 = arith.constant 0 : i32
    return %arg0, %c0_i32, %c0_i32_0 : i32, i32, i32
  }
  func.func @transform_1(%arg0: i32) -> (i32, i32, i32) {
    %c0_i32 = arith.constant 0 : i32
    %c0_i32_0 = arith.constant 0 : i32
    %c0_i32_1 = arith.constant 0 : i32
    %c0_i32_2 = arith.constant 0 : i32
    return %c0_i32, %c0_i32_0, %c0_i32_1 : i32, i32, i32
  }
  func.func @transform_2(%arg0: i32) -> (i32, i32) {
    %c0_i32 = arith.constant 0 : i32
    %c0_i32_0 = arith.constant 0 : i32
    %c0_i32_1 = arith.constant 0 : i32
    return %c0_i32, %c0_i32_0 : i32, i32
  }
  func.func @transform_3(%arg0: i32) -> (i32, i32) {
    %c0_i32 = arith.constant 0 : i32
    %c0_i32_0 = arith.constant 0 : i32
    %c0_i32_1 = arith.constant 0 : i32
    return %c0_i32, %c0_i32_0 : i32, i32
  }
  func.func @transform_4(%arg0: i32) -> (i32, i32, i32) {
    %c0_i32 = arith.constant 0 : i32
    %c0_i32_0 = arith.constant 0 : i32
    %c0_i32_1 = arith.constant 0 : i32
    return %arg0, %c0_i32, %c0_i32_0 : i32, i32, i32
  }
}

module attributes {stable_mosaic.version = 11 : i64} {
  func.func @_conv_tap_kernel(%arg0: i32, %arg1: memref<1x102x128xbf16, #tpu.memory_space<vmem>>, %arg2: memref<9x128x256xbf16, #tpu.memory_space<vmem>>, %arg3: memref<1x256xf32, #tpu.memory_space<vmem>>, %arg4: memref<16x69xbf16, #tpu.memory_space<vmem>>, %arg5: memref<1x16x256xbf16, #tpu.memory_space<vmem>>) attributes {dimension_semantics = [#tpu.dimension_semantics<parallel>], iteration_bounds = array<i64: 2>, scalar_prefetch = 0 : i64, scratch_operands = 0 : i64, tpu.core_type = #tpu.core_type<tc>, window_params = [{transform_indices = @transform_0, window_bounds = array<i64: 1, 102, 128>}, {pipeline_mode = #tpu.pipeline_mode<synchronous>, transform_indices = @transform_1, window_bounds = array<i64: 9, 128, 256>}, {pipeline_mode = #tpu.pipeline_mode<synchronous>, transform_indices = @transform_2, window_bounds = array<i64: 1, 256>}, {pipeline_mode = #tpu.pipeline_mode<synchronous>, transform_indices = @transform_3, window_bounds = array<i64: 16, 69>}, {transform_indices = @transform_4, window_bounds = array<i64: 1, 16, 256>}]} {
    %c0 = arith.constant 0 : index
    %c0_0 = arith.constant 0 : index
    %c0_1 = arith.constant 0 : index
    %0 = vector.load %arg1[%c0, %c0_0, %c0_1] : memref<1x102x128xbf16, #tpu.memory_space<vmem>>, vector<1x102x128xbf16>
    %1 = vector.shape_cast %0 : vector<1x102x128xbf16> to vector<102x128xbf16>
    %cst = arith.constant 0.000000e+00 : f32
    %2 = vector.broadcast %cst : f32 to vector<80x256xf32>
    %3 = vector.extract_strided_slice %1 {offsets = [0, 0], sizes = [80, 128], strides = [1, 1]} : vector<102x128xbf16> to vector<80x128xbf16>
    %c0_2 = arith.constant 0 : index
    %c0_3 = arith.constant 0 : index
    %c0_4 = arith.constant 0 : index
    %4 = vector.load %arg2[%c0_2, %c0_3, %c0_4] : memref<9x128x256xbf16, #tpu.memory_space<vmem>>, vector<1x128x256xbf16>
    %5 = vector.shape_cast %4 : vector<1x128x256xbf16> to vector<128x256xbf16>
    %cst_5 = arith.constant dense<0.000000e+00> : vector<80x256xf32>
    %6 = tpu.matmul %3, %5, %cst_5 {dimension_numbers = #tpu.dot_dimension_numbers<[1], [0], [0], [1], [0, 0, 1, 1], [], []>} : vector<80x128xbf16>, vector<128x256xbf16>, vector<80x256xf32> -> vector<80x256xf32>
    %7 = arith.addf %2, %6 : vector<80x256xf32>
    %8 = vector.extract_strided_slice %1 {offsets = [1, 0], sizes = [80, 128], strides = [1, 1]} : vector<102x128xbf16> to vector<80x128xbf16>
    %c1 = arith.constant 1 : index
    %c0_6 = arith.constant 0 : index
    %c0_7 = arith.constant 0 : index
    %9 = vector.load %arg2[%c1, %c0_6, %c0_7] : memref<9x128x256xbf16, #tpu.memory_space<vmem>>, vector<1x128x256xbf16>
    %10 = vector.shape_cast %9 : vector<1x128x256xbf16> to vector<128x256xbf16>
    %cst_8 = arith.constant dense<0.000000e+00> : vector<80x256xf32>
    %11 = tpu.matmul %8, %10, %cst_8 {dimension_numbers = #tpu.dot_dimension_numbers<[1], [0], [0], [1], [0, 0, 1, 1], [], []>} : vector<80x128xbf16>, vector<128x256xbf16>, vector<80x256xf32> -> vector<80x256xf32>
    %12 = arith.addf %7, %11 : vector<80x256xf32>
    %13 = vector.extract_strided_slice %1 {offsets = [2, 0], sizes = [80, 128], strides = [1, 1]} : vector<102x128xbf16> to vector<80x128xbf16>
    %c2 = arith.constant 2 : index
    %c0_9 = arith.constant 0 : index
    %c0_10 = arith.constant 0 : index
    %14 = vector.load %arg2[%c2, %c0_9, %c0_10] : memref<9x128x256xbf16, #tpu.memory_space<vmem>>, vector<1x128x256xbf16>
    %15 = vector.shape_cast %14 : vector<1x128x256xbf16> to vector<128x256xbf16>
    %cst_11 = arith.constant dense<0.000000e+00> : vector<80x256xf32>
    %16 = tpu.matmul %13, %15, %cst_11 {dimension_numbers = #tpu.dot_dimension_numbers<[1], [0], [0], [1], [0, 0, 1, 1], [], []>} : vector<80x128xbf16>, vector<128x256xbf16>, vector<80x256xf32> -> vector<80x256xf32>
    %17 = arith.addf %12, %16 : vector<80x256xf32>
    %18 = vector.extract_strided_slice %1 {offsets = [10, 0], sizes = [80, 128], strides = [1, 1]} : vector<102x128xbf16> to vector<80x128xbf16>
    %c3 = arith.constant 3 : index
    %c0_12 = arith.constant 0 : index
    %c0_13 = arith.constant 0 : index
    %19 = vector.load %arg2[%c3, %c0_12, %c0_13] : memref<9x128x256xbf16, #tpu.memory_space<vmem>>, vector<1x128x256xbf16>
    %20 = vector.shape_cast %19 : vector<1x128x256xbf16> to vector<128x256xbf16>
    %cst_14 = arith.constant dense<0.000000e+00> : vector<80x256xf32>
    %21 = tpu.matmul %18, %20, %cst_14 {dimension_numbers = #tpu.dot_dimension_numbers<[1], [0], [0], [1], [0, 0, 1, 1], [], []>} : vector<80x128xbf16>, vector<128x256xbf16>, vector<80x256xf32> -> vector<80x256xf32>
    %22 = arith.addf %17, %21 : vector<80x256xf32>
    %23 = vector.extract_strided_slice %1 {offsets = [11, 0], sizes = [80, 128], strides = [1, 1]} : vector<102x128xbf16> to vector<80x128xbf16>
    %c4 = arith.constant 4 : index
    %c0_15 = arith.constant 0 : index
    %c0_16 = arith.constant 0 : index
    %24 = vector.load %arg2[%c4, %c0_15, %c0_16] : memref<9x128x256xbf16, #tpu.memory_space<vmem>>, vector<1x128x256xbf16>
    %25 = vector.shape_cast %24 : vector<1x128x256xbf16> to vector<128x256xbf16>
    %cst_17 = arith.constant dense<0.000000e+00> : vector<80x256xf32>
    %26 = tpu.matmul %23, %25, %cst_17 {dimension_numbers = #tpu.dot_dimension_numbers<[1], [0], [0], [1], [0, 0, 1, 1], [], []>} : vector<80x128xbf16>, vector<128x256xbf16>, vector<80x256xf32> -> vector<80x256xf32>
    %27 = arith.addf %22, %26 : vector<80x256xf32>
    %28 = vector.extract_strided_slice %1 {offsets = [12, 0], sizes = [80, 128], strides = [1, 1]} : vector<102x128xbf16> to vector<80x128xbf16>
    %c5 = arith.constant 5 : index
    %c0_18 = arith.constant 0 : index
    %c0_19 = arith.constant 0 : index
    %29 = vector.load %arg2[%c5, %c0_18, %c0_19] : memref<9x128x256xbf16, #tpu.memory_space<vmem>>, vector<1x128x256xbf16>
    %30 = vector.shape_cast %29 : vector<1x128x256xbf16> to vector<128x256xbf16>
    %cst_20 = arith.constant dense<0.000000e+00> : vector<80x256xf32>
    %31 = tpu.matmul %28, %30, %cst_20 {dimension_numbers = #tpu.dot_dimension_numbers<[1], [0], [0], [1], [0, 0, 1, 1], [], []>} : vector<80x128xbf16>, vector<128x256xbf16>, vector<80x256xf32> -> vector<80x256xf32>
    %32 = arith.addf %27, %31 : vector<80x256xf32>
    %33 = vector.extract_strided_slice %1 {offsets = [20, 0], sizes = [80, 128], strides = [1, 1]} : vector<102x128xbf16> to vector<80x128xbf16>
    %c6 = arith.constant 6 : index
    %c0_21 = arith.constant 0 : index
    %c0_22 = arith.constant 0 : index
    %34 = vector.load %arg2[%c6, %c0_21, %c0_22] : memref<9x128x256xbf16, #tpu.memory_space<vmem>>, vector<1x128x256xbf16>
    %35 = vector.shape_cast %34 : vector<1x128x256xbf16> to vector<128x256xbf16>
    %cst_23 = arith.constant dense<0.000000e+00> : vector<80x256xf32>
    %36 = tpu.matmul %33, %35, %cst_23 {dimension_numbers = #tpu.dot_dimension_numbers<[1], [0], [0], [1], [0, 0, 1, 1], [], []>} : vector<80x128xbf16>, vector<128x256xbf16>, vector<80x256xf32> -> vector<80x256xf32>
    %37 = arith.addf %32, %36 : vector<80x256xf32>
    %38 = vector.extract_strided_slice %1 {offsets = [21, 0], sizes = [80, 128], strides = [1, 1]} : vector<102x128xbf16> to vector<80x128xbf16>
    %c7 = arith.constant 7 : index
    %c0_24 = arith.constant 0 : index
    %c0_25 = arith.constant 0 : index
    %39 = vector.load %arg2[%c7, %c0_24, %c0_25] : memref<9x128x256xbf16, #tpu.memory_space<vmem>>, vector<1x128x256xbf16>
    %40 = vector.shape_cast %39 : vector<1x128x256xbf16> to vector<128x256xbf16>
    %cst_26 = arith.constant dense<0.000000e+00> : vector<80x256xf32>
    %41 = tpu.matmul %38, %40, %cst_26 {dimension_numbers = #tpu.dot_dimension_numbers<[1], [0], [0], [1], [0, 0, 1, 1], [], []>} : vector<80x128xbf16>, vector<128x256xbf16>, vector<80x256xf32> -> vector<80x256xf32>
    %42 = arith.addf %37, %41 : vector<80x256xf32>
    %43 = vector.extract_strided_slice %1 {offsets = [22, 0], sizes = [80, 128], strides = [1, 1]} : vector<102x128xbf16> to vector<80x128xbf16>
    %c8 = arith.constant 8 : index
    %c0_27 = arith.constant 0 : index
    %c0_28 = arith.constant 0 : index
    %44 = vector.load %arg2[%c8, %c0_27, %c0_28] : memref<9x128x256xbf16, #tpu.memory_space<vmem>>, vector<1x128x256xbf16>
    %45 = vector.shape_cast %44 : vector<1x128x256xbf16> to vector<128x256xbf16>
    %cst_29 = arith.constant dense<0.000000e+00> : vector<80x256xf32>
    %46 = tpu.matmul %43, %45, %cst_29 {dimension_numbers = #tpu.dot_dimension_numbers<[1], [0], [0], [1], [0, 0, 1, 1], [], []>} : vector<80x128xbf16>, vector<128x256xbf16>, vector<80x256xf32> -> vector<80x256xf32>
    %47 = arith.addf %42, %46 : vector<80x256xf32>
    %c0_30 = arith.constant 0 : index
    %c0_31 = arith.constant 0 : index
    %48 = vector.load %arg3[%c0_30, %c0_31] : memref<1x256xf32, #tpu.memory_space<vmem>>, vector<1x256xf32>
    %49 = vector.broadcast %48 : vector<1x256xf32> to vector<80x256xf32>
    %50 = arith.addf %47, %49 : vector<80x256xf32>
    %cst_32 = arith.constant 0.000000e+00 : f32
    %51 = vector.broadcast %cst_32 : f32 to vector<80x256xf32>
    %52 = arith.maximumf %50, %51 : vector<80x256xf32>
    %53 = vector.extract_strided_slice %52 {offsets = [0, 0], sizes = [79, 256], strides = [1, 1]} : vector<80x256xf32> to vector<79x256xf32>
    %54 = vector.extract_strided_slice %52 {offsets = [1, 0], sizes = [79, 256], strides = [1, 1]} : vector<80x256xf32> to vector<79x256xf32>
    %55 = arith.maximumf %53, %54 : vector<79x256xf32>
    %56 = vector.extract_strided_slice %55 {offsets = [0, 0], sizes = [69, 256], strides = [1, 1]} : vector<79x256xf32> to vector<69x256xf32>
    %57 = vector.extract_strided_slice %55 {offsets = [10, 0], sizes = [69, 256], strides = [1, 1]} : vector<79x256xf32> to vector<69x256xf32>
    %58 = arith.maximumf %56, %57 : vector<69x256xf32>
    %c0_33 = arith.constant 0 : index
    %c0_34 = arith.constant 0 : index
    %59 = vector.load %arg4[%c0_33, %c0_34] : memref<16x69xbf16, #tpu.memory_space<vmem>>, vector<16x69xbf16>
    %60 = arith.truncf %58 : vector<69x256xf32> to vector<69x256xbf16>
    %cst_35 = arith.constant dense<0.000000e+00> : vector<16x256xf32>
    %61 = tpu.matmul %59, %60, %cst_35 {dimension_numbers = #tpu.dot_dimension_numbers<[1], [0], [0], [1], [0, 0, 1, 1], [], []>} : vector<16x69xbf16>, vector<69x256xbf16>, vector<16x256xf32> -> vector<16x256xf32>
    %62 = arith.truncf %61 : vector<16x256xf32> to vector<16x256xbf16>
    %c0_36 = arith.constant 0 : index
    %c0_37 = arith.constant 0 : index
    %c0_38 = arith.constant 0 : index
    %63 = vector.load %arg5[%c0_36, %c0_37, %c0_38] : memref<1x16x256xbf16, #tpu.memory_space<vmem>>, vector<1x16x256xbf16>
    %64 = vector.shape_cast %63 : vector<1x16x256xbf16> to vector<16x256xbf16>
    %65 = vector.shape_cast %62 : vector<16x256xbf16> to vector<1x16x256xbf16>
    tpu.vector_store %arg5[%c0_36, %c0_37, %c0_38], %65 {strides = array<i32>} : memref<1x16x256xbf16, #tpu.memory_space<vmem>>, vector<1x16x256xbf16>,
    return
  }
  func.func @transform_0(%arg0: i32) -> (i32, i32, i32) {
    %c0_i32 = arith.constant 0 : i32
    %c0_i32_0 = arith.constant 0 : i32
    %c0_i32_1 = arith.constant 0 : i32
    return %arg0, %c0_i32, %c0_i32_0 : i32, i32, i32
  }
  func.func @transform_1(%arg0: i32) -> (i32, i32, i32) {
    %c0_i32 = arith.constant 0 : i32
    %c0_i32_0 = arith.constant 0 : i32
    %c0_i32_1 = arith.constant 0 : i32
    %c0_i32_2 = arith.constant 0 : i32
    return %c0_i32, %c0_i32_0, %c0_i32_1 : i32, i32, i32
  }
  func.func @transform_2(%arg0: i32) -> (i32, i32) {
    %c0_i32 = arith.constant 0 : i32
    %c0_i32_0 = arith.constant 0 : i32
    %c0_i32_1 = arith.constant 0 : i32
    return %c0_i32, %c0_i32_0 : i32, i32
  }
  func.func @transform_3(%arg0: i32) -> (i32, i32) {
    %c0_i32 = arith.constant 0 : i32
    %c0_i32_0 = arith.constant 0 : i32
    %c0_i32_1 = arith.constant 0 : i32
    return %c0_i32, %c0_i32_0 : i32, i32
  }
  func.func @transform_4(%arg0: i32) -> (i32, i32, i32) {
    %c0_i32 = arith.constant 0 : i32
    %c0_i32_0 = arith.constant 0 : i32
    %c0_i32_1 = arith.constant 0 : i32
    return %arg0, %c0_i32, %c0_i32_0 : i32, i32, i32
  }
}

module attributes {stable_mosaic.version = 11 : i64} {
  func.func @kernel(%arg0: i32, %arg1: memref<2x2048xbf16, #tpu.memory_space<vmem>>, %arg2: memref<2048x512xbf16, #tpu.memory_space<vmem>>, %arg3: memref<1x512xf32, #tpu.memory_space<vmem>>, %arg4: memref<128x512xbf16, #tpu.memory_space<vmem>>, %arg5: memref<1x512xf32, #tpu.memory_space<vmem>>, %arg6: memref<512x10xbf16, #tpu.memory_space<vmem>>, %arg7: memref<1x10xf32, #tpu.memory_space<vmem>>, %arg8: memref<2x10xf32, #tpu.memory_space<vmem>>, %arg9: memref<2x512xf32, #tpu.memory_space<vmem>>) attributes {dimension_semantics = [#tpu.dimension_semantics<arbitrary>], iteration_bounds = array<i64: 2>, scalar_prefetch = 0 : i64, scratch_operands = 1 : i64, tpu.core_type = #tpu.core_type<tc>, window_params = [{transform_indices = @transform_0, window_bounds = array<i64: 2, 2048>}, {transform_indices = @transform_1, window_bounds = array<i64: 2048, 512>}, {pipeline_mode = #tpu.pipeline_mode<synchronous>, transform_indices = @transform_2, window_bounds = array<i64: 1, 512>}, {pipeline_mode = #tpu.pipeline_mode<synchronous>, transform_indices = @transform_3, window_bounds = array<i64: 128, 512>}, {pipeline_mode = #tpu.pipeline_mode<synchronous>, transform_indices = @transform_4, window_bounds = array<i64: 1, 512>}, {pipeline_mode = #tpu.pipeline_mode<synchronous>, transform_indices = @transform_5, window_bounds = array<i64: 512, 10>}, {pipeline_mode = #tpu.pipeline_mode<synchronous>, transform_indices = @transform_6, window_bounds = array<i64: 1, 10>}, {pipeline_mode = #tpu.pipeline_mode<synchronous>, transform_indices = @transform_7, window_bounds = array<i64: 2, 10>}]} {
    %c0_i32 = arith.constant 0 : i32
    %0 = arith.cmpi eq, %arg0, %c0_i32 : i32
    %1 = arith.extui %0 : i1 to i32
    %c0_i32_0 = arith.constant 0 : i32
    %2 = arith.cmpi ne, %1, %c0_i32_0 : i32
    scf.if %2 {
      %cst_9 = arith.constant 0.000000e+00 : f32
      %12 = vector.broadcast %cst_9 : f32 to vector<2x512xf32>
      %c0_10 = arith.constant 0 : index
      %c0_11 = arith.constant 0 : index
      %13 = vector.load %arg9[%c0_10, %c0_11] : memref<2x512xf32, #tpu.memory_space<vmem>>, vector<2x512xf32>
      tpu.vector_store %arg9[%c0_10, %c0_11], %12 {strides = array<i32>} : memref<2x512xf32, #tpu.memory_space<vmem>>, vector<2x512xf32>,
    } else {
    }
    %c0 = arith.constant 0 : index
    %c0_1 = arith.constant 0 : index
    %3 = vector.load %arg9[%c0, %c0_1] : memref<2x512xf32, #tpu.memory_space<vmem>>, vector<2x512xf32>
    %c0_2 = arith.constant 0 : index
    %c0_3 = arith.constant 0 : index
    %4 = vector.load %arg1[%c0_2, %c0_3] : memref<2x2048xbf16, #tpu.memory_space<vmem>>, vector<2x2048xbf16>
    %c0_4 = arith.constant 0 : index
    %c0_5 = arith.constant 0 : index
    %5 = vector.load %arg2[%c0_4, %c0_5] : memref<2048x512xbf16, #tpu.memory_space<vmem>>, vector<2048x512xbf16>
    %cst = arith.constant dense<0.000000e+00> : vector<2x512xf32>
    %6 = tpu.matmul %4, %5, %cst {dimension_numbers = #tpu.dot_dimension_numbers<[1], [0], [0], [1], [0, 0, 1, 1], [], []>} : vector<2x2048xbf16>, vector<2048x512xbf16>, vector<2x512xf32> -> vector<2x512xf32>
    %7 = arith.addf %3, %6 : vector<2x512xf32>
    %c0_6 = arith.constant 0 : index
    %c0_7 = arith.constant 0 : index
    %8 = vector.load %arg9[%c0_6, %c0_7] : memref<2x512xf32, #tpu.memory_space<vmem>>, vector<2x512xf32>
    tpu.vector_store %arg9[%c0_6, %c0_7], %7 {strides = array<i32>} : memref<2x512xf32, #tpu.memory_space<vmem>>, vector<2x512xf32>,
    %c1_i32 = arith.constant 1 : i32
    %9 = arith.cmpi eq, %arg0, %c1_i32 : i32
    %10 = arith.extui %9 : i1 to i32
    %c0_i32_8 = arith.constant 0 : i32
    %11 = arith.cmpi ne, %10, %c0_i32_8 : i32
    scf.if %11 {
      %c0_9 = arith.constant 0 : index
      %c0_10 = arith.constant 0 : index
      %12 = vector.load %arg9[%c0_9, %c0_10] : memref<2x512xf32, #tpu.memory_space<vmem>>, vector<2x512xf32>
      %c0_11 = arith.constant 0 : index
      %c0_12 = arith.constant 0 : index
      %13 = vector.load %arg3[%c0_11, %c0_12] : memref<1x512xf32, #tpu.memory_space<vmem>>, vector<1x512xf32>
      %14 = vector.broadcast %13 : vector<1x512xf32> to vector<2x512xf32>
      %15 = arith.addf %12, %14 : vector<2x512xf32>
      %16 = vector.extract_strided_slice %15 {offsets = [0, 0], sizes = [2, 128], strides = [1, 1]} : vector<2x512xf32> to vector<2x128xf32>
      %17 = arith.negf %16 : vector<2x128xf32>
      %18 = math.exp %17 : vector<2x128xf32>
      %cst_13 = arith.constant 1.000000e+00 : f32
      %19 = vector.broadcast %cst_13 : f32 to vector<2x128xf32>
      %20 = arith.addf %19, %18 : vector<2x128xf32>
      %21 = arith.divf %19, %20 : vector<2x128xf32>
      %22 = vector.extract_strided_slice %15 {offsets = [0, 256], sizes = [2, 128], strides = [1, 1]} : vector<2x512xf32> to vector<2x128xf32>
      %23 = math.tanh %22 : vector<2x128xf32>
      %24 = vector.extract_strided_slice %15 {offsets = [0, 384], sizes = [2, 128], strides = [1, 1]} : vector<2x512xf32> to vector<2x128xf32>
      %25 = arith.negf %24 : vector<2x128xf32>
      %26 = math.exp %25 : vector<2x128xf32>
      %cst_14 = arith.constant 1.000000e+00 : f32
      %27 = vector.broadcast %cst_14 : f32 to vector<2x128xf32>
      %28 = arith.addf %27, %26 : vector<2x128xf32>
      %29 = arith.divf %27, %28 : vector<2x128xf32>
      %30 = arith.mulf %21, %23 : vector<2x128xf32>
      %31 = math.tanh %30 : vector<2x128xf32>
      %32 = arith.mulf %29, %31 : vector<2x128xf32>
      %33 = arith.truncf %32 : vector<2x128xf32> to vector<2x128xbf16>
      %c0_15 = arith.constant 0 : index
      %c0_16 = arith.constant 0 : index
      %34 = vector.load %arg4[%c0_15, %c0_16] : memref<128x512xbf16, #tpu.memory_space<vmem>>, vector<128x512xbf16>
      %cst_17 = arith.constant dense<0.000000e+00> : vector<2x512xf32>
      %35 = tpu.matmul %33, %34, %cst_17 {dimension_numbers = #tpu.dot_dimension_numbers<[1], [0], [0], [1], [0, 0, 1, 1], [], []>} : vector<2x128xbf16>, vector<128x512xbf16>, vector<2x512xf32> -> vector<2x512xf32>
      %c0_18 = arith.constant 0 : index
      %c0_19 = arith.constant 0 : index
      %36 = vector.load %arg5[%c0_18, %c0_19] : memref<1x512xf32, #tpu.memory_space<vmem>>, vector<1x512xf32>
      %37 = vector.broadcast %36 : vector<1x512xf32> to vector<2x512xf32>
      %38 = arith.addf %35, %37 : vector<2x512xf32>
      %cst_20 = arith.constant 0.000000e+00 : f32
      %39 = vector.broadcast %cst_20 : f32 to vector<2x512xf32>
      %40 = arith.maximumf %38, %39 : vector<2x512xf32>
      %41 = arith.truncf %40 : vector<2x512xf32> to vector<2x512xbf16>
      %c0_21 = arith.constant 0 : index
      %c0_22 = arith.constant 0 : index
      %42 = vector.load %arg6[%c0_21, %c0_22] : memref<512x10xbf16, #tpu.memory_space<vmem>>, vector<512x10xbf16>
      %cst_23 = arith.constant dense<0.000000e+00> : vector<2x10xf32>
      %43 = tpu.matmul %41, %42, %cst_23 {dimension_numbers = #tpu.dot_dimension_numbers<[1], [0], [0], [1], [0, 0, 1, 1], [], []>} : vector<2x512xbf16>, vector<512x10xbf16>, vector<2x10xf32> -> vector<2x10xf32>
      %c0_24 = arith.constant 0 : index
      %c0_25 = arith.constant 0 : index
      %44 = vector.load %arg7[%c0_24, %c0_25] : memref<1x10xf32, #tpu.memory_space<vmem>>, vector<1x10xf32>
      %45 = vector.broadcast %44 : vector<1x10xf32> to vector<2x10xf32>
      %46 = arith.addf %43, %45 : vector<2x10xf32>
      %c0_26 = arith.constant 0 : index
      %c0_27 = arith.constant 0 : index
      %47 = vector.load %arg8[%c0_26, %c0_27] : memref<2x10xf32, #tpu.memory_space<vmem>>, vector<2x10xf32>
      tpu.vector_store %arg8[%c0_26, %c0_27], %46 {strides = array<i32>} : memref<2x10xf32, #tpu.memory_space<vmem>>, vector<2x10xf32>,
    } else {
    }
    return
  }
  func.func @transform_0(%arg0: i32) -> (i32, i32) {
    %c0_i32 = arith.constant 0 : i32
    %c0_i32_0 = arith.constant 0 : i32
    return %c0_i32, %arg0 : i32, i32
  }
  func.func @transform_1(%arg0: i32) -> (i32, i32) {
    %c0_i32 = arith.constant 0 : i32
    %c0_i32_0 = arith.constant 0 : i32
    return %arg0, %c0_i32 : i32, i32
  }
  func.func @transform_2(%arg0: i32) -> (i32, i32) {
    %c0_i32 = arith.constant 0 : i32
    %c0_i32_0 = arith.constant 0 : i32
    %c0_i32_1 = arith.constant 0 : i32
    return %c0_i32, %c0_i32_0 : i32, i32
  }
  func.func @transform_3(%arg0: i32) -> (i32, i32) {
    %c0_i32 = arith.constant 0 : i32
    %c0_i32_0 = arith.constant 0 : i32
    %c0_i32_1 = arith.constant 0 : i32
    return %c0_i32, %c0_i32_0 : i32, i32
  }
  func.func @transform_4(%arg0: i32) -> (i32, i32) {
    %c0_i32 = arith.constant 0 : i32
    %c0_i32_0 = arith.constant 0 : i32
    %c0_i32_1 = arith.constant 0 : i32
    return %c0_i32, %c0_i32_0 : i32, i32
  }
  func.func @transform_5(%arg0: i32) -> (i32, i32) {
    %c0_i32 = arith.constant 0 : i32
    %c0_i32_0 = arith.constant 0 : i32
    %c0_i32_1 = arith.constant 0 : i32
    return %c0_i32, %c0_i32_0 : i32, i32
  }
  func.func @transform_6(%arg0: i32) -> (i32, i32) {
    %c0_i32 = arith.constant 0 : i32
    %c0_i32_0 = arith.constant 0 : i32
    %c0_i32_1 = arith.constant 0 : i32
    return %c0_i32, %c0_i32_0 : i32, i32
  }
  func.func @transform_7(%arg0: i32) -> (i32, i32) {
    %c0_i32 = arith.constant 0 : i32
    %c0_i32_0 = arith.constant 0 : i32
    %c0_i32_1 = arith.constant 0 : i32
    return %c0_i32, %c0_i32_0 : i32, i32
  }
}

</mosaic_0001>

<llo_original>
// kernel: lstm_cnn_forward.4
$region0: #{lstm_cnn_forward.4}
  #allocation0 [shape = 'u32[]', space=smem, size = 0x4, offset = 0x4, fixed_abs, tag = 'smem constant byte address 0x4 - core index']
  #allocation1 [shape = 'u32[144,128]{1,0:T(1,128)}', space=vmem, size = 0x12000, scoped, tag = 'internal scratch']
  %s0 = inlined_call_operand.vmem [shape: bf16[2048,32], index: 0, kind: input, shape index: {}]
  %s1 = inlined_call_operand.vmem [shape: bf16[32,64], index: 1, kind: input, shape index: {}]
  %s2 = inlined_call_operand.vmem [shape: f32[1,64], index: 2, kind: input, shape index: {}]
  %s3 = inlined_call_operand.vmem [shape: bf16[512,64], index: 3, kind: output, shape index: {}]
  %s4 = sld [smem:[#allocation0]]
  $region45: #{lstm_cnn_forward.4} parent=0
    _
  %s6 = ssub.s32 1, %s4
  %s7 = scalar_select 0, %s6, %s4
  loop: start=0, step=1, limit=4
  $region2: #{lstm_cnn_forward.4} parent=0 // loop_pre_header
    _
  $region3: #{lstm_cnn_forward.4} parent=0 // loop_header
    %s9 = sphi 0, %s13
    %p10 = scmp.ge.s32.totalorder %s9, 4
    %s19 = sphi 0, %s21
    %s22 = sphi 0, %s19
    %s23 = sphi 0, %s22
    %s39 = sphi 0, %s23
    %s43 = sphi 0, %s43
    %s45 = sphi 0, %s43
    %s46 = sphi 0, %s45
    %s60 = sphi 0, %s46
    %s64 = sphi 0, %s64
    %s66 = sphi 0, %s64
    %s67 = sphi 0, %s66
    %s81 = sphi 0, %s67
    %s87 = sphi 0, %s89
    %s90 = sphi 0, %s87
    %s91 = sphi 0, %s90
    %s107 = sphi 0, %s91
  $region4: #{lstm_cnn_forward.4} parent=0 // loop_header_branch
    %12 = sbr.rel (%p10) target = $region8
  $region5: #{lstm_cnn_forward.4} parent=0 // loop_body
    %s14 = ssub.s32 %s9, 1
    %s15 = ssub.s32 %s9, 2
    %s16 = sadd.s32 %s9, 1
    %s17 = ssub.s32 %s9, %s16
    %p18 = scmp.eq.s32.totalorder %s17, 0
    %s20 = sadd.s32 %s19, 1
    %s21 = scalar_select %p18, %s19, %s20
    %p24 = pneg %p18
    %p25 = scmp.eq.s32.totalorder %s9, 1
    %p26 = por %p24, %p25
    %p27 = scmp.ne.s32.totalorder %s19, %s22
    %p28 = scmp.eq.s32.totalorder %s9, 0
    %p29 = por %p27, %p28
    %p30 = scmp.ne.s32.totalorder %s19, %s22
    %p31 = scmp.eq.s32.totalorder %s14, 1
    %p32 = por %p30, %p31
    %p33 = scmp.ne.s32.totalorder %s22, %s23
    %p34 = scmp.eq.s32.totalorder %s14, 0
    %p35 = por %p33, %p34
    %p36 = scmp.ne.s32.totalorder %s22, %s23
    %p37 = scmp.eq.s32.totalorder %s15, 1
    %p38 = por %p36, %p37
    %p40 = scmp.ne.s32.totalorder %s23, %s39
    %p41 = scmp.eq.s32.totalorder %s15, 0
    %p42 = por %p40, %p41
    %s44 = sadd.s32 %s43, 1
    %p47 = scmp.eq.s32.totalorder %s9, 1
    %p48 = scmp.ne.s32.totalorder %s43, %s45
    %p49 = scmp.eq.s32.totalorder %s9, 0
    %p50 = por %p48, %p49
    %p51 = scmp.ne.s32.totalorder %s43, %s45
    %p52 = scmp.eq.s32.totalorder %s14, 1
    %p53 = por %p51, %p52
    %p54 = scmp.ne.s32.totalorder %s45, %s46
    %p55 = scmp.eq.s32.totalorder %s14, 0
    %p56 = por %p54, %p55
    %p57 = scmp.ne.s32.totalorder %s45, %s46
    %p58 = scmp.eq.s32.totalorder %s15, 1
    %p59 = por %p57, %p58
    %p61 = scmp.ne.s32.totalorder %s46, %s60
    %p62 = scmp.eq.s32.totalorder %s15, 0
    %p63 = por %p61, %p62
    %s65 = sadd.s32 %s64, 1
    %p68 = scmp.eq.s32.totalorder %s9, 1
    %p69 = scmp.ne.s32.totalorder %s64, %s66
    %p70 = scmp.eq.s32.totalorder %s9, 0
    %p71 = por %p69, %p70
    %p72 = scmp.ne.s32.totalorder %s64, %s66
    %p73 = scmp.eq.s32.totalorder %s14, 1
    %p74 = por %p72, %p73
    %p75 = scmp.ne.s32.totalorder %s66, %s67
    %p76 = scmp.eq.s32.totalorder %s14, 0
    %p77 = por %p75, %p76
    %p78 = scmp.ne.s32.totalorder %s66, %s67
    %p79 = scmp.eq.s32.totalorder %s15, 1
    %p80 = por %p78, %p79
    %p82 = scmp.ne.s32.totalorder %s67, %s81
    %p83 = scmp.eq.s32.totalorder %s15, 0
    %p84 = por %p82, %p83
    %s85 = ssub.s32 %s9, %s16
    %p86 = scmp.eq.s32.totalorder %s85, 0
    %s88 = sadd.s32 %s87, 1
    %s89 = scalar_select %p86, %s87, %s88
    %p92 = pneg %p86
    %p93 = scmp.eq.s32.totalorder %s9, 1
    %p94 = por %p92, %p93
    %p95 = scmp.ne.s32.totalorder %s87, %s90
    %p96 = scmp.eq.s32.totalorder %s9, 0
    %p97 = por %p95, %p96
    %p98 = scmp.ne.s32.totalorder %s87, %s90
    %p99 = scmp.eq.s32.totalorder %s14, 1
    %p100 = por %p98, %p99
    %p101 = scmp.ne.s32.totalorder %s90, %s91
    %p102 = scmp.eq.s32.totalorder %s14, 0
    %p103 = por %p101, %p102
    %p104 = scmp.ne.s32.totalorder %s90, %s91
    %p105 = scmp.eq.s32.totalorder %s15, 1
    %p106 = por %p104, %p105
    %p108 = scmp.ne.s32.totalorder %s91, %s107
    %p109 = scmp.eq.s32.totalorder %s15, 0
    %p110 = por %p108, %p109
    %p111 = scmp.le.s32.totalorder 1, %s9
    %p112 = scmp.lt.s32.totalorder %s9, 3
    %p113 = pnand %p111, %p112
    %p114 = pneg %p113
    // Predicated region
    $region9: #{lstm_cnn_forward.4} parent=5 // pred_check
      _
    $region10: #{lstm_cnn_forward.4} parent=5 // pred_check_branch
      %116 = sbr.rel (%p113) target = $region12
    $region11: #{lstm_cnn_forward.4} parent=5 // pred_region
      %s117 = ssub.s32 %s9, 1
      // Predicated region
      $region13: #{lstm_cnn_forward.4} parent=11 // pred_check
        %p118 = pneg %p56
      $region14: #{lstm_cnn_forward.4} parent=11 // pred_check_branch
        %120 = sbr.rel (%p118) target = $region16
      $region15: #{lstm_cnn_forward.4} parent=11 // pred_region
        _
      $region16: #{lstm_cnn_forward.4} parent=11 // pred_fallthru
        _
      // Predicated region
      $region17: #{lstm_cnn_forward.4} parent=11 // pred_check
        %p121 = pneg %p77
      $region18: #{lstm_cnn_forward.4} parent=11 // pred_check_branch
        %123 = sbr.rel (%p121) target = $region20
      $region19: #{lstm_cnn_forward.4} parent=11 // pred_region
        _
      $region20: #{lstm_cnn_forward.4} parent=11 // pred_fallthru
        _
    $region12: #{lstm_cnn_forward.4} parent=5 // pred_fallthru
      _
    %p124 = scmp.lt.s32.totalorder %s9, 2
    // Predicated region
    $region21: #{lstm_cnn_forward.4} parent=5 // pred_check
      %p125 = pneg %p124
    $region22: #{lstm_cnn_forward.4} parent=5 // pred_check_branch
      %127 = sbr.rel (%p125) target = $region24
    $region23: #{lstm_cnn_forward.4} parent=5 // pred_region
      // Predicated region
      $region25: #{lstm_cnn_forward.4} parent=23 // pred_check
        %p128 = pneg %p29
      $region26: #{lstm_cnn_forward.4} parent=23 // pred_check_branch
        %130 = sbr.rel (%p128) target = $region28
      $region27: #{lstm_cnn_forward.4} parent=23 // pred_region
        %s131 = smul.u32 128, %s9
        %p132 = scmp.lt.s32.totalorder %s131, 255
        %s133 = scalar_select %p132, %s131, 255
        %s134 = smul.addr %s133, 4
        %s135 = scalar_lea.vmem %s0, %s134
        %s136 = smul.u32 128, %s9
      $region28: #{lstm_cnn_forward.4} parent=23 // pred_fallthru
        _
    $region24: #{lstm_cnn_forward.4} parent=5 // pred_fallthru
      _
    %p137 = scmp.le.s32.totalorder 1, %s9
    %p138 = scmp.lt.s32.totalorder %s9, 3
    %p139 = pnand %p137, %p138
    %p140 = pneg %p139
    // Predicated region
    $region29: #{lstm_cnn_forward.4} parent=5 // pred_check
      _
    $region30: #{lstm_cnn_forward.4} parent=5 // pred_check_branch
      %142 = sbr.rel (%p139) target = $region32
    $region31: #{lstm_cnn_forward.4} parent=5 // pred_region
      %s143 = ssub.s32 %s9, 1
      %s144 = smul.u32 128, %s14
      %p145 = scmp.lt.s32.totalorder %s144, 255
      %s146 = scalar_select %p145, %s144, 255
      %s147 = smul.addr %s146, 4
      %s148 = scalar_lea.vmem %s0, %s147
      %p149 = pneg %p35
      %p150 = pneg %p32
      %p151 = pneg %p56
      %p152 = pneg %p53
      %p153 = pneg %p77
      %p154 = pneg %p74
      %p155 = pneg %p103
      %p156 = pneg %p100
      %s157 = smul.u32 32, %s14
      %p158 = scmp.lt.s32.totalorder %s157, 63
      %s159 = scalar_select %p158, %s157, 63
      %s160 = smul.addr %s159, 4
      %s161 = scalar_lea.vmem %s3, %s160
      %s162 = smul.u32 128, %s14
      %p163 = scmp.lt.s32.totalorder %s162, 255
      %s164 = scalar_select %p163, %s162, 255
      %s165 = smul.addr %s164, 4
      %s166 = scalar_lea.vmem %s0, %s165
      %s167 = smul.u32 128, %s14
      %s168 = smul.u32 32, %s14
      %p169 = scmp.lt.s32.totalorder %s168, 63
      %s170 = scalar_select %p169, %s168, 63
      %s171 = smul.addr %s170, 4
      %s172 = scalar_lea.vmem %s3, %s171
      %s173 = smul.u32 32, %s14
      %v175 = vld [vmem:[%s166] sm:$0xf]
      %v176 = vld [vmem:[%s166 + $0x4] sm:$0xf]
      %v177 = vld [vmem:[%s166 + $0x8] sm:$0xf]
      %v178 = vld [vmem:[%s166 + $0xc] sm:$0xf]
      %v179 = vld [vmem:[%s166 + $0x10] sm:$0xf]
      %v180 = vld [vmem:[%s166 + $0x14] sm:$0xf]
      %v181 = vld [vmem:[%s166 + $0x18] sm:$0xf]
      %v182 = vld [vmem:[%s166 + $0x1c] sm:$0xf]
      %v183 = vld [vmem:[%s166 + $0x20] sm:$0xf]
      %v184 = vld [vmem:[%s166 + $0x24] sm:$0xf]
      %v185 = vld [vmem:[%s166 + $0x28] sm:$0xf]
      %v186 = vld [vmem:[%s166 + $0x2c] sm:$0xf]
      %v187 = vld [vmem:[%s166 + $0x30] sm:$0xf]
      %v188 = vld [vmem:[%s166 + $0x34] sm:$0xf]
      %v189 = vld [vmem:[%s166 + $0x38] sm:$0xf]
      %v190 = vld [vmem:[%s166 + $0x3c] sm:$0xf]
      %v191 = vld [vmem:[%s166 + $0x40] sm:$0xf]
      %v192 = vld [vmem:[%s166 + $0x44] sm:$0xf]
      %v193 = vld [vmem:[%s166 + $0x48] sm:$0xf]
      %v194 = vld [vmem:[%s166 + $0x4c] sm:$0xf]
      %v195 = vld [vmem:[%s166 + $0x50] sm:$0xf]
      %v196 = vld [vmem:[%s166 + $0x54] sm:$0xf]
      %v197 = vld [vmem:[%s166 + $0x58] sm:$0xf]
      %v198 = vld [vmem:[%s166 + $0x5c] sm:$0xf]
      %v199 = vld [vmem:[%s166 + $0x60] sm:$0xf]
      %v200 = vld [vmem:[%s166 + $0x64] sm:$0xf]
      %v201 = vld [vmem:[%s166 + $0x68] sm:$0xf]
      %v202 = vld [vmem:[%s166 + $0x6c] sm:$0xf]
      %v203 = vld [vmem:[%s166 + $0x70] sm:$0xf]
      %v204 = vld [vmem:[%s166 + $0x74] sm:$0xf]
      %v205 = vld [vmem:[%s166 + $0x78] sm:$0xf]
      %v206 = vld [vmem:[%s166 + $0x7c] sm:$0xf]
      %v207 = vld [vmem:[%s166 + $0x80] sm:$0xf]
      %v208 = vld [vmem:[%s166 + $0x84] sm:$0xf]
      %v209 = vld [vmem:[%s166 + $0x88] sm:$0xf]
      %v210 = vld [vmem:[%s166 + $0x8c] sm:$0xf]
      %v211 = vld [vmem:[%s166 + $0x90] sm:$0xf]
      %v212 = vld [vmem:[%s166 + $0x94] sm:$0xf]
      %v213 = vld [vmem:[%s166 + $0x98] sm:$0xf]
      %v214 = vld [vmem:[%s166 + $0x9c] sm:$0xf]
      %v215 = vld [vmem:[%s166 + $0xa0] sm:$0xf]
      %v216 = vld [vmem:[%s166 + $0xa4] sm:$0xf]
      %v217 = vld [vmem:[%s166 + $0xa8] sm:$0xf]
      %v218 = vld [vmem:[%s166 + $0xac] sm:$0xf]
      %v219 = vld [vmem:[%s166 + $0xb0] sm:$0xf]
      %v220 = vld [vmem:[%s166 + $0xb4] sm:$0xf]
      %v221 = vld [vmem:[%s166 + $0xb8] sm:$0xf]
      %v222 = vld [vmem:[%s166 + $0xbc] sm:$0xf]
      %v223 = vld [vmem:[%s166 + $0xc0] sm:$0xf]
      %v224 = vld [vmem:[%s166 + $0xc4] sm:$0xf]
      %v225 = vld [vmem:[%s166 + $0xc8] sm:$0xf]
      %v226 = vld [vmem:[%s166 + $0xcc] sm:$0xf]
      %v227 = vld [vmem:[%s166 + $0xd0] sm:$0xf]
      %v228 = vld [vmem:[%s166 + $0xd4] sm:$0xf]
      %v229 = vld [vmem:[%s166 + $0xd8] sm:$0xf]
      %v230 = vld [vmem:[%s166 + $0xdc] sm:$0xf]
      %v231 = vld [vmem:[%s166 + $0xe0] sm:$0xf]
      %v232 = vld [vmem:[%s166 + $0xe4] sm:$0xf]
      %v233 = vld [vmem:[%s166 + $0xe8] sm:$0xf]
      %v234 = vld [vmem:[%s166 + $0xec] sm:$0xf]
      %v235 = vld [vmem:[%s166 + $0xf0] sm:$0xf]
      %v236 = vld [vmem:[%s166 + $0xf4] sm:$0xf]
      %v237 = vld [vmem:[%s166 + $0xf8] sm:$0xf]
      %v238 = vld [vmem:[%s166 + $0xfc] sm:$0xf]
      %v239 = vld [vmem:[%s166 + $0x100] sm:$0xf]
      %v240 = vld [vmem:[%s166 + $0x104] sm:$0xf]
      %v241 = vld [vmem:[%s166 + $0x108] sm:$0xf]
      %v242 = vld [vmem:[%s166 + $0x10c] sm:$0xf]
      %v243 = vld [vmem:[%s166 + $0x110] sm:$0xf]
      %v244 = vld [vmem:[%s166 + $0x114] sm:$0xf]
      %v245 = vld [vmem:[%s166 + $0x118] sm:$0xf]
      %v246 = vld [vmem:[%s166 + $0x11c] sm:$0xf]
      %v247 = vld [vmem:[%s166 + $0x120] sm:$0xf]
      %v248 = vld [vmem:[%s166 + $0x124] sm:$0xf]
      %v249 = vld [vmem:[%s166 + $0x128] sm:$0xf]
      %v250 = vld [vmem:[%s166 + $0x12c] sm:$0xf]
      %v251 = vld [vmem:[%s166 + $0x130] sm:$0xf]
      %v252 = vld [vmem:[%s166 + $0x134] sm:$0xf]
      %v253 = vld [vmem:[%s166 + $0x138] sm:$0xf]
      %v254 = vld [vmem:[%s166 + $0x13c] sm:$0xf]
      %v255 = vld [vmem:[%s166 + $0x140] sm:$0xf]
      %v256 = vld [vmem:[%s166 + $0x144] sm:$0xf]
      %v257 = vld [vmem:[%s166 + $0x148] sm:$0xf]
      %v258 = vld [vmem:[%s166 + $0x14c] sm:$0xf]
      %v259 = vld [vmem:[%s166 + $0x150] sm:$0xf]
      %v260 = vld [vmem:[%s166 + $0x154] sm:$0xf]
      %v261 = vld [vmem:[%s166 + $0x158] sm:$0xf]
      %v262 = vld [vmem:[%s166 + $0x15c] sm:$0xf]
      %v263 = vld [vmem:[%s166 + $0x160] sm:$0xf]
      %v264 = vld [vmem:[%s166 + $0x164] sm:$0xf]
      %v265 = vld [vmem:[%s166 + $0x168] sm:$0xf]
      %v266 = vld [vmem:[%s166 + $0x16c] sm:$0xf]
      %v267 = vld [vmem:[%s166 + $0x170] sm:$0xf]
      %v268 = vld [vmem:[%s166 + $0x174] sm:$0xf]
      %v269 = vld [vmem:[%s166 + $0x178] sm:$0xf]
      %v270 = vld [vmem:[%s166 + $0x17c] sm:$0xf]
      %v271 = vld [vmem:[%s166 + $0x180] sm:$0xf]
      %v272 = vld [vmem:[%s166 + $0x184] sm:$0xf]
      %v273 = vld [vmem:[%s166 + $0x188] sm:$0xf]
      %v274 = vld [vmem:[%s166 + $0x18c] sm:$0xf]
      %v275 = vld [vmem:[%s166 + $0x190] sm:$0xf]
      %v276 = vld [vmem:[%s166 + $0x194] sm:$0xf]
      %v277 = vld [vmem:[%s166 + $0x198] sm:$0xf]
      %v278 = vld [vmem:[%s166 + $0x19c] sm:$0xf]
      %v279 = vld [vmem:[%s166 + $0x1a0] sm:$0xf]
      %v280 = vld [vmem:[%s166 + $0x1a4] sm:$0xf]
      %v281 = vld [vmem:[%s166 + $0x1a8] sm:$0xf]
      %v282 = vld [vmem:[%s166 + $0x1ac] sm:$0xf]
      %v283 = vld [vmem:[%s166 + $0x1b0] sm:$0xf]
      %v284 = vld [vmem:[%s166 + $0x1b4] sm:$0xf]
      %v285 = vld [vmem:[%s166 + $0x1b8] sm:$0xf]
      %v286 = vld [vmem:[%s166 + $0x1bc] sm:$0xf]
      %v287 = vld [vmem:[%s166 + $0x1c0] sm:$0xf]
      %v288 = vld [vmem:[%s166 + $0x1c4] sm:$0xf]
      %v289 = vld [vmem:[%s166 + $0x1c8] sm:$0xf]
      %v290 = vld [vmem:[%s166 + $0x1cc] sm:$0xf]
      %v291 = vld [vmem:[%s166 + $0x1d0] sm:$0xf]
      %v292 = vld [vmem:[%s166 + $0x1d4] sm:$0xf]
      %v293 = vld [vmem:[%s166 + $0x1d8] sm:$0xf]
      %v294 = vld [vmem:[%s166 + $0x1dc] sm:$0xf]
      %v295 = vld [vmem:[%s166 + $0x1e0] sm:$0xf]
      %v296 = vld [vmem:[%s166 + $0x1e4] sm:$0xf]
      %v297 = vld [vmem:[%s166 + $0x1e8] sm:$0xf]
      %v298 = vld [vmem:[%s166 + $0x1ec] sm:$0xf]
      %v299 = vld [vmem:[%s166 + $0x1f0] sm:$0xf]
      %v300 = vld [vmem:[%s166 + $0x1f4] sm:$0xf]
      %v301 = vld [vmem:[%s166 + $0x1f8] sm:$0xf]
      %v302 = vld [vmem:[%s166 + $0x1fc] sm:$0xf]
      %v303 = vld [vmem:[%s1] sm:$0xf]
      %v304 = vld [vmem:[%s1 + $0x4] sm:$0xf]
      %v305 = vld [vmem:[%s1 + $0x8] sm:$0xf]
      %v306 = vld [vmem:[%s1 + $0xc] sm:$0xf]
      %v435 = vunpack.c.l.b16 %v175
      %v436 = vunpack.c.l.b16 %v176
      %v437 = vunpack.c.l.b16 %v177
      %v438 = vunpack.c.l.b16 %v178
      %v439 = vunpack.c.l.b16 %v179
      %v440 = vunpack.c.l.b16 %v180
      %v441 = vunpack.c.l.b16 %v181
      %v442 = vunpack.c.l.b16 %v182
      %v443 = vunpack.c.l.b16 %v183
      %v444 = vunpack.c.l.b16 %v184
      %v445 = vunpack.c.l.b16 %v185
      %v446 = vunpack.c.l.b16 %v186
      %v447 = vunpack.c.l.b16 %v187
      %v448 = vunpack.c.l.b16 %v188
      %v449 = vunpack.c.l.b16 %v189
      %v450 = vunpack.c.l.b16 %v190
      %v451 = vunpack.c.l.b16 %v191
      %v452 = vunpack.c.l.b16 %v192
      %v453 = vunpack.c.l.b16 %v193
      %v454 = vunpack.c.l.b16 %v194
      %v455 = vunpack.c.l.b16 %v195
      %v456 = vunpack.c.l.b16 %v196
      %v457 = vunpack.c.l.b16 %v197
      %v458 = vunpack.c.l.b16 %v198
      %v459 = vunpack.c.l.b16 %v199
      %v460 = vunpack.c.l.b16 %v200
      %v461 = vunpack.c.l.b16 %v201
      %v462 = vunpack.c.l.b16 %v202
      %v463 = vunpack.c.l.b16 %v203
      %v464 = vunpack.c.l.b16 %v204
      %v465 = vunpack.c.l.b16 %v205
      %v466 = vunpack.c.l.b16 %v206
      %v467 = vunpack.c.l.b16 %v207
      %v468 = vunpack.c.l.b16 %v208
      %v469 = vunpack.c.l.b16 %v209
      %v470 = vunpack.c.l.b16 %v210
      %v471 = vunpack.c.l.b16 %v211
      %v472 = vunpack.c.l.b16 %v212
      %v473 = vunpack.c.l.b16 %v213
      %v474 = vunpack.c.l.b16 %v214
      %v475 = vunpack.c.l.b16 %v215
      %v476 = vunpack.c.l.b16 %v216
      %v477 = vunpack.c.l.b16 %v217
      %v478 = vunpack.c.l.b16 %v218
      %v479 = vunpack.c.l.b16 %v219
      %v480 = vunpack.c.l.b16 %v220
      %v481 = vunpack.c.l.b16 %v221
      %v482 = vunpack.c.l.b16 %v222
      %v483 = vunpack.c.l.b16 %v223
      %v484 = vunpack.c.l.b16 %v224
      %v485 = vunpack.c.l.b16 %v225
      %v486 = vunpack.c.l.b16 %v226
      %v487 = vunpack.c.l.b16 %v227
      %v488 = vunpack.c.l.b16 %v228
      %v489 = vunpack.c.l.b16 %v229
      %v490 = vunpack.c.l.b16 %v230
      %v491 = vunpack.c.l.b16 %v231
      %v492 = vunpack.c.l.b16 %v232
      %v493 = vunpack.c.l.b16 %v233
      %v494 = vunpack.c.l.b16 %v234
      %v495 = vunpack.c.l.b16 %v235
      %v496 = vunpack.c.l.b16 %v236
      %v497 = vunpack.c.l.b16 %v237
      %v498 = vunpack.c.l.b16 %v238
      %v499 = vunpack.c.l.b16 %v239
      %v500 = vunpack.c.l.b16 %v240
      %v501 = vunpack.c.l.b16 %v241
      %v502 = vunpack.c.l.b16 %v242
      %v503 = vunpack.c.l.b16 %v243
      %v504 = vunpack.c.l.b16 %v244
      %v505 = vunpack.c.l.b16 %v245
      %v506 = vunpack.c.l.b16 %v246
      %v507 = vunpack.c.l.b16 %v247
      %v508 = vunpack.c.l.b16 %v248
      %v509 = vunpack.c.l.b16 %v249
      %v510 = vunpack.c.l.b16 %v250
      %v511 = vunpack.c.l.b16 %v251
      %v512 = vunpack.c.l.b16 %v252
      %v513 = vunpack.c.l.b16 %v253
      %v514 = vunpack.c.l.b16 %v254
      %v515 = vunpack.c.l.b16 %v255
      %v516 = vunpack.c.l.b16 %v256
      %v517 = vunpack.c.l.b16 %v257
      %v518 = vunpack.c.l.b16 %v258
      %v519 = vunpack.c.l.b16 %v259
      %v520 = vunpack.c.l.b16 %v260
      %v521 = vunpack.c.l.b16 %v261
      %v522 = vunpack.c.l.b16 %v262
      %v523 = vunpack.c.l.b16 %v263
      %v524 = vunpack.c.l.b16 %v264
      %v525 = vunpack.c.l.b16 %v265
      %v526 = vunpack.c.l.b16 %v266
      %v527 = vunpack.c.l.b16 %v267
      %v528 = vunpack.c.l.b16 %v268
      %v529 = vunpack.c.l.b16 %v269
      %v530 = vunpack.c.l.b16 %v270
      %v531 = vunpack.c.l.b16 %v271
      %v532 = vunpack.c.l.b16 %v272
      %v533 = vunpack.c.l.b16 %v273
      %v534 = vunpack.c.l.b16 %v274
      %v535 = vunpack.c.l.b16 %v275
      %v536 = vunpack.c.l.b16 %v276
      %v537 = vunpack.c.l.b16 %v277
      %v538 = vunpack.c.l.b16 %v278
      %v539 = vunpack.c.l.b16 %v279
      %v540 = vunpack.c.l.b16 %v280
      %v541 = vunpack.c.l.b16 %v281
      %v542 = vunpack.c.l.b16 %v282
      %v543 = vunpack.c.l.b16 %v283
      %v544 = vunpack.c.l.b16 %v284
      %v545 = vunpack.c.l.b16 %v285
      %v546 = vunpack.c.l.b16 %v286
      %v547 = vunpack.c.l.b16 %v287
      %v548 = vunpack.c.l.b16 %v288
      %v549 = vunpack.c.l.b16 %v289
      %v550 = vunpack.c.l.b16 %v290
      %v551 = vunpack.c.l.b16 %v291
      %v552 = vunpack.c.l.b16 %v292
      %v553 = vunpack.c.l.b16 %v293
      %v554 = vunpack.c.l.b16 %v294
      %v555 = vunpack.c.l.b16 %v295
      %v556 = vunpack.c.l.b16 %v296
      %v557 = vunpack.c.l.b16 %v297
      %v558 = vunpack.c.l.b16 %v298
      %v559 = vunpack.c.l.b16 %v299
      %v560 = vunpack.c.l.b16 %v300
      %v561 = vunpack.c.l.b16 %v301
      %v562 = vunpack.c.l.b16 %v302
      %v563 = vpack.c.b16 %v436, %v435
      %v564 = vpack.c.b16 %v438, %v437
      %v565 = vpack.c.b16 %v440, %v439
      %v566 = vpack.c.b16 %v442, %v441
      %v567 = vpack.c.b16 %v444, %v443
      %v568 = vpack.c.b16 %v446, %v445
      %v569 = vpack.c.b16 %v448, %v447
      %v570 = vpack.c.b16 %v450, %v449
      %v571 = vpack.c.b16 %v452, %v451
      %v572 = vpack.c.b16 %v454, %v453
      %v573 = vpack.c.b16 %v456, %v455
      %v574 = vpack.c.b16 %v458, %v457
      %v575 = vpack.c.b16 %v460, %v459
      %v576 = vpack.c.b16 %v462, %v461
      %v577 = vpack.c.b16 %v464, %v463
      %v578 = vpack.c.b16 %v466, %v465
      %v579 = vpack.c.b16 %v468, %v467
      %v580 = vpack.c.b16 %v470, %v469
      %v581 = vpack.c.b16 %v472, %v471
      %v582 = vpack.c.b16 %v474, %v473
      %v583 = vpack.c.b16 %v476, %v475
      %v584 = vpack.c.b16 %v478, %v477
      %v585 = vpack.c.b16 %v480, %v479
      %v586 = vpack.c.b16 %v482, %v481
      %v587 = vpack.c.b16 %v484, %v483
      %v588 = vpack.c.b16 %v486, %v485
      %v589 = vpack.c.b16 %v488, %v487
      %v590 = vpack.c.b16 %v490, %v489
      %v591 = vpack.c.b16 %v492, %v491
      %v592 = vpack.c.b16 %v494, %v493
      %v593 = vpack.c.b16 %v496, %v495
      %v594 = vpack.c.b16 %v498, %v497
      %v595 = vpack.c.b16 %v500, %v499
      %v596 = vpack.c.b16 %v502, %v501
      %v597 = vpack.c.b16 %v504, %v503
      %v598 = vpack.c.b16 %v506, %v505
      %v599 = vpack.c.b16 %v508, %v507
      %v600 = vpack.c.b16 %v510, %v509
      %v601 = vpack.c.b16 %v512, %v511
      %v602 = vpack.c.b16 %v514, %v513
      %v603 = vpack.c.b16 %v516, %v515
      %v604 = vpack.c.b16 %v518, %v517
      %v605 = vpack.c.b16 %v520, %v519
      %v606 = vpack.c.b16 %v522, %v521
      %v607 = vpack.c.b16 %v524, %v523
      %v608 = vpack.c.b16 %v526, %v525
      %v609 = vpack.c.b16 %v528, %v527
      %v610 = vpack.c.b16 %v530, %v529
      %v611 = vpack.c.b16 %v532, %v531
      %v612 = vpack.c.b16 %v534, %v533
      %v613 = vpack.c.b16 %v536, %v535
      %v614 = vpack.c.b16 %v538, %v537
      %v615 = vpack.c.b16 %v540, %v539
      %v616 = vpack.c.b16 %v542, %v541
      %v617 = vpack.c.b16 %v544, %v543
      %v618 = vpack.c.b16 %v546, %v545
      %v619 = vpack.c.b16 %v548, %v547
      %v620 = vpack.c.b16 %v550, %v549
      %v621 = vpack.c.b16 %v552, %v551
      %v622 = vpack.c.b16 %v554, %v553
      %v623 = vpack.c.b16 %v556, %v555
      %v624 = vpack.c.b16 %v558, %v557
      %v625 = vpack.c.b16 %v560, %v559
      %v626 = vpack.c.b16 %v562, %v561
      %v631 = vunpack.c.l.b16 %v303
      %v632 = vunpack.c.l.b16 %v304
      %v633 = vunpack.c.l.b16 %v305
      %v634 = vunpack.c.l.b16 %v306
      %v635 = vpack.c.b16 %v632, %v631
      %v636 = vpack.c.b16 %v634, %v633
      %vm639 = vcmask 261120
      %v641 = vsel %vm639, %v563, 0
      %v644 = vsel %vm639, %v564, 0
      %v647 = vsel %vm639, %v565, 0
      %v650 = vsel %vm639, %v566, 0
      %v653 = vsel %vm639, %v567, 0
      %v656 = vsel %vm639, %v568, 0
      %v659 = vsel %vm639, %v569, 0
      %v662 = vsel %vm639, %v570, 0
      %v665 = vsel %vm639, %v571, 0
      %v668 = vsel %vm639, %v572, 0
      %v671 = vsel %vm639, %v573, 0
      %v674 = vsel %vm639, %v574, 0
      %v677 = vsel %vm639, %v575, 0
      %v680 = vsel %vm639, %v576, 0
      %v683 = vsel %vm639, %v577, 0
      %v686 = vsel %vm639, %v578, 0
      %v689 = vsel %vm639, %v579, 0
      %v692 = vsel %vm639, %v580, 0
      %v695 = vsel %vm639, %v581, 0
      %v698 = vsel %vm639, %v582, 0
      %v701 = vsel %vm639, %v583, 0
      %v704 = vsel %vm639, %v584, 0
      %v707 = vsel %vm639, %v585, 0
      %v710 = vsel %vm639, %v586, 0
      %v713 = vsel %vm639, %v587, 0
      %v716 = vsel %vm639, %v588, 0
      %v719 = vsel %vm639, %v589, 0
      %v722 = vsel %vm639, %v590, 0
      %v725 = vsel %vm639, %v591, 0
      %v728 = vsel %vm639, %v592, 0
      %v731 = vsel %vm639, %v593, 0
      %v734 = vsel %vm639, %v594, 0
      %v737 = vsel %vm639, %v595, 0
      %v740 = vsel %vm639, %v596, 0
      %v743 = vsel %vm639, %v597, 0
      %v746 = vsel %vm639, %v598, 0
      %v749 = vsel %vm639, %v599, 0
      %v752 = vsel %vm639, %v600, 0
      %v755 = vsel %vm639, %v601, 0
      %v758 = vsel %vm639, %v602, 0
      %v761 = vsel %vm639, %v603, 0
      %v764 = vsel %vm639, %v604, 0
      %v767 = vsel %vm639, %v605, 0
      %v770 = vsel %vm639, %v606, 0
      %v773 = vsel %vm639, %v607, 0
      %v776 = vsel %vm639, %v608, 0
      %v779 = vsel %vm639, %v609, 0
      %v782 = vsel %vm639, %v610, 0
      %v785 = vsel %vm639, %v611, 0
      %v788 = vsel %vm639, %v612, 0
      %v791 = vsel %vm639, %v613, 0
      %v794 = vsel %vm639, %v614, 0
      %v797 = vsel %vm639, %v615, 0
      %v800 = vsel %vm639, %v616, 0
      %v803 = vsel %vm639, %v617, 0
      %v806 = vsel %vm639, %v618, 0
      %v809 = vsel %vm639, %v619, 0
      %v812 = vsel %vm639, %v620, 0
      %v815 = vsel %vm639, %v621, 0
      %v818 = vsel %vm639, %v622, 0
      %v821 = vsel %vm639, %v623, 0
      %v824 = vsel %vm639, %v624, 0
      %v827 = vsel %vm639, %v625, 0
      %v830 = vsel %vm639, %v626, 0
      %832 = vmatprep.subr.bf16.mxu0 0
      %833 = vmatpush1.bf16.msra.mxu0 0
      %834 = vmatprep.subr.bf16.mxu0 0
      %835 = vmatpush1.bf16.msra.mxu0 0
      %836 = vmatprep.subr.bf16.mxu0 0
      %837 = vmatpush1.bf16.msra.mxu0 0
      %838 = vmatprep.subr.bf16.mxu0 0
      %839 = vmatpush1.bf16.msra.mxu0 0
      %840 = vmatprep.subr.bf16.mxu0 0
      %841 = vmatpush1.bf16.msra.mxu0 0
      %842 = vmatprep.subr.bf16.mxu0 0
      %843 = vmatpush1.bf16.msra.mxu0 0
      %844 = vmatprep.subr.bf16.mxu0 0
      %845 = vmatpush1.bf16.msra.mxu0 %v636
      %846 = vmatprep.subr.bf16.mxu0 0
      %847 = vmatpush1.bf16.msra.mxu0 %v635
      %848 = vmatprep.subr.bf16.mxu0 0
      %849 = vmatpush2.bf16.msra.mxu0 0
      %850 = vmatprep.subr.bf16.mxu0 0
      %851 = vmatpush2.bf16.msra.mxu0 0
      %852 = vmatprep.subr.bf16.mxu0 0
      %853 = vmatpush2.bf16.msra.mxu0 0
      %854 = vmatprep.subr.bf16.mxu0 0
      %855 = vmatpush2.bf16.msra.mxu0 0
      %856 = vmatprep.subr.bf16.mxu0 0
      %857 = vmatpush2.bf16.msra.mxu0 0
      %858 = vmatprep.subr.bf16.mxu0 0
      %859 = vmatpush2.bf16.msra.mxu0 0
      %860 = vmatprep.subr.bf16.mxu0 0
      %861 = vmatpush2.bf16.msra.mxu0 0
      %862 = vmatprep.subr.bf16.mxu0 0
      %863 = vmatpush2.bf16.msra.mxu0 0
      %864 = vmatprep.mubr.bf16.mxu0 0
      %865 = vmatmul.mubr.bf16.gmra.mxu0 %v641
      %v866 = vpop.f32.mrf.mxu0
      %v867 = vadd.f32 0.0, %v866
      %v868 = vpop.f32.mrf.mxu0
      %v869 = vpop.f32.mrf.mxu0
      %v870 = vadd.f32 0.0, %v869
      %v871 = vpop.f32.mrf.mxu0
      %872 = vmatprep.mubr.bf16.mxu0 0
      %873 = vmatmul.mubr.bf16.gmra.mxu0 %v644
      %v874 = vpop.f32.mrf.mxu0
      %v875 = vadd.f32 0.0, %v874
      %v876 = vpop.f32.mrf.mxu0
      %v877 = vpop.f32.mrf.mxu0
      %v878 = vadd.f32 0.0, %v877
      %v879 = vpop.f32.mrf.mxu0
      %880 = vmatprep.mubr.bf16.mxu0 0
      %881 = vmatmul.mubr.bf16.gmra.mxu0 %v647
      %v882 = vpop.f32.mrf.mxu0
      %v883 = vadd.f32 0.0, %v882
      %v884 = vpop.f32.mrf.mxu0
      %v885 = vpop.f32.mrf.mxu0
      %v886 = vadd.f32 0.0, %v885
      %v887 = vpop.f32.mrf.mxu0
      %888 = vmatprep.mubr.bf16.mxu0 0
      %889 = vmatmul.mubr.bf16.gmra.mxu0 %v650
      %v890 = vpop.f32.mrf.mxu0
      %v891 = vadd.f32 0.0, %v890
      %v892 = vpop.f32.mrf.mxu0
      %v893 = vpop.f32.mrf.mxu0
      %v894 = vadd.f32 0.0, %v893
      %v895 = vpop.f32.mrf.mxu0
      %896 = vmatprep.mubr.bf16.mxu0 0
      %897 = vmatmul.mubr.bf16.gmra.mxu0 %v653
      %v898 = vpop.f32.mrf.mxu0
      %v899 = vadd.f32 0.0, %v898
      %v900 = vpop.f32.mrf.mxu0
      %v901 = vpop.f32.mrf.mxu0
      %v902 = vadd.f32 0.0, %v901
      %v903 = vpop.f32.mrf.mxu0
      %904 = vmatprep.mubr.bf16.mxu0 0
      %905 = vmatmul.mubr.bf16.gmra.mxu0 %v656
      %v906 = vpop.f32.mrf.mxu0
      %v907 = vadd.f32 0.0, %v906
      %v908 = vpop.f32.mrf.mxu0
      %v909 = vpop.f32.mrf.mxu0
      %v910 = vadd.f32 0.0, %v909
      %v911 = vpop.f32.mrf.mxu0
      %912 = vmatprep.mubr.bf16.mxu0 0
      %913 = vmatmul.mubr.bf16.gmra.mxu0 %v659
      %v914 = vpop.f32.mrf.mxu0
      %v915 = vadd.f32 0.0, %v914
      %v916 = vpop.f32.mrf.mxu0
      %v917 = vpop.f32.mrf.mxu0
      %v918 = vadd.f32 0.0, %v917
      %v919 = vpop.f32.mrf.mxu0
      %920 = vmatprep.mubr.bf16.mxu0 0
      %921 = vmatmul.mubr.bf16.gmra.mxu0 %v662
      %v922 = vpop.f32.mrf.mxu0
      %v923 = vadd.f32 0.0, %v922
      %v924 = vpop.f32.mrf.mxu0
      %v925 = vpop.f32.mrf.mxu0
      %v926 = vadd.f32 0.0, %v925
      %v927 = vpop.f32.mrf.mxu0
      %928 = vmatprep.mubr.bf16.mxu0 0
      %929 = vmatmul.mubr.bf16.gmra.mxu0 %v665
      %v930 = vpop.f32.mrf.mxu0
      %v931 = vadd.f32 0.0, %v930
      %v932 = vpop.f32.mrf.mxu0
      %v933 = vpop.f32.mrf.mxu0
      %v934 = vadd.f32 0.0, %v933
      %v935 = vpop.f32.mrf.mxu0
      %936 = vmatprep.mubr.bf16.mxu0 0
      %937 = vmatmul.mubr.bf16.gmra.mxu0 %v668
      %v938 = vpop.f32.mrf.mxu0
      %v939 = vadd.f32 0.0, %v938
      %v940 = vpop.f32.mrf.mxu0
      %v941 = vpop.f32.mrf.mxu0
      %v942 = vadd.f32 0.0, %v941
      %v943 = vpop.f32.mrf.mxu0
      %944 = vmatprep.mubr.bf16.mxu0 0
      %945 = vmatmul.mubr.bf16.gmra.mxu0 %v671
      %v946 = vpop.f32.mrf.mxu0
      %v947 = vadd.f32 0.0, %v946
      %v948 = vpop.f32.mrf.mxu0
      %v949 = vpop.f32.mrf.mxu0
      %v950 = vadd.f32 0.0, %v949
      %v951 = vpop.f32.mrf.mxu0
      %952 = vmatprep.mubr.bf16.mxu0 0
      %953 = vmatmul.mubr.bf16.gmra.mxu0 %v674
      %v954 = vpop.f32.mrf.mxu0
      %v955 = vadd.f32 0.0, %v954
      %v956 = vpop.f32.mrf.mxu0
      %v957 = vpop.f32.mrf.mxu0
      %v958 = vadd.f32 0.0, %v957
      %v959 = vpop.f32.mrf.mxu0
      %960 = vmatprep.mubr.bf16.mxu0 0
      %961 = vmatmul.mubr.bf16.gmra.mxu0 %v677
      %v962 = vpop.f32.mrf.mxu0
      %v963 = vadd.f32 0.0, %v962
      %v964 = vpop.f32.mrf.mxu0
      %v965 = vpop.f32.mrf.mxu0
      %v966 = vadd.f32 0.0, %v965
      %v967 = vpop.f32.mrf.mxu0
      %968 = vmatprep.mubr.bf16.mxu0 0
      %969 = vmatmul.mubr.bf16.gmra.mxu0 %v680
      %v970 = vpop.f32.mrf.mxu0
      %v971 = vadd.f32 0.0, %v970
      %v972 = vpop.f32.mrf.mxu0
      %v973 = vpop.f32.mrf.mxu0
      %v974 = vadd.f32 0.0, %v973
      %v975 = vpop.f32.mrf.mxu0
      %976 = vmatprep.mubr.bf16.mxu0 0
      %977 = vmatmul.mubr.bf16.gmra.mxu0 %v683
      %v978 = vpop.f32.mrf.mxu0
      %v979 = vadd.f32 0.0, %v978
      %v980 = vpop.f32.mrf.mxu0
      %v981 = vpop.f32.mrf.mxu0
      %v982 = vadd.f32 0.0, %v981
      %v983 = vpop.f32.mrf.mxu0
      %984 = vmatprep.mubr.bf16.mxu0 0
      %985 = vmatmul.mubr.bf16.gmra.mxu0 %v686
      %v986 = vpop.f32.mrf.mxu0
      %v987 = vadd.f32 0.0, %v986
      %v988 = vpop.f32.mrf.mxu0
      %v989 = vpop.f32.mrf.mxu0
      %v990 = vadd.f32 0.0, %v989
      %v991 = vpop.f32.mrf.mxu0
      %992 = vmatprep.mubr.bf16.mxu0 0
      %993 = vmatmul.mubr.bf16.gmra.mxu0 %v689
      %v994 = vpop.f32.mrf.mxu0
      %v995 = vadd.f32 0.0, %v994
      %v996 = vpop.f32.mrf.mxu0
      %v997 = vpop.f32.mrf.mxu0
      %v998 = vadd.f32 0.0, %v997
      %v999 = vpop.f32.mrf.mxu0
      %1000 = vmatprep.mubr.bf16.mxu0 0
      %1001 = vmatmul.mubr.bf16.gmra.mxu0 %v692
      %v1002 = vpop.f32.mrf.mxu0
      %v1003 = vadd.f32 0.0, %v1002
      %v1004 = vpop.f32.mrf.mxu0
      %v1005 = vpop.f32.mrf.mxu0
      %v1006 = vadd.f32 0.0, %v1005
      %v1007 = vpop.f32.mrf.mxu0
      %1008 = vmatprep.mubr.bf16.mxu0 0
      %1009 = vmatmul.mubr.bf16.gmra.mxu0 %v695
      %v1010 = vpop.f32.mrf.mxu0
      %v1011 = vadd.f32 0.0, %v1010
      %v1012 = vpop.f32.mrf.mxu0
      %v1013 = vpop.f32.mrf.mxu0
      %v1014 = vadd.f32 0.0, %v1013
      %v1015 = vpop.f32.mrf.mxu0
      %1016 = vmatprep.mubr.bf16.mxu0 0
      %1017 = vmatmul.mubr.bf16.gmra.mxu0 %v698
      %v1018 = vpop.f32.mrf.mxu0
      %v1019 = vadd.f32 0.0, %v1018
      %v1020 = vpop.f32.mrf.mxu0
      %v1021 = vpop.f32.mrf.mxu0
      %v1022 = vadd.f32 0.0, %v1021
      %v1023 = vpop.f32.mrf.mxu0
      %1024 = vmatprep.mubr.bf16.mxu0 0
      %1025 = vmatmul.mubr.bf16.gmra.mxu0 %v701
      %v1026 = vpop.f32.mrf.mxu0
      %v1027 = vadd.f32 0.0, %v1026
      %v1028 = vpop.f32.mrf.mxu0
      %v1029 = vpop.f32.mrf.mxu0
      %v1030 = vadd.f32 0.0, %v1029
      %v1031 = vpop.f32.mrf.mxu0
      %1032 = vmatprep.mubr.bf16.mxu0 0
      %1033 = vmatmul.mubr.bf16.gmra.mxu0 %v704
      %v1034 = vpop.f32.mrf.mxu0
      %v1035 = vadd.f32 0.0, %v1034
      %v1036 = vpop.f32.mrf.mxu0
      %v1037 = vpop.f32.mrf.mxu0
      %v1038 = vadd.f32 0.0, %v1037
      %v1039 = vpop.f32.mrf.mxu0
      %1040 = vmatprep.mubr.bf16.mxu0 0
      %1041 = vmatmul.mubr.bf16.gmra.mxu0 %v707
      %v1042 = vpop.f32.mrf.mxu0
      %v1043 = vadd.f32 0.0, %v1042
      %v1044 = vpop.f32.mrf.mxu0
      %v1045 = vpop.f32.mrf.mxu0
      %v1046 = vadd.f32 0.0, %v1045
      %v1047 = vpop.f32.mrf.mxu0
      %1048 = vmatprep.mubr.bf16.mxu0 0
      %1049 = vmatmul.mubr.bf16.gmra.mxu0 %v710
      %v1050 = vpop.f32.mrf.mxu0
      %v1051 = vadd.f32 0.0, %v1050
      %v1052 = vpop.f32.mrf.mxu0
      %v1053 = vpop.f32.mrf.mxu0
      %v1054 = vadd.f32 0.0, %v1053
      %v1055 = vpop.f32.mrf.mxu0
      %1056 = vmatprep.mubr.bf16.mxu0 0
      %1057 = vmatmul.mubr.bf16.gmra.mxu0 %v713
      %v1058 = vpop.f32.mrf.mxu0
      %v1059 = vadd.f32 0.0, %v1058
      %v1060 = vpop.f32.mrf.mxu0
      %v1061 = vpop.f32.mrf.mxu0
      %v1062 = vadd.f32 0.0, %v1061
      %v1063 = vpop.f32.mrf.mxu0
      %1064 = vmatprep.mubr.bf16.mxu0 0
      %1065 = vmatmul.mubr.bf16.gmra.mxu0 %v716
      %v1066 = vpop.f32.mrf.mxu0
      %v1067 = vadd.f32 0.0, %v1066
      %v1068 = vpop.f32.mrf.mxu0
      %v1069 = vpop.f32.mrf.mxu0
      %v1070 = vadd.f32 0.0, %v1069
      %v1071 = vpop.f32.mrf.mxu0
      %1072 = vmatprep.mubr.bf16.mxu0 0
      %1073 = vmatmul.mubr.bf16.gmra.mxu0 %v719
      %v1074 = vpop.f32.mrf.mxu0
      %v1075 = vadd.f32 0.0, %v1074
      %v1076 = vpop.f32.mrf.mxu0
      %v1077 = vpop.f32.mrf.mxu0
      %v1078 = vadd.f32 0.0, %v1077
      %v1079 = vpop.f32.mrf.mxu0
      %1080 = vmatprep.mubr.bf16.mxu0 0
      %1081 = vmatmul.mubr.bf16.gmra.mxu0 %v722
      %v1082 = vpop.f32.mrf.mxu0
      %v1083 = vadd.f32 0.0, %v1082
      %v1084 = vpop.f32.mrf.mxu0
      %v1085 = vpop.f32.mrf.mxu0
      %v1086 = vadd.f32 0.0, %v1085
      %v1087 = vpop.f32.mrf.mxu0
      %1088 = vmatprep.mubr.bf16.mxu0 0
      %1089 = vmatmul.mubr.bf16.gmra.mxu0 %v725
      %v1090 = vpop.f32.mrf.mxu0
      %v1091 = vadd.f32 0.0, %v1090
      %v1092 = vpop.f32.mrf.mxu0
      %v1093 = vpop.f32.mrf.mxu0
      %v1094 = vadd.f32 0.0, %v1093
      %v1095 = vpop.f32.mrf.mxu0
      %1096 = vmatprep.mubr.bf16.mxu0 0
      %1097 = vmatmul.mubr.bf16.gmra.mxu0 %v728
      %v1098 = vpop.f32.mrf.mxu0
      %v1099 = vadd.f32 0.0, %v1098
      %v1100 = vpop.f32.mrf.mxu0
      %v1101 = vpop.f32.mrf.mxu0
      %v1102 = vadd.f32 0.0, %v1101
      %v1103 = vpop.f32.mrf.mxu0
      %1104 = vmatprep.mubr.bf16.mxu0 0
      %1105 = vmatmul.mubr.bf16.gmra.mxu0 %v731
      %v1106 = vpop.f32.mrf.mxu0
      %v1107 = vadd.f32 0.0, %v1106
      %v1108 = vpop.f32.mrf.mxu0
      %v1109 = vpop.f32.mrf.mxu0
      %v1110 = vadd.f32 0.0, %v1109
      %v1111 = vpop.f32.mrf.mxu0
      %1112 = vmatprep.mubr.bf16.mxu0 0
      %1113 = vmatmul.mubr.bf16.gmra.mxu0 %v734
      %v1114 = vpop.f32.mrf.mxu0
      %v1115 = vadd.f32 0.0, %v1114
      %v1116 = vpop.f32.mrf.mxu0
      %v1117 = vpop.f32.mrf.mxu0
      %v1118 = vadd.f32 0.0, %v1117
      %v1119 = vpop.f32.mrf.mxu0
      %1120 = vmatprep.mubr.bf16.mxu0 0
      %1121 = vmatmul.mubr.bf16.gmra.mxu0 %v737
      %v1122 = vpop.f32.mrf.mxu0
      %v1123 = vadd.f32 0.0, %v1122
      %v1124 = vpop.f32.mrf.mxu0
      %v1125 = vpop.f32.mrf.mxu0
      %v1126 = vadd.f32 0.0, %v1125
      %v1127 = vpop.f32.mrf.mxu0
      %1128 = vmatprep.mubr.bf16.mxu0 0
      %1129 = vmatmul.mubr.bf16.gmra.mxu0 %v740
      %v1130 = vpop.f32.mrf.mxu0
      %v1131 = vadd.f32 0.0, %v1130
      %v1132 = vpop.f32.mrf.mxu0
      %v1133 = vpop.f32.mrf.mxu0
      %v1134 = vadd.f32 0.0, %v1133
      %v1135 = vpop.f32.mrf.mxu0
      %1136 = vmatprep.mubr.bf16.mxu0 0
      %1137 = vmatmul.mubr.bf16.gmra.mxu0 %v743
      %v1138 = vpop.f32.mrf.mxu0
      %v1139 = vadd.f32 0.0, %v1138
      %v1140 = vpop.f32.mrf.mxu0
      %v1141 = vpop.f32.mrf.mxu0
      %v1142 = vadd.f32 0.0, %v1141
      %v1143 = vpop.f32.mrf.mxu0
      %1144 = vmatprep.mubr.bf16.mxu0 0
      %1145 = vmatmul.mubr.bf16.gmra.mxu0 %v746
      %v1146 = vpop.f32.mrf.mxu0
      %v1147 = vadd.f32 0.0, %v1146
      %v1148 = vpop.f32.mrf.mxu0
      %v1149 = vpop.f32.mrf.mxu0
      %v1150 = vadd.f32 0.0, %v1149
      %v1151 = vpop.f32.mrf.mxu0
      %1152 = vmatprep.mubr.bf16.mxu0 0
      %1153 = vmatmul.mubr.bf16.gmra.mxu0 %v749
      %v1154 = vpop.f32.mrf.mxu0
      %v1155 = vadd.f32 0.0, %v1154
      %v1156 = vpop.f32.mrf.mxu0
      %v1157 = vpop.f32.mrf.mxu0
      %v1158 = vadd.f32 0.0, %v1157
      %v1159 = vpop.f32.mrf.mxu0
      %1160 = vmatprep.mubr.bf16.mxu0 0
      %1161 = vmatmul.mubr.bf16.gmra.mxu0 %v752
      %v1162 = vpop.f32.mrf.mxu0
      %v1163 = vadd.f32 0.0, %v1162
      %v1164 = vpop.f32.mrf.mxu0
      %v1165 = vpop.f32.mrf.mxu0
      %v1166 = vadd.f32 0.0, %v1165
      %v1167 = vpop.f32.mrf.mxu0
      %1168 = vmatprep.mubr.bf16.mxu0 0
      %1169 = vmatmul.mubr.bf16.gmra.mxu0 %v755
      %v1170 = vpop.f32.mrf.mxu0
      %v1171 = vadd.f32 0.0, %v1170
      %v1172 = vpop.f32.mrf.mxu0
      %v1173 = vpop.f32.mrf.mxu0
      %v1174 = vadd.f32 0.0, %v1173
      %v1175 = vpop.f32.mrf.mxu0
      %1176 = vmatprep.mubr.bf16.mxu0 0
      %1177 = vmatmul.mubr.bf16.gmra.mxu0 %v758
      %v1178 = vpop.f32.mrf.mxu0
      %v1179 = vadd.f32 0.0, %v1178
      %v1180 = vpop.f32.mrf.mxu0
      %v1181 = vpop.f32.mrf.mxu0
      %v1182 = vadd.f32 0.0, %v1181
      %v1183 = vpop.f32.mrf.mxu0
      %1184 = vmatprep.mubr.bf16.mxu0 0
      %1185 = vmatmul.mubr.bf16.gmra.mxu0 %v761
      %v1186 = vpop.f32.mrf.mxu0
      %v1187 = vadd.f32 0.0, %v1186
      %v1188 = vpop.f32.mrf.mxu0
      %v1189 = vpop.f32.mrf.mxu0
      %v1190 = vadd.f32 0.0, %v1189
      %v1191 = vpop.f32.mrf.mxu0
      %1192 = vmatprep.mubr.bf16.mxu0 0
      %1193 = vmatmul.mubr.bf16.gmra.mxu0 %v764
      %v1194 = vpop.f32.mrf.mxu0
      %v1195 = vadd.f32 0.0, %v1194
      %v1196 = vpop.f32.mrf.mxu0
      %v1197 = vpop.f32.mrf.mxu0
      %v1198 = vadd.f32 0.0, %v1197
      %v1199 = vpop.f32.mrf.mxu0
      %1200 = vmatprep.mubr.bf16.mxu0 0
      %1201 = vmatmul.mubr.bf16.gmra.mxu0 %v767
      %v1202 = vpop.f32.mrf.mxu0
      %v1203 = vadd.f32 0.0, %v1202
      %v1204 = vpop.f32.mrf.mxu0
      %v1205 = vpop.f32.mrf.mxu0
      %v1206 = vadd.f32 0.0, %v1205
      %v1207 = vpop.f32.mrf.mxu0
      %1208 = vmatprep.mubr.bf16.mxu0 0
      %1209 = vmatmul.mubr.bf16.gmra.mxu0 %v770
      %v1210 = vpop.f32.mrf.mxu0
      %v1211 = vadd.f32 0.0, %v1210
      %v1212 = vpop.f32.mrf.mxu0
      %v1213 = vpop.f32.mrf.mxu0
      %v1214 = vadd.f32 0.0, %v1213
      %v1215 = vpop.f32.mrf.mxu0
      %1216 = vmatprep.mubr.bf16.mxu0 0
      %1217 = vmatmul.mubr.bf16.gmra.mxu0 %v773
      %v1218 = vpop.f32.mrf.mxu0
      %v1219 = vadd.f32 0.0, %v1218
      %v1220 = vpop.f32.mrf.mxu0
      %v1221 = vpop.f32.mrf.mxu0
      %v1222 = vadd.f32 0.0, %v1221
      %v1223 = vpop.f32.mrf.mxu0
      %1224 = vmatprep.mubr.bf16.mxu0 0
      %1225 = vmatmul.mubr.bf16.gmra.mxu0 %v776
      %v1226 = vpop.f32.mrf.mxu0
      %v1227 = vadd.f32 0.0, %v1226
      %v1228 = vpop.f32.mrf.mxu0
      %v1229 = vpop.f32.mrf.mxu0
      %v1230 = vadd.f32 0.0, %v1229
      %v1231 = vpop.f32.mrf.mxu0
      %1232 = vmatprep.mubr.bf16.mxu0 0
      %1233 = vmatmul.mubr.bf16.gmra.mxu0 %v779
      %v1234 = vpop.f32.mrf.mxu0
      %v1235 = vadd.f32 0.0, %v1234
      %v1236 = vpop.f32.mrf.mxu0
      %v1237 = vpop.f32.mrf.mxu0
      %v1238 = vadd.f32 0.0, %v1237
      %v1239 = vpop.f32.mrf.mxu0
      %1240 = vmatprep.mubr.bf16.mxu0 0
      %1241 = vmatmul.mubr.bf16.gmra.mxu0 %v782
      %v1242 = vpop.f32.mrf.mxu0
      %v1243 = vadd.f32 0.0, %v1242
      %v1244 = vpop.f32.mrf.mxu0
      %v1245 = vpop.f32.mrf.mxu0
      %v1246 = vadd.f32 0.0, %v1245
      %v1247 = vpop.f32.mrf.mxu0
      %1248 = vmatprep.mubr.bf16.mxu0 0
      %1249 = vmatmul.mubr.bf16.gmra.mxu0 %v785
      %v1250 = vpop.f32.mrf.mxu0
      %v1251 = vadd.f32 0.0, %v1250
      %v1252 = vpop.f32.mrf.mxu0
      %v1253 = vpop.f32.mrf.mxu0
      %v1254 = vadd.f32 0.0, %v1253
      %v1255 = vpop.f32.mrf.mxu0
      %1256 = vmatprep.mubr.bf16.mxu0 0
      %1257 = vmatmul.mubr.bf16.gmra.mxu0 %v788
      %v1258 = vpop.f32.mrf.mxu0
      %v1259 = vadd.f32 0.0, %v1258
      %v1260 = vpop.f32.mrf.mxu0
      %v1261 = vpop.f32.mrf.mxu0
      %v1262 = vadd.f32 0.0, %v1261
      %v1263 = vpop.f32.mrf.mxu0
      %1264 = vmatprep.mubr.bf16.mxu0 0
      %1265 = vmatmul.mubr.bf16.gmra.mxu0 %v791
      %v1266 = vpop.f32.mrf.mxu0
      %v1267 = vadd.f32 0.0, %v1266
      %v1268 = vpop.f32.mrf.mxu0
      %v1269 = vpop.f32.mrf.mxu0
      %v1270 = vadd.f32 0.0, %v1269
      %v1271 = vpop.f32.mrf.mxu0
      %1272 = vmatprep.mubr.bf16.mxu0 0
      %1273 = vmatmul.mubr.bf16.gmra.mxu0 %v794
      %v1274 = vpop.f32.mrf.mxu0
      %v1275 = vadd.f32 0.0, %v1274
      %v1276 = vpop.f32.mrf.mxu0
      %v1277 = vpop.f32.mrf.mxu0
      %v1278 = vadd.f32 0.0, %v1277
      %v1279 = vpop.f32.mrf.mxu0
      %1280 = vmatprep.mubr.bf16.mxu0 0
      %1281 = vmatmul.mubr.bf16.gmra.mxu0 %v797
      %v1282 = vpop.f32.mrf.mxu0
      %v1283 = vadd.f32 0.0, %v1282
      %v1284 = vpop.f32.mrf.mxu0
      %v1285 = vpop.f32.mrf.mxu0
      %v1286 = vadd.f32 0.0, %v1285
      %v1287 = vpop.f32.mrf.mxu0
      %1288 = vmatprep.mubr.bf16.mxu0 0
      %1289 = vmatmul.mubr.bf16.gmra.mxu0 %v800
      %v1290 = vpop.f32.mrf.mxu0
      %v1291 = vadd.f32 0.0, %v1290
      %v1292 = vpop.f32.mrf.mxu0
      %v1293 = vpop.f32.mrf.mxu0
      %v1294 = vadd.f32 0.0, %v1293
      %v1295 = vpop.f32.mrf.mxu0
      %1296 = vmatprep.mubr.bf16.mxu0 0
      %1297 = vmatmul.mubr.bf16.gmra.mxu0 %v803
      %v1298 = vpop.f32.mrf.mxu0
      %v1299 = vadd.f32 0.0, %v1298
      %v1300 = vpop.f32.mrf.mxu0
      %v1301 = vpop.f32.mrf.mxu0
      %v1302 = vadd.f32 0.0, %v1301
      %v1303 = vpop.f32.mrf.mxu0
      %1304 = vmatprep.mubr.bf16.mxu0 0
      %1305 = vmatmul.mubr.bf16.gmra.mxu0 %v806
      %v1306 = vpop.f32.mrf.mxu0
      %v1307 = vadd.f32 0.0, %v1306
      %v1308 = vpop.f32.mrf.mxu0
      %v1309 = vpop.f32.mrf.mxu0
      %v1310 = vadd.f32 0.0, %v1309
      %v1311 = vpop.f32.mrf.mxu0
      %1312 = vmatprep.mubr.bf16.mxu0 0
      %1313 = vmatmul.mubr.bf16.gmra.mxu0 %v809
      %v1314 = vpop.f32.mrf.mxu0
      %v1315 = vadd.f32 0.0, %v1314
      %v1316 = vpop.f32.mrf.mxu0
      %v1317 = vpop.f32.mrf.mxu0
      %v1318 = vadd.f32 0.0, %v1317
      %v1319 = vpop.f32.mrf.mxu0
      %1320 = vmatprep.mubr.bf16.mxu0 0
      %1321 = vmatmul.mubr.bf16.gmra.mxu0 %v812
      %v1322 = vpop.f32.mrf.mxu0
      %v1323 = vadd.f32 0.0, %v1322
      %v1324 = vpop.f32.mrf.mxu0
      %v1325 = vpop.f32.mrf.mxu0
      %v1326 = vadd.f32 0.0, %v1325
      %v1327 = vpop.f32.mrf.mxu0
      %1328 = vmatprep.mubr.bf16.mxu0 0
      %1329 = vmatmul.mubr.bf16.gmra.mxu0 %v815
      %v1330 = vpop.f32.mrf.mxu0
      %v1331 = vadd.f32 0.0, %v1330
      %v1332 = vpop.f32.mrf.mxu0
      %v1333 = vpop.f32.mrf.mxu0
      %v1334 = vadd.f32 0.0, %v1333
      %v1335 = vpop.f32.mrf.mxu0
      %1336 = vmatprep.mubr.bf16.mxu0 0
      %1337 = vmatmul.mubr.bf16.gmra.mxu0 %v818
      %v1338 = vpop.f32.mrf.mxu0
      %v1339 = vadd.f32 0.0, %v1338
      %v1340 = vpop.f32.mrf.mxu0
      %v1341 = vpop.f32.mrf.mxu0
      %v1342 = vadd.f32 0.0, %v1341
      %v1343 = vpop.f32.mrf.mxu0
      %1344 = vmatprep.mubr.bf16.mxu0 0
      %1345 = vmatmul.mubr.bf16.gmra.mxu0 %v821
      %v1346 = vpop.f32.mrf.mxu0
      %v1347 = vadd.f32 0.0, %v1346
      %v1348 = vpop.f32.mrf.mxu0
      %v1349 = vpop.f32.mrf.mxu0
      %v1350 = vadd.f32 0.0, %v1349
      %v1351 = vpop.f32.mrf.mxu0
      %1352 = vmatprep.mubr.bf16.mxu0 0
      %1353 = vmatmul.mubr.bf16.gmra.mxu0 %v824
      %v1354 = vpop.f32.mrf.mxu0
      %v1355 = vadd.f32 0.0, %v1354
      %v1356 = vpop.f32.mrf.mxu0
      %v1357 = vpop.f32.mrf.mxu0
      %v1358 = vadd.f32 0.0, %v1357
      %v1359 = vpop.f32.mrf.mxu0
      %1360 = vmatprep.mubr.bf16.mxu0 0
      %1361 = vmatmul.mubr.bf16.gmra.mxu0 %v827
      %v1362 = vpop.f32.mrf.mxu0
      %v1363 = vadd.f32 0.0, %v1362
      %v1364 = vpop.f32.mrf.mxu0
      %v1365 = vpop.f32.mrf.mxu0
      %v1366 = vadd.f32 0.0, %v1365
      %v1367 = vpop.f32.mrf.mxu0
      %1368 = vmatprep.mubr.bf16.mxu0 0
      %1369 = vmatmul.mubr.bf16.gmra.mxu0 %v830
      %v1370 = vpop.f32.mrf.mxu0
      %v1371 = vadd.f32 0.0, %v1370
      %v1372 = vpop.f32.mrf.mxu0
      %v1373 = vpop.f32.mrf.mxu0
      %v1374 = vadd.f32 0.0, %v1373
      %v1375 = vpop.f32.mrf.mxu0
      %1376 = vdwg.mxu0
      %v1377 = vmax.f32 %v867, %v995
      %v1378 = vmax.f32 %v870, %v998
      %v1379 = vmax.f32 %v875, %v1003
      %v1380 = vmax.f32 %v878, %v1006
      %v1381 = vmax.f32 %v883, %v1011
      %v1382 = vmax.f32 %v886, %v1014
      %v1383 = vmax.f32 %v891, %v1019
      %v1384 = vmax.f32 %v894, %v1022
      %v1385 = vmax.f32 %v899, %v1027
      %v1386 = vmax.f32 %v902, %v1030
      %v1387 = vmax.f32 %v907, %v1035
      %v1388 = vmax.f32 %v910, %v1038
      %v1389 = vmax.f32 %v915, %v1043
      %v1390 = vmax.f32 %v918, %v1046
      %v1391 = vmax.f32 %v923, %v1051
      %v1392 = vmax.f32 %v926, %v1054
      %v1393 = vmax.f32 %v931, %v1059
      %v1394 = vmax.f32 %v934, %v1062
      %v1395 = vmax.f32 %v939, %v1067
      %v1396 = vmax.f32 %v942, %v1070
      %v1397 = vmax.f32 %v947, %v1075
      %v1398 = vmax.f32 %v950, %v1078
      %v1399 = vmax.f32 %v955, %v1083
      %v1400 = vmax.f32 %v958, %v1086
      %v1401 = vmax.f32 %v963, %v1091
      %v1402 = vmax.f32 %v966, %v1094
      %v1403 = vmax.f32 %v971, %v1099
      %v1404 = vmax.f32 %v974, %v1102
      %v1405 = vmax.f32 %v979, %v1107
      %v1406 = vmax.f32 %v982, %v1110
      %v1407 = vmax.f32 %v987, %v1115
      %v1408 = vmax.f32 %v990, %v1118
      %v1409 = vmax.f32 %v1123, %v1251
      %v1410 = vmax.f32 %v1126, %v1254
      %v1411 = vmax.f32 %v1131, %v1259
      %v1412 = vmax.f32 %v1134, %v1262
      %v1413 = vmax.f32 %v1139, %v1267
      %v1414 = vmax.f32 %v1142, %v1270
      %v1415 = vmax.f32 %v1147, %v1275
      %v1416 = vmax.f32 %v1150, %v1278
      %v1417 = vmax.f32 %v1155, %v1283
      %v1418 = vmax.f32 %v1158, %v1286
      %v1419 = vmax.f32 %v1163, %v1291
      %v1420 = vmax.f32 %v1166, %v1294
      %v1421 = vmax.f32 %v1171, %v1299
      %v1422 = vmax.f32 %v1174, %v1302
      %v1423 = vmax.f32 %v1179, %v1307
      %v1424 = vmax.f32 %v1182, %v1310
      %v1425 = vmax.f32 %v1187, %v1315
      %v1426 = vmax.f32 %v1190, %v1318
      %v1427 = vmax.f32 %v1195, %v1323
      %v1428 = vmax.f32 %v1198, %v1326
      %v1429 = vmax.f32 %v1203, %v1331
      %v1430 = vmax.f32 %v1206, %v1334
      %v1431 = vmax.f32 %v1211, %v1339
      %v1432 = vmax.f32 %v1214, %v1342
      %v1433 = vmax.f32 %v1219, %v1347
      %v1434 = vmax.f32 %v1222, %v1350
      %v1435 = vmax.f32 %v1227, %v1355
      %v1436 = vmax.f32 %v1230, %v1358
      %v1437 = vmax.f32 %v1235, %v1363
      %v1438 = vmax.f32 %v1238, %v1366
      %v1439 = vmax.f32 %v1243, %v1371
      %v1440 = vmax.f32 %v1246, %v1374
      %v1441 = vmax.f32 %v1377, %v1409
      %v1442 = vmax.f32 %v1378, %v1410
      %v1443 = vmax.f32 %v1379, %v1411
      %v1444 = vmax.f32 %v1380, %v1412
      %v1445 = vmax.f32 %v1381, %v1413
      %v1446 = vmax.f32 %v1382, %v1414
      %v1447 = vmax.f32 %v1383, %v1415
      %v1448 = vmax.f32 %v1384, %v1416
      %v1449 = vmax.f32 %v1385, %v1417
      %v1450 = vmax.f32 %v1386, %v1418
      %v1451 = vmax.f32 %v1387, %v1419
      %v1452 = vmax.f32 %v1388, %v1420
      %v1453 = vmax.f32 %v1389, %v1421
      %v1454 = vmax.f32 %v1390, %v1422
      %v1455 = vmax.f32 %v1391, %v1423
      %v1456 = vmax.f32 %v1392, %v1424
      %v1457 = vmax.f32 %v1393, %v1425
      %v1458 = vmax.f32 %v1394, %v1426
      %v1459 = vmax.f32 %v1395, %v1427
      %v1460 = vmax.f32 %v1396, %v1428
      %v1461 = vmax.f32 %v1397, %v1429
      %v1462 = vmax.f32 %v1398, %v1430
      %v1463 = vmax.f32 %v1399, %v1431
      %v1464 = vmax.f32 %v1400, %v1432
      %v1465 = vmax.f32 %v1401, %v1433
      %v1466 = vmax.f32 %v1402, %v1434
      %v1467 = vmax.f32 %v1403, %v1435
      %v1468 = vmax.f32 %v1404, %v1436
      %v1469 = vmax.f32 %v1405, %v1437
      %v1470 = vmax.f32 %v1406, %v1438
      %v1471 = vmax.f32 %v1407, %v1439
      %v1472 = vmax.f32 %v1408, %v1440
      %v1473 = vld [vmem:[%s2] sm:$0x1]
      %v1475 = vlaneseq
      %v1476 = vshrl.u32 %v1475, 7
      %v1477 = vsub.s32 0, %v1476
      %v1478 = vrot.slane %v1473, %v1477
      %v1480 = vadd.f32 %v1441, %v1478
      %v1481 = vadd.f32 %v1442, %v1478
      %v1482 = vadd.f32 %v1443, %v1478
      %v1483 = vadd.f32 %v1444, %v1478
      %v1484 = vadd.f32 %v1445, %v1478
      %v1485 = vadd.f32 %v1446, %v1478
      %v1486 = vadd.f32 %v1447, %v1478
      %v1487 = vadd.f32 %v1448, %v1478
      %v1488 = vadd.f32 %v1449, %v1478
      %v1489 = vadd.f32 %v1450, %v1478
      %v1490 = vadd.f32 %v1451, %v1478
      %v1491 = vadd.f32 %v1452, %v1478
      %v1492 = vadd.f32 %v1453, %v1478
      %v1493 = vadd.f32 %v1454, %v1478
      %v1494 = vadd.f32 %v1455, %v1478
      %v1495 = vadd.f32 %v1456, %v1478
      %v1496 = vadd.f32 %v1457, %v1478
      %v1497 = vadd.f32 %v1458, %v1478
      %v1498 = vadd.f32 %v1459, %v1478
      %v1499 = vadd.f32 %v1460, %v1478
      %v1500 = vadd.f32 %v1461, %v1478
      %v1501 = vadd.f32 %v1462, %v1478
      %v1502 = vadd.f32 %v1463, %v1478
      %v1503 = vadd.f32 %v1464, %v1478
      %v1504 = vadd.f32 %v1465, %v1478
      %v1505 = vadd.f32 %v1466, %v1478
      %v1506 = vadd.f32 %v1467, %v1478
      %v1507 = vadd.f32 %v1468, %v1478
      %v1508 = vadd.f32 %v1469, %v1478
      %v1509 = vadd.f32 %v1470, %v1478
      %v1510 = vadd.f32 %v1471, %v1478
      %v1511 = vadd.f32 %v1472, %v1478
      %v1512 = vmax.f32 %v1480, 0.0
      %v1513 = vmax.f32 %v1481, 0.0
      %v1514 = vmax.f32 %v1482, 0.0
      %v1515 = vmax.f32 %v1483, 0.0
      %v1516 = vmax.f32 %v1484, 0.0
      %v1517 = vmax.f32 %v1485, 0.0
      %v1518 = vmax.f32 %v1486, 0.0
      %v1519 = vmax.f32 %v1487, 0.0
      %v1520 = vmax.f32 %v1488, 0.0
      %v1521 = vmax.f32 %v1489, 0.0
      %v1522 = vmax.f32 %v1490, 0.0
      %v1523 = vmax.f32 %v1491, 0.0
      %v1524 = vmax.f32 %v1492, 0.0
      %v1525 = vmax.f32 %v1493, 0.0
      %v1526 = vmax.f32 %v1494, 0.0
      %v1527 = vmax.f32 %v1495, 0.0
      %v1528 = vmax.f32 %v1496, 0.0
      %v1529 = vmax.f32 %v1497, 0.0
      %v1530 = vmax.f32 %v1498, 0.0
      %v1531 = vmax.f32 %v1499, 0.0
      %v1532 = vmax.f32 %v1500, 0.0
      %v1533 = vmax.f32 %v1501, 0.0
      %v1534 = vmax.f32 %v1502, 0.0
      %v1535 = vmax.f32 %v1503, 0.0
      %v1536 = vmax.f32 %v1504, 0.0
      %v1537 = vmax.f32 %v1505, 0.0
      %v1538 = vmax.f32 %v1506, 0.0
      %v1539 = vmax.f32 %v1507, 0.0
      %v1540 = vmax.f32 %v1508, 0.0
      %v1541 = vmax.f32 %v1509, 0.0
      %v1542 = vmax.f32 %v1510, 0.0
      %v1543 = vmax.f32 %v1511, 0.0
      %v1544 = vpack.c.bf16 %v1513, %v1512
      %v1545 = vpack.c.bf16 %v1515, %v1514
      %v1546 = vpack.c.bf16 %v1517, %v1516
      %v1547 = vpack.c.bf16 %v1519, %v1518
      %v1548 = vpack.c.bf16 %v1521, %v1520
      %v1549 = vpack.c.bf16 %v1523, %v1522
      %v1550 = vpack.c.bf16 %v1525, %v1524
      %v1551 = vpack.c.bf16 %v1527, %v1526
      %v1552 = vpack.c.bf16 %v1529, %v1528
      %v1553 = vpack.c.bf16 %v1531, %v1530
      %v1554 = vpack.c.bf16 %v1533, %v1532
      %v1555 = vpack.c.bf16 %v1535, %v1534
      %v1556 = vpack.c.bf16 %v1537, %v1536
      %v1557 = vpack.c.bf16 %v1539, %v1538
      %v1558 = vpack.c.bf16 %v1541, %v1540
      %v1559 = vpack.c.bf16 %v1543, %v1542
      %v1576 = vunpack.c.l.b16 %v1544
      %v1577 = vunpack.c.h.b16 %v1544
      %v1578 = vunpack.c.l.b16 %v1545
      %v1579 = vunpack.c.h.b16 %v1545
      %v1580 = vunpack.c.l.b16 %v1546
      %v1581 = vunpack.c.h.b16 %v1546
      %v1582 = vunpack.c.l.b16 %v1547
      %v1583 = vunpack.c.h.b16 %v1547
      %v1584 = vunpack.c.l.b16 %v1548
      %v1585 = vunpack.c.h.b16 %v1548
      %v1586 = vunpack.c.l.b16 %v1549
      %v1587 = vunpack.c.h.b16 %v1549
      %v1588 = vunpack.c.l.b16 %v1550
      %v1589 = vunpack.c.h.b16 %v1550
      %v1590 = vunpack.c.l.b16 %v1551
      %v1591 = vunpack.c.h.b16 %v1551
      %v1592 = vunpack.c.l.b16 %v1552
      %v1593 = vunpack.c.h.b16 %v1552
      %v1594 = vunpack.c.l.b16 %v1553
      %v1595 = vunpack.c.h.b16 %v1553
      %v1596 = vunpack.c.l.b16 %v1554
      %v1597 = vunpack.c.h.b16 %v1554
      %v1598 = vunpack.c.l.b16 %v1555
      %v1599 = vunpack.c.h.b16 %v1555
      %v1600 = vunpack.c.l.b16 %v1556
      %v1601 = vunpack.c.h.b16 %v1556
      %v1602 = vunpack.c.l.b16 %v1557
      %v1603 = vunpack.c.h.b16 %v1557
      %v1604 = vunpack.c.l.b16 %v1558
      %v1605 = vunpack.c.h.b16 %v1558
      %v1606 = vunpack.c.l.b16 %v1559
      %v1607 = vunpack.c.h.b16 %v1559
      %v1608 = vpack.c.b16 %v1576, %v1576
      %v1609 = vpack.c.b16 %v1577, %v1577
      %v1610 = vpack.c.b16 %v1578, %v1578
      %v1611 = vpack.c.b16 %v1579, %v1579
      %v1612 = vpack.c.b16 %v1580, %v1580
      %v1613 = vpack.c.b16 %v1581, %v1581
      %v1614 = vpack.c.b16 %v1582, %v1582
      %v1615 = vpack.c.b16 %v1583, %v1583
      %v1616 = vpack.c.b16 %v1584, %v1584
      %v1617 = vpack.c.b16 %v1585, %v1585
      %v1618 = vpack.c.b16 %v1586, %v1586
      %v1619 = vpack.c.b16 %v1587, %v1587
      %v1620 = vpack.c.b16 %v1588, %v1588
      %v1621 = vpack.c.b16 %v1589, %v1589
      %v1622 = vpack.c.b16 %v1590, %v1590
      %v1623 = vpack.c.b16 %v1591, %v1591
      %v1624 = vpack.c.b16 %v1592, %v1592
      %v1625 = vpack.c.b16 %v1593, %v1593
      %v1626 = vpack.c.b16 %v1594, %v1594
      %v1627 = vpack.c.b16 %v1595, %v1595
      %v1628 = vpack.c.b16 %v1596, %v1596
      %v1629 = vpack.c.b16 %v1597, %v1597
      %v1630 = vpack.c.b16 %v1598, %v1598
      %v1631 = vpack.c.b16 %v1599, %v1599
      %v1632 = vpack.c.b16 %v1600, %v1600
      %v1633 = vpack.c.b16 %v1601, %v1601
      %v1634 = vpack.c.b16 %v1602, %v1602
      %v1635 = vpack.c.b16 %v1603, %v1603
      %v1636 = vpack.c.b16 %v1604, %v1604
      %v1637 = vpack.c.b16 %v1605, %v1605
      %v1638 = vpack.c.b16 %v1606, %v1606
      %v1639 = vpack.c.b16 %v1607, %v1607
      %vm1672 = vcmask 519168
      %1673 = vst.msk [vmem:[%s172] sm:$0xf] %vm1672, %v1608
      %1674 = vst.msk [vmem:[%s172 + $0x4] sm:$0xf] %vm1672, %v1609
      %1675 = vst.msk [vmem:[%s172 + $0x8] sm:$0xf] %vm1672, %v1610
      %1676 = vst.msk [vmem:[%s172 + $0xc] sm:$0xf] %vm1672, %v1611
      %1677 = vst.msk [vmem:[%s172 + $0x10] sm:$0xf] %vm1672, %v1612
      %1678 = vst.msk [vmem:[%s172 + $0x14] sm:$0xf] %vm1672, %v1613
      %1679 = vst.msk [vmem:[%s172 + $0x18] sm:$0xf] %vm1672, %v1614
      %1680 = vst.msk [vmem:[%s172 + $0x1c] sm:$0xf] %vm1672, %v1615
      %1681 = vst.msk [vmem:[%s172 + $0x20] sm:$0xf] %vm1672, %v1616
      %1682 = vst.msk [vmem:[%s172 + $0x24] sm:$0xf] %vm1672, %v1617
      %1683 = vst.msk [vmem:[%s172 + $0x28] sm:$0xf] %vm1672, %v1618
      %1684 = vst.msk [vmem:[%s172 + $0x2c] sm:$0xf] %vm1672, %v1619
      %1685 = vst.msk [vmem:[%s172 + $0x30] sm:$0xf] %vm1672, %v1620
      %1686 = vst.msk [vmem:[%s172 + $0x34] sm:$0xf] %vm1672, %v1621
      %1687 = vst.msk [vmem:[%s172 + $0x38] sm:$0xf] %vm1672, %v1622
      %1688 = vst.msk [vmem:[%s172 + $0x3c] sm:$0xf] %vm1672, %v1623
      %1689 = vst.msk [vmem:[%s172 + $0x40] sm:$0xf] %vm1672, %v1624
      %1690 = vst.msk [vmem:[%s172 + $0x44] sm:$0xf] %vm1672, %v1625
      %1691 = vst.msk [vmem:[%s172 + $0x48] sm:$0xf] %vm1672, %v1626
      %1692 = vst.msk [vmem:[%s172 + $0x4c] sm:$0xf] %vm1672, %v1627
      %1693 = vst.msk [vmem:[%s172 + $0x50] sm:$0xf] %vm1672, %v1628
      %1694 = vst.msk [vmem:[%s172 + $0x54] sm:$0xf] %vm1672, %v1629
      %1695 = vst.msk [vmem:[%s172 + $0x58] sm:$0xf] %vm1672, %v1630
      %1696 = vst.msk [vmem:[%s172 + $0x5c] sm:$0xf] %vm1672, %v1631
      %1697 = vst.msk [vmem:[%s172 + $0x60] sm:$0xf] %vm1672, %v1632
      %1698 = vst.msk [vmem:[%s172 + $0x64] sm:$0xf] %vm1672, %v1633
      %1699 = vst.msk [vmem:[%s172 + $0x68] sm:$0xf] %vm1672, %v1634
      %1700 = vst.msk [vmem:[%s172 + $0x6c] sm:$0xf] %vm1672, %v1635
      %1701 = vst.msk [vmem:[%s172 + $0x70] sm:$0xf] %vm1672, %v1636
      %1702 = vst.msk [vmem:[%s172 + $0x74] sm:$0xf] %vm1672, %v1637
      %1703 = vst.msk [vmem:[%s172 + $0x78] sm:$0xf] %vm1672, %v1638
      %1704 = vst.msk [vmem:[%s172 + $0x7c] sm:$0xf] %vm1672, %v1639
      %s1705 = smul.u32 32, %s14
      %p1706 = scmp.lt.s32.totalorder %s1705, 63
      %s1707 = scalar_select %p1706, %s1705, 63
      %s1708 = smul.addr %s1707, 4
      %s1709 = scalar_lea.vmem %s3, %s1708
      // Predicated region
      $region33: #{lstm_cnn_forward.4} parent=31 // pred_check
        %p1710 = pneg %p100
      $region34: #{lstm_cnn_forward.4} parent=31 // pred_check_branch
        %1712 = sbr.rel (%p1710) target = $region36
      $region35: #{lstm_cnn_forward.4} parent=31 // pred_region
        %s1713 = smul.u32 32, %s14
      $region36: #{lstm_cnn_forward.4} parent=31 // pred_fallthru
        _
    $region32: #{lstm_cnn_forward.4} parent=5 // pred_fallthru
      _
    %p1714 = scmp.le.s32.totalorder 2, %s9
    // Predicated region
    $region37: #{lstm_cnn_forward.4} parent=5 // pred_check
      %p1715 = pneg %p1714
    $region38: #{lstm_cnn_forward.4} parent=5 // pred_check_branch
      %1717 = sbr.rel (%p1715) target = $region40
    $region39: #{lstm_cnn_forward.4} parent=5 // pred_region
      %s1718 = ssub.s32 %s9, 2
      // Predicated region
      $region41: #{lstm_cnn_forward.4} parent=39 // pred_check
        %p1719 = pneg %p106
      $region42: #{lstm_cnn_forward.4} parent=39 // pred_check_branch
        %1721 = sbr.rel (%p1719) target = $region44
      $region43: #{lstm_cnn_forward.4} parent=39 // pred_region
        %s1722 = smul.u32 32, %s15
        %p1723 = scmp.lt.s32.totalorder %s1722, 63
        %s1724 = scalar_select %p1723, %s1722, 63
        %s1725 = smul.addr %s1724, 4
        %s1726 = scalar_lea.vmem %s3, %s1725
      $region44: #{lstm_cnn_forward.4} parent=39 // pred_fallthru
        _
    $region40: #{lstm_cnn_forward.4} parent=5 // pred_fallthru
      _
  $region6: #{lstm_cnn_forward.4} parent=0 // loop_footer
    %s13 = sadd.s32 1, %s9
  $region7: #{lstm_cnn_forward.4} parent=0 // loop_footer_branch
    %8 = sbr.rel target = $region3
  $region8: #{lstm_cnn_forward.4} parent=0 // loop_exit
    _

// kernel: lstm_cnn_forward.5
$region0: #{lstm_cnn_forward.5}
  #allocation0 [shape = 'u32[]', space=smem, size = 0x4, offset = 0x4, fixed_abs, tag = 'smem constant byte address 0x4 - core index']
  #allocation1 [shape = 'u32[144,128]{1,0:T(1,128)}', space=vmem, size = 0x12000, scoped, tag = 'internal scratch']
  %s0 = inlined_call_operand.vmem [shape: bf16[2,326,64], index: 0, kind: input, shape index: {}]
  %s1 = inlined_call_operand.vmem [shape: bf16[9,64,128], index: 1, kind: input, shape index: {}]
  %s2 = inlined_call_operand.vmem [shape: f32[1,128], index: 2, kind: input, shape index: {}]
  %s3 = inlined_call_operand.vmem [shape: bf16[64,269], index: 3, kind: input, shape index: {}]
  %s4 = inlined_call_operand.vmem [shape: bf16[2,64,128], index: 4, kind: output, shape index: {}]
  %s5 = sld [smem:[#allocation0]]
  $region49: #{lstm_cnn_forward.5} parent=0
    _
  %s7 = ssub.s32 1, %s5
  %s8 = scalar_select 0, %s7, %s5
  loop: start=0, step=1, limit=4
  $region2: #{lstm_cnn_forward.5} parent=0 // loop_pre_header
    _
  $region3: #{lstm_cnn_forward.5} parent=0 // loop_header
    %s10 = sphi 0, %s14
    %p11 = scmp.ge.s32.totalorder %s10, 4
    %s20 = sphi 0, %s22
    %s23 = sphi 0, %s20
    %s24 = sphi 0, %s23
    %s40 = sphi 0, %s24
    %s44 = sphi 0, %s44
    %s46 = sphi 0, %s44
    %s47 = sphi 0, %s46
    %s61 = sphi 0, %s47
    %s65 = sphi 0, %s65
    %s67 = sphi 0, %s65
    %s68 = sphi 0, %s67
    %s82 = sphi 0, %s68
    %s86 = sphi 0, %s86
    %s88 = sphi 0, %s86
    %s89 = sphi 0, %s88
    %s103 = sphi 0, %s89
    %s109 = sphi 0, %s111
    %s112 = sphi 0, %s109
    %s113 = sphi 0, %s112
    %s129 = sphi 0, %s113
  $region4: #{lstm_cnn_forward.5} parent=0 // loop_header_branch
    %13 = sbr.rel (%p11) target = $region8
  $region5: #{lstm_cnn_forward.5} parent=0 // loop_body
    %s15 = ssub.s32 %s10, 1
    %s16 = ssub.s32 %s10, 2
    %s17 = sadd.s32 %s10, 1
    %s18 = ssub.s32 %s10, %s17
    %p19 = scmp.eq.s32.totalorder %s18, 0
    %s21 = sadd.s32 %s20, 1
    %s22 = scalar_select %p19, %s20, %s21
    %p25 = pneg %p19
    %p26 = scmp.eq.s32.totalorder %s10, 1
    %p27 = por %p25, %p26
    %p28 = scmp.ne.s32.totalorder %s20, %s23
    %p29 = scmp.eq.s32.totalorder %s10, 0
    %p30 = por %p28, %p29
    %p31 = scmp.ne.s32.totalorder %s20, %s23
    %p32 = scmp.eq.s32.totalorder %s15, 1
    %p33 = por %p31, %p32
    %p34 = scmp.ne.s32.totalorder %s23, %s24
    %p35 = scmp.eq.s32.totalorder %s15, 0
    %p36 = por %p34, %p35
    %p37 = scmp.ne.s32.totalorder %s23, %s24
    %p38 = scmp.eq.s32.totalorder %s16, 1
    %p39 = por %p37, %p38
    %p41 = scmp.ne.s32.totalorder %s24, %s40
    %p42 = scmp.eq.s32.totalorder %s16, 0
    %p43 = por %p41, %p42
    %s45 = sadd.s32 %s44, 1
    %p48 = scmp.eq.s32.totalorder %s10, 1
    %p49 = scmp.ne.s32.totalorder %s44, %s46
    %p50 = scmp.eq.s32.totalorder %s10, 0
    %p51 = por %p49, %p50
    %p52 = scmp.ne.s32.totalorder %s44, %s46
    %p53 = scmp.eq.s32.totalorder %s15, 1
    %p54 = por %p52, %p53
    %p55 = scmp.ne.s32.totalorder %s46, %s47
    %p56 = scmp.eq.s32.totalorder %s15, 0
    %p57 = por %p55, %p56
    %p58 = scmp.ne.s32.totalorder %s46, %s47
    %p59 = scmp.eq.s32.totalorder %s16, 1
    %p60 = por %p58, %p59
    %p62 = scmp.ne.s32.totalorder %s47, %s61
    %p63 = scmp.eq.s32.totalorder %s16, 0
    %p64 = por %p62, %p63
    %s66 = sadd.s32 %s65, 1
    %p69 = scmp.eq.s32.totalorder %s10, 1
    %p70 = scmp.ne.s32.totalorder %s65, %s67
    %p71 = scmp.eq.s32.totalorder %s10, 0
    %p72 = por %p70, %p71
    %p73 = scmp.ne.s32.totalorder %s65, %s67
    %p74 = scmp.eq.s32.totalorder %s15, 1
    %p75 = por %p73, %p74
    %p76 = scmp.ne.s32.totalorder %s67, %s68
    %p77 = scmp.eq.s32.totalorder %s15, 0
    %p78 = por %p76, %p77
    %p79 = scmp.ne.s32.totalorder %s67, %s68
    %p80 = scmp.eq.s32.totalorder %s16, 1
    %p81 = por %p79, %p80
    %p83 = scmp.ne.s32.totalorder %s68, %s82
    %p84 = scmp.eq.s32.totalorder %s16, 0
    %p85 = por %p83, %p84
    %s87 = sadd.s32 %s86, 1
    %p90 = scmp.eq.s32.totalorder %s10, 1
    %p91 = scmp.ne.s32.totalorder %s86, %s88
    %p92 = scmp.eq.s32.totalorder %s10, 0
    %p93 = por %p91, %p92
    %p94 = scmp.ne.s32.totalorder %s86, %s88
    %p95 = scmp.eq.s32.totalorder %s15, 1
    %p96 = por %p94, %p95
    %p97 = scmp.ne.s32.totalorder %s88, %s89
    %p98 = scmp.eq.s32.totalorder %s15, 0
    %p99 = por %p97, %p98
    %p100 = scmp.ne.s32.totalorder %s88, %s89
    %p101 = scmp.eq.s32.totalorder %s16, 1
    %p102 = por %p100, %p101
    %p104 = scmp.ne.s32.totalorder %s89, %s103
    %p105 = scmp.eq.s32.totalorder %s16, 0
    %p106 = por %p104, %p105
    %s107 = ssub.s32 %s10, %s17
    %p108 = scmp.eq.s32.totalorder %s107, 0
    %s110 = sadd.s32 %s109, 1
    %s111 = scalar_select %p108, %s109, %s110
    %p114 = pneg %p108
    %p115 = scmp.eq.s32.totalorder %s10, 1
    %p116 = por %p114, %p115
    %p117 = scmp.ne.s32.totalorder %s109, %s112
    %p118 = scmp.eq.s32.totalorder %s10, 0
    %p119 = por %p117, %p118
    %p120 = scmp.ne.s32.totalorder %s109, %s112
    %p121 = scmp.eq.s32.totalorder %s15, 1
    %p122 = por %p120, %p121
    %p123 = scmp.ne.s32.totalorder %s112, %s113
    %p124 = scmp.eq.s32.totalorder %s15, 0
    %p125 = por %p123, %p124
    %p126 = scmp.ne.s32.totalorder %s112, %s113
    %p127 = scmp.eq.s32.totalorder %s16, 1
    %p128 = por %p126, %p127
    %p130 = scmp.ne.s32.totalorder %s113, %s129
    %p131 = scmp.eq.s32.totalorder %s16, 0
    %p132 = por %p130, %p131
    %p133 = scmp.le.s32.totalorder 1, %s10
    %p134 = scmp.lt.s32.totalorder %s10, 3
    %p135 = pnand %p133, %p134
    %p136 = pneg %p135
    // Predicated region
    $region9: #{lstm_cnn_forward.5} parent=5 // pred_check
      _
    $region10: #{lstm_cnn_forward.5} parent=5 // pred_check_branch
      %138 = sbr.rel (%p135) target = $region12
    $region11: #{lstm_cnn_forward.5} parent=5 // pred_region
      %s139 = ssub.s32 %s10, 1
      // Predicated region
      $region13: #{lstm_cnn_forward.5} parent=11 // pred_check
        %p140 = pneg %p57
      $region14: #{lstm_cnn_forward.5} parent=11 // pred_check_branch
        %142 = sbr.rel (%p140) target = $region16
      $region15: #{lstm_cnn_forward.5} parent=11 // pred_region
        _
      $region16: #{lstm_cnn_forward.5} parent=11 // pred_fallthru
        _
      // Predicated region
      $region17: #{lstm_cnn_forward.5} parent=11 // pred_check
        %p143 = pneg %p78
      $region18: #{lstm_cnn_forward.5} parent=11 // pred_check_branch
        %145 = sbr.rel (%p143) target = $region20
      $region19: #{lstm_cnn_forward.5} parent=11 // pred_region
        _
      $region20: #{lstm_cnn_forward.5} parent=11 // pred_fallthru
        _
      // Predicated region
      $region21: #{lstm_cnn_forward.5} parent=11 // pred_check
        %p146 = pneg %p99
      $region22: #{lstm_cnn_forward.5} parent=11 // pred_check_branch
        %148 = sbr.rel (%p146) target = $region24
      $region23: #{lstm_cnn_forward.5} parent=11 // pred_region
        _
      $region24: #{lstm_cnn_forward.5} parent=11 // pred_fallthru
        _
    $region12: #{lstm_cnn_forward.5} parent=5 // pred_fallthru
      _
    %p149 = scmp.lt.s32.totalorder %s10, 2
    // Predicated region
    $region25: #{lstm_cnn_forward.5} parent=5 // pred_check
      %p150 = pneg %p149
    $region26: #{lstm_cnn_forward.5} parent=5 // pred_check_branch
      %152 = sbr.rel (%p150) target = $region28
    $region27: #{lstm_cnn_forward.5} parent=5 // pred_region
      // Predicated region
      $region29: #{lstm_cnn_forward.5} parent=27 // pred_check
        %p153 = pneg %p30
      $region30: #{lstm_cnn_forward.5} parent=27 // pred_check_branch
        %155 = sbr.rel (%p153) target = $region32
      $region31: #{lstm_cnn_forward.5} parent=27 // pred_region
        %p156 = scmp.lt.s32.totalorder %s10, 1
        %s157 = scalar_select %p156, %s10, 1
        %s158 = smul.addr %s157, 41
        %s159 = smul.addr %s158, 4
        %s160 = scalar_lea.vmem %s0, %s159
      $region32: #{lstm_cnn_forward.5} parent=27 // pred_fallthru
        _
    $region28: #{lstm_cnn_forward.5} parent=5 // pred_fallthru
      _
    %p161 = scmp.le.s32.totalorder 1, %s10
    %p162 = scmp.lt.s32.totalorder %s10, 3
    %p163 = pnand %p161, %p162
    %p164 = pneg %p163
    // Predicated region
    $region33: #{lstm_cnn_forward.5} parent=5 // pred_check
      _
    $region34: #{lstm_cnn_forward.5} parent=5 // pred_check_branch
      %166 = sbr.rel (%p163) target = $region36
    $region35: #{lstm_cnn_forward.5} parent=5 // pred_region
      %s167 = ssub.s32 %s10, 1
      %p168 = scmp.lt.s32.totalorder %s15, 1
      %s169 = scalar_select %p168, %s15, 1
      %s170 = smul.addr %s169, 41
      %s171 = smul.addr %s170, 4
      %s172 = scalar_lea.vmem %s0, %s171
      %p173 = pneg %p36
      %p174 = pneg %p33
      %p175 = pneg %p57
      %p176 = pneg %p54
      %p177 = pneg %p78
      %p178 = pneg %p75
      %p179 = pneg %p99
      %p180 = pneg %p96
      %p181 = pneg %p125
      %p182 = pneg %p122
      %p183 = scmp.lt.s32.totalorder %s15, 1
      %s184 = scalar_select %p183, %s15, 1
      %s185 = smul.addr %s184, 8
      %s186 = smul.addr %s185, 4
      %s187 = scalar_lea.vmem %s4, %s186
      %p188 = scmp.lt.s32.totalorder %s15, 1
      %s189 = scalar_select %p188, %s15, 1
      %s190 = smul.addr %s189, 41
      %s191 = smul.addr %s190, 4
      %s192 = scalar_lea.vmem %s0, %s191
      %p193 = scmp.lt.s32.totalorder %s15, 1
      %s194 = scalar_select %p193, %s15, 1
      %s195 = smul.addr %s194, 8
      %s196 = smul.addr %s195, 4
      %s197 = scalar_lea.vmem %s4, %s196
      %v199 = vld [vmem:[%s192] sm:$0xf]
      %v200 = vld [vmem:[%s192 + $0x4] sm:$0xf]
      %v201 = vld [vmem:[%s192 + $0x8] sm:$0xf]
      %v202 = vld [vmem:[%s192 + $0xc] sm:$0xf]
      %v203 = vld [vmem:[%s192 + $0x10] sm:$0xf]
      %v204 = vld [vmem:[%s192 + $0x14] sm:$0xf]
      %v205 = vld [vmem:[%s192 + $0x18] sm:$0xf]
      %v206 = vld [vmem:[%s192 + $0x1c] sm:$0xf]
      %v207 = vld [vmem:[%s192 + $0x20] sm:$0xf]
      %v208 = vld [vmem:[%s192 + $0x24] sm:$0xf]
      %v209 = vld [vmem:[%s192 + $0x28] sm:$0xf]
      %v210 = vld [vmem:[%s192 + $0x2c] sm:$0xf]
      %v211 = vld [vmem:[%s192 + $0x30] sm:$0xf]
      %v212 = vld [vmem:[%s192 + $0x34] sm:$0xf]
      %v213 = vld [vmem:[%s192 + $0x38] sm:$0xf]
      %v214 = vld [vmem:[%s192 + $0x3c] sm:$0xf]
      %v215 = vld [vmem:[%s192 + $0x40] sm:$0xf]
      %v216 = vld [vmem:[%s192 + $0x44] sm:$0xf]
      %v217 = vld [vmem:[%s192 + $0x48] sm:$0xf]
      %v218 = vld [vmem:[%s192 + $0x4c] sm:$0xf]
      %v219 = vld [vmem:[%s192 + $0x50] sm:$0xf]
      %v220 = vld [vmem:[%s192 + $0x54] sm:$0xf]
      %v221 = vld [vmem:[%s192 + $0x58] sm:$0xf]
      %v222 = vld [vmem:[%s192 + $0x5c] sm:$0xf]
      %v223 = vld [vmem:[%s192 + $0x60] sm:$0xf]
      %v224 = vld [vmem:[%s192 + $0x64] sm:$0xf]
      %v225 = vld [vmem:[%s192 + $0x68] sm:$0xf]
      %v226 = vld [vmem:[%s192 + $0x6c] sm:$0xf]
      %v227 = vld [vmem:[%s192 + $0x70] sm:$0xf]
      %v228 = vld [vmem:[%s192 + $0x74] sm:$0xf]
      %v229 = vld [vmem:[%s192 + $0x78] sm:$0xf]
      %v230 = vld [vmem:[%s192 + $0x7c] sm:$0xf]
      %v231 = vld [vmem:[%s192 + $0x80] sm:$0xf]
      %v232 = vld [vmem:[%s192 + $0x84] sm:$0xf]
      %v233 = vld [vmem:[%s192 + $0x88] sm:$0xf]
      %v234 = vld [vmem:[%s192 + $0x8c] sm:$0xf]
      %v235 = vld [vmem:[%s192 + $0x90] sm:$0xf]
      %v236 = vld [vmem:[%s192 + $0x94] sm:$0xf]
      %v237 = vld [vmem:[%s192 + $0x98] sm:$0xf]
      %v238 = vld [vmem:[%s192 + $0x9c] sm:$0xf]
      %v239 = vld [vmem:[%s192 + $0xa0] sm:$0x7]
      %v240 = vld [vmem:[%s1] sm:$0xf]
      %v241 = vld [vmem:[%s1 + $0x4] sm:$0xf]
      %v242 = vld [vmem:[%s1 + $0x8] sm:$0xf]
      %v243 = vld [vmem:[%s1 + $0xc] sm:$0xf]
      %v244 = vld [vmem:[%s1 + $0x10] sm:$0xf]
      %v245 = vld [vmem:[%s1 + $0x14] sm:$0xf]
      %v246 = vld [vmem:[%s1 + $0x18] sm:$0xf]
      %v247 = vld [vmem:[%s1 + $0x1c] sm:$0xf]
      %s248 = scalar_lea.vmem %s1, 32
      %v249 = vld [vmem:[%s248] sm:$0xf]
      %v250 = vld [vmem:[%s248 + $0x4] sm:$0xf]
      %v251 = vld [vmem:[%s248 + $0x8] sm:$0xf]
      %v252 = vld [vmem:[%s248 + $0xc] sm:$0xf]
      %v253 = vld [vmem:[%s248 + $0x10] sm:$0xf]
      %v254 = vld [vmem:[%s248 + $0x14] sm:$0xf]
      %v255 = vld [vmem:[%s248 + $0x18] sm:$0xf]
      %v256 = vld [vmem:[%s248 + $0x1c] sm:$0xf]
      %v294 = vunpack.c.l.b16 %v199
      %v295 = vunpack.c.l.b16 %v200
      %v296 = vunpack.c.l.b16 %v201
      %v297 = vunpack.c.l.b16 %v202
      %v298 = vunpack.c.l.b16 %v203
      %v299 = vunpack.c.l.b16 %v204
      %v300 = vunpack.c.l.b16 %v205
      %v301 = vunpack.c.l.b16 %v206
      %v302 = vunpack.c.l.b16 %v207
      %v303 = vunpack.c.l.b16 %v208
      %v304 = vunpack.c.l.b16 %v209
      %v305 = vunpack.c.l.b16 %v210
      %v306 = vunpack.c.l.b16 %v211
      %v307 = vunpack.c.l.b16 %v212
      %v308 = vunpack.c.l.b16 %v213
      %v309 = vunpack.c.l.b16 %v214
      %v310 = vunpack.c.l.b16 %v215
      %v311 = vunpack.c.l.b16 %v216
      %v312 = vunpack.c.l.b16 %v217
      %v313 = vunpack.c.l.b16 %v218
      %v314 = vunpack.c.l.b16 %v219
      %v315 = vunpack.c.l.b16 %v220
      %v316 = vunpack.c.l.b16 %v221
      %v317 = vunpack.c.l.b16 %v222
      %v318 = vunpack.c.l.b16 %v223
      %v319 = vunpack.c.l.b16 %v224
      %v320 = vunpack.c.l.b16 %v225
      %v321 = vunpack.c.l.b16 %v226
      %v322 = vunpack.c.l.b16 %v227
      %v323 = vunpack.c.l.b16 %v228
      %v324 = vunpack.c.l.b16 %v229
      %v325 = vunpack.c.l.b16 %v230
      %v326 = vunpack.c.l.b16 %v231
      %v327 = vunpack.c.l.b16 %v232
      %v328 = vunpack.c.l.b16 %v233
      %v329 = vunpack.c.l.b16 %v234
      %v330 = vunpack.c.l.b16 %v235
      %v331 = vpack.c.b16 %v295, %v294
      %v332 = vpack.c.b16 %v297, %v296
      %v333 = vpack.c.b16 %v299, %v298
      %v334 = vpack.c.b16 %v301, %v300
      %v335 = vpack.c.b16 %v303, %v302
      %v336 = vpack.c.b16 %v305, %v304
      %v337 = vpack.c.b16 %v307, %v306
      %v338 = vpack.c.b16 %v309, %v308
      %v339 = vpack.c.b16 %v311, %v310
      %v340 = vpack.c.b16 %v313, %v312
      %v341 = vpack.c.b16 %v315, %v314
      %v342 = vpack.c.b16 %v317, %v316
      %v343 = vpack.c.b16 %v319, %v318
      %v344 = vpack.c.b16 %v321, %v320
      %v345 = vpack.c.b16 %v323, %v322
      %v346 = vpack.c.b16 %v325, %v324
      %v347 = vpack.c.b16 %v327, %v326
      %v348 = vpack.c.b16 %v329, %v328
      %v349 = vpack.c.b16 %v330, %v330
      %vm350 = vsmask.f32 7424
      %v352 = vshrl.u32 %v331, 16
      %v354 = vshll.u32 %v331, 16
      %v356 = vrot.slane %v354, 1
      %v357 = vor.u32 %v352, %v356
      %v359 = vshll.u32 %v332, 16
      %v361 = vrot.slane %v359, 1
      %v362 = vsel %vm350, %v357, %v361
      %v363 = vshrl.u32 %v332, 16
      %v365 = vor.u32 %v363, %v361
      %v367 = vshll.u32 %v333, 16
      %v369 = vrot.slane %v367, 1
      %v370 = vsel %vm350, %v365, %v369
      %v371 = vshrl.u32 %v333, 16
      %v373 = vor.u32 %v371, %v369
      %v375 = vshll.u32 %v334, 16
      %v377 = vrot.slane %v375, 1
      %v378 = vsel %vm350, %v373, %v377
      %v379 = vshrl.u32 %v334, 16
      %v381 = vor.u32 %v379, %v377
      %v383 = vshll.u32 %v335, 16
      %v385 = vrot.slane %v383, 1
      %v386 = vsel %vm350, %v381, %v385
      %v387 = vshrl.u32 %v335, 16
      %v389 = vor.u32 %v387, %v385
      %v391 = vshll.u32 %v336, 16
      %v393 = vrot.slane %v391, 1
      %v394 = vsel %vm350, %v389, %v393
      %v395 = vshrl.u32 %v336, 16
      %v397 = vor.u32 %v395, %v393
      %v399 = vshll.u32 %v337, 16
      %v401 = vrot.slane %v399, 1
      %v402 = vsel %vm350, %v397, %v401
      %v403 = vshrl.u32 %v337, 16
      %v405 = vor.u32 %v403, %v401
      %v407 = vshll.u32 %v338, 16
      %v409 = vrot.slane %v407, 1
      %v410 = vsel %vm350, %v405, %v409
      %v411 = vshrl.u32 %v338, 16
      %v413 = vor.u32 %v411, %v409
      %v415 = vshll.u32 %v339, 16
      %v417 = vrot.slane %v415, 1
      %v418 = vsel %vm350, %v413, %v417
      %v419 = vshrl.u32 %v339, 16
      %v421 = vor.u32 %v419, %v417
      %v423 = vshll.u32 %v340, 16
      %v425 = vrot.slane %v423, 1
      %v426 = vsel %vm350, %v421, %v425
      %v427 = vshrl.u32 %v340, 16
      %v429 = vor.u32 %v427, %v425
      %v431 = vshll.u32 %v341, 16
      %v433 = vrot.slane %v431, 1
      %v434 = vsel %vm350, %v429, %v433
      %v435 = vshrl.u32 %v341, 16
      %v437 = vor.u32 %v435, %v433
      %v439 = vshll.u32 %v342, 16
      %v441 = vrot.slane %v439, 1
      %v442 = vsel %vm350, %v437, %v441
      %v443 = vshrl.u32 %v342, 16
      %v445 = vor.u32 %v443, %v441
      %v447 = vshll.u32 %v343, 16
      %v449 = vrot.slane %v447, 1
      %v450 = vsel %vm350, %v445, %v449
      %v451 = vshrl.u32 %v343, 16
      %v453 = vor.u32 %v451, %v449
      %v455 = vshll.u32 %v344, 16
      %v457 = vrot.slane %v455, 1
      %v458 = vsel %vm350, %v453, %v457
      %v459 = vshrl.u32 %v344, 16
      %v461 = vor.u32 %v459, %v457
      %v463 = vshll.u32 %v345, 16
      %v465 = vrot.slane %v463, 1
      %v466 = vsel %vm350, %v461, %v465
      %v467 = vshrl.u32 %v345, 16
      %v469 = vor.u32 %v467, %v465
      %v471 = vshll.u32 %v346, 16
      %v473 = vrot.slane %v471, 1
      %v474 = vsel %vm350, %v469, %v473
      %v475 = vshrl.u32 %v346, 16
      %v477 = vor.u32 %v475, %v473
      %v479 = vshll.u32 %v347, 16
      %v481 = vrot.slane %v479, 1
      %v482 = vsel %vm350, %v477, %v481
      %v483 = vshrl.u32 %v347, 16
      %v485 = vor.u32 %v483, %v481
      %v487 = vshll.u32 %v348, 16
      %v489 = vrot.slane %v487, 1
      %v490 = vsel %vm350, %v485, %v489
      %v491 = vshrl.u32 %v348, 16
      %v493 = vor.u32 %v491, %v489
      %v495 = vshll.u32 %v349, 16
      %v497 = vrot.slane %v495, 1
      %v498 = vsel %vm350, %v493, %v497
      %v507 = vunpack.c.l.b16 %v249
      %v508 = vunpack.c.l.b16 %v250
      %v509 = vunpack.c.l.b16 %v251
      %v510 = vunpack.c.l.b16 %v252
      %v511 = vunpack.c.l.b16 %v253
      %v512 = vunpack.c.l.b16 %v254
      %v513 = vunpack.c.l.b16 %v255
      %v514 = vunpack.c.l.b16 %v256
      %v515 = vpack.c.b16 %v508, %v507
      %v516 = vpack.c.b16 %v510, %v509
      %v517 = vpack.c.b16 %v512, %v511
      %v518 = vpack.c.b16 %v514, %v513
      %vm523 = vcmask 523264
      %v525 = vsel %vm523, %v362, 0
      %v528 = vsel %vm523, %v370, 0
      %v531 = vsel %vm523, %v378, 0
      %v534 = vsel %vm523, %v386, 0
      %v537 = vsel %vm523, %v394, 0
      %v540 = vsel %vm523, %v402, 0
      %v543 = vsel %vm523, %v410, 0
      %v546 = vsel %vm523, %v418, 0
      %v549 = vsel %vm523, %v426, 0
      %v552 = vsel %vm523, %v434, 0
      %v555 = vsel %vm523, %v442, 0
      %v558 = vsel %vm523, %v450, 0
      %v561 = vsel %vm523, %v458, 0
      %v564 = vsel %vm523, %v466, 0
      %v567 = vsel %vm523, %v474, 0
      %v570 = vsel %vm523, %v482, 0
      %v573 = vsel %vm523, %v490, 0
      %v576 = vsel %vm523, %v498, 0
      %578 = vmatprep.subr.bf16.mxu0 0
      %579 = vmatpush1.bf16.msra.mxu0 0
      %580 = vmatprep.subr.bf16.mxu0 0
      %581 = vmatpush1.bf16.msra.mxu0 0
      %582 = vmatprep.subr.bf16.mxu0 0
      %583 = vmatpush1.bf16.msra.mxu0 0
      %584 = vmatprep.subr.bf16.mxu0 0
      %585 = vmatpush1.bf16.msra.mxu0 0
      %586 = vmatprep.subr.bf16.mxu0 0
      %587 = vmatpush1.bf16.msra.mxu0 %v518
      %588 = vmatprep.subr.bf16.mxu0 0
      %589 = vmatpush1.bf16.msra.mxu0 %v517
      %590 = vmatprep.subr.bf16.mxu0 0
      %591 = vmatpush1.bf16.msra.mxu0 %v516
      %592 = vmatprep.subr.bf16.mxu0 0
      %593 = vmatpush1.bf16.msra.mxu0 %v515
      %594 = vmatprep.subr.bf16.mxu0 0
      %595 = vmatpush2.bf16.msra.mxu0 0
      %596 = vmatprep.subr.bf16.mxu0 0
      %597 = vmatpush2.bf16.msra.mxu0 0
      %598 = vmatprep.subr.bf16.mxu0 0
      %599 = vmatpush2.bf16.msra.mxu0 0
      %600 = vmatprep.subr.bf16.mxu0 0
      %601 = vmatpush2.bf16.msra.mxu0 0
      %602 = vmatprep.subr.bf16.mxu0 0
      %603 = vmatpush2.bf16.msra.mxu0 0
      %604 = vmatprep.subr.bf16.mxu0 0
      %605 = vmatpush2.bf16.msra.mxu0 0
      %606 = vmatprep.subr.bf16.mxu0 0
      %607 = vmatpush2.bf16.msra.mxu0 0
      %608 = vmatprep.subr.bf16.mxu0 0
      %609 = vmatpush2.bf16.msra.mxu0 0
      %610 = vmatprep.mubr.bf16.mxu0 0
      %611 = vmatmul.mubr.bf16.gmra.mxu0 %v525
      %v612 = vpop.f32.mrf.mxu0
      %v613 = vadd.f32 0.0, %v612
      %v614 = vpop.f32.mrf.mxu0
      %v615 = vpop.f32.mrf.mxu0
      %v616 = vadd.f32 0.0, %v615
      %v617 = vpop.f32.mrf.mxu0
      %618 = vmatprep.mubr.bf16.mxu0 0
      %619 = vmatmul.mubr.bf16.gmra.mxu0 %v528
      %v620 = vpop.f32.mrf.mxu0
      %v621 = vadd.f32 0.0, %v620
      %v622 = vpop.f32.mrf.mxu0
      %v623 = vpop.f32.mrf.mxu0
      %v624 = vadd.f32 0.0, %v623
      %v625 = vpop.f32.mrf.mxu0
      %626 = vmatprep.mubr.bf16.mxu0 0
      %627 = vmatmul.mubr.bf16.gmra.mxu0 %v531
      %v628 = vpop.f32.mrf.mxu0
      %v629 = vadd.f32 0.0, %v628
      %v630 = vpop.f32.mrf.mxu0
      %v631 = vpop.f32.mrf.mxu0
      %v632 = vadd.f32 0.0, %v631
      %v633 = vpop.f32.mrf.mxu0
      %634 = vmatprep.mubr.bf16.mxu0 0
      %635 = vmatmul.mubr.bf16.gmra.mxu0 %v534
      %v636 = vpop.f32.mrf.mxu0
      %v637 = vadd.f32 0.0, %v636
      %v638 = vpop.f32.mrf.mxu0
      %v639 = vpop.f32.mrf.mxu0
      %v640 = vadd.f32 0.0, %v639
      %v641 = vpop.f32.mrf.mxu0
      %642 = vmatprep.mubr.bf16.mxu0 0
      %643 = vmatmul.mubr.bf16.gmra.mxu0 %v537
      %v644 = vpop.f32.mrf.mxu0
      %v645 = vadd.f32 0.0, %v644
      %v646 = vpop.f32.mrf.mxu0
      %v647 = vpop.f32.mrf.mxu0
      %v648 = vadd.f32 0.0, %v647
      %v649 = vpop.f32.mrf.mxu0
      %650 = vmatprep.mubr.bf16.mxu0 0
      %651 = vmatmul.mubr.bf16.gmra.mxu0 %v540
      %v652 = vpop.f32.mrf.mxu0
      %v653 = vadd.f32 0.0, %v652
      %v654 = vpop.f32.mrf.mxu0
      %v655 = vpop.f32.mrf.mxu0
      %v656 = vadd.f32 0.0, %v655
      %v657 = vpop.f32.mrf.mxu0
      %658 = vmatprep.mubr.bf16.mxu0 0
      %659 = vmatmul.mubr.bf16.gmra.mxu0 %v543
      %v660 = vpop.f32.mrf.mxu0
      %v661 = vadd.f32 0.0, %v660
      %v662 = vpop.f32.mrf.mxu0
      %v663 = vpop.f32.mrf.mxu0
      %v664 = vadd.f32 0.0, %v663
      %v665 = vpop.f32.mrf.mxu0
      %666 = vmatprep.mubr.bf16.mxu0 0
      %667 = vmatmul.mubr.bf16.gmra.mxu0 %v546
      %v668 = vpop.f32.mrf.mxu0
      %v669 = vadd.f32 0.0, %v668
      %v670 = vpop.f32.mrf.mxu0
      %v671 = vpop.f32.mrf.mxu0
      %v672 = vadd.f32 0.0, %v671
      %v673 = vpop.f32.mrf.mxu0
      %674 = vmatprep.mubr.bf16.mxu0 0
      %675 = vmatmul.mubr.bf16.gmra.mxu0 %v549
      %v676 = vpop.f32.mrf.mxu0
      %v677 = vadd.f32 0.0, %v676
      %v678 = vpop.f32.mrf.mxu0
      %v679 = vpop.f32.mrf.mxu0
      %v680 = vadd.f32 0.0, %v679
      %v681 = vpop.f32.mrf.mxu0
      %682 = vmatprep.mubr.bf16.mxu0 0
      %683 = vmatmul.mubr.bf16.gmra.mxu0 %v552
      %v684 = vpop.f32.mrf.mxu0
      %v685 = vadd.f32 0.0, %v684
      %v686 = vpop.f32.mrf.mxu0
      %v687 = vpop.f32.mrf.mxu0
      %v688 = vadd.f32 0.0, %v687
      %v689 = vpop.f32.mrf.mxu0
      %690 = vmatprep.mubr.bf16.mxu0 0
      %691 = vmatmul.mubr.bf16.gmra.mxu0 %v555
      %v692 = vpop.f32.mrf.mxu0
      %v693 = vadd.f32 0.0, %v692
      %v694 = vpop.f32.mrf.mxu0
      %v695 = vpop.f32.mrf.mxu0
      %v696 = vadd.f32 0.0, %v695
      %v697 = vpop.f32.mrf.mxu0
      %698 = vmatprep.mubr.bf16.mxu0 0
      %699 = vmatmul.mubr.bf16.gmra.mxu0 %v558
      %v700 = vpop.f32.mrf.mxu0
      %v701 = vadd.f32 0.0, %v700
      %v702 = vpop.f32.mrf.mxu0
      %v703 = vpop.f32.mrf.mxu0
      %v704 = vadd.f32 0.0, %v703
      %v705 = vpop.f32.mrf.mxu0
      %706 = vmatprep.mubr.bf16.mxu0 0
      %707 = vmatmul.mubr.bf16.gmra.mxu0 %v561
      %v708 = vpop.f32.mrf.mxu0
      %v709 = vadd.f32 0.0, %v708
      %v710 = vpop.f32.mrf.mxu0
      %v711 = vpop.f32.mrf.mxu0
      %v712 = vadd.f32 0.0, %v711
      %v713 = vpop.f32.mrf.mxu0
      %714 = vmatprep.mubr.bf16.mxu0 0
      %715 = vmatmul.mubr.bf16.gmra.mxu0 %v564
      %v716 = vpop.f32.mrf.mxu0
      %v717 = vadd.f32 0.0, %v716
      %v718 = vpop.f32.mrf.mxu0
      %v719 = vpop.f32.mrf.mxu0
      %v720 = vadd.f32 0.0, %v719
      %v721 = vpop.f32.mrf.mxu0
      %722 = vmatprep.mubr.bf16.mxu0 0
      %723 = vmatmul.mubr.bf16.gmra.mxu0 %v567
      %v724 = vpop.f32.mrf.mxu0
      %v725 = vadd.f32 0.0, %v724
      %v726 = vpop.f32.mrf.mxu0
      %v727 = vpop.f32.mrf.mxu0
      %v728 = vadd.f32 0.0, %v727
      %v729 = vpop.f32.mrf.mxu0
      %730 = vmatprep.mubr.bf16.mxu0 0
      %731 = vmatmul.mubr.bf16.gmra.mxu0 %v570
      %v732 = vpop.f32.mrf.mxu0
      %v733 = vadd.f32 0.0, %v732
      %v734 = vpop.f32.mrf.mxu0
      %v735 = vpop.f32.mrf.mxu0
      %v736 = vadd.f32 0.0, %v735
      %v737 = vpop.f32.mrf.mxu0
      %738 = vmatprep.mubr.bf16.mxu0 0
      %739 = vmatmul.mubr.bf16.gmra.mxu0 %v573
      %v740 = vpop.f32.mrf.mxu0
      %v741 = vadd.f32 0.0, %v740
      %v742 = vpop.f32.mrf.mxu0
      %v743 = vpop.f32.mrf.mxu0
      %v744 = vadd.f32 0.0, %v743
      %v745 = vpop.f32.mrf.mxu0
      %746 = vmatprep.mubr.bf16.mxu0 0
      %747 = vmatmul.mubr.bf16.gmra.mxu0 %v576
      %v748 = vpop.f32.mrf.mxu0
      %v749 = vadd.f32 0.0, %v748
      %v750 = vpop.f32.mrf.mxu0
      %v751 = vpop.f32.mrf.mxu0
      %v752 = vadd.f32 0.0, %v751
      %v753 = vpop.f32.mrf.mxu0
      %754 = vdwg.mxu0
      %v763 = vunpack.c.l.b16 %v240
      %v764 = vunpack.c.l.b16 %v241
      %v765 = vunpack.c.l.b16 %v242
      %v766 = vunpack.c.l.b16 %v243
      %v767 = vunpack.c.l.b16 %v244
      %v768 = vunpack.c.l.b16 %v245
      %v769 = vunpack.c.l.b16 %v246
      %v770 = vunpack.c.l.b16 %v247
      %v771 = vpack.c.b16 %v764, %v763
      %v772 = vpack.c.b16 %v766, %v765
      %v773 = vpack.c.b16 %v768, %v767
      %v774 = vpack.c.b16 %v770, %v769
      %v779 = vsel %vm523, %v331, 0
      %v781 = vsel %vm523, %v332, 0
      %v783 = vsel %vm523, %v333, 0
      %v785 = vsel %vm523, %v334, 0
      %v787 = vsel %vm523, %v335, 0
      %v789 = vsel %vm523, %v336, 0
      %v791 = vsel %vm523, %v337, 0
      %v793 = vsel %vm523, %v338, 0
      %v795 = vsel %vm523, %v339, 0
      %v797 = vsel %vm523, %v340, 0
      %v799 = vsel %vm523, %v341, 0
      %v801 = vsel %vm523, %v342, 0
      %v803 = vsel %vm523, %v343, 0
      %v805 = vsel %vm523, %v344, 0
      %v807 = vsel %vm523, %v345, 0
      %v809 = vsel %vm523, %v346, 0
      %v811 = vsel %vm523, %v347, 0
      %v813 = vsel %vm523, %v348, 0
      %815 = vmatprep.subr.bf16.mxu0 0
      %816 = vmatpush1.bf16.msra.mxu0 0
      %817 = vmatprep.subr.bf16.mxu0 0
      %818 = vmatpush1.bf16.msra.mxu0 0
      %819 = vmatprep.subr.bf16.mxu0 0
      %820 = vmatpush1.bf16.msra.mxu0 0
      %821 = vmatprep.subr.bf16.mxu0 0
      %822 = vmatpush1.bf16.msra.mxu0 0
      %823 = vmatprep.subr.bf16.mxu0 0
      %824 = vmatpush1.bf16.msra.mxu0 %v774
      %825 = vmatprep.subr.bf16.mxu0 0
      %826 = vmatpush1.bf16.msra.mxu0 %v773
      %827 = vmatprep.subr.bf16.mxu0 0
      %828 = vmatpush1.bf16.msra.mxu0 %v772
      %829 = vmatprep.subr.bf16.mxu0 0
      %830 = vmatpush1.bf16.msra.mxu0 %v771
      %831 = vmatprep.subr.bf16.mxu0 0
      %832 = vmatpush2.bf16.msra.mxu0 0
      %833 = vmatprep.subr.bf16.mxu0 0
      %834 = vmatpush2.bf16.msra.mxu0 0
      %835 = vmatprep.subr.bf16.mxu0 0
      %836 = vmatpush2.bf16.msra.mxu0 0
      %837 = vmatprep.subr.bf16.mxu0 0
      %838 = vmatpush2.bf16.msra.mxu0 0
      %839 = vmatprep.subr.bf16.mxu0 0
      %840 = vmatpush2.bf16.msra.mxu0 0
      %841 = vmatprep.subr.bf16.mxu0 0
      %842 = vmatpush2.bf16.msra.mxu0 0
      %843 = vmatprep.subr.bf16.mxu0 0
      %844 = vmatpush2.bf16.msra.mxu0 0
      %845 = vmatprep.subr.bf16.mxu0 0
      %846 = vmatpush2.bf16.msra.mxu0 0
      %847 = vmatprep.mubr.bf16.mxu0 0
      %848 = vmatmul.mubr.bf16.gmra.mxu0 %v779
      %v849 = vpop.f32.mrf.mxu0
      %v850 = vadd.f32 %v613, %v849
      %v851 = vpop.f32.mrf.mxu0
      %v852 = vpop.f32.mrf.mxu0
      %v853 = vadd.f32 %v616, %v852
      %v854 = vpop.f32.mrf.mxu0
      %855 = vmatprep.mubr.bf16.mxu0 0
      %856 = vmatmul.mubr.bf16.gmra.mxu0 %v781
      %v857 = vpop.f32.mrf.mxu0
      %v858 = vadd.f32 %v621, %v857
      %v859 = vpop.f32.mrf.mxu0
      %v860 = vpop.f32.mrf.mxu0
      %v861 = vadd.f32 %v624, %v860
      %v862 = vpop.f32.mrf.mxu0
      %863 = vmatprep.mubr.bf16.mxu0 0
      %864 = vmatmul.mubr.bf16.gmra.mxu0 %v783
      %v865 = vpop.f32.mrf.mxu0
      %v866 = vadd.f32 %v629, %v865
      %v867 = vpop.f32.mrf.mxu0
      %v868 = vpop.f32.mrf.mxu0
      %v869 = vadd.f32 %v632, %v868
      %v870 = vpop.f32.mrf.mxu0
      %871 = vmatprep.mubr.bf16.mxu0 0
      %872 = vmatmul.mubr.bf16.gmra.mxu0 %v785
      %v873 = vpop.f32.mrf.mxu0
      %v874 = vadd.f32 %v637, %v873
      %v875 = vpop.f32.mrf.mxu0
      %v876 = vpop.f32.mrf.mxu0
      %v877 = vadd.f32 %v640, %v876
      %v878 = vpop.f32.mrf.mxu0
      %879 = vmatprep.mubr.bf16.mxu0 0
      %880 = vmatmul.mubr.bf16.gmra.mxu0 %v787
      %v881 = vpop.f32.mrf.mxu0
      %v882 = vadd.f32 %v645, %v881
      %v883 = vpop.f32.mrf.mxu0
      %v884 = vpop.f32.mrf.mxu0
      %v885 = vadd.f32 %v648, %v884
      %v886 = vpop.f32.mrf.mxu0
      %887 = vmatprep.mubr.bf16.mxu0 0
      %888 = vmatmul.mubr.bf16.gmra.mxu0 %v789
      %v889 = vpop.f32.mrf.mxu0
      %v890 = vadd.f32 %v653, %v889
      %v891 = vpop.f32.mrf.mxu0
      %v892 = vpop.f32.mrf.mxu0
      %v893 = vadd.f32 %v656, %v892
      %v894 = vpop.f32.mrf.mxu0
      %895 = vmatprep.mubr.bf16.mxu0 0
      %896 = vmatmul.mubr.bf16.gmra.mxu0 %v791
      %v897 = vpop.f32.mrf.mxu0
      %v898 = vadd.f32 %v661, %v897
      %v899 = vpop.f32.mrf.mxu0
      %v900 = vpop.f32.mrf.mxu0
      %v901 = vadd.f32 %v664, %v900
      %v902 = vpop.f32.mrf.mxu0
      %903 = vmatprep.mubr.bf16.mxu0 0
      %904 = vmatmul.mubr.bf16.gmra.mxu0 %v793
      %v905 = vpop.f32.mrf.mxu0
      %v906 = vadd.f32 %v669, %v905
      %v907 = vpop.f32.mrf.mxu0
      %v908 = vpop.f32.mrf.mxu0
      %v909 = vadd.f32 %v672, %v908
      %v910 = vpop.f32.mrf.mxu0
      %911 = vmatprep.mubr.bf16.mxu0 0
      %912 = vmatmul.mubr.bf16.gmra.mxu0 %v795
      %v913 = vpop.f32.mrf.mxu0
      %v914 = vadd.f32 %v677, %v913
      %v915 = vpop.f32.mrf.mxu0
      %v916 = vpop.f32.mrf.mxu0
      %v917 = vadd.f32 %v680, %v916
      %v918 = vpop.f32.mrf.mxu0
      %919 = vmatprep.mubr.bf16.mxu0 0
      %920 = vmatmul.mubr.bf16.gmra.mxu0 %v797
      %v921 = vpop.f32.mrf.mxu0
      %v922 = vadd.f32 %v685, %v921
      %v923 = vpop.f32.mrf.mxu0
      %v924 = vpop.f32.mrf.mxu0
      %v925 = vadd.f32 %v688, %v924
      %v926 = vpop.f32.mrf.mxu0
      %927 = vmatprep.mubr.bf16.mxu0 0
      %928 = vmatmul.mubr.bf16.gmra.mxu0 %v799
      %v929 = vpop.f32.mrf.mxu0
      %v930 = vadd.f32 %v693, %v929
      %v931 = vpop.f32.mrf.mxu0
      %v932 = vpop.f32.mrf.mxu0
      %v933 = vadd.f32 %v696, %v932
      %v934 = vpop.f32.mrf.mxu0
      %935 = vmatprep.mubr.bf16.mxu0 0
      %936 = vmatmul.mubr.bf16.gmra.mxu0 %v801
      %v937 = vpop.f32.mrf.mxu0
      %v938 = vadd.f32 %v701, %v937
      %v939 = vpop.f32.mrf.mxu0
      %v940 = vpop.f32.mrf.mxu0
      %v941 = vadd.f32 %v704, %v940
      %v942 = vpop.f32.mrf.mxu0
      %943 = vmatprep.mubr.bf16.mxu0 0
      %944 = vmatmul.mubr.bf16.gmra.mxu0 %v803
      %v945 = vpop.f32.mrf.mxu0
      %v946 = vadd.f32 %v709, %v945
      %v947 = vpop.f32.mrf.mxu0
      %v948 = vpop.f32.mrf.mxu0
      %v949 = vadd.f32 %v712, %v948
      %v950 = vpop.f32.mrf.mxu0
      %951 = vmatprep.mubr.bf16.mxu0 0
      %952 = vmatmul.mubr.bf16.gmra.mxu0 %v805
      %v953 = vpop.f32.mrf.mxu0
      %v954 = vadd.f32 %v717, %v953
      %v955 = vpop.f32.mrf.mxu0
      %v956 = vpop.f32.mrf.mxu0
      %v957 = vadd.f32 %v720, %v956
      %v958 = vpop.f32.mrf.mxu0
      %959 = vmatprep.mubr.bf16.mxu0 0
      %960 = vmatmul.mubr.bf16.gmra.mxu0 %v807
      %v961 = vpop.f32.mrf.mxu0
      %v962 = vadd.f32 %v725, %v961
      %v963 = vpop.f32.mrf.mxu0
      %v964 = vpop.f32.mrf.mxu0
      %v965 = vadd.f32 %v728, %v964
      %v966 = vpop.f32.mrf.mxu0
      %967 = vmatprep.mubr.bf16.mxu0 0
      %968 = vmatmul.mubr.bf16.gmra.mxu0 %v809
      %v969 = vpop.f32.mrf.mxu0
      %v970 = vadd.f32 %v733, %v969
      %v971 = vpop.f32.mrf.mxu0
      %v972 = vpop.f32.mrf.mxu0
      %v973 = vadd.f32 %v736, %v972
      %v974 = vpop.f32.mrf.mxu0
      %975 = vmatprep.mubr.bf16.mxu0 0
      %976 = vmatmul.mubr.bf16.gmra.mxu0 %v811
      %v977 = vpop.f32.mrf.mxu0
      %v978 = vadd.f32 %v741, %v977
      %v979 = vpop.f32.mrf.mxu0
      %v980 = vpop.f32.mrf.mxu0
      %v981 = vadd.f32 %v744, %v980
      %v982 = vpop.f32.mrf.mxu0
      %983 = vmatprep.mubr.bf16.mxu0 0
      %984 = vmatmul.mubr.bf16.gmra.mxu0 %v813
      %v985 = vpop.f32.mrf.mxu0
      %v986 = vadd.f32 %v749, %v985
      %v987 = vpop.f32.mrf.mxu0
      %v988 = vpop.f32.mrf.mxu0
      %v989 = vadd.f32 %v752, %v988
      %v990 = vpop.f32.mrf.mxu0
      %991 = vdwg.mxu0
      %s992 = scalar_lea.vmem %s1, 64
      %v993 = vld [vmem:[%s992] sm:$0xf]
      %v994 = vld [vmem:[%s992 + $0x4] sm:$0xf]
      %v995 = vld [vmem:[%s992 + $0x8] sm:$0xf]
      %v996 = vld [vmem:[%s992 + $0xc] sm:$0xf]
      %v997 = vld [vmem:[%s992 + $0x10] sm:$0xf]
      %v998 = vld [vmem:[%s992 + $0x14] sm:$0xf]
      %v999 = vld [vmem:[%s992 + $0x18] sm:$0xf]
      %v1000 = vld [vmem:[%s992 + $0x1c] sm:$0xf]
      %vm1001 = vcmask 1046528
      %v1002 = vrot.slane %v331, 1
      %v1003 = vrot.slane %v332, 1
      %v1004 = vsel %vm1001, %v1002, %v1003
      %v1005 = vrot.slane %v333, 1
      %v1006 = vsel %vm1001, %v1003, %v1005
      %v1007 = vrot.slane %v334, 1
      %v1008 = vsel %vm1001, %v1005, %v1007
      %v1009 = vrot.slane %v335, 1
      %v1010 = vsel %vm1001, %v1007, %v1009
      %v1011 = vrot.slane %v336, 1
      %v1012 = vsel %vm1001, %v1009, %v1011
      %v1013 = vrot.slane %v337, 1
      %v1014 = vsel %vm1001, %v1011, %v1013
      %v1015 = vrot.slane %v338, 1
      %v1016 = vsel %vm1001, %v1013, %v1015
      %v1017 = vrot.slane %v339, 1
      %v1018 = vsel %vm1001, %v1015, %v1017
      %v1019 = vrot.slane %v340, 1
      %v1020 = vsel %vm1001, %v1017, %v1019
      %v1021 = vrot.slane %v341, 1
      %v1022 = vsel %vm1001, %v1019, %v1021
      %v1023 = vrot.slane %v342, 1
      %v1024 = vsel %vm1001, %v1021, %v1023
      %v1025 = vrot.slane %v343, 1
      %v1026 = vsel %vm1001, %v1023, %v1025
      %v1027 = vrot.slane %v344, 1
      %v1028 = vsel %vm1001, %v1025, %v1027
      %v1029 = vrot.slane %v345, 1
      %v1030 = vsel %vm1001, %v1027, %v1029
      %v1031 = vrot.slane %v346, 1
      %v1032 = vsel %vm1001, %v1029, %v1031
      %v1033 = vrot.slane %v347, 1
      %v1034 = vsel %vm1001, %v1031, %v1033
      %v1035 = vrot.slane %v348, 1
      %v1036 = vsel %vm1001, %v1033, %v1035
      %v1037 = vrot.slane %v349, 1
      %v1038 = vsel %vm1001, %v1035, %v1037
      %v1047 = vunpack.c.l.b16 %v993
      %v1048 = vunpack.c.l.b16 %v994
      %v1049 = vunpack.c.l.b16 %v995
      %v1050 = vunpack.c.l.b16 %v996
      %v1051 = vunpack.c.l.b16 %v997
      %v1052 = vunpack.c.l.b16 %v998
      %v1053 = vunpack.c.l.b16 %v999
      %v1054 = vunpack.c.l.b16 %v1000
      %v1055 = vpack.c.b16 %v1048, %v1047
      %v1056 = vpack.c.b16 %v1050, %v1049
      %v1057 = vpack.c.b16 %v1052, %v1051
      %v1058 = vpack.c.b16 %v1054, %v1053
      %v1064 = vsel %vm523, %v1004, 0
      %v1067 = vsel %vm523, %v1006, 0
      %v1070 = vsel %vm523, %v1008, 0
      %v1073 = vsel %vm523, %v1010, 0
      %v1076 = vsel %vm523, %v1012, 0
      %v1079 = vsel %vm523, %v1014, 0
      %v1082 = vsel %vm523, %v1016, 0
      %v1085 = vsel %vm523, %v1018, 0
      %v1088 = vsel %vm523, %v1020, 0
      %v1091 = vsel %vm523, %v1022, 0
      %v1094 = vsel %vm523, %v1024, 0
      %v1097 = vsel %vm523, %v1026, 0
      %v1100 = vsel %vm523, %v1028, 0
      %v1103 = vsel %vm523, %v1030, 0
      %v1106 = vsel %vm523, %v1032, 0
      %v1109 = vsel %vm523, %v1034, 0
      %v1112 = vsel %vm523, %v1036, 0
      %v1115 = vsel %vm523, %v1038, 0
      %1117 = vmatprep.subr.bf16.mxu0 0
      %1118 = vmatpush1.bf16.msra.mxu0 0
      %1119 = vmatprep.subr.bf16.mxu0 0
      %1120 = vmatpush1.bf16.msra.mxu0 0
      %1121 = vmatprep.subr.bf16.mxu0 0
      %1122 = vmatpush1.bf16.msra.mxu0 0
      %1123 = vmatprep.subr.bf16.mxu0 0
      %1124 = vmatpush1.bf16.msra.mxu0 0
      %1125 = vmatprep.subr.bf16.mxu0 0
      %1126 = vmatpush1.bf16.msra.mxu0 %v1058
      %1127 = vmatprep.subr.bf16.mxu0 0
      %1128 = vmatpush1.bf16.msra.mxu0 %v1057
      %1129 = vmatprep.subr.bf16.mxu0 0
      %1130 = vmatpush1.bf16.msra.mxu0 %v1056
      %1131 = vmatprep.subr.bf16.mxu0 0
      %1132 = vmatpush1.bf16.msra.mxu0 %v1055
      %1133 = vmatprep.subr.bf16.mxu0 0
      %1134 = vmatpush2.bf16.msra.mxu0 0
      %1135 = vmatprep.subr.bf16.mxu0 0
      %1136 = vmatpush2.bf16.msra.mxu0 0
      %1137 = vmatprep.subr.bf16.mxu0 0
      %1138 = vmatpush2.bf16.msra.mxu0 0
      %1139 = vmatprep.subr.bf16.mxu0 0
      %1140 = vmatpush2.bf16.msra.mxu0 0
      %1141 = vmatprep.subr.bf16.mxu0 0
      %1142 = vmatpush2.bf16.msra.mxu0 0
      %1143 = vmatprep.subr.bf16.mxu0 0
      %1144 = vmatpush2.bf16.msra.mxu0 0
      %1145 = vmatprep.subr.bf16.mxu0 0
      %1146 = vmatpush2.bf16.msra.mxu0 0
      %1147 = vmatprep.subr.bf16.mxu0 0
      %1148 = vmatpush2.bf16.msra.mxu0 0
      %1149 = vmatprep.mubr.bf16.mxu0 0
      %1150 = vmatmul.mubr.bf16.gmra.mxu0 %v1064
      %v1151 = vpop.f32.mrf.mxu0
      %v1152 = vadd.f32 0.0, %v1151
      %v1153 = vpop.f32.mrf.mxu0
      %v1154 = vpop.f32.mrf.mxu0
      %v1155 = vadd.f32 0.0, %v1154
      %v1156 = vpop.f32.mrf.mxu0
      %1157 = vmatprep.mubr.bf16.mxu0 0
      %1158 = vmatmul.mubr.bf16.gmra.mxu0 %v1067
      %v1159 = vpop.f32.mrf.mxu0
      %v1160 = vadd.f32 0.0, %v1159
      %v1161 = vpop.f32.mrf.mxu0
      %v1162 = vpop.f32.mrf.mxu0
      %v1163 = vadd.f32 0.0, %v1162
      %v1164 = vpop.f32.mrf.mxu0
      %1165 = vmatprep.mubr.bf16.mxu0 0
      %1166 = vmatmul.mubr.bf16.gmra.mxu0 %v1070
      %v1167 = vpop.f32.mrf.mxu0
      %v1168 = vadd.f32 0.0, %v1167
      %v1169 = vpop.f32.mrf.mxu0
      %v1170 = vpop.f32.mrf.mxu0
      %v1171 = vadd.f32 0.0, %v1170
      %v1172 = vpop.f32.mrf.mxu0
      %1173 = vmatprep.mubr.bf16.mxu0 0
      %1174 = vmatmul.mubr.bf16.gmra.mxu0 %v1073
      %v1175 = vpop.f32.mrf.mxu0
      %v1176 = vadd.f32 0.0, %v1175
      %v1177 = vpop.f32.mrf.mxu0
      %v1178 = vpop.f32.mrf.mxu0
      %v1179 = vadd.f32 0.0, %v1178
      %v1180 = vpop.f32.mrf.mxu0
      %1181 = vmatprep.mubr.bf16.mxu0 0
      %1182 = vmatmul.mubr.bf16.gmra.mxu0 %v1076
      %v1183 = vpop.f32.mrf.mxu0
      %v1184 = vadd.f32 0.0, %v1183
      %v1185 = vpop.f32.mrf.mxu0
      %v1186 = vpop.f32.mrf.mxu0
      %v1187 = vadd.f32 0.0, %v1186
      %v1188 = vpop.f32.mrf.mxu0
      %1189 = vmatprep.mubr.bf16.mxu0 0
      %1190 = vmatmul.mubr.bf16.gmra.mxu0 %v1079
      %v1191 = vpop.f32.mrf.mxu0
      %v1192 = vadd.f32 0.0, %v1191
      %v1193 = vpop.f32.mrf.mxu0
      %v1194 = vpop.f32.mrf.mxu0
      %v1195 = vadd.f32 0.0, %v1194
      %v1196 = vpop.f32.mrf.mxu0
      %1197 = vmatprep.mubr.bf16.mxu0 0
      %1198 = vmatmul.mubr.bf16.gmra.mxu0 %v1082
      %v1199 = vpop.f32.mrf.mxu0
      %v1200 = vadd.f32 0.0, %v1199
      %v1201 = vpop.f32.mrf.mxu0
      %v1202 = vpop.f32.mrf.mxu0
      %v1203 = vadd.f32 0.0, %v1202
      %v1204 = vpop.f32.mrf.mxu0
      %1205 = vmatprep.mubr.bf16.mxu0 0
      %1206 = vmatmul.mubr.bf16.gmra.mxu0 %v1085
      %v1207 = vpop.f32.mrf.mxu0
      %v1208 = vadd.f32 0.0, %v1207
      %v1209 = vpop.f32.mrf.mxu0
      %v1210 = vpop.f32.mrf.mxu0
      %v1211 = vadd.f32 0.0, %v1210
      %v1212 = vpop.f32.mrf.mxu0
      %1213 = vmatprep.mubr.bf16.mxu0 0
      %1214 = vmatmul.mubr.bf16.gmra.mxu0 %v1088
      %v1215 = vpop.f32.mrf.mxu0
      %v1216 = vadd.f32 0.0, %v1215
      %v1217 = vpop.f32.mrf.mxu0
      %v1218 = vpop.f32.mrf.mxu0
      %v1219 = vadd.f32 0.0, %v1218
      %v1220 = vpop.f32.mrf.mxu0
      %1221 = vmatprep.mubr.bf16.mxu0 0
      %1222 = vmatmul.mubr.bf16.gmra.mxu0 %v1091
      %v1223 = vpop.f32.mrf.mxu0
      %v1224 = vadd.f32 0.0, %v1223
      %v1225 = vpop.f32.mrf.mxu0
      %v1226 = vpop.f32.mrf.mxu0
      %v1227 = vadd.f32 0.0, %v1226
      %v1228 = vpop.f32.mrf.mxu0
      %1229 = vmatprep.mubr.bf16.mxu0 0
      %1230 = vmatmul.mubr.bf16.gmra.mxu0 %v1094
      %v1231 = vpop.f32.mrf.mxu0
      %v1232 = vadd.f32 0.0, %v1231
      %v1233 = vpop.f32.mrf.mxu0
      %v1234 = vpop.f32.mrf.mxu0
      %v1235 = vadd.f32 0.0, %v1234
      %v1236 = vpop.f32.mrf.mxu0
      %1237 = vmatprep.mubr.bf16.mxu0 0
      %1238 = vmatmul.mubr.bf16.gmra.mxu0 %v1097
      %v1239 = vpop.f32.mrf.mxu0
      %v1240 = vadd.f32 0.0, %v1239
      %v1241 = vpop.f32.mrf.mxu0
      %v1242 = vpop.f32.mrf.mxu0
      %v1243 = vadd.f32 0.0, %v1242
      %v1244 = vpop.f32.mrf.mxu0
      %1245 = vmatprep.mubr.bf16.mxu0 0
      %1246 = vmatmul.mubr.bf16.gmra.mxu0 %v1100
      %v1247 = vpop.f32.mrf.mxu0
      %v1248 = vadd.f32 0.0, %v1247
      %v1249 = vpop.f32.mrf.mxu0
      %v1250 = vpop.f32.mrf.mxu0
      %v1251 = vadd.f32 0.0, %v1250
      %v1252 = vpop.f32.mrf.mxu0
      %1253 = vmatprep.mubr.bf16.mxu0 0
      %1254 = vmatmul.mubr.bf16.gmra.mxu0 %v1103
      %v1255 = vpop.f32.mrf.mxu0
      %v1256 = vadd.f32 0.0, %v1255
      %v1257 = vpop.f32.mrf.mxu0
      %v1258 = vpop.f32.mrf.mxu0
      %v1259 = vadd.f32 0.0, %v1258
      %v1260 = vpop.f32.mrf.mxu0
      %1261 = vmatprep.mubr.bf16.mxu0 0
      %1262 = vmatmul.mubr.bf16.gmra.mxu0 %v1106
      %v1263 = vpop.f32.mrf.mxu0
      %v1264 = vadd.f32 0.0, %v1263
      %v1265 = vpop.f32.mrf.mxu0
      %v1266 = vpop.f32.mrf.mxu0
      %v1267 = vadd.f32 0.0, %v1266
      %v1268 = vpop.f32.mrf.mxu0
      %1269 = vmatprep.mubr.bf16.mxu0 0
      %1270 = vmatmul.mubr.bf16.gmra.mxu0 %v1109
      %v1271 = vpop.f32.mrf.mxu0
      %v1272 = vadd.f32 0.0, %v1271
      %v1273 = vpop.f32.mrf.mxu0
      %v1274 = vpop.f32.mrf.mxu0
      %v1275 = vadd.f32 0.0, %v1274
      %v1276 = vpop.f32.mrf.mxu0
      %1277 = vmatprep.mubr.bf16.mxu0 0
      %1278 = vmatmul.mubr.bf16.gmra.mxu0 %v1112
      %v1279 = vpop.f32.mrf.mxu0
      %v1280 = vadd.f32 0.0, %v1279
      %v1281 = vpop.f32.mrf.mxu0
      %v1282 = vpop.f32.mrf.mxu0
      %v1283 = vadd.f32 0.0, %v1282
      %v1284 = vpop.f32.mrf.mxu0
      %1285 = vmatprep.mubr.bf16.mxu0 0
      %1286 = vmatmul.mubr.bf16.gmra.mxu0 %v1115
      %v1287 = vpop.f32.mrf.mxu0
      %v1288 = vadd.f32 0.0, %v1287
      %v1289 = vpop.f32.mrf.mxu0
      %v1290 = vpop.f32.mrf.mxu0
      %v1291 = vadd.f32 0.0, %v1290
      %v1292 = vpop.f32.mrf.mxu0
      %1293 = vdwg.mxu0
      %v1294 = vadd.f32 %v850, %v1152
      %v1295 = vadd.f32 %v853, %v1155
      %v1296 = vadd.f32 %v858, %v1160
      %v1297 = vadd.f32 %v861, %v1163
      %v1298 = vadd.f32 %v866, %v1168
      %v1299 = vadd.f32 %v869, %v1171
      %v1300 = vadd.f32 %v874, %v1176
      %v1301 = vadd.f32 %v877, %v1179
      %v1302 = vadd.f32 %v882, %v1184
      %v1303 = vadd.f32 %v885, %v1187
      %v1304 = vadd.f32 %v890, %v1192
      %v1305 = vadd.f32 %v893, %v1195
      %v1306 = vadd.f32 %v898, %v1200
      %v1307 = vadd.f32 %v901, %v1203
      %v1308 = vadd.f32 %v906, %v1208
      %v1309 = vadd.f32 %v909, %v1211
      %v1310 = vadd.f32 %v914, %v1216
      %v1311 = vadd.f32 %v917, %v1219
      %v1312 = vadd.f32 %v922, %v1224
      %v1313 = vadd.f32 %v925, %v1227
      %v1314 = vadd.f32 %v930, %v1232
      %v1315 = vadd.f32 %v933, %v1235
      %v1316 = vadd.f32 %v938, %v1240
      %v1317 = vadd.f32 %v941, %v1243
      %v1318 = vadd.f32 %v946, %v1248
      %v1319 = vadd.f32 %v949, %v1251
      %v1320 = vadd.f32 %v954, %v1256
      %v1321 = vadd.f32 %v957, %v1259
      %v1322 = vadd.f32 %v962, %v1264
      %v1323 = vadd.f32 %v965, %v1267
      %v1324 = vadd.f32 %v970, %v1272
      %v1325 = vadd.f32 %v973, %v1275
      %v1326 = vadd.f32 %v978, %v1280
      %v1327 = vadd.f32 %v981, %v1283
      %v1328 = vadd.f32 %v986, %v1288
      %v1329 = vadd.f32 %v989, %v1291
      %s1330 = scalar_lea.vmem %s1, 96
      %v1331 = vld [vmem:[%s1330] sm:$0xf]
      %v1332 = vld [vmem:[%s1330 + $0x4] sm:$0xf]
      %v1333 = vld [vmem:[%s1330 + $0x8] sm:$0xf]
      %v1334 = vld [vmem:[%s1330 + $0xc] sm:$0xf]
      %v1335 = vld [vmem:[%s1330 + $0x10] sm:$0xf]
      %v1336 = vld [vmem:[%s1330 + $0x14] sm:$0xf]
      %v1337 = vld [vmem:[%s1330 + $0x18] sm:$0xf]
      %v1338 = vld [vmem:[%s1330 + $0x1c] sm:$0xf]
      %v1341 = vunpack.c.l.b16 %v236
      %v1342 = vunpack.c.l.b16 %v237
      %v1343 = vpack.c.b16 %v1341, %v330
      %v1344 = vpack.c.b16 %v1342, %v1342
      %v1345 = vrot.slane %v1343, 1
      %v1346 = vsel %vm1001, %v1035, %v1345
      %v1347 = vrot.slane %v1344, 1
      %v1348 = vsel %vm1001, %v1345, %v1347
      %v1357 = vunpack.c.l.b16 %v1331
      %v1358 = vunpack.c.l.b16 %v1332
      %v1359 = vunpack.c.l.b16 %v1333
      %v1360 = vunpack.c.l.b16 %v1334
      %v1361 = vunpack.c.l.b16 %v1335
      %v1362 = vunpack.c.l.b16 %v1336
      %v1363 = vunpack.c.l.b16 %v1337
      %v1364 = vunpack.c.l.b16 %v1338
      %v1365 = vpack.c.b16 %v1358, %v1357
      %v1366 = vpack.c.b16 %v1360, %v1359
      %v1367 = vpack.c.b16 %v1362, %v1361
      %v1368 = vpack.c.b16 %v1364, %v1363
      %v1374 = vsel %vm523, %v1346, 0
      %v1377 = vsel %vm523, %v1348, 0
      %1379 = vmatprep.subr.bf16.mxu0 0
      %1380 = vmatpush1.bf16.msra.mxu0 0
      %1381 = vmatprep.subr.bf16.mxu0 0
      %1382 = vmatpush1.bf16.msra.mxu0 0
      %1383 = vmatprep.subr.bf16.mxu0 0
      %1384 = vmatpush1.bf16.msra.mxu0 0
      %1385 = vmatprep.subr.bf16.mxu0 0
      %1386 = vmatpush1.bf16.msra.mxu0 0
      %1387 = vmatprep.subr.bf16.mxu0 0
      %1388 = vmatpush1.bf16.msra.mxu0 %v1368
      %1389 = vmatprep.subr.bf16.mxu0 0
      %1390 = vmatpush1.bf16.msra.mxu0 %v1367
      %1391 = vmatprep.subr.bf16.mxu0 0
      %1392 = vmatpush1.bf16.msra.mxu0 %v1366
      %1393 = vmatprep.subr.bf16.mxu0 0
      %1394 = vmatpush1.bf16.msra.mxu0 %v1365
      %1395 = vmatprep.subr.bf16.mxu0 0
      %1396 = vmatpush2.bf16.msra.mxu0 0
      %1397 = vmatprep.subr.bf16.mxu0 0
      %1398 = vmatpush2.bf16.msra.mxu0 0
      %1399 = vmatprep.subr.bf16.mxu0 0
      %1400 = vmatpush2.bf16.msra.mxu0 0
      %1401 = vmatprep.subr.bf16.mxu0 0
      %1402 = vmatpush2.bf16.msra.mxu0 0
      %1403 = vmatprep.subr.bf16.mxu0 0
      %1404 = vmatpush2.bf16.msra.mxu0 0
      %1405 = vmatprep.subr.bf16.mxu0 0
      %1406 = vmatpush2.bf16.msra.mxu0 0
      %1407 = vmatprep.subr.bf16.mxu0 0
      %1408 = vmatpush2.bf16.msra.mxu0 0
      %1409 = vmatprep.subr.bf16.mxu0 0
      %1410 = vmatpush2.bf16.msra.mxu0 0
      %1411 = vmatprep.mubr.bf16.mxu0 0
      %1412 = vmatmul.mubr.bf16.gmra.mxu0 %v1067
      %v1413 = vpop.f32.mrf.mxu0
      %v1414 = vadd.f32 0.0, %v1413
      %v1415 = vpop.f32.mrf.mxu0
      %v1416 = vpop.f32.mrf.mxu0
      %v1417 = vadd.f32 0.0, %v1416
      %v1418 = vpop.f32.mrf.mxu0
      %1419 = vmatprep.mubr.bf16.mxu0 0
      %1420 = vmatmul.mubr.bf16.gmra.mxu0 %v1070
      %v1421 = vpop.f32.mrf.mxu0
      %v1422 = vadd.f32 0.0, %v1421
      %v1423 = vpop.f32.mrf.mxu0
      %v1424 = vpop.f32.mrf.mxu0
      %v1425 = vadd.f32 0.0, %v1424
      %v1426 = vpop.f32.mrf.mxu0
      %1427 = vmatprep.mubr.bf16.mxu0 0
      %1428 = vmatmul.mubr.bf16.gmra.mxu0 %v1073
      %v1429 = vpop.f32.mrf.mxu0
      %v1430 = vadd.f32 0.0, %v1429
      %v1431 = vpop.f32.mrf.mxu0
      %v1432 = vpop.f32.mrf.mxu0
      %v1433 = vadd.f32 0.0, %v1432
      %v1434 = vpop.f32.mrf.mxu0
      %1435 = vmatprep.mubr.bf16.mxu0 0
      %1436 = vmatmul.mubr.bf16.gmra.mxu0 %v1076
      %v1437 = vpop.f32.mrf.mxu0
      %v1438 = vadd.f32 0.0, %v1437
      %v1439 = vpop.f32.mrf.mxu0
      %v1440 = vpop.f32.mrf.mxu0
      %v1441 = vadd.f32 0.0, %v1440
      %v1442 = vpop.f32.mrf.mxu0
      %1443 = vmatprep.mubr.bf16.mxu0 0
      %1444 = vmatmul.mubr.bf16.gmra.mxu0 %v1079
      %v1445 = vpop.f32.mrf.mxu0
      %v1446 = vadd.f32 0.0, %v1445
      %v1447 = vpop.f32.mrf.mxu0
      %v1448 = vpop.f32.mrf.mxu0
      %v1449 = vadd.f32 0.0, %v1448
      %v1450 = vpop.f32.mrf.mxu0
      %1451 = vmatprep.mubr.bf16.mxu0 0
      %1452 = vmatmul.mubr.bf16.gmra.mxu0 %v1082
      %v1453 = vpop.f32.mrf.mxu0
      %v1454 = vadd.f32 0.0, %v1453
      %v1455 = vpop.f32.mrf.mxu0
      %v1456 = vpop.f32.mrf.mxu0
      %v1457 = vadd.f32 0.0, %v1456
      %v1458 = vpop.f32.mrf.mxu0
      %1459 = vmatprep.mubr.bf16.mxu0 0
      %1460 = vmatmul.mubr.bf16.gmra.mxu0 %v1085
      %v1461 = vpop.f32.mrf.mxu0
      %v1462 = vadd.f32 0.0, %v1461
      %v1463 = vpop.f32.mrf.mxu0
      %v1464 = vpop.f32.mrf.mxu0
      %v1465 = vadd.f32 0.0, %v1464
      %v1466 = vpop.f32.mrf.mxu0
      %1467 = vmatprep.mubr.bf16.mxu0 0
      %1468 = vmatmul.mubr.bf16.gmra.mxu0 %v1088
      %v1469 = vpop.f32.mrf.mxu0
      %v1470 = vadd.f32 0.0, %v1469
      %v1471 = vpop.f32.mrf.mxu0
      %v1472 = vpop.f32.mrf.mxu0
      %v1473 = vadd.f32 0.0, %v1472
      %v1474 = vpop.f32.mrf.mxu0
      %1475 = vmatprep.mubr.bf16.mxu0 0
      %1476 = vmatmul.mubr.bf16.gmra.mxu0 %v1091
      %v1477 = vpop.f32.mrf.mxu0
      %v1478 = vadd.f32 0.0, %v1477
      %v1479 = vpop.f32.mrf.mxu0
      %v1480 = vpop.f32.mrf.mxu0
      %v1481 = vadd.f32 0.0, %v1480
      %v1482 = vpop.f32.mrf.mxu0
      %1483 = vmatprep.mubr.bf16.mxu0 0
      %1484 = vmatmul.mubr.bf16.gmra.mxu0 %v1094
      %v1485 = vpop.f32.mrf.mxu0
      %v1486 = vadd.f32 0.0, %v1485
      %v1487 = vpop.f32.mrf.mxu0
      %v1488 = vpop.f32.mrf.mxu0
      %v1489 = vadd.f32 0.0, %v1488
      %v1490 = vpop.f32.mrf.mxu0
      %1491 = vmatprep.mubr.bf16.mxu0 0
      %1492 = vmatmul.mubr.bf16.gmra.mxu0 %v1097
      %v1493 = vpop.f32.mrf.mxu0
      %v1494 = vadd.f32 0.0, %v1493
      %v1495 = vpop.f32.mrf.mxu0
      %v1496 = vpop.f32.mrf.mxu0
      %v1497 = vadd.f32 0.0, %v1496
      %v1498 = vpop.f32.mrf.mxu0
      %1499 = vmatprep.mubr.bf16.mxu0 0
      %1500 = vmatmul.mubr.bf16.gmra.mxu0 %v1100
      %v1501 = vpop.f32.mrf.mxu0
      %v1502 = vadd.f32 0.0, %v1501
      %v1503 = vpop.f32.mrf.mxu0
      %v1504 = vpop.f32.mrf.mxu0
      %v1505 = vadd.f32 0.0, %v1504
      %v1506 = vpop.f32.mrf.mxu0
      %1507 = vmatprep.mubr.bf16.mxu0 0
      %1508 = vmatmul.mubr.bf16.gmra.mxu0 %v1103
      %v1509 = vpop.f32.mrf.mxu0
      %v1510 = vadd.f32 0.0, %v1509
      %v1511 = vpop.f32.mrf.mxu0
      %v1512 = vpop.f32.mrf.mxu0
      %v1513 = vadd.f32 0.0, %v1512
      %v1514 = vpop.f32.mrf.mxu0
      %1515 = vmatprep.mubr.bf16.mxu0 0
      %1516 = vmatmul.mubr.bf16.gmra.mxu0 %v1106
      %v1517 = vpop.f32.mrf.mxu0
      %v1518 = vadd.f32 0.0, %v1517
      %v1519 = vpop.f32.mrf.mxu0
      %v1520 = vpop.f32.mrf.mxu0
      %v1521 = vadd.f32 0.0, %v1520
      %v1522 = vpop.f32.mrf.mxu0
      %1523 = vmatprep.mubr.bf16.mxu0 0
      %1524 = vmatmul.mubr.bf16.gmra.mxu0 %v1109
      %v1525 = vpop.f32.mrf.mxu0
      %v1526 = vadd.f32 0.0, %v1525
      %v1527 = vpop.f32.mrf.mxu0
      %v1528 = vpop.f32.mrf.mxu0
      %v1529 = vadd.f32 0.0, %v1528
      %v1530 = vpop.f32.mrf.mxu0
      %1531 = vmatprep.mubr.bf16.mxu0 0
      %1532 = vmatmul.mubr.bf16.gmra.mxu0 %v1112
      %v1533 = vpop.f32.mrf.mxu0
      %v1534 = vadd.f32 0.0, %v1533
      %v1535 = vpop.f32.mrf.mxu0
      %v1536 = vpop.f32.mrf.mxu0
      %v1537 = vadd.f32 0.0, %v1536
      %v1538 = vpop.f32.mrf.mxu0
      %1539 = vmatprep.mubr.bf16.mxu0 0
      %1540 = vmatmul.mubr.bf16.gmra.mxu0 %v1374
      %v1541 = vpop.f32.mrf.mxu0
      %v1542 = vadd.f32 0.0, %v1541
      %v1543 = vpop.f32.mrf.mxu0
      %v1544 = vpop.f32.mrf.mxu0
      %v1545 = vadd.f32 0.0, %v1544
      %v1546 = vpop.f32.mrf.mxu0
      %1547 = vmatprep.mubr.bf16.mxu0 0
      %1548 = vmatmul.mubr.bf16.gmra.mxu0 %v1377
      %v1549 = vpop.f32.mrf.mxu0
      %v1550 = vadd.f32 0.0, %v1549
      %v1551 = vpop.f32.mrf.mxu0
      %v1552 = vpop.f32.mrf.mxu0
      %v1553 = vadd.f32 0.0, %v1552
      %v1554 = vpop.f32.mrf.mxu0
      %1555 = vdwg.mxu0
      %v1556 = vadd.f32 %v1294, %v1414
      %v1557 = vadd.f32 %v1295, %v1417
      %v1558 = vadd.f32 %v1296, %v1422
      %v1559 = vadd.f32 %v1297, %v1425
      %v1560 = vadd.f32 %v1298, %v1430
      %v1561 = vadd.f32 %v1299, %v1433
      %v1562 = vadd.f32 %v1300, %v1438
      %v1563 = vadd.f32 %v1301, %v1441
      %v1564 = vadd.f32 %v1302, %v1446
      %v1565 = vadd.f32 %v1303, %v1449
      %v1566 = vadd.f32 %v1304, %v1454
      %v1567 = vadd.f32 %v1305, %v1457
      %v1568 = vadd.f32 %v1306, %v1462
      %v1569 = vadd.f32 %v1307, %v1465
      %v1570 = vadd.f32 %v1308, %v1470
      %v1571 = vadd.f32 %v1309, %v1473
      %v1572 = vadd.f32 %v1310, %v1478
      %v1573 = vadd.f32 %v1311, %v1481
      %v1574 = vadd.f32 %v1312, %v1486
      %v1575 = vadd.f32 %v1313, %v1489
      %v1576 = vadd.f32 %v1314, %v1494
      %v1577 = vadd.f32 %v1315, %v1497
      %v1578 = vadd.f32 %v1316, %v1502
      %v1579 = vadd.f32 %v1317, %v1505
      %v1580 = vadd.f32 %v1318, %v1510
      %v1581 = vadd.f32 %v1319, %v1513
      %v1582 = vadd.f32 %v1320, %v1518
      %v1583 = vadd.f32 %v1321, %v1521
      %v1584 = vadd.f32 %v1322, %v1526
      %v1585 = vadd.f32 %v1323, %v1529
      %v1586 = vadd.f32 %v1324, %v1534
      %v1587 = vadd.f32 %v1325, %v1537
      %v1588 = vadd.f32 %v1326, %v1542
      %v1589 = vadd.f32 %v1327, %v1545
      %v1590 = vadd.f32 %v1328, %v1550
      %v1591 = vadd.f32 %v1329, %v1553
      %s1592 = scalar_lea.vmem %s1, 128
      %v1593 = vld [vmem:[%s1592] sm:$0xf]
      %v1594 = vld [vmem:[%s1592 + $0x4] sm:$0xf]
      %v1595 = vld [vmem:[%s1592 + $0x8] sm:$0xf]
      %v1596 = vld [vmem:[%s1592 + $0xc] sm:$0xf]
      %v1597 = vld [vmem:[%s1592 + $0x10] sm:$0xf]
      %v1598 = vld [vmem:[%s1592 + $0x14] sm:$0xf]
      %v1599 = vld [vmem:[%s1592 + $0x18] sm:$0xf]
      %v1600 = vld [vmem:[%s1592 + $0x1c] sm:$0xf]
      %vm1601 = vsmask.f32 6400
      %v1602 = vrot.slane %v363, 1
      %v1603 = vrot.slane %v359, 2
      %v1604 = vor.u32 %v1602, %v1603
      %v1605 = vrot.slane %v371, 1
      %v1606 = vrot.slane %v367, 2
      %v1607 = vor.u32 %v1605, %v1606
      %v1608 = vsel %vm1601, %v1604, %v1607
      %v1609 = vrot.slane %v379, 1
      %v1610 = vrot.slane %v375, 2
      %v1611 = vor.u32 %v1609, %v1610
      %v1612 = vsel %vm1601, %v1607, %v1611
      %v1613 = vrot.slane %v387, 1
      %v1614 = vrot.slane %v383, 2
      %v1615 = vor.u32 %v1613, %v1614
      %v1616 = vsel %vm1601, %v1611, %v1615
      %v1617 = vrot.slane %v395, 1
      %v1618 = vrot.slane %v391, 2
      %v1619 = vor.u32 %v1617, %v1618
      %v1620 = vsel %vm1601, %v1615, %v1619
      %v1621 = vrot.slane %v403, 1
      %v1622 = vrot.slane %v399, 2
      %v1623 = vor.u32 %v1621, %v1622
      %v1624 = vsel %vm1601, %v1619, %v1623
      %v1625 = vrot.slane %v411, 1
      %v1626 = vrot.slane %v407, 2
      %v1627 = vor.u32 %v1625, %v1626
      %v1628 = vsel %vm1601, %v1623, %v1627
      %v1629 = vrot.slane %v419, 1
      %v1630 = vrot.slane %v415, 2
      %v1631 = vor.u32 %v1629, %v1630
      %v1632 = vsel %vm1601, %v1627, %v1631
      %v1633 = vrot.slane %v427, 1
      %v1634 = vrot.slane %v423, 2
      %v1635 = vor.u32 %v1633, %v1634
      %v1636 = vsel %vm1601, %v1631, %v1635
      %v1637 = vrot.slane %v435, 1
      %v1638 = vrot.slane %v431, 2
      %v1639 = vor.u32 %v1637, %v1638
      %v1640 = vsel %vm1601, %v1635, %v1639
      %v1641 = vrot.slane %v443, 1
      %v1642 = vrot.slane %v439, 2
      %v1643 = vor.u32 %v1641, %v1642
      %v1644 = vsel %vm1601, %v1639, %v1643
      %v1645 = vrot.slane %v451, 1
      %v1646 = vrot.slane %v447, 2
      %v1647 = vor.u32 %v1645, %v1646
      %v1648 = vsel %vm1601, %v1643, %v1647
      %v1649 = vrot.slane %v459, 1
      %v1650 = vrot.slane %v455, 2
      %v1651 = vor.u32 %v1649, %v1650
      %v1652 = vsel %vm1601, %v1647, %v1651
      %v1653 = vrot.slane %v467, 1
      %v1654 = vrot.slane %v463, 2
      %v1655 = vor.u32 %v1653, %v1654
      %v1656 = vsel %vm1601, %v1651, %v1655
      %v1657 = vrot.slane %v475, 1
      %v1658 = vrot.slane %v471, 2
      %v1659 = vor.u32 %v1657, %v1658
      %v1660 = vsel %vm1601, %v1655, %v1659
      %v1661 = vrot.slane %v483, 1
      %v1662 = vrot.slane %v479, 2
      %v1663 = vor.u32 %v1661, %v1662
      %v1664 = vsel %vm1601, %v1659, %v1663
      %v1665 = vrot.slane %v491, 1
      %v1666 = vrot.slane %v487, 2
      %v1667 = vor.u32 %v1665, %v1666
      %v1668 = vsel %vm1601, %v1663, %v1667
      %v1670 = vshrl.u32 %v1343, 16
      %v1672 = vrot.slane %v1670, 1
      %v1673 = vshll.u32 %v1343, 16
      %v1675 = vrot.slane %v1673, 2
      %v1676 = vor.u32 %v1672, %v1675
      %v1677 = vsel %vm1601, %v1667, %v1676
      %v1679 = vshrl.u32 %v1344, 16
      %v1681 = vrot.slane %v1679, 1
      %v1682 = vshll.u32 %v1344, 16
      %v1684 = vrot.slane %v1682, 2
      %v1685 = vor.u32 %v1681, %v1684
      %v1686 = vsel %vm1601, %v1676, %v1685
      %v1695 = vunpack.c.l.b16 %v1593
      %v1696 = vunpack.c.l.b16 %v1594
      %v1697 = vunpack.c.l.b16 %v1595
      %v1698 = vunpack.c.l.b16 %v1596
      %v1699 = vunpack.c.l.b16 %v1597
      %v1700 = vunpack.c.l.b16 %v1598
      %v1701 = vunpack.c.l.b16 %v1599
      %v1702 = vunpack.c.l.b16 %v1600
      %v1703 = vpack.c.b16 %v1696, %v1695
      %v1704 = vpack.c.b16 %v1698, %v1697
      %v1705 = vpack.c.b16 %v1700, %v1699
      %v1706 = vpack.c.b16 %v1702, %v1701
      %v1712 = vsel %vm523, %v1608, 0
      %v1715 = vsel %vm523, %v1612, 0
      %v1718 = vsel %vm523, %v1616, 0
      %v1721 = vsel %vm523, %v1620, 0
      %v1724 = vsel %vm523, %v1624, 0
      %v1727 = vsel %vm523, %v1628, 0
      %v1730 = vsel %vm523, %v1632, 0
      %v1733 = vsel %vm523, %v1636, 0
      %v1736 = vsel %vm523, %v1640, 0
      %v1739 = vsel %vm523, %v1644, 0
      %v1742 = vsel %vm523, %v1648, 0
      %v1745 = vsel %vm523, %v1652, 0
      %v1748 = vsel %vm523, %v1656, 0
      %v1751 = vsel %vm523, %v1660, 0
      %v1754 = vsel %vm523, %v1664, 0
      %v1757 = vsel %vm523, %v1668, 0
      %v1760 = vsel %vm523, %v1677, 0
      %v1763 = vsel %vm523, %v1686, 0
      %1765 = vmatprep.subr.bf16.mxu0 0
      %1766 = vmatpush1.bf16.msra.mxu0 0
      %1767 = vmatprep.subr.bf16.mxu0 0
      %1768 = vmatpush1.bf16.msra.mxu0 0
      %1769 = vmatprep.subr.bf16.mxu0 0
      %1770 = vmatpush1.bf16.msra.mxu0 0
      %1771 = vmatprep.subr.bf16.mxu0 0
      %1772 = vmatpush1.bf16.msra.mxu0 0
      %1773 = vmatprep.subr.bf16.mxu0 0
      %1774 = vmatpush1.bf16.msra.mxu0 %v1706
      %1775 = vmatprep.subr.bf16.mxu0 0
      %1776 = vmatpush1.bf16.msra.mxu0 %v1705
      %1777 = vmatprep.subr.bf16.mxu0 0
      %1778 = vmatpush1.bf16.msra.mxu0 %v1704
      %1779 = vmatprep.subr.bf16.mxu0 0
      %1780 = vmatpush1.bf16.msra.mxu0 %v1703
      %1781 = vmatprep.subr.bf16.mxu0 0
      %1782 = vmatpush2.bf16.msra.mxu0 0
      %1783 = vmatprep.subr.bf16.mxu0 0
      %1784 = vmatpush2.bf16.msra.mxu0 0
      %1785 = vmatprep.subr.bf16.mxu0 0
      %1786 = vmatpush2.bf16.msra.mxu0 0
      %1787 = vmatprep.subr.bf16.mxu0 0
      %1788 = vmatpush2.bf16.msra.mxu0 0
      %1789 = vmatprep.subr.bf16.mxu0 0
      %1790 = vmatpush2.bf16.msra.mxu0 0
      %1791 = vmatprep.subr.bf16.mxu0 0
      %1792 = vmatpush2.bf16.msra.mxu0 0
      %1793 = vmatprep.subr.bf16.mxu0 0
      %1794 = vmatpush2.bf16.msra.mxu0 0
      %1795 = vmatprep.subr.bf16.mxu0 0
      %1796 = vmatpush2.bf16.msra.mxu0 0
      %1797 = vmatprep.mubr.bf16.mxu0 0
      %1798 = vmatmul.mubr.bf16.gmra.mxu0 %v1712
      %v1799 = vpop.f32.mrf.mxu0
      %v1800 = vadd.f32 0.0, %v1799
      %v1801 = vpop.f32.mrf.mxu0
      %v1802 = vpop.f32.mrf.mxu0
      %v1803 = vadd.f32 0.0, %v1802
      %v1804 = vpop.f32.mrf.mxu0
      %1805 = vmatprep.mubr.bf16.mxu0 0
      %1806 = vmatmul.mubr.bf16.gmra.mxu0 %v1715
      %v1807 = vpop.f32.mrf.mxu0
      %v1808 = vadd.f32 0.0, %v1807
      %v1809 = vpop.f32.mrf.mxu0
      %v1810 = vpop.f32.mrf.mxu0
      %v1811 = vadd.f32 0.0, %v1810
      %v1812 = vpop.f32.mrf.mxu0
      %1813 = vmatprep.mubr.bf16.mxu0 0
      %1814 = vmatmul.mubr.bf16.gmra.mxu0 %v1718
      %v1815 = vpop.f32.mrf.mxu0
      %v1816 = vadd.f32 0.0, %v1815
      %v1817 = vpop.f32.mrf.mxu0
      %v1818 = vpop.f32.mrf.mxu0
      %v1819 = vadd.f32 0.0, %v1818
      %v1820 = vpop.f32.mrf.mxu0
      %1821 = vmatprep.mubr.bf16.mxu0 0
      %1822 = vmatmul.mubr.bf16.gmra.mxu0 %v1721
      %v1823 = vpop.f32.mrf.mxu0
      %v1824 = vadd.f32 0.0, %v1823
      %v1825 = vpop.f32.mrf.mxu0
      %v1826 = vpop.f32.mrf.mxu0
      %v1827 = vadd.f32 0.0, %v1826
      %v1828 = vpop.f32.mrf.mxu0
      %1829 = vmatprep.mubr.bf16.mxu0 0
      %1830 = vmatmul.mubr.bf16.gmra.mxu0 %v1724
      %v1831 = vpop.f32.mrf.mxu0
      %v1832 = vadd.f32 0.0, %v1831
      %v1833 = vpop.f32.mrf.mxu0
      %v1834 = vpop.f32.mrf.mxu0
      %v1835 = vadd.f32 0.0, %v1834
      %v1836 = vpop.f32.mrf.mxu0
      %1837 = vmatprep.mubr.bf16.mxu0 0
      %1838 = vmatmul.mubr.bf16.gmra.mxu0 %v1727
      %v1839 = vpop.f32.mrf.mxu0
      %v1840 = vadd.f32 0.0, %v1839
      %v1841 = vpop.f32.mrf.mxu0
      %v1842 = vpop.f32.mrf.mxu0
      %v1843 = vadd.f32 0.0, %v1842
      %v1844 = vpop.f32.mrf.mxu0
      %1845 = vmatprep.mubr.bf16.mxu0 0
      %1846 = vmatmul.mubr.bf16.gmra.mxu0 %v1730
      %v1847 = vpop.f32.mrf.mxu0
      %v1848 = vadd.f32 0.0, %v1847
      %v1849 = vpop.f32.mrf.mxu0
      %v1850 = vpop.f32.mrf.mxu0
      %v1851 = vadd.f32 0.0, %v1850
      %v1852 = vpop.f32.mrf.mxu0
      %1853 = vmatprep.mubr.bf16.mxu0 0
      %1854 = vmatmul.mubr.bf16.gmra.mxu0 %v1733
      %v1855 = vpop.f32.mrf.mxu0
      %v1856 = vadd.f32 0.0, %v1855
      %v1857 = vpop.f32.mrf.mxu0
      %v1858 = vpop.f32.mrf.mxu0
      %v1859 = vadd.f32 0.0, %v1858
      %v1860 = vpop.f32.mrf.mxu0
      %1861 = vmatprep.mubr.bf16.mxu0 0
      %1862 = vmatmul.mubr.bf16.gmra.mxu0 %v1736
      %v1863 = vpop.f32.mrf.mxu0
      %v1864 = vadd.f32 0.0, %v1863
      %v1865 = vpop.f32.mrf.mxu0
      %v1866 = vpop.f32.mrf.mxu0
      %v1867 = vadd.f32 0.0, %v1866
      %v1868 = vpop.f32.mrf.mxu0
      %1869 = vmatprep.mubr.bf16.mxu0 0
      %1870 = vmatmul.mubr.bf16.gmra.mxu0 %v1739
      %v1871 = vpop.f32.mrf.mxu0
      %v1872 = vadd.f32 0.0, %v1871
      %v1873 = vpop.f32.mrf.mxu0
      %v1874 = vpop.f32.mrf.mxu0
      %v1875 = vadd.f32 0.0, %v1874
      %v1876 = vpop.f32.mrf.mxu0
      %1877 = vmatprep.mubr.bf16.mxu0 0
      %1878 = vmatmul.mubr.bf16.gmra.mxu0 %v1742
      %v1879 = vpop.f32.mrf.mxu0
      %v1880 = vadd.f32 0.0, %v1879
      %v1881 = vpop.f32.mrf.mxu0
      %v1882 = vpop.f32.mrf.mxu0
      %v1883 = vadd.f32 0.0, %v1882
      %v1884 = vpop.f32.mrf.mxu0
      %1885 = vmatprep.mubr.bf16.mxu0 0
      %1886 = vmatmul.mubr.bf16.gmra.mxu0 %v1745
      %v1887 = vpop.f32.mrf.mxu0
      %v1888 = vadd.f32 0.0, %v1887
      %v1889 = vpop.f32.mrf.mxu0
      %v1890 = vpop.f32.mrf.mxu0
      %v1891 = vadd.f32 0.0, %v1890
      %v1892 = vpop.f32.mrf.mxu0
      %1893 = vmatprep.mubr.bf16.mxu0 0
      %1894 = vmatmul.mubr.bf16.gmra.mxu0 %v1748
      %v1895 = vpop.f32.mrf.mxu0
      %v1896 = vadd.f32 0.0, %v1895
      %v1897 = vpop.f32.mrf.mxu0
      %v1898 = vpop.f32.mrf.mxu0
      %v1899 = vadd.f32 0.0, %v1898
      %v1900 = vpop.f32.mrf.mxu0
      %1901 = vmatprep.mubr.bf16.mxu0 0
      %1902 = vmatmul.mubr.bf16.gmra.mxu0 %v1751
      %v1903 = vpop.f32.mrf.mxu0
      %v1904 = vadd.f32 0.0, %v1903
      %v1905 = vpop.f32.mrf.mxu0
      %v1906 = vpop.f32.mrf.mxu0
      %v1907 = vadd.f32 0.0, %v1906
      %v1908 = vpop.f32.mrf.mxu0
      %1909 = vmatprep.mubr.bf16.mxu0 0
      %1910 = vmatmul.mubr.bf16.gmra.mxu0 %v1754
      %v1911 = vpop.f32.mrf.mxu0
      %v1912 = vadd.f32 0.0, %v1911
      %v1913 = vpop.f32.mrf.mxu0
      %v1914 = vpop.f32.mrf.mxu0
      %v1915 = vadd.f32 0.0, %v1914
      %v1916 = vpop.f32.mrf.mxu0
      %1917 = vmatprep.mubr.bf16.mxu0 0
      %1918 = vmatmul.mubr.bf16.gmra.mxu0 %v1757
      %v1919 = vpop.f32.mrf.mxu0
      %v1920 = vadd.f32 0.0, %v1919
      %v1921 = vpop.f32.mrf.mxu0
      %v1922 = vpop.f32.mrf.mxu0
      %v1923 = vadd.f32 0.0, %v1922
      %v1924 = vpop.f32.mrf.mxu0
      %1925 = vmatprep.mubr.bf16.mxu0 0
      %1926 = vmatmul.mubr.bf16.gmra.mxu0 %v1760
      %v1927 = vpop.f32.mrf.mxu0
      %v1928 = vadd.f32 0.0, %v1927
      %v1929 = vpop.f32.mrf.mxu0
      %v1930 = vpop.f32.mrf.mxu0
      %v1931 = vadd.f32 0.0, %v1930
      %v1932 = vpop.f32.mrf.mxu0
      %1933 = vmatprep.mubr.bf16.mxu0 0
      %1934 = vmatmul.mubr.bf16.gmra.mxu0 %v1763
      %v1935 = vpop.f32.mrf.mxu0
      %v1936 = vadd.f32 0.0, %v1935
      %v1937 = vpop.f32.mrf.mxu0
      %v1938 = vpop.f32.mrf.mxu0
      %v1939 = vadd.f32 0.0, %v1938
      %v1940 = vpop.f32.mrf.mxu0
      %1941 = vdwg.mxu0
      %v1942 = vadd.f32 %v1556, %v1800
      %v1943 = vadd.f32 %v1557, %v1803
      %v1944 = vadd.f32 %v1558, %v1808
      %v1945 = vadd.f32 %v1559, %v1811
      %v1946 = vadd.f32 %v1560, %v1816
      %v1947 = vadd.f32 %v1561, %v1819
      %v1948 = vadd.f32 %v1562, %v1824
      %v1949 = vadd.f32 %v1563, %v1827
      %v1950 = vadd.f32 %v1564, %v1832
      %v1951 = vadd.f32 %v1565, %v1835
      %v1952 = vadd.f32 %v1566, %v1840
      %v1953 = vadd.f32 %v1567, %v1843
      %v1954 = vadd.f32 %v1568, %v1848
      %v1955 = vadd.f32 %v1569, %v1851
      %v1956 = vadd.f32 %v1570, %v1856
      %v1957 = vadd.f32 %v1571, %v1859
      %v1958 = vadd.f32 %v1572, %v1864
      %v1959 = vadd.f32 %v1573, %v1867
      %v1960 = vadd.f32 %v1574, %v1872
      %v1961 = vadd.f32 %v1575, %v1875
      %v1962 = vadd.f32 %v1576, %v1880
      %v1963 = vadd.f32 %v1577, %v1883
      %v1964 = vadd.f32 %v1578, %v1888
      %v1965 = vadd.f32 %v1579, %v1891
      %v1966 = vadd.f32 %v1580, %v1896
      %v1967 = vadd.f32 %v1581, %v1899
      %v1968 = vadd.f32 %v1582, %v1904
      %v1969 = vadd.f32 %v1583, %v1907
      %v1970 = vadd.f32 %v1584, %v1912
      %v1971 = vadd.f32 %v1585, %v1915
      %v1972 = vadd.f32 %v1586, %v1920
      %v1973 = vadd.f32 %v1587, %v1923
      %v1974 = vadd.f32 %v1588, %v1928
      %v1975 = vadd.f32 %v1589, %v1931
      %v1976 = vadd.f32 %v1590, %v1936
      %v1977 = vadd.f32 %v1591, %v1939
      %s1978 = scalar_lea.vmem %s1, 160
      %v1979 = vld [vmem:[%s1978] sm:$0xf]
      %v1980 = vld [vmem:[%s1978 + $0x4] sm:$0xf]
      %v1981 = vld [vmem:[%s1978 + $0x8] sm:$0xf]
      %v1982 = vld [vmem:[%s1978 + $0xc] sm:$0xf]
      %v1983 = vld [vmem:[%s1978 + $0x10] sm:$0xf]
      %v1984 = vld [vmem:[%s1978 + $0x14] sm:$0xf]
      %v1985 = vld [vmem:[%s1978 + $0x18] sm:$0xf]
      %v1986 = vld [vmem:[%s1978 + $0x1c] sm:$0xf]
      %vm1987 = vcmask 1045504
      %v1988 = vrot.slane %v332, 2
      %v1989 = vrot.slane %v333, 2
      %v1990 = vsel %vm1987, %v1988, %v1989
      %v1991 = vrot.slane %v334, 2
      %v1992 = vsel %vm1987, %v1989, %v1991
      %v1993 = vrot.slane %v335, 2
      %v1994 = vsel %vm1987, %v1991, %v1993
      %v1995 = vrot.slane %v336, 2
      %v1996 = vsel %vm1987, %v1993, %v1995
      %v1997 = vrot.slane %v337, 2
      %v1998 = vsel %vm1987, %v1995, %v1997
      %v1999 = vrot.slane %v338, 2
      %v2000 = vsel %vm1987, %v1997, %v1999
      %v2001 = vrot.slane %v339, 2
      %v2002 = vsel %vm1987, %v1999, %v2001
      %v2003 = vrot.slane %v340, 2
      %v2004 = vsel %vm1987, %v2001, %v2003
      %v2005 = vrot.slane %v341, 2
      %v2006 = vsel %vm1987, %v2003, %v2005
      %v2007 = vrot.slane %v342, 2
      %v2008 = vsel %vm1987, %v2005, %v2007
      %v2009 = vrot.slane %v343, 2
      %v2010 = vsel %vm1987, %v2007, %v2009
      %v2011 = vrot.slane %v344, 2
      %v2012 = vsel %vm1987, %v2009, %v2011
      %v2013 = vrot.slane %v345, 2
      %v2014 = vsel %vm1987, %v2011, %v2013
      %v2015 = vrot.slane %v346, 2
      %v2016 = vsel %vm1987, %v2013, %v2015
      %v2017 = vrot.slane %v347, 2
      %v2018 = vsel %vm1987, %v2015, %v2017
      %v2019 = vrot.slane %v348, 2
      %v2020 = vsel %vm1987, %v2017, %v2019
      %v2021 = vrot.slane %v1343, 2
      %v2022 = vsel %vm1987, %v2019, %v2021
      %v2023 = vrot.slane %v1344, 2
      %v2024 = vsel %vm1987, %v2021, %v2023
      %v2033 = vunpack.c.l.b16 %v1979
      %v2034 = vunpack.c.l.b16 %v1980
      %v2035 = vunpack.c.l.b16 %v1981
      %v2036 = vunpack.c.l.b16 %v1982
      %v2037 = vunpack.c.l.b16 %v1983
      %v2038 = vunpack.c.l.b16 %v1984
      %v2039 = vunpack.c.l.b16 %v1985
      %v2040 = vunpack.c.l.b16 %v1986
      %v2041 = vpack.c.b16 %v2034, %v2033
      %v2042 = vpack.c.b16 %v2036, %v2035
      %v2043 = vpack.c.b16 %v2038, %v2037
      %v2044 = vpack.c.b16 %v2040, %v2039
      %v2050 = vsel %vm523, %v1990, 0
      %v2053 = vsel %vm523, %v1992, 0
      %v2056 = vsel %vm523, %v1994, 0
      %v2059 = vsel %vm523, %v1996, 0
      %v2062 = vsel %vm523, %v1998, 0
      %v2065 = vsel %vm523, %v2000, 0
      %v2068 = vsel %vm523, %v2002, 0
      %v2071 = vsel %vm523, %v2004, 0
      %v2074 = vsel %vm523, %v2006, 0
      %v2077 = vsel %vm523, %v2008, 0
      %v2080 = vsel %vm523, %v2010, 0
      %v2083 = vsel %vm523, %v2012, 0
      %v2086 = vsel %vm523, %v2014, 0
      %v2089 = vsel %vm523, %v2016, 0
      %v2092 = vsel %vm523, %v2018, 0
      %v2095 = vsel %vm523, %v2020, 0
      %v2098 = vsel %vm523, %v2022, 0
      %v2101 = vsel %vm523, %v2024, 0
      %2103 = vmatprep.subr.bf16.mxu0 0
      %2104 = vmatpush1.bf16.msra.mxu0 0
      %2105 = vmatprep.subr.bf16.mxu0 0
      %2106 = vmatpush1.bf16.msra.mxu0 0
      %2107 = vmatprep.subr.bf16.mxu0 0
      %2108 = vmatpush1.bf16.msra.mxu0 0
      %2109 = vmatprep.subr.bf16.mxu0 0
      %2110 = vmatpush1.bf16.msra.mxu0 0
      %2111 = vmatprep.subr.bf16.mxu0 0
      %2112 = vmatpush1.bf16.msra.mxu0 %v2044
      %2113 = vmatprep.subr.bf16.mxu0 0
      %2114 = vmatpush1.bf16.msra.mxu0 %v2043
      %2115 = vmatprep.subr.bf16.mxu0 0
      %2116 = vmatpush1.bf16.msra.mxu0 %v2042
      %2117 = vmatprep.subr.bf16.mxu0 0
      %2118 = vmatpush1.bf16.msra.mxu0 %v2041
      %2119 = vmatprep.subr.bf16.mxu0 0
      %2120 = vmatpush2.bf16.msra.mxu0 0
      %2121 = vmatprep.subr.bf16.mxu0 0
      %2122 = vmatpush2.bf16.msra.mxu0 0
      %2123 = vmatprep.subr.bf16.mxu0 0
      %2124 = vmatpush2.bf16.msra.mxu0 0
      %2125 = vmatprep.subr.bf16.mxu0 0
      %2126 = vmatpush2.bf16.msra.mxu0 0
      %2127 = vmatprep.subr.bf16.mxu0 0
      %2128 = vmatpush2.bf16.msra.mxu0 0
      %2129 = vmatprep.subr.bf16.mxu0 0
      %2130 = vmatpush2.bf16.msra.mxu0 0
      %2131 = vmatprep.subr.bf16.mxu0 0
      %2132 = vmatpush2.bf16.msra.mxu0 0
      %2133 = vmatprep.subr.bf16.mxu0 0
      %2134 = vmatpush2.bf16.msra.mxu0 0
      %2135 = vmatprep.mubr.bf16.mxu0 0
      %2136 = vmatmul.mubr.bf16.gmra.mxu0 %v2050
      %v2137 = vpop.f32.mrf.mxu0
      %v2138 = vadd.f32 0.0, %v2137
      %v2139 = vpop.f32.mrf.mxu0
      %v2140 = vpop.f32.mrf.mxu0
      %v2141 = vadd.f32 0.0, %v2140
      %v2142 = vpop.f32.mrf.mxu0
      %2143 = vmatprep.mubr.bf16.mxu0 0
      %2144 = vmatmul.mubr.bf16.gmra.mxu0 %v2053
      %v2145 = vpop.f32.mrf.mxu0
      %v2146 = vadd.f32 0.0, %v2145
      %v2147 = vpop.f32.mrf.mxu0
      %v2148 = vpop.f32.mrf.mxu0
      %v2149 = vadd.f32 0.0, %v2148
      %v2150 = vpop.f32.mrf.mxu0
      %2151 = vmatprep.mubr.bf16.mxu0 0
      %2152 = vmatmul.mubr.bf16.gmra.mxu0 %v2056
      %v2153 = vpop.f32.mrf.mxu0
      %v2154 = vadd.f32 0.0, %v2153
      %v2155 = vpop.f32.mrf.mxu0
      %v2156 = vpop.f32.mrf.mxu0
      %v2157 = vadd.f32 0.0, %v2156
      %v2158 = vpop.f32.mrf.mxu0
      %2159 = vmatprep.mubr.bf16.mxu0 0
      %2160 = vmatmul.mubr.bf16.gmra.mxu0 %v2059
      %v2161 = vpop.f32.mrf.mxu0
      %v2162 = vadd.f32 0.0, %v2161
      %v2163 = vpop.f32.mrf.mxu0
      %v2164 = vpop.f32.mrf.mxu0
      %v2165 = vadd.f32 0.0, %v2164
      %v2166 = vpop.f32.mrf.mxu0
      %2167 = vmatprep.mubr.bf16.mxu0 0
      %2168 = vmatmul.mubr.bf16.gmra.mxu0 %v2062
      %v2169 = vpop.f32.mrf.mxu0
      %v2170 = vadd.f32 0.0, %v2169
      %v2171 = vpop.f32.mrf.mxu0
      %v2172 = vpop.f32.mrf.mxu0
      %v2173 = vadd.f32 0.0, %v2172
      %v2174 = vpop.f32.mrf.mxu0
      %2175 = vmatprep.mubr.bf16.mxu0 0
      %2176 = vmatmul.mubr.bf16.gmra.mxu0 %v2065
      %v2177 = vpop.f32.mrf.mxu0
      %v2178 = vadd.f32 0.0, %v2177
      %v2179 = vpop.f32.mrf.mxu0
      %v2180 = vpop.f32.mrf.mxu0
      %v2181 = vadd.f32 0.0, %v2180
      %v2182 = vpop.f32.mrf.mxu0
      %2183 = vmatprep.mubr.bf16.mxu0 0
      %2184 = vmatmul.mubr.bf16.gmra.mxu0 %v2068
      %v2185 = vpop.f32.mrf.mxu0
      %v2186 = vadd.f32 0.0, %v2185
      %v2187 = vpop.f32.mrf.mxu0
      %v2188 = vpop.f32.mrf.mxu0
      %v2189 = vadd.f32 0.0, %v2188
      %v2190 = vpop.f32.mrf.mxu0
      %2191 = vmatprep.mubr.bf16.mxu0 0
      %2192 = vmatmul.mubr.bf16.gmra.mxu0 %v2071
      %v2193 = vpop.f32.mrf.mxu0
      %v2194 = vadd.f32 0.0, %v2193
      %v2195 = vpop.f32.mrf.mxu0
      %v2196 = vpop.f32.mrf.mxu0
      %v2197 = vadd.f32 0.0, %v2196
      %v2198 = vpop.f32.mrf.mxu0
      %2199 = vmatprep.mubr.bf16.mxu0 0
      %2200 = vmatmul.mubr.bf16.gmra.mxu0 %v2074
      %v2201 = vpop.f32.mrf.mxu0
      %v2202 = vadd.f32 0.0, %v2201
      %v2203 = vpop.f32.mrf.mxu0
      %v2204 = vpop.f32.mrf.mxu0
      %v2205 = vadd.f32 0.0, %v2204
      %v2206 = vpop.f32.mrf.mxu0
      %2207 = vmatprep.mubr.bf16.mxu0 0
      %2208 = vmatmul.mubr.bf16.gmra.mxu0 %v2077
      %v2209 = vpop.f32.mrf.mxu0
      %v2210 = vadd.f32 0.0, %v2209
      %v2211 = vpop.f32.mrf.mxu0
      %v2212 = vpop.f32.mrf.mxu0
      %v2213 = vadd.f32 0.0, %v2212
      %v2214 = vpop.f32.mrf.mxu0
      %2215 = vmatprep.mubr.bf16.mxu0 0
      %2216 = vmatmul.mubr.bf16.gmra.mxu0 %v2080
      %v2217 = vpop.f32.mrf.mxu0
      %v2218 = vadd.f32 0.0, %v2217
      %v2219 = vpop.f32.mrf.mxu0
      %v2220 = vpop.f32.mrf.mxu0
      %v2221 = vadd.f32 0.0, %v2220
      %v2222 = vpop.f32.mrf.mxu0
      %2223 = vmatprep.mubr.bf16.mxu0 0
      %2224 = vmatmul.mubr.bf16.gmra.mxu0 %v2083
      %v2225 = vpop.f32.mrf.mxu0
      %v2226 = vadd.f32 0.0, %v2225
      %v2227 = vpop.f32.mrf.mxu0
      %v2228 = vpop.f32.mrf.mxu0
      %v2229 = vadd.f32 0.0, %v2228
      %v2230 = vpop.f32.mrf.mxu0
      %2231 = vmatprep.mubr.bf16.mxu0 0
      %2232 = vmatmul.mubr.bf16.gmra.mxu0 %v2086
      %v2233 = vpop.f32.mrf.mxu0
      %v2234 = vadd.f32 0.0, %v2233
      %v2235 = vpop.f32.mrf.mxu0
      %v2236 = vpop.f32.mrf.mxu0
      %v2237 = vadd.f32 0.0, %v2236
      %v2238 = vpop.f32.mrf.mxu0
      %2239 = vmatprep.mubr.bf16.mxu0 0
      %2240 = vmatmul.mubr.bf16.gmra.mxu0 %v2089
      %v2241 = vpop.f32.mrf.mxu0
      %v2242 = vadd.f32 0.0, %v2241
      %v2243 = vpop.f32.mrf.mxu0
      %v2244 = vpop.f32.mrf.mxu0
      %v2245 = vadd.f32 0.0, %v2244
      %v2246 = vpop.f32.mrf.mxu0
      %2247 = vmatprep.mubr.bf16.mxu0 0
      %2248 = vmatmul.mubr.bf16.gmra.mxu0 %v2092
      %v2249 = vpop.f32.mrf.mxu0
      %v2250 = vadd.f32 0.0, %v2249
      %v2251 = vpop.f32.mrf.mxu0
      %v2252 = vpop.f32.mrf.mxu0
      %v2253 = vadd.f32 0.0, %v2252
      %v2254 = vpop.f32.mrf.mxu0
      %2255 = vmatprep.mubr.bf16.mxu0 0
      %2256 = vmatmul.mubr.bf16.gmra.mxu0 %v2095
      %v2257 = vpop.f32.mrf.mxu0
      %v2258 = vadd.f32 0.0, %v2257
      %v2259 = vpop.f32.mrf.mxu0
      %v2260 = vpop.f32.mrf.mxu0
      %v2261 = vadd.f32 0.0, %v2260
      %v2262 = vpop.f32.mrf.mxu0
      %2263 = vmatprep.mubr.bf16.mxu0 0
      %2264 = vmatmul.mubr.bf16.gmra.mxu0 %v2098
      %v2265 = vpop.f32.mrf.mxu0
      %v2266 = vadd.f32 0.0, %v2265
      %v2267 = vpop.f32.mrf.mxu0
      %v2268 = vpop.f32.mrf.mxu0
      %v2269 = vadd.f32 0.0, %v2268
      %v2270 = vpop.f32.mrf.mxu0
      %2271 = vmatprep.mubr.bf16.mxu0 0
      %2272 = vmatmul.mubr.bf16.gmra.mxu0 %v2101
      %v2273 = vpop.f32.mrf.mxu0
      %v2274 = vadd.f32 0.0, %v2273
      %v2275 = vpop.f32.mrf.mxu0
      %v2276 = vpop.f32.mrf.mxu0
      %v2277 = vadd.f32 0.0, %v2276
      %v2278 = vpop.f32.mrf.mxu0
      %2279 = vdwg.mxu0
      %v2280 = vadd.f32 %v1942, %v2138
      %v2281 = vadd.f32 %v1943, %v2141
      %v2282 = vadd.f32 %v1944, %v2146
      %v2283 = vadd.f32 %v1945, %v2149
      %v2284 = vadd.f32 %v1946, %v2154
      %v2285 = vadd.f32 %v1947, %v2157
      %v2286 = vadd.f32 %v1948, %v2162
      %v2287 = vadd.f32 %v1949, %v2165
      %v2288 = vadd.f32 %v1950, %v2170
      %v2289 = vadd.f32 %v1951, %v2173
      %v2290 = vadd.f32 %v1952, %v2178
      %v2291 = vadd.f32 %v1953, %v2181
      %v2292 = vadd.f32 %v1954, %v2186
      %v2293 = vadd.f32 %v1955, %v2189
      %v2294 = vadd.f32 %v1956, %v2194
      %v2295 = vadd.f32 %v1957, %v2197
      %v2296 = vadd.f32 %v1958, %v2202
      %v2297 = vadd.f32 %v1959, %v2205
      %v2298 = vadd.f32 %v1960, %v2210
      %v2299 = vadd.f32 %v1961, %v2213
      %v2300 = vadd.f32 %v1962, %v2218
      %v2301 = vadd.f32 %v1963, %v2221
      %v2302 = vadd.f32 %v1964, %v2226
      %v2303 = vadd.f32 %v1965, %v2229
      %v2304 = vadd.f32 %v1966, %v2234
      %v2305 = vadd.f32 %v1967, %v2237
      %v2306 = vadd.f32 %v1968, %v2242
      %v2307 = vadd.f32 %v1969, %v2245
      %v2308 = vadd.f32 %v1970, %v2250
      %v2309 = vadd.f32 %v1971, %v2253
      %v2310 = vadd.f32 %v1972, %v2258
      %v2311 = vadd.f32 %v1973, %v2261
      %v2312 = vadd.f32 %v1974, %v2266
      %v2313 = vadd.f32 %v1975, %v2269
      %v2314 = vadd.f32 %v1976, %v2274
      %v2315 = vadd.f32 %v1977, %v2277
      %s2316 = scalar_lea.vmem %s1, 192
      %v2317 = vld [vmem:[%s2316] sm:$0xf]
      %v2318 = vld [vmem:[%s2316 + $0x4] sm:$0xf]
      %v2319 = vld [vmem:[%s2316 + $0x8] sm:$0xf]
      %v2320 = vld [vmem:[%s2316 + $0xc] sm:$0xf]
      %v2321 = vld [vmem:[%s2316 + $0x10] sm:$0xf]
      %v2322 = vld [vmem:[%s2316 + $0x14] sm:$0xf]
      %v2323 = vld [vmem:[%s2316 + $0x18] sm:$0xf]
      %v2324 = vld [vmem:[%s2316 + $0x1c] sm:$0xf]
      %v2327 = vunpack.c.l.b16 %v238
      %v2328 = vunpack.c.l.b16 %v239
      %v2329 = vpack.c.b16 %v2327, %v1342
      %v2330 = vpack.c.b16 %v2328, %v2328
      %v2331 = vrot.slane %v2329, 2
      %v2332 = vsel %vm1987, %v2021, %v2331
      %v2333 = vrot.slane %v2330, 2
      %v2334 = vsel %vm1987, %v2331, %v2333
      %v2343 = vunpack.c.l.b16 %v2317
      %v2344 = vunpack.c.l.b16 %v2318
      %v2345 = vunpack.c.l.b16 %v2319
      %v2346 = vunpack.c.l.b16 %v2320
      %v2347 = vunpack.c.l.b16 %v2321
      %v2348 = vunpack.c.l.b16 %v2322
      %v2349 = vunpack.c.l.b16 %v2323
      %v2350 = vunpack.c.l.b16 %v2324
      %v2351 = vpack.c.b16 %v2344, %v2343
      %v2352 = vpack.c.b16 %v2346, %v2345
      %v2353 = vpack.c.b16 %v2348, %v2347
      %v2354 = vpack.c.b16 %v2350, %v2349
      %v2360 = vsel %vm523, %v2332, 0
      %v2363 = vsel %vm523, %v2334, 0
      %2365 = vmatprep.subr.bf16.mxu0 0
      %2366 = vmatpush1.bf16.msra.mxu0 0
      %2367 = vmatprep.subr.bf16.mxu0 0
      %2368 = vmatpush1.bf16.msra.mxu0 0
      %2369 = vmatprep.subr.bf16.mxu0 0
      %2370 = vmatpush1.bf16.msra.mxu0 0
      %2371 = vmatprep.subr.bf16.mxu0 0
      %2372 = vmatpush1.bf16.msra.mxu0 0
      %2373 = vmatprep.subr.bf16.mxu0 0
      %2374 = vmatpush1.bf16.msra.mxu0 %v2354
      %2375 = vmatprep.subr.bf16.mxu0 0
      %2376 = vmatpush1.bf16.msra.mxu0 %v2353
      %2377 = vmatprep.subr.bf16.mxu0 0
      %2378 = vmatpush1.bf16.msra.mxu0 %v2352
      %2379 = vmatprep.subr.bf16.mxu0 0
      %2380 = vmatpush1.bf16.msra.mxu0 %v2351
      %2381 = vmatprep.subr.bf16.mxu0 0
      %2382 = vmatpush2.bf16.msra.mxu0 0
      %2383 = vmatprep.subr.bf16.mxu0 0
      %2384 = vmatpush2.bf16.msra.mxu0 0
      %2385 = vmatprep.subr.bf16.mxu0 0
      %2386 = vmatpush2.bf16.msra.mxu0 0
      %2387 = vmatprep.subr.bf16.mxu0 0
      %2388 = vmatpush2.bf16.msra.mxu0 0
      %2389 = vmatprep.subr.bf16.mxu0 0
      %2390 = vmatpush2.bf16.msra.mxu0 0
      %2391 = vmatprep.subr.bf16.mxu0 0
      %2392 = vmatpush2.bf16.msra.mxu0 0
      %2393 = vmatprep.subr.bf16.mxu0 0
      %2394 = vmatpush2.bf16.msra.mxu0 0
      %2395 = vmatprep.subr.bf16.mxu0 0
      %2396 = vmatpush2.bf16.msra.mxu0 0
      %2397 = vmatprep.mubr.bf16.mxu0 0
      %2398 = vmatmul.mubr.bf16.gmra.mxu0 %v2053
      %v2399 = vpop.f32.mrf.mxu0
      %v2400 = vadd.f32 0.0, %v2399
      %v2401 = vpop.f32.mrf.mxu0
      %v2402 = vpop.f32.mrf.mxu0
      %v2403 = vadd.f32 0.0, %v2402
      %v2404 = vpop.f32.mrf.mxu0
      %2405 = vmatprep.mubr.bf16.mxu0 0
      %2406 = vmatmul.mubr.bf16.gmra.mxu0 %v2056
      %v2407 = vpop.f32.mrf.mxu0
      %v2408 = vadd.f32 0.0, %v2407
      %v2409 = vpop.f32.mrf.mxu0
      %v2410 = vpop.f32.mrf.mxu0
      %v2411 = vadd.f32 0.0, %v2410
      %v2412 = vpop.f32.mrf.mxu0
      %2413 = vmatprep.mubr.bf16.mxu0 0
      %2414 = vmatmul.mubr.bf16.gmra.mxu0 %v2059
      %v2415 = vpop.f32.mrf.mxu0
      %v2416 = vadd.f32 0.0, %v2415
      %v2417 = vpop.f32.mrf.mxu0
      %v2418 = vpop.f32.mrf.mxu0
      %v2419 = vadd.f32 0.0, %v2418
      %v2420 = vpop.f32.mrf.mxu0
      %2421 = vmatprep.mubr.bf16.mxu0 0
      %2422 = vmatmul.mubr.bf16.gmra.mxu0 %v2062
      %v2423 = vpop.f32.mrf.mxu0
      %v2424 = vadd.f32 0.0, %v2423
      %v2425 = vpop.f32.mrf.mxu0
      %v2426 = vpop.f32.mrf.mxu0
      %v2427 = vadd.f32 0.0, %v2426
      %v2428 = vpop.f32.mrf.mxu0
      %2429 = vmatprep.mubr.bf16.mxu0 0
      %2430 = vmatmul.mubr.bf16.gmra.mxu0 %v2065
      %v2431 = vpop.f32.mrf.mxu0
      %v2432 = vadd.f32 0.0, %v2431
      %v2433 = vpop.f32.mrf.mxu0
      %v2434 = vpop.f32.mrf.mxu0
      %v2435 = vadd.f32 0.0, %v2434
      %v2436 = vpop.f32.mrf.mxu0
      %2437 = vmatprep.mubr.bf16.mxu0 0
      %2438 = vmatmul.mubr.bf16.gmra.mxu0 %v2068
      %v2439 = vpop.f32.mrf.mxu0
      %v2440 = vadd.f32 0.0, %v2439
      %v2441 = vpop.f32.mrf.mxu0
      %v2442 = vpop.f32.mrf.mxu0
      %v2443 = vadd.f32 0.0, %v2442
      %v2444 = vpop.f32.mrf.mxu0
      %2445 = vmatprep.mubr.bf16.mxu0 0
      %2446 = vmatmul.mubr.bf16.gmra.mxu0 %v2071
      %v2447 = vpop.f32.mrf.mxu0
      %v2448 = vadd.f32 0.0, %v2447
      %v2449 = vpop.f32.mrf.mxu0
      %v2450 = vpop.f32.mrf.mxu0
      %v2451 = vadd.f32 0.0, %v2450
      %v2452 = vpop.f32.mrf.mxu0
      %2453 = vmatprep.mubr.bf16.mxu0 0
      %2454 = vmatmul.mubr.bf16.gmra.mxu0 %v2074
      %v2455 = vpop.f32.mrf.mxu0
      %v2456 = vadd.f32 0.0, %v2455
      %v2457 = vpop.f32.mrf.mxu0
      %v2458 = vpop.f32.mrf.mxu0
      %v2459 = vadd.f32 0.0, %v2458
      %v2460 = vpop.f32.mrf.mxu0
      %2461 = vmatprep.mubr.bf16.mxu0 0
      %2462 = vmatmul.mubr.bf16.gmra.mxu0 %v2077
      %v2463 = vpop.f32.mrf.mxu0
      %v2464 = vadd.f32 0.0, %v2463
      %v2465 = vpop.f32.mrf.mxu0
      %v2466 = vpop.f32.mrf.mxu0
      %v2467 = vadd.f32 0.0, %v2466
      %v2468 = vpop.f32.mrf.mxu0
      %2469 = vmatprep.mubr.bf16.mxu0 0
      %2470 = vmatmul.mubr.bf16.gmra.mxu0 %v2080
      %v2471 = vpop.f32.mrf.mxu0
      %v2472 = vadd.f32 0.0, %v2471
      %v2473 = vpop.f32.mrf.mxu0
      %v2474 = vpop.f32.mrf.mxu0
      %v2475 = vadd.f32 0.0, %v2474
      %v2476 = vpop.f32.mrf.mxu0
      %2477 = vmatprep.mubr.bf16.mxu0 0
      %2478 = vmatmul.mubr.bf16.gmra.mxu0 %v2083
      %v2479 = vpop.f32.mrf.mxu0
      %v2480 = vadd.f32 0.0, %v2479
      %v2481 = vpop.f32.mrf.mxu0
      %v2482 = vpop.f32.mrf.mxu0
      %v2483 = vadd.f32 0.0, %v2482
      %v2484 = vpop.f32.mrf.mxu0
      %2485 = vmatprep.mubr.bf16.mxu0 0
      %2486 = vmatmul.mubr.bf16.gmra.mxu0 %v2086
      %v2487 = vpop.f32.mrf.mxu0
      %v2488 = vadd.f32 0.0, %v2487
      %v2489 = vpop.f32.mrf.mxu0
      %v2490 = vpop.f32.mrf.mxu0
      %v2491 = vadd.f32 0.0, %v2490
      %v2492 = vpop.f32.mrf.mxu0
      %2493 = vmatprep.mubr.bf16.mxu0 0
      %2494 = vmatmul.mubr.bf16.gmra.mxu0 %v2089
      %v2495 = vpop.f32.mrf.mxu0
      %v2496 = vadd.f32 0.0, %v2495
      %v2497 = vpop.f32.mrf.mxu0
      %v2498 = vpop.f32.mrf.mxu0
      %v2499 = vadd.f32 0.0, %v2498
      %v2500 = vpop.f32.mrf.mxu0
      %2501 = vmatprep.mubr.bf16.mxu0 0
      %2502 = vmatmul.mubr.bf16.gmra.mxu0 %v2092
      %v2503 = vpop.f32.mrf.mxu0
      %v2504 = vadd.f32 0.0, %v2503
      %v2505 = vpop.f32.mrf.mxu0
      %v2506 = vpop.f32.mrf.mxu0
      %v2507 = vadd.f32 0.0, %v2506
      %v2508 = vpop.f32.mrf.mxu0
      %2509 = vmatprep.mubr.bf16.mxu0 0
      %2510 = vmatmul.mubr.bf16.gmra.mxu0 %v2095
      %v2511 = vpop.f32.mrf.mxu0
      %v2512 = vadd.f32 0.0, %v2511
      %v2513 = vpop.f32.mrf.mxu0
      %v2514 = vpop.f32.mrf.mxu0
      %v2515 = vadd.f32 0.0, %v2514
      %v2516 = vpop.f32.mrf.mxu0
      %2517 = vmatprep.mubr.bf16.mxu0 0
      %2518 = vmatmul.mubr.bf16.gmra.mxu0 %v2098
      %v2519 = vpop.f32.mrf.mxu0
      %v2520 = vadd.f32 0.0, %v2519
      %v2521 = vpop.f32.mrf.mxu0
      %v2522 = vpop.f32.mrf.mxu0
      %v2523 = vadd.f32 0.0, %v2522
      %v2524 = vpop.f32.mrf.mxu0
      %2525 = vmatprep.mubr.bf16.mxu0 0
      %2526 = vmatmul.mubr.bf16.gmra.mxu0 %v2360
      %v2527 = vpop.f32.mrf.mxu0
      %v2528 = vadd.f32 0.0, %v2527
      %v2529 = vpop.f32.mrf.mxu0
      %v2530 = vpop.f32.mrf.mxu0
      %v2531 = vadd.f32 0.0, %v2530
      %v2532 = vpop.f32.mrf.mxu0
      %2533 = vmatprep.mubr.bf16.mxu0 0
      %2534 = vmatmul.mubr.bf16.gmra.mxu0 %v2363
      %v2535 = vpop.f32.mrf.mxu0
      %v2536 = vadd.f32 0.0, %v2535
      %v2537 = vpop.f32.mrf.mxu0
      %v2538 = vpop.f32.mrf.mxu0
      %v2539 = vadd.f32 0.0, %v2538
      %v2540 = vpop.f32.mrf.mxu0
      %2541 = vdwg.mxu0
      %v2542 = vadd.f32 %v2280, %v2400
      %v2543 = vadd.f32 %v2281, %v2403
      %v2544 = vadd.f32 %v2282, %v2408
      %v2545 = vadd.f32 %v2283, %v2411
      %v2546 = vadd.f32 %v2284, %v2416
      %v2547 = vadd.f32 %v2285, %v2419
      %v2548 = vadd.f32 %v2286, %v2424
      %v2549 = vadd.f32 %v2287, %v2427
      %v2550 = vadd.f32 %v2288, %v2432
      %v2551 = vadd.f32 %v2289, %v2435
      %v2552 = vadd.f32 %v2290, %v2440
      %v2553 = vadd.f32 %v2291, %v2443
      %v2554 = vadd.f32 %v2292, %v2448
      %v2555 = vadd.f32 %v2293, %v2451
      %v2556 = vadd.f32 %v2294, %v2456
      %v2557 = vadd.f32 %v2295, %v2459
      %v2558 = vadd.f32 %v2296, %v2464
      %v2559 = vadd.f32 %v2297, %v2467
      %v2560 = vadd.f32 %v2298, %v2472
      %v2561 = vadd.f32 %v2299, %v2475
      %v2562 = vadd.f32 %v2300, %v2480
      %v2563 = vadd.f32 %v2301, %v2483
      %v2564 = vadd.f32 %v2302, %v2488
      %v2565 = vadd.f32 %v2303, %v2491
      %v2566 = vadd.f32 %v2304, %v2496
      %v2567 = vadd.f32 %v2305, %v2499
      %v2568 = vadd.f32 %v2306, %v2504
      %v2569 = vadd.f32 %v2307, %v2507
      %v2570 = vadd.f32 %v2308, %v2512
      %v2571 = vadd.f32 %v2309, %v2515
      %v2572 = vadd.f32 %v2310, %v2520
      %v2573 = vadd.f32 %v2311, %v2523
      %v2574 = vadd.f32 %v2312, %v2528
      %v2575 = vadd.f32 %v2313, %v2531
      %v2576 = vadd.f32 %v2314, %v2536
      %v2577 = vadd.f32 %v2315, %v2539
      %s2578 = scalar_lea.vmem %s1, 224
      %v2579 = vld [vmem:[%s2578] sm:$0xf]
      %v2580 = vld [vmem:[%s2578 + $0x4] sm:$0xf]
      %v2581 = vld [vmem:[%s2578 + $0x8] sm:$0xf]
      %v2582 = vld [vmem:[%s2578 + $0xc] sm:$0xf]
      %v2583 = vld [vmem:[%s2578 + $0x10] sm:$0xf]
      %v2584 = vld [vmem:[%s2578 + $0x14] sm:$0xf]
      %v2585 = vld [vmem:[%s2578 + $0x18] sm:$0xf]
      %v2586 = vld [vmem:[%s2578 + $0x1c] sm:$0xf]
      %vm2587 = vsmask.f32 5376
      %v2588 = vrot.slane %v371, 2
      %v2589 = vrot.slane %v367, 3
      %v2590 = vor.u32 %v2588, %v2589
      %v2591 = vrot.slane %v379, 2
      %v2592 = vrot.slane %v375, 3
      %v2593 = vor.u32 %v2591, %v2592
      %v2594 = vsel %vm2587, %v2590, %v2593
      %v2595 = vrot.slane %v387, 2
      %v2596 = vrot.slane %v383, 3
      %v2597 = vor.u32 %v2595, %v2596
      %v2598 = vsel %vm2587, %v2593, %v2597
      %v2599 = vrot.slane %v395, 2
      %v2600 = vrot.slane %v391, 3
      %v2601 = vor.u32 %v2599, %v2600
      %v2602 = vsel %vm2587, %v2597, %v2601
      %v2603 = vrot.slane %v403, 2
      %v2604 = vrot.slane %v399, 3
      %v2605 = vor.u32 %v2603, %v2604
      %v2606 = vsel %vm2587, %v2601, %v2605
      %v2607 = vrot.slane %v411, 2
      %v2608 = vrot.slane %v407, 3
      %v2609 = vor.u32 %v2607, %v2608
      %v2610 = vsel %vm2587, %v2605, %v2609
      %v2611 = vrot.slane %v419, 2
      %v2612 = vrot.slane %v415, 3
      %v2613 = vor.u32 %v2611, %v2612
      %v2614 = vsel %vm2587, %v2609, %v2613
      %v2615 = vrot.slane %v427, 2
      %v2616 = vrot.slane %v423, 3
      %v2617 = vor.u32 %v2615, %v2616
      %v2618 = vsel %vm2587, %v2613, %v2617
      %v2619 = vrot.slane %v435, 2
      %v2620 = vrot.slane %v431, 3
      %v2621 = vor.u32 %v2619, %v2620
      %v2622 = vsel %vm2587, %v2617, %v2621
      %v2623 = vrot.slane %v443, 2
      %v2624 = vrot.slane %v439, 3
      %v2625 = vor.u32 %v2623, %v2624
      %v2626 = vsel %vm2587, %v2621, %v2625
      %v2627 = vrot.slane %v451, 2
      %v2628 = vrot.slane %v447, 3
      %v2629 = vor.u32 %v2627, %v2628
      %v2630 = vsel %vm2587, %v2625, %v2629
      %v2631 = vrot.slane %v459, 2
      %v2632 = vrot.slane %v455, 3
      %v2633 = vor.u32 %v2631, %v2632
      %v2634 = vsel %vm2587, %v2629, %v2633
      %v2635 = vrot.slane %v467, 2
      %v2636 = vrot.slane %v463, 3
      %v2637 = vor.u32 %v2635, %v2636
      %v2638 = vsel %vm2587, %v2633, %v2637
      %v2639 = vrot.slane %v475, 2
      %v2640 = vrot.slane %v471, 3
      %v2641 = vor.u32 %v2639, %v2640
      %v2642 = vsel %vm2587, %v2637, %v2641
      %v2643 = vrot.slane %v483, 2
      %v2644 = vrot.slane %v479, 3
      %v2645 = vor.u32 %v2643, %v2644
      %v2646 = vsel %vm2587, %v2641, %v2645
      %v2647 = vrot.slane %v491, 2
      %v2648 = vrot.slane %v487, 3
      %v2649 = vor.u32 %v2647, %v2648
      %v2650 = vsel %vm2587, %v2645, %v2649
      %v2651 = vrot.slane %v1670, 2
      %v2652 = vrot.slane %v1673, 3
      %v2653 = vor.u32 %v2651, %v2652
      %v2654 = vsel %vm2587, %v2649, %v2653
      %v2656 = vshrl.u32 %v2329, 16
      %v2658 = vrot.slane %v2656, 2
      %v2659 = vshll.u32 %v2329, 16
      %v2661 = vrot.slane %v2659, 3
      %v2662 = vor.u32 %v2658, %v2661
      %v2663 = vsel %vm2587, %v2653, %v2662
      %v2665 = vshrl.u32 %v2330, 16
      %v2667 = vrot.slane %v2665, 2
      %v2668 = vshll.u32 %v2330, 16
      %v2670 = vrot.slane %v2668, 3
      %v2671 = vor.u32 %v2667, %v2670
      %v2672 = vsel %vm2587, %v2662, %v2671
      %v2681 = vunpack.c.l.b16 %v2579
      %v2682 = vunpack.c.l.b16 %v2580
      %v2683 = vunpack.c.l.b16 %v2581
      %v2684 = vunpack.c.l.b16 %v2582
      %v2685 = vunpack.c.l.b16 %v2583
      %v2686 = vunpack.c.l.b16 %v2584
      %v2687 = vunpack.c.l.b16 %v2585
      %v2688 = vunpack.c.l.b16 %v2586
      %v2689 = vpack.c.b16 %v2682, %v2681
      %v2690 = vpack.c.b16 %v2684, %v2683
      %v2691 = vpack.c.b16 %v2686, %v2685
      %v2692 = vpack.c.b16 %v2688, %v2687
      %v2698 = vsel %vm523, %v2594, 0
      %v2701 = vsel %vm523, %v2598, 0
      %v2704 = vsel %vm523, %v2602, 0
      %v2707 = vsel %vm523, %v2606, 0
      %v2710 = vsel %vm523, %v2610, 0
      %v2713 = vsel %vm523, %v2614, 0
      %v2716 = vsel %vm523, %v2618, 0
      %v2719 = vsel %vm523, %v2622, 0
      %v2722 = vsel %vm523, %v2626, 0
      %v2725 = vsel %vm523, %v2630, 0
      %v2728 = vsel %vm523, %v2634, 0
      %v2731 = vsel %vm523, %v2638, 0
      %v2734 = vsel %vm523, %v2642, 0
      %v2737 = vsel %vm523, %v2646, 0
      %v2740 = vsel %vm523, %v2650, 0
      %v2743 = vsel %vm523, %v2654, 0
      %v2746 = vsel %vm523, %v2663, 0
      %v2749 = vsel %vm523, %v2672, 0
      %2751 = vmatprep.subr.bf16.mxu0 0
      %2752 = vmatpush1.bf16.msra.mxu0 0
      %2753 = vmatprep.subr.bf16.mxu0 0
      %2754 = vmatpush1.bf16.msra.mxu0 0
      %2755 = vmatprep.subr.bf16.mxu0 0
      %2756 = vmatpush1.bf16.msra.mxu0 0
      %2757 = vmatprep.subr.bf16.mxu0 0
      %2758 = vmatpush1.bf16.msra.mxu0 0
      %2759 = vmatprep.subr.bf16.mxu0 0
      %2760 = vmatpush1.bf16.msra.mxu0 %v2692
      %2761 = vmatprep.subr.bf16.mxu0 0
      %2762 = vmatpush1.bf16.msra.mxu0 %v2691
      %2763 = vmatprep.subr.bf16.mxu0 0
      %2764 = vmatpush1.bf16.msra.mxu0 %v2690
      %2765 = vmatprep.subr.bf16.mxu0 0
      %2766 = vmatpush1.bf16.msra.mxu0 %v2689
      %2767 = vmatprep.subr.bf16.mxu0 0
      %2768 = vmatpush2.bf16.msra.mxu0 0
      %2769 = vmatprep.subr.bf16.mxu0 0
      %2770 = vmatpush2.bf16.msra.mxu0 0
      %2771 = vmatprep.subr.bf16.mxu0 0
      %2772 = vmatpush2.bf16.msra.mxu0 0
      %2773 = vmatprep.subr.bf16.mxu0 0
      %2774 = vmatpush2.bf16.msra.mxu0 0
      %2775 = vmatprep.subr.bf16.mxu0 0
      %2776 = vmatpush2.bf16.msra.mxu0 0
      %2777 = vmatprep.subr.bf16.mxu0 0
      %2778 = vmatpush2.bf16.msra.mxu0 0
      %2779 = vmatprep.subr.bf16.mxu0 0
      %2780 = vmatpush2.bf16.msra.mxu0 0
      %2781 = vmatprep.subr.bf16.mxu0 0
      %2782 = vmatpush2.bf16.msra.mxu0 0
      %2783 = vmatprep.mubr.bf16.mxu0 0
      %2784 = vmatmul.mubr.bf16.gmra.mxu0 %v2698
      %v2785 = vpop.f32.mrf.mxu0
      %v2786 = vadd.f32 0.0, %v2785
      %v2787 = vpop.f32.mrf.mxu0
      %v2788 = vpop.f32.mrf.mxu0
      %v2789 = vadd.f32 0.0, %v2788
      %v2790 = vpop.f32.mrf.mxu0
      %2791 = vmatprep.mubr.bf16.mxu0 0
      %2792 = vmatmul.mubr.bf16.gmra.mxu0 %v2701
      %v2793 = vpop.f32.mrf.mxu0
      %v2794 = vadd.f32 0.0, %v2793
      %v2795 = vpop.f32.mrf.mxu0
      %v2796 = vpop.f32.mrf.mxu0
      %v2797 = vadd.f32 0.0, %v2796
      %v2798 = vpop.f32.mrf.mxu0
      %2799 = vmatprep.mubr.bf16.mxu0 0
      %2800 = vmatmul.mubr.bf16.gmra.mxu0 %v2704
      %v2801 = vpop.f32.mrf.mxu0
      %v2802 = vadd.f32 0.0, %v2801
      %v2803 = vpop.f32.mrf.mxu0
      %v2804 = vpop.f32.mrf.mxu0
      %v2805 = vadd.f32 0.0, %v2804
      %v2806 = vpop.f32.mrf.mxu0
      %2807 = vmatprep.mubr.bf16.mxu0 0
      %2808 = vmatmul.mubr.bf16.gmra.mxu0 %v2707
      %v2809 = vpop.f32.mrf.mxu0
      %v2810 = vadd.f32 0.0, %v2809
      %v2811 = vpop.f32.mrf.mxu0
      %v2812 = vpop.f32.mrf.mxu0
      %v2813 = vadd.f32 0.0, %v2812
      %v2814 = vpop.f32.mrf.mxu0
      %2815 = vmatprep.mubr.bf16.mxu0 0
      %2816 = vmatmul.mubr.bf16.gmra.mxu0 %v2710
      %v2817 = vpop.f32.mrf.mxu0
      %v2818 = vadd.f32 0.0, %v2817
      %v2819 = vpop.f32.mrf.mxu0
      %v2820 = vpop.f32.mrf.mxu0
      %v2821 = vadd.f32 0.0, %v2820
      %v2822 = vpop.f32.mrf.mxu0
      %2823 = vmatprep.mubr.bf16.mxu0 0
      %2824 = vmatmul.mubr.bf16.gmra.mxu0 %v2713
      %v2825 = vpop.f32.mrf.mxu0
      %v2826 = vadd.f32 0.0, %v2825
      %v2827 = vpop.f32.mrf.mxu0
      %v2828 = vpop.f32.mrf.mxu0
      %v2829 = vadd.f32 0.0, %v2828
      %v2830 = vpop.f32.mrf.mxu0
      %2831 = vmatprep.mubr.bf16.mxu0 0
      %2832 = vmatmul.mubr.bf16.gmra.mxu0 %v2716
      %v2833 = vpop.f32.mrf.mxu0
      %v2834 = vadd.f32 0.0, %v2833
      %v2835 = vpop.f32.mrf.mxu0
      %v2836 = vpop.f32.mrf.mxu0
      %v2837 = vadd.f32 0.0, %v2836
      %v2838 = vpop.f32.mrf.mxu0
      %2839 = vmatprep.mubr.bf16.mxu0 0
      %2840 = vmatmul.mubr.bf16.gmra.mxu0 %v2719
      %v2841 = vpop.f32.mrf.mxu0
      %v2842 = vadd.f32 0.0, %v2841
      %v2843 = vpop.f32.mrf.mxu0
      %v2844 = vpop.f32.mrf.mxu0
      %v2845 = vadd.f32 0.0, %v2844
      %v2846 = vpop.f32.mrf.mxu0
      %2847 = vmatprep.mubr.bf16.mxu0 0
      %2848 = vmatmul.mubr.bf16.gmra.mxu0 %v2722
      %v2849 = vpop.f32.mrf.mxu0
      %v2850 = vadd.f32 0.0, %v2849
      %v2851 = vpop.f32.mrf.mxu0
      %v2852 = vpop.f32.mrf.mxu0
      %v2853 = vadd.f32 0.0, %v2852
      %v2854 = vpop.f32.mrf.mxu0
      %2855 = vmatprep.mubr.bf16.mxu0 0
      %2856 = vmatmul.mubr.bf16.gmra.mxu0 %v2725
      %v2857 = vpop.f32.mrf.mxu0
      %v2858 = vadd.f32 0.0, %v2857
      %v2859 = vpop.f32.mrf.mxu0
      %v2860 = vpop.f32.mrf.mxu0
      %v2861 = vadd.f32 0.0, %v2860
      %v2862 = vpop.f32.mrf.mxu0
      %2863 = vmatprep.mubr.bf16.mxu0 0
      %2864 = vmatmul.mubr.bf16.gmra.mxu0 %v2728
      %v2865 = vpop.f32.mrf.mxu0
      %v2866 = vadd.f32 0.0, %v2865
      %v2867 = vpop.f32.mrf.mxu0
      %v2868 = vpop.f32.mrf.mxu0
      %v2869 = vadd.f32 0.0, %v2868
      %v2870 = vpop.f32.mrf.mxu0
      %2871 = vmatprep.mubr.bf16.mxu0 0
      %2872 = vmatmul.mubr.bf16.gmra.mxu0 %v2731
      %v2873 = vpop.f32.mrf.mxu0
      %v2874 = vadd.f32 0.0, %v2873
      %v2875 = vpop.f32.mrf.mxu0
      %v2876 = vpop.f32.mrf.mxu0
      %v2877 = vadd.f32 0.0, %v2876
      %v2878 = vpop.f32.mrf.mxu0
      %2879 = vmatprep.mubr.bf16.mxu0 0
      %2880 = vmatmul.mubr.bf16.gmra.mxu0 %v2734
      %v2881 = vpop.f32.mrf.mxu0
      %v2882 = vadd.f32 0.0, %v2881
      %v2883 = vpop.f32.mrf.mxu0
      %v2884 = vpop.f32.mrf.mxu0
      %v2885 = vadd.f32 0.0, %v2884
      %v2886 = vpop.f32.mrf.mxu0
      %2887 = vmatprep.mubr.bf16.mxu0 0
      %2888 = vmatmul.mubr.bf16.gmra.mxu0 %v2737
      %v2889 = vpop.f32.mrf.mxu0
      %v2890 = vadd.f32 0.0, %v2889
      %v2891 = vpop.f32.mrf.mxu0
      %v2892 = vpop.f32.mrf.mxu0
      %v2893 = vadd.f32 0.0, %v2892
      %v2894 = vpop.f32.mrf.mxu0
      %2895 = vmatprep.mubr.bf16.mxu0 0
      %2896 = vmatmul.mubr.bf16.gmra.mxu0 %v2740
      %v2897 = vpop.f32.mrf.mxu0
      %v2898 = vadd.f32 0.0, %v2897
      %v2899 = vpop.f32.mrf.mxu0
      %v2900 = vpop.f32.mrf.mxu0
      %v2901 = vadd.f32 0.0, %v2900
      %v2902 = vpop.f32.mrf.mxu0
      %2903 = vmatprep.mubr.bf16.mxu0 0
      %2904 = vmatmul.mubr.bf16.gmra.mxu0 %v2743
      %v2905 = vpop.f32.mrf.mxu0
      %v2906 = vadd.f32 0.0, %v2905
      %v2907 = vpop.f32.mrf.mxu0
      %v2908 = vpop.f32.mrf.mxu0
      %v2909 = vadd.f32 0.0, %v2908
      %v2910 = vpop.f32.mrf.mxu0
      %2911 = vmatprep.mubr.bf16.mxu0 0
      %2912 = vmatmul.mubr.bf16.gmra.mxu0 %v2746
      %v2913 = vpop.f32.mrf.mxu0
      %v2914 = vadd.f32 0.0, %v2913
      %v2915 = vpop.f32.mrf.mxu0
      %v2916 = vpop.f32.mrf.mxu0
      %v2917 = vadd.f32 0.0, %v2916
      %v2918 = vpop.f32.mrf.mxu0
      %2919 = vmatprep.mubr.bf16.mxu0 0
      %2920 = vmatmul.mubr.bf16.gmra.mxu0 %v2749
      %v2921 = vpop.f32.mrf.mxu0
      %v2922 = vadd.f32 0.0, %v2921
      %v2923 = vpop.f32.mrf.mxu0
      %v2924 = vpop.f32.mrf.mxu0
      %v2925 = vadd.f32 0.0, %v2924
      %v2926 = vpop.f32.mrf.mxu0
      %2927 = vdwg.mxu0
      %v2928 = vadd.f32 %v2542, %v2786
      %v2929 = vadd.f32 %v2543, %v2789
      %v2930 = vadd.f32 %v2544, %v2794
      %v2931 = vadd.f32 %v2545, %v2797
      %v2932 = vadd.f32 %v2546, %v2802
      %v2933 = vadd.f32 %v2547, %v2805
      %v2934 = vadd.f32 %v2548, %v2810
      %v2935 = vadd.f32 %v2549, %v2813
      %v2936 = vadd.f32 %v2550, %v2818
      %v2937 = vadd.f32 %v2551, %v2821
      %v2938 = vadd.f32 %v2552, %v2826
      %v2939 = vadd.f32 %v2553, %v2829
      %v2940 = vadd.f32 %v2554, %v2834
      %v2941 = vadd.f32 %v2555, %v2837
      %v2942 = vadd.f32 %v2556, %v2842
      %v2943 = vadd.f32 %v2557, %v2845
      %v2944 = vadd.f32 %v2558, %v2850
      %v2945 = vadd.f32 %v2559, %v2853
      %v2946 = vadd.f32 %v2560, %v2858
      %v2947 = vadd.f32 %v2561, %v2861
      %v2948 = vadd.f32 %v2562, %v2866
      %v2949 = vadd.f32 %v2563, %v2869
      %v2950 = vadd.f32 %v2564, %v2874
      %v2951 = vadd.f32 %v2565, %v2877
      %v2952 = vadd.f32 %v2566, %v2882
      %v2953 = vadd.f32 %v2567, %v2885
      %v2954 = vadd.f32 %v2568, %v2890
      %v2955 = vadd.f32 %v2569, %v2893
      %v2956 = vadd.f32 %v2570, %v2898
      %v2957 = vadd.f32 %v2571, %v2901
      %v2958 = vadd.f32 %v2572, %v2906
      %v2959 = vadd.f32 %v2573, %v2909
      %v2960 = vadd.f32 %v2574, %v2914
      %v2961 = vadd.f32 %v2575, %v2917
      %v2962 = vadd.f32 %v2576, %v2922
      %v2963 = vadd.f32 %v2577, %v2925
      %s2964 = scalar_lea.vmem %s1, 256
      %v2965 = vld [vmem:[%s2964] sm:$0xf]
      %v2966 = vld [vmem:[%s2964 + $0x4] sm:$0xf]
      %v2967 = vld [vmem:[%s2964 + $0x8] sm:$0xf]
      %v2968 = vld [vmem:[%s2964 + $0xc] sm:$0xf]
      %v2969 = vld [vmem:[%s2964 + $0x10] sm:$0xf]
      %v2970 = vld [vmem:[%s2964 + $0x14] sm:$0xf]
      %v2971 = vld [vmem:[%s2964 + $0x18] sm:$0xf]
      %v2972 = vld [vmem:[%s2964 + $0x1c] sm:$0xf]
      %vm2973 = vcmask 1044480
      %v2974 = vrot.slane %v333, 3
      %v2975 = vrot.slane %v334, 3
      %v2976 = vsel %vm2973, %v2974, %v2975
      %v2977 = vrot.slane %v335, 3
      %v2978 = vsel %vm2973, %v2975, %v2977
      %v2979 = vrot.slane %v336, 3
      %v2980 = vsel %vm2973, %v2977, %v2979
      %v2981 = vrot.slane %v337, 3
      %v2982 = vsel %vm2973, %v2979, %v2981
      %v2983 = vrot.slane %v338, 3
      %v2984 = vsel %vm2973, %v2981, %v2983
      %v2985 = vrot.slane %v339, 3
      %v2986 = vsel %vm2973, %v2983, %v2985
      %v2987 = vrot.slane %v340, 3
      %v2988 = vsel %vm2973, %v2985, %v2987
      %v2989 = vrot.slane %v341, 3
      %v2990 = vsel %vm2973, %v2987, %v2989
      %v2991 = vrot.slane %v342, 3
      %v2992 = vsel %vm2973, %v2989, %v2991
      %v2993 = vrot.slane %v343, 3
      %v2994 = vsel %vm2973, %v2991, %v2993
      %v2995 = vrot.slane %v344, 3
      %v2996 = vsel %vm2973, %v2993, %v2995
      %v2997 = vrot.slane %v345, 3
      %v2998 = vsel %vm2973, %v2995, %v2997
      %v2999 = vrot.slane %v346, 3
      %v3000 = vsel %vm2973, %v2997, %v2999
      %v3001 = vrot.slane %v347, 3
      %v3002 = vsel %vm2973, %v2999, %v3001
      %v3003 = vrot.slane %v348, 3
      %v3004 = vsel %vm2973, %v3001, %v3003
      %v3005 = vrot.slane %v1343, 3
      %v3006 = vsel %vm2973, %v3003, %v3005
      %v3007 = vrot.slane %v2329, 3
      %v3008 = vsel %vm2973, %v3005, %v3007
      %v3009 = vrot.slane %v2330, 3
      %v3010 = vsel %vm2973, %v3007, %v3009
      %v3019 = vunpack.c.l.b16 %v2965
      %v3020 = vunpack.c.l.b16 %v2966
      %v3021 = vunpack.c.l.b16 %v2967
      %v3022 = vunpack.c.l.b16 %v2968
      %v3023 = vunpack.c.l.b16 %v2969
      %v3024 = vunpack.c.l.b16 %v2970
      %v3025 = vunpack.c.l.b16 %v2971
      %v3026 = vunpack.c.l.b16 %v2972
      %v3027 = vpack.c.b16 %v3020, %v3019
      %v3028 = vpack.c.b16 %v3022, %v3021
      %v3029 = vpack.c.b16 %v3024, %v3023
      %v3030 = vpack.c.b16 %v3026, %v3025
      %v3036 = vsel %vm523, %v2976, 0
      %v3039 = vsel %vm523, %v2978, 0
      %v3042 = vsel %vm523, %v2980, 0
      %v3045 = vsel %vm523, %v2982, 0
      %v3048 = vsel %vm523, %v2984, 0
      %v3051 = vsel %vm523, %v2986, 0
      %v3054 = vsel %vm523, %v2988, 0
      %v3057 = vsel %vm523, %v2990, 0
      %v3060 = vsel %vm523, %v2992, 0
      %v3063 = vsel %vm523, %v2994, 0
      %v3066 = vsel %vm523, %v2996, 0
      %v3069 = vsel %vm523, %v2998, 0
      %v3072 = vsel %vm523, %v3000, 0
      %v3075 = vsel %vm523, %v3002, 0
      %v3078 = vsel %vm523, %v3004, 0
      %v3081 = vsel %vm523, %v3006, 0
      %v3084 = vsel %vm523, %v3008, 0
      %v3087 = vsel %vm523, %v3010, 0
      %3089 = vmatprep.subr.bf16.mxu0 0
      %3090 = vmatpush1.bf16.msra.mxu0 0
      %3091 = vmatprep.subr.bf16.mxu0 0
      %3092 = vmatpush1.bf16.msra.mxu0 0
      %3093 = vmatprep.subr.bf16.mxu0 0
      %3094 = vmatpush1.bf16.msra.mxu0 0
      %3095 = vmatprep.subr.bf16.mxu0 0
      %3096 = vmatpush1.bf16.msra.mxu0 0
      %3097 = vmatprep.subr.bf16.mxu0 0
      %3098 = vmatpush1.bf16.msra.mxu0 %v3030
      %3099 = vmatprep.subr.bf16.mxu0 0
      %3100 = vmatpush1.bf16.msra.mxu0 %v3029
      %3101 = vmatprep.subr.bf16.mxu0 0
      %3102 = vmatpush1.bf16.msra.mxu0 %v3028
      %3103 = vmatprep.subr.bf16.mxu0 0
      %3104 = vmatpush1.bf16.msra.mxu0 %v3027
      %3105 = vmatprep.subr.bf16.mxu0 0
      %3106 = vmatpush2.bf16.msra.mxu0 0
      %3107 = vmatprep.subr.bf16.mxu0 0
      %3108 = vmatpush2.bf16.msra.mxu0 0
      %3109 = vmatprep.subr.bf16.mxu0 0
      %3110 = vmatpush2.bf16.msra.mxu0 0
      %3111 = vmatprep.subr.bf16.mxu0 0
      %3112 = vmatpush2.bf16.msra.mxu0 0
      %3113 = vmatprep.subr.bf16.mxu0 0
      %3114 = vmatpush2.bf16.msra.mxu0 0
      %3115 = vmatprep.subr.bf16.mxu0 0
      %3116 = vmatpush2.bf16.msra.mxu0 0
      %3117 = vmatprep.subr.bf16.mxu0 0
      %3118 = vmatpush2.bf16.msra.mxu0 0
      %3119 = vmatprep.subr.bf16.mxu0 0
      %3120 = vmatpush2.bf16.msra.mxu0 0
      %3121 = vmatprep.mubr.bf16.mxu0 0
      %3122 = vmatmul.mubr.bf16.gmra.mxu0 %v3036
      %v3123 = vpop.f32.mrf.mxu0
      %v3124 = vadd.f32 0.0, %v3123
      %v3125 = vpop.f32.mrf.mxu0
      %v3126 = vpop.f32.mrf.mxu0
      %v3127 = vadd.f32 0.0, %v3126
      %v3128 = vpop.f32.mrf.mxu0
      %3129 = vmatprep.mubr.bf16.mxu0 0
      %3130 = vmatmul.mubr.bf16.gmra.mxu0 %v3039
      %v3131 = vpop.f32.mrf.mxu0
      %v3132 = vadd.f32 0.0, %v3131
      %v3133 = vpop.f32.mrf.mxu0
      %v3134 = vpop.f32.mrf.mxu0
      %v3135 = vadd.f32 0.0, %v3134
      %v3136 = vpop.f32.mrf.mxu0
      %3137 = vmatprep.mubr.bf16.mxu0 0
      %3138 = vmatmul.mubr.bf16.gmra.mxu0 %v3042
      %v3139 = vpop.f32.mrf.mxu0
      %v3140 = vadd.f32 0.0, %v3139
      %v3141 = vpop.f32.mrf.mxu0
      %v3142 = vpop.f32.mrf.mxu0
      %v3143 = vadd.f32 0.0, %v3142
      %v3144 = vpop.f32.mrf.mxu0
      %3145 = vmatprep.mubr.bf16.mxu0 0
      %3146 = vmatmul.mubr.bf16.gmra.mxu0 %v3045
      %v3147 = vpop.f32.mrf.mxu0
      %v3148 = vadd.f32 0.0, %v3147
      %v3149 = vpop.f32.mrf.mxu0
      %v3150 = vpop.f32.mrf.mxu0
      %v3151 = vadd.f32 0.0, %v3150
      %v3152 = vpop.f32.mrf.mxu0
      %3153 = vmatprep.mubr.bf16.mxu0 0
      %3154 = vmatmul.mubr.bf16.gmra.mxu0 %v3048
      %v3155 = vpop.f32.mrf.mxu0
      %v3156 = vadd.f32 0.0, %v3155
      %v3157 = vpop.f32.mrf.mxu0
      %v3158 = vpop.f32.mrf.mxu0
      %v3159 = vadd.f32 0.0, %v3158
      %v3160 = vpop.f32.mrf.mxu0
      %3161 = vmatprep.mubr.bf16.mxu0 0
      %3162 = vmatmul.mubr.bf16.gmra.mxu0 %v3051
      %v3163 = vpop.f32.mrf.mxu0
      %v3164 = vadd.f32 0.0, %v3163
      %v3165 = vpop.f32.mrf.mxu0
      %v3166 = vpop.f32.mrf.mxu0
      %v3167 = vadd.f32 0.0, %v3166
      %v3168 = vpop.f32.mrf.mxu0
      %3169 = vmatprep.mubr.bf16.mxu0 0
      %3170 = vmatmul.mubr.bf16.gmra.mxu0 %v3054
      %v3171 = vpop.f32.mrf.mxu0
      %v3172 = vadd.f32 0.0, %v3171
      %v3173 = vpop.f32.mrf.mxu0
      %v3174 = vpop.f32.mrf.mxu0
      %v3175 = vadd.f32 0.0, %v3174
      %v3176 = vpop.f32.mrf.mxu0
      %3177 = vmatprep.mubr.bf16.mxu0 0
      %3178 = vmatmul.mubr.bf16.gmra.mxu0 %v3057
      %v3179 = vpop.f32.mrf.mxu0
      %v3180 = vadd.f32 0.0, %v3179
      %v3181 = vpop.f32.mrf.mxu0
      %v3182 = vpop.f32.mrf.mxu0
      %v3183 = vadd.f32 0.0, %v3182
      %v3184 = vpop.f32.mrf.mxu0
      %3185 = vmatprep.mubr.bf16.mxu0 0
      %3186 = vmatmul.mubr.bf16.gmra.mxu0 %v3060
      %v3187 = vpop.f32.mrf.mxu0
      %v3188 = vadd.f32 0.0, %v3187
      %v3189 = vpop.f32.mrf.mxu0
      %v3190 = vpop.f32.mrf.mxu0
      %v3191 = vadd.f32 0.0, %v3190
      %v3192 = vpop.f32.mrf.mxu0
      %3193 = vmatprep.mubr.bf16.mxu0 0
      %3194 = vmatmul.mubr.bf16.gmra.mxu0 %v3063
      %v3195 = vpop.f32.mrf.mxu0
      %v3196 = vadd.f32 0.0, %v3195
      %v3197 = vpop.f32.mrf.mxu0
      %v3198 = vpop.f32.mrf.mxu0
      %v3199 = vadd.f32 0.0, %v3198
      %v3200 = vpop.f32.mrf.mxu0
      %3201 = vmatprep.mubr.bf16.mxu0 0
      %3202 = vmatmul.mubr.bf16.gmra.mxu0 %v3066
      %v3203 = vpop.f32.mrf.mxu0
      %v3204 = vadd.f32 0.0, %v3203
      %v3205 = vpop.f32.mrf.mxu0
      %v3206 = vpop.f32.mrf.mxu0
      %v3207 = vadd.f32 0.0, %v3206
      %v3208 = vpop.f32.mrf.mxu0
      %3209 = vmatprep.mubr.bf16.mxu0 0
      %3210 = vmatmul.mubr.bf16.gmra.mxu0 %v3069
      %v3211 = vpop.f32.mrf.mxu0
      %v3212 = vadd.f32 0.0, %v3211
      %v3213 = vpop.f32.mrf.mxu0
      %v3214 = vpop.f32.mrf.mxu0
      %v3215 = vadd.f32 0.0, %v3214
      %v3216 = vpop.f32.mrf.mxu0
      %3217 = vmatprep.mubr.bf16.mxu0 0
      %3218 = vmatmul.mubr.bf16.gmra.mxu0 %v3072
      %v3219 = vpop.f32.mrf.mxu0
      %v3220 = vadd.f32 0.0, %v3219
      %v3221 = vpop.f32.mrf.mxu0
      %v3222 = vpop.f32.mrf.mxu0
      %v3223 = vadd.f32 0.0, %v3222
      %v3224 = vpop.f32.mrf.mxu0
      %3225 = vmatprep.mubr.bf16.mxu0 0
      %3226 = vmatmul.mubr.bf16.gmra.mxu0 %v3075
      %v3227 = vpop.f32.mrf.mxu0
      %v3228 = vadd.f32 0.0, %v3227
      %v3229 = vpop.f32.mrf.mxu0
      %v3230 = vpop.f32.mrf.mxu0
      %v3231 = vadd.f32 0.0, %v3230
      %v3232 = vpop.f32.mrf.mxu0
      %3233 = vmatprep.mubr.bf16.mxu0 0
      %3234 = vmatmul.mubr.bf16.gmra.mxu0 %v3078
      %v3235 = vpop.f32.mrf.mxu0
      %v3236 = vadd.f32 0.0, %v3235
      %v3237 = vpop.f32.mrf.mxu0
      %v3238 = vpop.f32.mrf.mxu0
      %v3239 = vadd.f32 0.0, %v3238
      %v3240 = vpop.f32.mrf.mxu0
      %3241 = vmatprep.mubr.bf16.mxu0 0
      %3242 = vmatmul.mubr.bf16.gmra.mxu0 %v3081
      %v3243 = vpop.f32.mrf.mxu0
      %v3244 = vadd.f32 0.0, %v3243
      %v3245 = vpop.f32.mrf.mxu0
      %v3246 = vpop.f32.mrf.mxu0
      %v3247 = vadd.f32 0.0, %v3246
      %v3248 = vpop.f32.mrf.mxu0
      %3249 = vmatprep.mubr.bf16.mxu0 0
      %3250 = vmatmul.mubr.bf16.gmra.mxu0 %v3084
      %v3251 = vpop.f32.mrf.mxu0
      %v3252 = vadd.f32 0.0, %v3251
      %v3253 = vpop.f32.mrf.mxu0
      %v3254 = vpop.f32.mrf.mxu0
      %v3255 = vadd.f32 0.0, %v3254
      %v3256 = vpop.f32.mrf.mxu0
      %3257 = vmatprep.mubr.bf16.mxu0 0
      %3258 = vmatmul.mubr.bf16.gmra.mxu0 %v3087
      %v3259 = vpop.f32.mrf.mxu0
      %v3260 = vadd.f32 0.0, %v3259
      %v3261 = vpop.f32.mrf.mxu0
      %v3262 = vpop.f32.mrf.mxu0
      %v3263 = vadd.f32 0.0, %v3262
      %v3264 = vpop.f32.mrf.mxu0
      %3265 = vdwg.mxu0
      %v3266 = vadd.f32 %v2928, %v3124
      %v3267 = vadd.f32 %v2929, %v3127
      %v3268 = vadd.f32 %v2930, %v3132
      %v3269 = vadd.f32 %v2931, %v3135
      %v3270 = vadd.f32 %v2932, %v3140
      %v3271 = vadd.f32 %v2933, %v3143
      %v3272 = vadd.f32 %v2934, %v3148
      %v3273 = vadd.f32 %v2935, %v3151
      %v3274 = vadd.f32 %v2936, %v3156
      %v3275 = vadd.f32 %v2937, %v3159
      %v3276 = vadd.f32 %v2938, %v3164
      %v3277 = vadd.f32 %v2939, %v3167
      %v3278 = vadd.f32 %v2940, %v3172
      %v3279 = vadd.f32 %v2941, %v3175
      %v3280 = vadd.f32 %v2942, %v3180
      %v3281 = vadd.f32 %v2943, %v3183
      %v3282 = vadd.f32 %v2944, %v3188
      %v3283 = vadd.f32 %v2945, %v3191
      %v3284 = vadd.f32 %v2946, %v3196
      %v3285 = vadd.f32 %v2947, %v3199
      %v3286 = vadd.f32 %v2948, %v3204
      %v3287 = vadd.f32 %v2949, %v3207
      %v3288 = vadd.f32 %v2950, %v3212
      %v3289 = vadd.f32 %v2951, %v3215
      %v3290 = vadd.f32 %v2952, %v3220
      %v3291 = vadd.f32 %v2953, %v3223
      %v3292 = vadd.f32 %v2954, %v3228
      %v3293 = vadd.f32 %v2955, %v3231
      %v3294 = vadd.f32 %v2956, %v3236
      %v3295 = vadd.f32 %v2957, %v3239
      %v3296 = vadd.f32 %v2958, %v3244
      %v3297 = vadd.f32 %v2959, %v3247
      %v3298 = vadd.f32 %v2960, %v3252
      %v3299 = vadd.f32 %v2961, %v3255
      %v3300 = vadd.f32 %v2962, %v3260
      %v3301 = vadd.f32 %v2963, %v3263
      %v3302 = vld [vmem:[%s2] sm:$0x1]
      %v3304 = vlaneseq
      %v3305 = vshrl.u32 %v3304, 7
      %v3306 = vsub.s32 0, %v3305
      %v3307 = vrot.slane %v3302, %v3306
      %v3309 = vadd.f32 %v3266, %v3307
      %v3310 = vadd.f32 %v3267, %v3307
      %v3311 = vadd.f32 %v3268, %v3307
      %v3312 = vadd.f32 %v3269, %v3307
      %v3313 = vadd.f32 %v3270, %v3307
      %v3314 = vadd.f32 %v3271, %v3307
      %v3315 = vadd.f32 %v3272, %v3307
      %v3316 = vadd.f32 %v3273, %v3307
      %v3317 = vadd.f32 %v3274, %v3307
      %v3318 = vadd.f32 %v3275, %v3307
      %v3319 = vadd.f32 %v3276, %v3307
      %v3320 = vadd.f32 %v3277, %v3307
      %v3321 = vadd.f32 %v3278, %v3307
      %v3322 = vadd.f32 %v3279, %v3307
      %v3323 = vadd.f32 %v3280, %v3307
      %v3324 = vadd.f32 %v3281, %v3307
      %v3325 = vadd.f32 %v3282, %v3307
      %v3326 = vadd.f32 %v3283, %v3307
      %v3327 = vadd.f32 %v3284, %v3307
      %v3328 = vadd.f32 %v3285, %v3307
      %v3329 = vadd.f32 %v3286, %v3307
      %v3330 = vadd.f32 %v3287, %v3307
      %v3331 = vadd.f32 %v3288, %v3307
      %v3332 = vadd.f32 %v3289, %v3307
      %v3333 = vadd.f32 %v3290, %v3307
      %v3334 = vadd.f32 %v3291, %v3307
      %v3335 = vadd.f32 %v3292, %v3307
      %v3336 = vadd.f32 %v3293, %v3307
      %v3337 = vadd.f32 %v3294, %v3307
      %v3338 = vadd.f32 %v3295, %v3307
      %v3339 = vadd.f32 %v3296, %v3307
      %v3340 = vadd.f32 %v3297, %v3307
      %v3341 = vadd.f32 %v3298, %v3307
      %v3342 = vadd.f32 %v3299, %v3307
      %v3343 = vadd.f32 %v3300, %v3307
      %v3344 = vadd.f32 %v3301, %v3307
      %v3345 = vmax.f32 %v3309, 0.0
      %v3346 = vmax.f32 %v3310, 0.0
      %v3347 = vmax.f32 %v3311, 0.0
      %v3348 = vmax.f32 %v3312, 0.0
      %v3349 = vmax.f32 %v3313, 0.0
      %v3350 = vmax.f32 %v3314, 0.0
      %v3351 = vmax.f32 %v3315, 0.0
      %v3352 = vmax.f32 %v3316, 0.0
      %v3353 = vmax.f32 %v3317, 0.0
      %v3354 = vmax.f32 %v3318, 0.0
      %v3355 = vmax.f32 %v3319, 0.0
      %v3356 = vmax.f32 %v3320, 0.0
      %v3357 = vmax.f32 %v3321, 0.0
      %v3358 = vmax.f32 %v3322, 0.0
      %v3359 = vmax.f32 %v3323, 0.0
      %v3360 = vmax.f32 %v3324, 0.0
      %v3361 = vmax.f32 %v3325, 0.0
      %v3362 = vmax.f32 %v3326, 0.0
      %v3363 = vmax.f32 %v3327, 0.0
      %v3364 = vmax.f32 %v3328, 0.0
      %v3365 = vmax.f32 %v3329, 0.0
      %v3366 = vmax.f32 %v3330, 0.0
      %v3367 = vmax.f32 %v3331, 0.0
      %v3368 = vmax.f32 %v3332, 0.0
      %v3369 = vmax.f32 %v3333, 0.0
      %v3370 = vmax.f32 %v3334, 0.0
      %v3371 = vmax.f32 %v3335, 0.0
      %v3372 = vmax.f32 %v3336, 0.0
      %v3373 = vmax.f32 %v3337, 0.0
      %v3374 = vmax.f32 %v3338, 0.0
      %v3375 = vmax.f32 %v3339, 0.0
      %v3376 = vmax.f32 %v3340, 0.0
      %v3377 = vmax.f32 %v3341, 0.0
      %v3378 = vmax.f32 %v3342, 0.0
      %v3379 = vmax.f32 %v3343, 0.0
      %v3380 = vmax.f32 %v3344, 0.0
      %vm3417 = vcmask 1046528
      %v3418 = vrot.slane %v3345, 1
      %v3419 = vrot.slane %v3346, 1
      %v3420 = vsel %vm3417, %v3418, %v3419
      %v3421 = vrot.slane %v3347, 1
      %v3422 = vsel %vm3417, %v3419, %v3421
      %v3423 = vrot.slane %v3348, 1
      %v3424 = vsel %vm3417, %v3421, %v3423
      %v3425 = vrot.slane %v3349, 1
      %v3426 = vsel %vm3417, %v3423, %v3425
      %v3427 = vrot.slane %v3350, 1
      %v3428 = vsel %vm3417, %v3425, %v3427
      %v3429 = vrot.slane %v3351, 1
      %v3430 = vsel %vm3417, %v3427, %v3429
      %v3431 = vrot.slane %v3352, 1
      %v3432 = vsel %vm3417, %v3429, %v3431
      %v3433 = vrot.slane %v3353, 1
      %v3434 = vsel %vm3417, %v3431, %v3433
      %v3435 = vrot.slane %v3354, 1
      %v3436 = vsel %vm3417, %v3433, %v3435
      %v3437 = vrot.slane %v3355, 1
      %v3438 = vsel %vm3417, %v3435, %v3437
      %v3439 = vrot.slane %v3356, 1
      %v3440 = vsel %vm3417, %v3437, %v3439
      %v3441 = vrot.slane %v3357, 1
      %v3442 = vsel %vm3417, %v3439, %v3441
      %v3443 = vrot.slane %v3358, 1
      %v3444 = vsel %vm3417, %v3441, %v3443
      %v3445 = vrot.slane %v3359, 1
      %v3446 = vsel %vm3417, %v3443, %v3445
      %v3447 = vrot.slane %v3360, 1
      %v3448 = vsel %vm3417, %v3445, %v3447
      %v3449 = vrot.slane %v3361, 1
      %v3450 = vsel %vm3417, %v3447, %v3449
      %v3451 = vrot.slane %v3362, 1
      %v3452 = vsel %vm3417, %v3449, %v3451
      %v3453 = vrot.slane %v3363, 1
      %v3454 = vsel %vm3417, %v3451, %v3453
      %v3455 = vrot.slane %v3364, 1
      %v3456 = vsel %vm3417, %v3453, %v3455
      %v3457 = vrot.slane %v3365, 1
      %v3458 = vsel %vm3417, %v3455, %v3457
      %v3459 = vrot.slane %v3366, 1
      %v3460 = vsel %vm3417, %v3457, %v3459
      %v3461 = vrot.slane %v3367, 1
      %v3462 = vsel %vm3417, %v3459, %v3461
      %v3463 = vrot.slane %v3368, 1
      %v3464 = vsel %vm3417, %v3461, %v3463
      %v3465 = vrot.slane %v3369, 1
      %v3466 = vsel %vm3417, %v3463, %v3465
      %v3467 = vrot.slane %v3370, 1
      %v3468 = vsel %vm3417, %v3465, %v3467
      %v3469 = vrot.slane %v3371, 1
      %v3470 = vsel %vm3417, %v3467, %v3469
      %v3471 = vrot.slane %v3372, 1
      %v3472 = vsel %vm3417, %v3469, %v3471
      %v3473 = vrot.slane %v3373, 1
      %v3474 = vsel %vm3417, %v3471, %v3473
      %v3475 = vrot.slane %v3374, 1
      %v3476 = vsel %vm3417, %v3473, %v3475
      %v3477 = vrot.slane %v3375, 1
      %v3478 = vsel %vm3417, %v3475, %v3477
      %v3479 = vrot.slane %v3376, 1
      %v3480 = vsel %vm3417, %v3477, %v3479
      %v3481 = vrot.slane %v3377, 1
      %v3482 = vsel %vm3417, %v3479, %v3481
      %v3483 = vrot.slane %v3378, 1
      %v3484 = vsel %vm3417, %v3481, %v3483
      %v3485 = vrot.slane %v3379, 1
      %v3486 = vsel %vm3417, %v3483, %v3485
      %v3487 = vrot.slane %v3380, 1
      %v3488 = vsel %vm3417, %v3485, %v3487
      %v3525 = vmax.f32 %v3345, %v3420
      %v3526 = vmax.f32 %v3346, %v3422
      %v3527 = vmax.f32 %v3347, %v3424
      %v3528 = vmax.f32 %v3348, %v3426
      %v3529 = vmax.f32 %v3349, %v3428
      %v3530 = vmax.f32 %v3350, %v3430
      %v3531 = vmax.f32 %v3351, %v3432
      %v3532 = vmax.f32 %v3352, %v3434
      %v3533 = vmax.f32 %v3353, %v3436
      %v3534 = vmax.f32 %v3354, %v3438
      %v3535 = vmax.f32 %v3355, %v3440
      %v3536 = vmax.f32 %v3356, %v3442
      %v3537 = vmax.f32 %v3357, %v3444
      %v3538 = vmax.f32 %v3358, %v3446
      %v3539 = vmax.f32 %v3359, %v3448
      %v3540 = vmax.f32 %v3360, %v3450
      %v3541 = vmax.f32 %v3361, %v3452
      %v3542 = vmax.f32 %v3362, %v3454
      %v3543 = vmax.f32 %v3363, %v3456
      %v3544 = vmax.f32 %v3364, %v3458
      %v3545 = vmax.f32 %v3365, %v3460
      %v3546 = vmax.f32 %v3366, %v3462
      %v3547 = vmax.f32 %v3367, %v3464
      %v3548 = vmax.f32 %v3368, %v3466
      %v3549 = vmax.f32 %v3369, %v3468
      %v3550 = vmax.f32 %v3370, %v3470
      %v3551 = vmax.f32 %v3371, %v3472
      %v3552 = vmax.f32 %v3372, %v3474
      %v3553 = vmax.f32 %v3373, %v3476
      %v3554 = vmax.f32 %v3374, %v3478
      %v3555 = vmax.f32 %v3375, %v3480
      %v3556 = vmax.f32 %v3376, %v3482
      %v3557 = vmax.f32 %v3377, %v3484
      %v3558 = vmax.f32 %v3378, %v3486
      %v3559 = vmax.f32 %v3379, %v3488
      %v3560 = vmax.f32 %v3380, %v3487
      %vm3595 = vcmask 1045504
      %v3596 = vrot.slane %v3527, 2
      %v3597 = vrot.slane %v3528, 2
      %v3598 = vsel %vm3595, %v3596, %v3597
      %v3599 = vrot.slane %v3529, 2
      %v3600 = vsel %vm3595, %v3597, %v3599
      %v3601 = vrot.slane %v3530, 2
      %v3602 = vsel %vm3595, %v3599, %v3601
      %v3603 = vrot.slane %v3531, 2
      %v3604 = vsel %vm3595, %v3601, %v3603
      %v3605 = vrot.slane %v3532, 2
      %v3606 = vsel %vm3595, %v3603, %v3605
      %v3607 = vrot.slane %v3533, 2
      %v3608 = vsel %vm3595, %v3605, %v3607
      %v3609 = vrot.slane %v3534, 2
      %v3610 = vsel %vm3595, %v3607, %v3609
      %v3611 = vrot.slane %v3535, 2
      %v3612 = vsel %vm3595, %v3609, %v3611
      %v3613 = vrot.slane %v3536, 2
      %v3614 = vsel %vm3595, %v3611, %v3613
      %v3615 = vrot.slane %v3537, 2
      %v3616 = vsel %vm3595, %v3613, %v3615
      %v3617 = vrot.slane %v3538, 2
      %v3618 = vsel %vm3595, %v3615, %v3617
      %v3619 = vrot.slane %v3539, 2
      %v3620 = vsel %vm3595, %v3617, %v3619
      %v3621 = vrot.slane %v3540, 2
      %v3622 = vsel %vm3595, %v3619, %v3621
      %v3623 = vrot.slane %v3541, 2
      %v3624 = vsel %vm3595, %v3621, %v3623
      %v3625 = vrot.slane %v3542, 2
      %v3626 = vsel %vm3595, %v3623, %v3625
      %v3627 = vrot.slane %v3543, 2
      %v3628 = vsel %vm3595, %v3625, %v3627
      %v3629 = vrot.slane %v3544, 2
      %v3630 = vsel %vm3595, %v3627, %v3629
      %v3631 = vrot.slane %v3545, 2
      %v3632 = vsel %vm3595, %v3629, %v3631
      %v3633 = vrot.slane %v3546, 2
      %v3634 = vsel %vm3595, %v3631, %v3633
      %v3635 = vrot.slane %v3547, 2
      %v3636 = vsel %vm3595, %v3633, %v3635
      %v3637 = vrot.slane %v3548, 2
      %v3638 = vsel %vm3595, %v3635, %v3637
      %v3639 = vrot.slane %v3549, 2
      %v3640 = vsel %vm3595, %v3637, %v3639
      %v3641 = vrot.slane %v3550, 2
      %v3642 = vsel %vm3595, %v3639, %v3641
      %v3643 = vrot.slane %v3551, 2
      %v3644 = vsel %vm3595, %v3641, %v3643
      %v3645 = vrot.slane %v3552, 2
      %v3646 = vsel %vm3595, %v3643, %v3645
      %v3647 = vrot.slane %v3553, 2
      %v3648 = vsel %vm3595, %v3645, %v3647
      %v3649 = vrot.slane %v3554, 2
      %v3650 = vsel %vm3595, %v3647, %v3649
      %v3651 = vrot.slane %v3555, 2
      %v3652 = vsel %vm3595, %v3649, %v3651
      %v3653 = vrot.slane %v3556, 2
      %v3654 = vsel %vm3595, %v3651, %v3653
      %v3655 = vrot.slane %v3557, 2
      %v3656 = vsel %vm3595, %v3653, %v3655
      %v3657 = vrot.slane %v3558, 2
      %v3658 = vsel %vm3595, %v3655, %v3657
      %v3659 = vrot.slane %v3559, 2
      %v3660 = vsel %vm3595, %v3657, %v3659
      %v3661 = vrot.slane %v3560, 2
      %v3662 = vsel %vm3595, %v3659, %v3661
      %v3697 = vmax.f32 %v3525, %v3598
      %v3698 = vmax.f32 %v3526, %v3600
      %v3699 = vmax.f32 %v3527, %v3602
      %v3700 = vmax.f32 %v3528, %v3604
      %v3701 = vmax.f32 %v3529, %v3606
      %v3702 = vmax.f32 %v3530, %v3608
      %v3703 = vmax.f32 %v3531, %v3610
      %v3704 = vmax.f32 %v3532, %v3612
      %v3705 = vmax.f32 %v3533, %v3614
      %v3706 = vmax.f32 %v3534, %v3616
      %v3707 = vmax.f32 %v3535, %v3618
      %v3708 = vmax.f32 %v3536, %v3620
      %v3709 = vmax.f32 %v3537, %v3622
      %v3710 = vmax.f32 %v3538, %v3624
      %v3711 = vmax.f32 %v3539, %v3626
      %v3712 = vmax.f32 %v3540, %v3628
      %v3713 = vmax.f32 %v3541, %v3630
      %v3714 = vmax.f32 %v3542, %v3632
      %v3715 = vmax.f32 %v3543, %v3634
      %v3716 = vmax.f32 %v3544, %v3636
      %v3717 = vmax.f32 %v3545, %v3638
      %v3718 = vmax.f32 %v3546, %v3640
      %v3719 = vmax.f32 %v3547, %v3642
      %v3720 = vmax.f32 %v3548, %v3644
      %v3721 = vmax.f32 %v3549, %v3646
      %v3722 = vmax.f32 %v3550, %v3648
      %v3723 = vmax.f32 %v3551, %v3650
      %v3724 = vmax.f32 %v3552, %v3652
      %v3725 = vmax.f32 %v3553, %v3654
      %v3726 = vmax.f32 %v3554, %v3656
      %v3727 = vmax.f32 %v3555, %v3658
      %v3728 = vmax.f32 %v3556, %v3660
      %v3729 = vmax.f32 %v3557, %v3662
      %v3730 = vmax.f32 %v3558, %v3661
      %v3731 = vld [vmem:[%s3] sm:$0xff]
      %v3732 = vld [vmem:[%s3 + $0x8] sm:$0xf]
      %v3733 = vld [vmem:[%s3 + $0xc] sm:$0xff]
      %v3734 = vld [vmem:[%s3 + $0x14] sm:$0xf]
      %v3735 = vld [vmem:[%s3 + $0x18] sm:$0xff]
      %v3736 = vld [vmem:[%s3 + $0x20] sm:$0xf]
      %v3737 = vld [vmem:[%s3 + $0x24] sm:$0xff]
      %v3738 = vld [vmem:[%s3 + $0x2c] sm:$0xf]
      %v3739 = vld [vmem:[%s3 + $0x30] sm:$0xff]
      %v3740 = vld [vmem:[%s3 + $0x38] sm:$0xf]
      %v3741 = vld [vmem:[%s3 + $0x3c] sm:$0xff]
      %v3742 = vld [vmem:[%s3 + $0x44] sm:$0xf]
      %v3743 = vld [vmem:[%s3 + $0x48] sm:$0xff]
      %v3744 = vld [vmem:[%s3 + $0x50] sm:$0xf]
      %v3745 = vld [vmem:[%s3 + $0x54] sm:$0xff]
      %v3746 = vld [vmem:[%s3 + $0x5c] sm:$0xf]
      %v3747 = vpack.c.bf16 %v3698, %v3697
      %v3748 = vpack.c.bf16 %v3700, %v3699
      %v3749 = vpack.c.bf16 %v3702, %v3701
      %v3750 = vpack.c.bf16 %v3704, %v3703
      %v3751 = vpack.c.bf16 %v3706, %v3705
      %v3752 = vpack.c.bf16 %v3708, %v3707
      %v3753 = vpack.c.bf16 %v3710, %v3709
      %v3754 = vpack.c.bf16 %v3712, %v3711
      %v3755 = vpack.c.bf16 %v3714, %v3713
      %v3756 = vpack.c.bf16 %v3716, %v3715
      %v3757 = vpack.c.bf16 %v3718, %v3717
      %v3758 = vpack.c.bf16 %v3720, %v3719
      %v3759 = vpack.c.bf16 %v3722, %v3721
      %v3760 = vpack.c.bf16 %v3724, %v3723
      %v3761 = vpack.c.bf16 %v3726, %v3725
      %v3762 = vpack.c.bf16 %v3728, %v3727
      %v3763 = vpack.c.bf16 %v3730, %v3729
      %v3780 = vunpack.c.l.b16 %v3731
      %v3781 = vunpack.c.h.b16 %v3731
      %v3782 = vunpack.c.l.b16 %v3732
      %v3783 = vunpack.c.l.b16 %v3733
      %v3784 = vunpack.c.h.b16 %v3733
      %v3785 = vunpack.c.l.b16 %v3734
      %v3786 = vunpack.c.l.b16 %v3735
      %v3787 = vunpack.c.h.b16 %v3735
      %v3788 = vunpack.c.l.b16 %v3736
      %v3789 = vunpack.c.l.b16 %v3737
      %v3790 = vunpack.c.h.b16 %v3737
      %v3791 = vunpack.c.l.b16 %v3738
      %v3792 = vunpack.c.l.b16 %v3739
      %v3793 = vunpack.c.h.b16 %v3739
      %v3794 = vunpack.c.l.b16 %v3740
      %v3795 = vunpack.c.l.b16 %v3741
      %v3796 = vunpack.c.h.b16 %v3741
      %v3797 = vunpack.c.l.b16 %v3742
      %v3798 = vunpack.c.l.b16 %v3743
      %v3799 = vunpack.c.h.b16 %v3743
      %v3800 = vunpack.c.l.b16 %v3744
      %v3801 = vunpack.c.l.b16 %v3745
      %v3802 = vunpack.c.h.b16 %v3745
      %v3803 = vunpack.c.l.b16 %v3746
      %v3804 = vpack.c.b16 %v3783, %v3780
      %v3805 = vpack.c.b16 %v3784, %v3781
      %v3806 = vpack.c.b16 %v3785, %v3782
      %v3807 = vpack.c.b16 %v3789, %v3786
      %v3808 = vpack.c.b16 %v3790, %v3787
      %v3809 = vpack.c.b16 %v3791, %v3788
      %v3810 = vpack.c.b16 %v3795, %v3792
      %v3811 = vpack.c.b16 %v3796, %v3793
      %v3812 = vpack.c.b16 %v3797, %v3794
      %v3813 = vpack.c.b16 %v3801, %v3798
      %v3814 = vpack.c.b16 %v3802, %v3799
      %v3815 = vpack.c.b16 %v3803, %v3800
      %vm3824 = vcmask 105472
      %v3826 = vsel %vm3824, %v3806, 0
      %v3829 = vsel %vm3824, %v3809, 0
      %v3832 = vsel %vm3824, %v3812, 0
      %v3835 = vsel %vm3824, %v3815, 0
      %v3837 = vsel %vm3595, 4294967295, 65535
      %v3838 = vsel %vm3417, %v3837, 0
      %v3840 = vand.u32 %v3763, %v3838
      %3842 = vmatprep.subr.bf16.mxu0 0
      %3843 = vmatpush1.bf16.msra.mxu0 %v3754
      %3844 = vmatprep.subr.bf16.mxu0 0
      %3845 = vmatpush1.bf16.msra.mxu0 %v3753
      %3846 = vmatprep.subr.bf16.mxu0 0
      %3847 = vmatpush1.bf16.msra.mxu0 %v3752
      %3848 = vmatprep.subr.bf16.mxu0 0
      %3849 = vmatpush1.bf16.msra.mxu0 %v3751
      %3850 = vmatprep.subr.bf16.mxu0 0
      %3851 = vmatpush1.bf16.msra.mxu0 %v3750
      %3852 = vmatprep.subr.bf16.mxu0 0
      %3853 = vmatpush1.bf16.msra.mxu0 %v3749
      %3854 = vmatprep.subr.bf16.mxu0 0
      %3855 = vmatpush1.bf16.msra.mxu0 %v3748
      %3856 = vmatprep.subr.bf16.mxu0 0
      %3857 = vmatpush1.bf16.msra.mxu0 %v3747
      %3858 = vmatprep.subr.bf16.mxu0 0
      %3859 = vmatpush2.bf16.msra.mxu0 %v3762
      %3860 = vmatprep.subr.bf16.mxu0 0
      %3861 = vmatpush2.bf16.msra.mxu0 %v3761
      %3862 = vmatprep.subr.bf16.mxu0 0
      %3863 = vmatpush2.bf16.msra.mxu0 %v3760
      %3864 = vmatprep.subr.bf16.mxu0 0
      %3865 = vmatpush2.bf16.msra.mxu0 %v3759
      %3866 = vmatprep.subr.bf16.mxu0 0
      %3867 = vmatpush2.bf16.msra.mxu0 %v3758
      %3868 = vmatprep.subr.bf16.mxu0 0
      %3869 = vmatpush2.bf16.msra.mxu0 %v3757
      %3870 = vmatprep.subr.bf16.mxu0 0
      %3871 = vmatpush2.bf16.msra.mxu0 %v3756
      %3872 = vmatprep.subr.bf16.mxu0 0
      %3873 = vmatpush2.bf16.msra.mxu0 %v3755
      %3874 = vmatprep.mubr.bf16.mxu0 %v3805
      %3875 = vmatmul.mubr.bf16.gmra.mxu0 %v3804
      %v3876 = vpop.f32.mrf.mxu0
      %v3877 = vadd.f32 0.0, %v3876
      %v3878 = vpop.f32.mrf.mxu0
      %v3879 = vpop.f32.mrf.mxu0
      %v3880 = vadd.f32 0.0, %v3879
      %v3881 = vpop.f32.mrf.mxu0
      %3882 = vmatprep.mubr.bf16.mxu0 %v3808
      %3883 = vmatmul.mubr.bf16.gmra.mxu0 %v3807
      %v3884 = vpop.f32.mrf.mxu0
      %v3885 = vadd.f32 0.0, %v3884
      %v3886 = vpop.f32.mrf.mxu0
      %v3887 = vpop.f32.mrf.mxu0
      %v3888 = vadd.f32 0.0, %v3887
      %v3889 = vpop.f32.mrf.mxu0
      %3890 = vmatprep.mubr.bf16.mxu0 %v3811
      %3891 = vmatmul.mubr.bf16.gmra.mxu0 %v3810
      %v3892 = vpop.f32.mrf.mxu0
      %v3893 = vadd.f32 0.0, %v3892
      %v3894 = vpop.f32.mrf.mxu0
      %v3895 = vpop.f32.mrf.mxu0
      %v3896 = vadd.f32 0.0, %v3895
      %v3897 = vpop.f32.mrf.mxu0
      %3898 = vmatprep.mubr.bf16.mxu0 %v3814
      %3899 = vmatmul.mubr.bf16.gmra.mxu0 %v3813
      %v3900 = vpop.f32.mrf.mxu0
      %v3901 = vadd.f32 0.0, %v3900
      %v3902 = vpop.f32.mrf.mxu0
      %v3903 = vpop.f32.mrf.mxu0
      %v3904 = vadd.f32 0.0, %v3903
      %v3905 = vpop.f32.mrf.mxu0
      %3906 = vdwg.mxu0
      %3907 = vmatprep.subr.bf16.mxu0 0
      %3908 = vmatpush1.bf16.msra.mxu0 0
      %3909 = vmatprep.subr.bf16.mxu0 0
      %3910 = vmatpush1.bf16.msra.mxu0 0
      %3911 = vmatprep.subr.bf16.mxu0 0
      %3912 = vmatpush1.bf16.msra.mxu0 0
      %3913 = vmatprep.subr.bf16.mxu0 0
      %3914 = vmatpush1.bf16.msra.mxu0 0
      %3915 = vmatprep.subr.bf16.mxu0 0
      %3916 = vmatpush1.bf16.msra.mxu0 0
      %3917 = vmatprep.subr.bf16.mxu0 0
      %3918 = vmatpush1.bf16.msra.mxu0 0
      %3919 = vmatprep.subr.bf16.mxu0 0
      %3920 = vmatpush1.bf16.msra.mxu0 0
      %3921 = vmatprep.subr.bf16.mxu0 0
      %3922 = vmatpush1.bf16.msra.mxu0 %v3840
      %3923 = vmatprep.subr.bf16.mxu0 0
      %3924 = vmatpush2.bf16.msra.mxu0 0
      %3925 = vmatprep.subr.bf16.mxu0 0
      %3926 = vmatpush2.bf16.msra.mxu0 0
      %3927 = vmatprep.subr.bf16.mxu0 0
      %3928 = vmatpush2.bf16.msra.mxu0 0
      %3929 = vmatprep.subr.bf16.mxu0 0
      %3930 = vmatpush2.bf16.msra.mxu0 0
      %3931 = vmatprep.subr.bf16.mxu0 0
      %3932 = vmatpush2.bf16.msra.mxu0 0
      %3933 = vmatprep.subr.bf16.mxu0 0
      %3934 = vmatpush2.bf16.msra.mxu0 0
      %3935 = vmatprep.subr.bf16.mxu0 0
      %3936 = vmatpush2.bf16.msra.mxu0 0
      %3937 = vmatprep.subr.bf16.mxu0 0
      %3938 = vmatpush2.bf16.msra.mxu0 0
      %3939 = vmatprep.mubr.bf16.mxu0 0
      %3940 = vmatmul.mubr.bf16.gmra.mxu0 %v3826
      %v3941 = vpop.f32.mrf.mxu0
      %v3942 = vadd.f32 %v3877, %v3941
      %v3943 = vpop.f32.mrf.mxu0
      %v3944 = vpop.f32.mrf.mxu0
      %v3945 = vadd.f32 %v3880, %v3944
      %v3946 = vpop.f32.mrf.mxu0
      %3947 = vmatprep.mubr.bf16.mxu0 0
      %3948 = vmatmul.mubr.bf16.gmra.mxu0 %v3829
      %v3949 = vpop.f32.mrf.mxu0
      %v3950 = vadd.f32 %v3885, %v3949
      %v3951 = vpop.f32.mrf.mxu0
      %v3952 = vpop.f32.mrf.mxu0
      %v3953 = vadd.f32 %v3888, %v3952
      %v3954 = vpop.f32.mrf.mxu0
      %3955 = vmatprep.mubr.bf16.mxu0 0
      %3956 = vmatmul.mubr.bf16.gmra.mxu0 %v3832
      %v3957 = vpop.f32.mrf.mxu0
      %v3958 = vadd.f32 %v3893, %v3957
      %v3959 = vpop.f32.mrf.mxu0
      %v3960 = vpop.f32.mrf.mxu0
      %v3961 = vadd.f32 %v3896, %v3960
      %v3962 = vpop.f32.mrf.mxu0
      %3963 = vmatprep.mubr.bf16.mxu0 0
      %3964 = vmatmul.mubr.bf16.gmra.mxu0 %v3835
      %v3965 = vpop.f32.mrf.mxu0
      %v3966 = vadd.f32 %v3901, %v3965
      %v3967 = vpop.f32.mrf.mxu0
      %v3968 = vpop.f32.mrf.mxu0
      %v3969 = vadd.f32 %v3904, %v3968
      %v3970 = vpop.f32.mrf.mxu0
      %3971 = vdwg.mxu0
      %v3972 = vpack.c.bf16 %v3945, %v3942
      %v3973 = vpack.c.bf16 %v3953, %v3950
      %v3974 = vpack.c.bf16 %v3961, %v3958
      %v3975 = vpack.c.bf16 %v3969, %v3966
      %v3980 = vunpack.c.l.b16 %v3972
      %v3981 = vunpack.c.h.b16 %v3972
      %v3982 = vunpack.c.l.b16 %v3973
      %v3983 = vunpack.c.h.b16 %v3973
      %v3984 = vunpack.c.l.b16 %v3974
      %v3985 = vunpack.c.h.b16 %v3974
      %v3986 = vunpack.c.l.b16 %v3975
      %v3987 = vunpack.c.h.b16 %v3975
      %v3988 = vpack.c.b16 %v3980, %v3980
      %v3989 = vpack.c.b16 %v3981, %v3981
      %v3990 = vpack.c.b16 %v3982, %v3982
      %v3991 = vpack.c.b16 %v3983, %v3983
      %v3992 = vpack.c.b16 %v3984, %v3984
      %v3993 = vpack.c.b16 %v3985, %v3985
      %v3994 = vpack.c.b16 %v3986, %v3986
      %v3995 = vpack.c.b16 %v3987, %v3987
      %4004 = vst [vmem:[%s197] sm:$0xf] %v3988
      %4005 = vst [vmem:[%s197 + $0x4] sm:$0xf] %v3989
      %4006 = vst [vmem:[%s197 + $0x8] sm:$0xf] %v3990
      %4007 = vst [vmem:[%s197 + $0xc] sm:$0xf] %v3991
      %4008 = vst [vmem:[%s197 + $0x10] sm:$0xf] %v3992
      %4009 = vst [vmem:[%s197 + $0x14] sm:$0xf] %v3993
      %4010 = vst [vmem:[%s197 + $0x18] sm:$0xf] %v3994
      %4011 = vst [vmem:[%s197 + $0x1c] sm:$0xf] %v3995
      %p4012 = scmp.lt.s32.totalorder %s15, 1
      %s4013 = scalar_select %p4012, %s15, 1
      %s4014 = smul.addr %s4013, 8
      %s4015 = smul.addr %s4014, 4
      %s4016 = scalar_lea.vmem %s4, %s4015
      // Predicated region
      $region37: #{lstm_cnn_forward.5} parent=35 // pred_check
        %p4017 = pneg %p122
      $region38: #{lstm_cnn_forward.5} parent=35 // pred_check_branch
        %4019 = sbr.rel (%p4017) target = $region40
      $region39: #{lstm_cnn_forward.5} parent=35 // pred_region
        _
      $region40: #{lstm_cnn_forward.5} parent=35 // pred_fallthru
        _
    $region36: #{lstm_cnn_forward.5} parent=5 // pred_fallthru
      _
    %p4020 = scmp.le.s32.totalorder 2, %s10
    // Predicated region
    $region41: #{lstm_cnn_forward.5} parent=5 // pred_check
      %p4021 = pneg %p4020
    $region42: #{lstm_cnn_forward.5} parent=5 // pred_check_branch
      %4023 = sbr.rel (%p4021) target = $region44
    $region43: #{lstm_cnn_forward.5} parent=5 // pred_region
      %s4024 = ssub.s32 %s10, 2
      // Predicated region
      $region45: #{lstm_cnn_forward.5} parent=43 // pred_check
        %p4025 = pneg %p128
      $region46: #{lstm_cnn_forward.5} parent=43 // pred_check_branch
        %4027 = sbr.rel (%p4025) target = $region48
      $region47: #{lstm_cnn_forward.5} parent=43 // pred_region
        %p4028 = scmp.lt.s32.totalorder %s16, 1
        %s4029 = scalar_select %p4028, %s16, 1
        %s4030 = smul.addr %s4029, 8
        %s4031 = smul.addr %s4030, 4
        %s4032 = scalar_lea.vmem %s4, %s4031
      $region48: #{lstm_cnn_forward.5} parent=43 // pred_fallthru
        _
    $region44: #{lstm_cnn_forward.5} parent=5 // pred_fallthru
      _
  $region6: #{lstm_cnn_forward.5} parent=0 // loop_footer
    %s14 = sadd.s32 1, %s10
  $region7: #{lstm_cnn_forward.5} parent=0 // loop_footer_branch
    %9 = sbr.rel target = $region3
  $region8: #{lstm_cnn_forward.5} parent=0 // loop_exit
    _

// kernel: lstm_cnn_forward.6
$region0: #{lstm_cnn_forward.6}
  #allocation0 [shape = 'u32[]', space=smem, size = 0x4, offset = 0x4, fixed_abs, tag = 'smem constant byte address 0x4 - core index']
  #allocation1 [shape = 'u32[144,128]{1,0:T(1,128)}', space=vmem, size = 0x12000, scoped, tag = 'internal scratch']
  %s0 = inlined_call_operand.vmem [shape: bf16[2,102,128], index: 0, kind: input, shape index: {}]
  %s1 = inlined_call_operand.vmem [shape: bf16[9,128,256], index: 1, kind: input, shape index: {}]
  %s2 = inlined_call_operand.vmem [shape: f32[1,256], index: 2, kind: input, shape index: {}]
  %s3 = inlined_call_operand.vmem [shape: bf16[16,69], index: 3, kind: input, shape index: {}]
  %s4 = inlined_call_operand.vmem [shape: bf16[2,16,256], index: 4, kind: output, shape index: {}]
  %s5 = sld [smem:[#allocation0]]
  $region49: #{lstm_cnn_forward.6} parent=0
    _
  %s7 = ssub.s32 1, %s5
  %s8 = scalar_select 0, %s7, %s5
  loop: start=0, step=1, limit=4
  $region2: #{lstm_cnn_forward.6} parent=0 // loop_pre_header
    _
  $region3: #{lstm_cnn_forward.6} parent=0 // loop_header
    %s10 = sphi 0, %s14
    %p11 = scmp.ge.s32.totalorder %s10, 4
    %s20 = sphi 0, %s22
    %s23 = sphi 0, %s20
    %s24 = sphi 0, %s23
    %s40 = sphi 0, %s24
    %s44 = sphi 0, %s44
    %s46 = sphi 0, %s44
    %s47 = sphi 0, %s46
    %s61 = sphi 0, %s47
    %s65 = sphi 0, %s65
    %s67 = sphi 0, %s65
    %s68 = sphi 0, %s67
    %s82 = sphi 0, %s68
    %s86 = sphi 0, %s86
    %s88 = sphi 0, %s86
    %s89 = sphi 0, %s88
    %s103 = sphi 0, %s89
    %s109 = sphi 0, %s111
    %s112 = sphi 0, %s109
    %s113 = sphi 0, %s112
    %s129 = sphi 0, %s113
  $region4: #{lstm_cnn_forward.6} parent=0 // loop_header_branch
    %13 = sbr.rel (%p11) target = $region8
  $region5: #{lstm_cnn_forward.6} parent=0 // loop_body
    %s15 = ssub.s32 %s10, 1
    %s16 = ssub.s32 %s10, 2
    %s17 = sadd.s32 %s10, 1
    %s18 = ssub.s32 %s10, %s17
    %p19 = scmp.eq.s32.totalorder %s18, 0
    %s21 = sadd.s32 %s20, 1
    %s22 = scalar_select %p19, %s20, %s21
    %p25 = pneg %p19
    %p26 = scmp.eq.s32.totalorder %s10, 1
    %p27 = por %p25, %p26
    %p28 = scmp.ne.s32.totalorder %s20, %s23
    %p29 = scmp.eq.s32.totalorder %s10, 0
    %p30 = por %p28, %p29
    %p31 = scmp.ne.s32.totalorder %s20, %s23
    %p32 = scmp.eq.s32.totalorder %s15, 1
    %p33 = por %p31, %p32
    %p34 = scmp.ne.s32.totalorder %s23, %s24
    %p35 = scmp.eq.s32.totalorder %s15, 0
    %p36 = por %p34, %p35
    %p37 = scmp.ne.s32.totalorder %s23, %s24
    %p38 = scmp.eq.s32.totalorder %s16, 1
    %p39 = por %p37, %p38
    %p41 = scmp.ne.s32.totalorder %s24, %s40
    %p42 = scmp.eq.s32.totalorder %s16, 0
    %p43 = por %p41, %p42
    %s45 = sadd.s32 %s44, 1
    %p48 = scmp.eq.s32.totalorder %s10, 1
    %p49 = scmp.ne.s32.totalorder %s44, %s46
    %p50 = scmp.eq.s32.totalorder %s10, 0
    %p51 = por %p49, %p50
    %p52 = scmp.ne.s32.totalorder %s44, %s46
    %p53 = scmp.eq.s32.totalorder %s15, 1
    %p54 = por %p52, %p53
    %p55 = scmp.ne.s32.totalorder %s46, %s47
    %p56 = scmp.eq.s32.totalorder %s15, 0
    %p57 = por %p55, %p56
    %p58 = scmp.ne.s32.totalorder %s46, %s47
    %p59 = scmp.eq.s32.totalorder %s16, 1
    %p60 = por %p58, %p59
    %p62 = scmp.ne.s32.totalorder %s47, %s61
    %p63 = scmp.eq.s32.totalorder %s16, 0
    %p64 = por %p62, %p63
    %s66 = sadd.s32 %s65, 1
    %p69 = scmp.eq.s32.totalorder %s10, 1
    %p70 = scmp.ne.s32.totalorder %s65, %s67
    %p71 = scmp.eq.s32.totalorder %s10, 0
    %p72 = por %p70, %p71
    %p73 = scmp.ne.s32.totalorder %s65, %s67
    %p74 = scmp.eq.s32.totalorder %s15, 1
    %p75 = por %p73, %p74
    %p76 = scmp.ne.s32.totalorder %s67, %s68
    %p77 = scmp.eq.s32.totalorder %s15, 0
    %p78 = por %p76, %p77
    %p79 = scmp.ne.s32.totalorder %s67, %s68
    %p80 = scmp.eq.s32.totalorder %s16, 1
    %p81 = por %p79, %p80
    %p83 = scmp.ne.s32.totalorder %s68, %s82
    %p84 = scmp.eq.s32.totalorder %s16, 0
    %p85 = por %p83, %p84
    %s87 = sadd.s32 %s86, 1
    %p90 = scmp.eq.s32.totalorder %s10, 1
    %p91 = scmp.ne.s32.totalorder %s86, %s88
    %p92 = scmp.eq.s32.totalorder %s10, 0
    %p93 = por %p91, %p92
    %p94 = scmp.ne.s32.totalorder %s86, %s88
    %p95 = scmp.eq.s32.totalorder %s15, 1
    %p96 = por %p94, %p95
    %p97 = scmp.ne.s32.totalorder %s88, %s89
    %p98 = scmp.eq.s32.totalorder %s15, 0
    %p99 = por %p97, %p98
    %p100 = scmp.ne.s32.totalorder %s88, %s89
    %p101 = scmp.eq.s32.totalorder %s16, 1
    %p102 = por %p100, %p101
    %p104 = scmp.ne.s32.totalorder %s89, %s103
    %p105 = scmp.eq.s32.totalorder %s16, 0
    %p106 = por %p104, %p105
    %s107 = ssub.s32 %s10, %s17
    %p108 = scmp.eq.s32.totalorder %s107, 0
    %s110 = sadd.s32 %s109, 1
    %s111 = scalar_select %p108, %s109, %s110
    %p114 = pneg %p108
    %p115 = scmp.eq.s32.totalorder %s10, 1
    %p116 = por %p114, %p115
    %p117 = scmp.ne.s32.totalorder %s109, %s112
    %p118 = scmp.eq.s32.totalorder %s10, 0
    %p119 = por %p117, %p118
    %p120 = scmp.ne.s32.totalorder %s109, %s112
    %p121 = scmp.eq.s32.totalorder %s15, 1
    %p122 = por %p120, %p121
    %p123 = scmp.ne.s32.totalorder %s112, %s113
    %p124 = scmp.eq.s32.totalorder %s15, 0
    %p125 = por %p123, %p124
    %p126 = scmp.ne.s32.totalorder %s112, %s113
    %p127 = scmp.eq.s32.totalorder %s16, 1
    %p128 = por %p126, %p127
    %p130 = scmp.ne.s32.totalorder %s113, %s129
    %p131 = scmp.eq.s32.totalorder %s16, 0
    %p132 = por %p130, %p131
    %p133 = scmp.le.s32.totalorder 1, %s10
    %p134 = scmp.lt.s32.totalorder %s10, 3
    %p135 = pnand %p133, %p134
    %p136 = pneg %p135
    // Predicated region
    $region9: #{lstm_cnn_forward.6} parent=5 // pred_check
      _
    $region10: #{lstm_cnn_forward.6} parent=5 // pred_check_branch
      %138 = sbr.rel (%p135) target = $region12
    $region11: #{lstm_cnn_forward.6} parent=5 // pred_region
      %s139 = ssub.s32 %s10, 1
      // Predicated region
      $region13: #{lstm_cnn_forward.6} parent=11 // pred_check
        %p140 = pneg %p57
      $region14: #{lstm_cnn_forward.6} parent=11 // pred_check_branch
        %142 = sbr.rel (%p140) target = $region16
      $region15: #{lstm_cnn_forward.6} parent=11 // pred_region
        _
      $region16: #{lstm_cnn_forward.6} parent=11 // pred_fallthru
        _
      // Predicated region
      $region17: #{lstm_cnn_forward.6} parent=11 // pred_check
        %p143 = pneg %p78
      $region18: #{lstm_cnn_forward.6} parent=11 // pred_check_branch
        %145 = sbr.rel (%p143) target = $region20
      $region19: #{lstm_cnn_forward.6} parent=11 // pred_region
        _
      $region20: #{lstm_cnn_forward.6} parent=11 // pred_fallthru
        _
      // Predicated region
      $region21: #{lstm_cnn_forward.6} parent=11 // pred_check
        %p146 = pneg %p99
      $region22: #{lstm_cnn_forward.6} parent=11 // pred_check_branch
        %148 = sbr.rel (%p146) target = $region24
      $region23: #{lstm_cnn_forward.6} parent=11 // pred_region
        _
      $region24: #{lstm_cnn_forward.6} parent=11 // pred_fallthru
        _
    $region12: #{lstm_cnn_forward.6} parent=5 // pred_fallthru
      _
    %p149 = scmp.lt.s32.totalorder %s10, 2
    // Predicated region
    $region25: #{lstm_cnn_forward.6} parent=5 // pred_check
      %p150 = pneg %p149
    $region26: #{lstm_cnn_forward.6} parent=5 // pred_check_branch
      %152 = sbr.rel (%p150) target = $region28
    $region27: #{lstm_cnn_forward.6} parent=5 // pred_region
      // Predicated region
      $region29: #{lstm_cnn_forward.6} parent=27 // pred_check
        %p153 = pneg %p30
      $region30: #{lstm_cnn_forward.6} parent=27 // pred_check_branch
        %155 = sbr.rel (%p153) target = $region32
      $region31: #{lstm_cnn_forward.6} parent=27 // pred_region
        %p156 = scmp.lt.s32.totalorder %s10, 1
        %s157 = scalar_select %p156, %s10, 1
        %s158 = smul.addr %s157, 13
        %s159 = smul.addr %s158, 4
        %s160 = scalar_lea.vmem %s0, %s159
      $region32: #{lstm_cnn_forward.6} parent=27 // pred_fallthru
        _
    $region28: #{lstm_cnn_forward.6} parent=5 // pred_fallthru
      _
    %p161 = scmp.le.s32.totalorder 1, %s10
    %p162 = scmp.lt.s32.totalorder %s10, 3
    %p163 = pnand %p161, %p162
    %p164 = pneg %p163
    // Predicated region
    $region33: #{lstm_cnn_forward.6} parent=5 // pred_check
      _
    $region34: #{lstm_cnn_forward.6} parent=5 // pred_check_branch
      %166 = sbr.rel (%p163) target = $region36
    $region35: #{lstm_cnn_forward.6} parent=5 // pred_region
      %s167 = ssub.s32 %s10, 1
      %p168 = scmp.lt.s32.totalorder %s15, 1
      %s169 = scalar_select %p168, %s15, 1
      %s170 = smul.addr %s169, 13
      %s171 = smul.addr %s170, 4
      %s172 = scalar_lea.vmem %s0, %s171
      %p173 = pneg %p36
      %p174 = pneg %p33
      %p175 = pneg %p57
      %p176 = pneg %p54
      %p177 = pneg %p78
      %p178 = pneg %p75
      %p179 = pneg %p99
      %p180 = pneg %p96
      %p181 = pneg %p125
      %p182 = pneg %p122
      %p183 = scmp.lt.s32.totalorder %s15, 1
      %s184 = scalar_select %p183, %s15, 1
      %s185 = smul.addr %s184, 4
      %s186 = smul.addr %s185, 4
      %s187 = scalar_lea.vmem %s4, %s186
      %p188 = scmp.lt.s32.totalorder %s15, 1
      %s189 = scalar_select %p188, %s15, 1
      %s190 = smul.addr %s189, 13
      %s191 = smul.addr %s190, 4
      %s192 = scalar_lea.vmem %s0, %s191
      %p193 = scmp.lt.s32.totalorder %s15, 1
      %s194 = scalar_select %p193, %s15, 1
      %s195 = smul.addr %s194, 4
      %s196 = smul.addr %s195, 4
      %s197 = scalar_lea.vmem %s4, %s196
      %v199 = vld [vmem:[%s192] sm:$0xf]
      %v200 = vld [vmem:[%s192 + $0x4] sm:$0xf]
      %v201 = vld [vmem:[%s192 + $0x8] sm:$0xf]
      %v202 = vld [vmem:[%s192 + $0xc] sm:$0xf]
      %v203 = vld [vmem:[%s192 + $0x10] sm:$0xf]
      %v204 = vld [vmem:[%s192 + $0x14] sm:$0xf]
      %v205 = vld [vmem:[%s192 + $0x18] sm:$0xf]
      %v206 = vld [vmem:[%s192 + $0x1c] sm:$0xf]
      %v207 = vld [vmem:[%s192 + $0x20] sm:$0xf]
      %v208 = vld [vmem:[%s192 + $0x24] sm:$0xf]
      %v209 = vld [vmem:[%s192 + $0x28] sm:$0xf]
      %v210 = vld [vmem:[%s192 + $0x2c] sm:$0xf]
      %v211 = vld [vmem:[%s192 + $0x30] sm:$0x7]
      %v212 = vld [vmem:[%s1] sm:$0xff]
      %v213 = vld [vmem:[%s1 + $0x8] sm:$0xff]
      %v214 = vld [vmem:[%s1 + $0x10] sm:$0xff]
      %v215 = vld [vmem:[%s1 + $0x18] sm:$0xff]
      %v216 = vld [vmem:[%s1 + $0x20] sm:$0xff]
      %v217 = vld [vmem:[%s1 + $0x28] sm:$0xff]
      %v218 = vld [vmem:[%s1 + $0x30] sm:$0xff]
      %v219 = vld [vmem:[%s1 + $0x38] sm:$0xff]
      %v220 = vld [vmem:[%s1 + $0x40] sm:$0xff]
      %v221 = vld [vmem:[%s1 + $0x48] sm:$0xff]
      %v222 = vld [vmem:[%s1 + $0x50] sm:$0xff]
      %v223 = vld [vmem:[%s1 + $0x58] sm:$0xff]
      %v224 = vld [vmem:[%s1 + $0x60] sm:$0xff]
      %v225 = vld [vmem:[%s1 + $0x68] sm:$0xff]
      %v226 = vld [vmem:[%s1 + $0x70] sm:$0xff]
      %v227 = vld [vmem:[%s1 + $0x78] sm:$0xff]
      %s228 = scalar_lea.vmem %s1, 128
      %v229 = vld [vmem:[%s228] sm:$0xff]
      %v230 = vld [vmem:[%s228 + $0x8] sm:$0xff]
      %v231 = vld [vmem:[%s228 + $0x10] sm:$0xff]
      %v232 = vld [vmem:[%s228 + $0x18] sm:$0xff]
      %v233 = vld [vmem:[%s228 + $0x20] sm:$0xff]
      %v234 = vld [vmem:[%s228 + $0x28] sm:$0xff]
      %v235 = vld [vmem:[%s228 + $0x30] sm:$0xff]
      %v236 = vld [vmem:[%s228 + $0x38] sm:$0xff]
      %v237 = vld [vmem:[%s228 + $0x40] sm:$0xff]
      %v238 = vld [vmem:[%s228 + $0x48] sm:$0xff]
      %v239 = vld [vmem:[%s228 + $0x50] sm:$0xff]
      %v240 = vld [vmem:[%s228 + $0x58] sm:$0xff]
      %v241 = vld [vmem:[%s228 + $0x60] sm:$0xff]
      %v242 = vld [vmem:[%s228 + $0x68] sm:$0xff]
      %v243 = vld [vmem:[%s228 + $0x70] sm:$0xff]
      %v244 = vld [vmem:[%s228 + $0x78] sm:$0xff]
      %v256 = vunpack.c.l.b16 %v199
      %v257 = vunpack.c.l.b16 %v200
      %v258 = vunpack.c.l.b16 %v201
      %v259 = vunpack.c.l.b16 %v202
      %v260 = vunpack.c.l.b16 %v203
      %v261 = vunpack.c.l.b16 %v204
      %v262 = vunpack.c.l.b16 %v205
      %v263 = vunpack.c.l.b16 %v206
      %v264 = vunpack.c.l.b16 %v207
      %v265 = vunpack.c.l.b16 %v208
      %v266 = vunpack.c.l.b16 %v209
      %v267 = vpack.c.b16 %v257, %v256
      %v268 = vpack.c.b16 %v259, %v258
      %v269 = vpack.c.b16 %v261, %v260
      %v270 = vpack.c.b16 %v263, %v262
      %v271 = vpack.c.b16 %v265, %v264
      %v272 = vpack.c.b16 %v266, %v266
      %vm273 = vsmask.f32 7424
      %v275 = vshrl.u32 %v267, 16
      %v277 = vshll.u32 %v267, 16
      %v279 = vrot.slane %v277, 1
      %v280 = vor.u32 %v275, %v279
      %v282 = vshll.u32 %v268, 16
      %v284 = vrot.slane %v282, 1
      %v285 = vsel %vm273, %v280, %v284
      %v286 = vshrl.u32 %v268, 16
      %v288 = vor.u32 %v286, %v284
      %v290 = vshll.u32 %v269, 16
      %v292 = vrot.slane %v290, 1
      %v293 = vsel %vm273, %v288, %v292
      %v294 = vshrl.u32 %v269, 16
      %v296 = vor.u32 %v294, %v292
      %v298 = vshll.u32 %v270, 16
      %v300 = vrot.slane %v298, 1
      %v301 = vsel %vm273, %v296, %v300
      %v302 = vshrl.u32 %v270, 16
      %v304 = vor.u32 %v302, %v300
      %v306 = vshll.u32 %v271, 16
      %v308 = vrot.slane %v306, 1
      %v309 = vsel %vm273, %v304, %v308
      %v310 = vshrl.u32 %v271, 16
      %v312 = vor.u32 %v310, %v308
      %v314 = vshll.u32 %v272, 16
      %v316 = vrot.slane %v314, 1
      %v317 = vsel %vm273, %v312, %v316
      %v339 = vunpack.c.l.b16 %v229
      %v340 = vunpack.c.h.b16 %v229
      %v341 = vunpack.c.l.b16 %v230
      %v342 = vunpack.c.h.b16 %v230
      %v343 = vunpack.c.l.b16 %v231
      %v344 = vunpack.c.h.b16 %v231
      %v345 = vunpack.c.l.b16 %v232
      %v346 = vunpack.c.h.b16 %v232
      %v347 = vunpack.c.l.b16 %v233
      %v348 = vunpack.c.h.b16 %v233
      %v349 = vunpack.c.l.b16 %v234
      %v350 = vunpack.c.h.b16 %v234
      %v351 = vunpack.c.l.b16 %v235
      %v352 = vunpack.c.h.b16 %v235
      %v353 = vunpack.c.l.b16 %v236
      %v354 = vunpack.c.h.b16 %v236
      %v355 = vunpack.c.l.b16 %v237
      %v356 = vunpack.c.h.b16 %v237
      %v357 = vunpack.c.l.b16 %v238
      %v358 = vunpack.c.h.b16 %v238
      %v359 = vunpack.c.l.b16 %v239
      %v360 = vunpack.c.h.b16 %v239
      %v361 = vunpack.c.l.b16 %v240
      %v362 = vunpack.c.h.b16 %v240
      %v363 = vunpack.c.l.b16 %v241
      %v364 = vunpack.c.h.b16 %v241
      %v365 = vunpack.c.l.b16 %v242
      %v366 = vunpack.c.h.b16 %v242
      %v367 = vunpack.c.l.b16 %v243
      %v368 = vunpack.c.h.b16 %v243
      %v369 = vunpack.c.l.b16 %v244
      %v370 = vunpack.c.h.b16 %v244
      %v371 = vpack.c.b16 %v341, %v339
      %v372 = vpack.c.b16 %v342, %v340
      %v373 = vpack.c.b16 %v345, %v343
      %v374 = vpack.c.b16 %v346, %v344
      %v375 = vpack.c.b16 %v349, %v347
      %v376 = vpack.c.b16 %v350, %v348
      %v377 = vpack.c.b16 %v353, %v351
      %v378 = vpack.c.b16 %v354, %v352
      %v379 = vpack.c.b16 %v357, %v355
      %v380 = vpack.c.b16 %v358, %v356
      %v381 = vpack.c.b16 %v361, %v359
      %v382 = vpack.c.b16 %v362, %v360
      %v383 = vpack.c.b16 %v365, %v363
      %v384 = vpack.c.b16 %v366, %v364
      %v385 = vpack.c.b16 %v369, %v367
      %v386 = vpack.c.b16 %v370, %v368
      %403 = vmatprep.subr.bf16.mxu0 %v386
      %404 = vmatpush1.bf16.msra.mxu0 %v385
      %405 = vmatprep.subr.bf16.mxu0 %v384
      %406 = vmatpush1.bf16.msra.mxu0 %v383
      %407 = vmatprep.subr.bf16.mxu0 %v382
      %408 = vmatpush1.bf16.msra.mxu0 %v381
      %409 = vmatprep.subr.bf16.mxu0 %v380
      %410 = vmatpush1.bf16.msra.mxu0 %v379
      %411 = vmatprep.subr.bf16.mxu0 %v378
      %412 = vmatpush1.bf16.msra.mxu0 %v377
      %413 = vmatprep.subr.bf16.mxu0 %v376
      %414 = vmatpush1.bf16.msra.mxu0 %v375
      %415 = vmatprep.subr.bf16.mxu0 %v374
      %416 = vmatpush1.bf16.msra.mxu0 %v373
      %417 = vmatprep.subr.bf16.mxu0 %v372
      %418 = vmatpush1.bf16.msra.mxu0 %v371
      %419 = vmatprep.subr.bf16.mxu0 0
      %420 = vmatpush2.bf16.msra.mxu0 0
      %421 = vmatprep.subr.bf16.mxu0 0
      %422 = vmatpush2.bf16.msra.mxu0 0
      %423 = vmatprep.subr.bf16.mxu0 0
      %424 = vmatpush2.bf16.msra.mxu0 0
      %425 = vmatprep.subr.bf16.mxu0 0
      %426 = vmatpush2.bf16.msra.mxu0 0
      %427 = vmatprep.subr.bf16.mxu0 0
      %428 = vmatpush2.bf16.msra.mxu0 0
      %429 = vmatprep.subr.bf16.mxu0 0
      %430 = vmatpush2.bf16.msra.mxu0 0
      %431 = vmatprep.subr.bf16.mxu0 0
      %432 = vmatpush2.bf16.msra.mxu0 0
      %433 = vmatprep.subr.bf16.mxu0 0
      %434 = vmatpush2.bf16.msra.mxu0 0
      %435 = vmatprep.mubr.bf16.mxu0 0
      %436 = vmatmul.mubr.bf16.gmra.mxu0 %v285
      %v437 = vpop.f32.mrf.mxu0
      %v438 = vadd.f32 0.0, %v437
      %v439 = vpop.f32.mrf.mxu0
      %v440 = vadd.f32 0.0, %v439
      %v441 = vpop.f32.mrf.mxu0
      %v442 = vadd.f32 0.0, %v441
      %v443 = vpop.f32.mrf.mxu0
      %v444 = vadd.f32 0.0, %v443
      %445 = vmatprep.mubr.bf16.mxu0 0
      %446 = vmatmul.mubr.bf16.gmra.mxu0 %v293
      %v447 = vpop.f32.mrf.mxu0
      %v448 = vadd.f32 0.0, %v447
      %v449 = vpop.f32.mrf.mxu0
      %v450 = vadd.f32 0.0, %v449
      %v451 = vpop.f32.mrf.mxu0
      %v452 = vadd.f32 0.0, %v451
      %v453 = vpop.f32.mrf.mxu0
      %v454 = vadd.f32 0.0, %v453
      %455 = vmatprep.mubr.bf16.mxu0 0
      %456 = vmatmul.mubr.bf16.gmra.mxu0 %v301
      %v457 = vpop.f32.mrf.mxu0
      %v458 = vadd.f32 0.0, %v457
      %v459 = vpop.f32.mrf.mxu0
      %v460 = vadd.f32 0.0, %v459
      %v461 = vpop.f32.mrf.mxu0
      %v462 = vadd.f32 0.0, %v461
      %v463 = vpop.f32.mrf.mxu0
      %v464 = vadd.f32 0.0, %v463
      %465 = vmatprep.mubr.bf16.mxu0 0
      %466 = vmatmul.mubr.bf16.gmra.mxu0 %v309
      %v467 = vpop.f32.mrf.mxu0
      %v468 = vadd.f32 0.0, %v467
      %v469 = vpop.f32.mrf.mxu0
      %v470 = vadd.f32 0.0, %v469
      %v471 = vpop.f32.mrf.mxu0
      %v472 = vadd.f32 0.0, %v471
      %v473 = vpop.f32.mrf.mxu0
      %v474 = vadd.f32 0.0, %v473
      %475 = vmatprep.mubr.bf16.mxu0 0
      %476 = vmatmul.mubr.bf16.gmra.mxu0 %v317
      %v477 = vpop.f32.mrf.mxu0
      %v478 = vadd.f32 0.0, %v477
      %v479 = vpop.f32.mrf.mxu0
      %v480 = vadd.f32 0.0, %v479
      %v481 = vpop.f32.mrf.mxu0
      %v482 = vadd.f32 0.0, %v481
      %v483 = vpop.f32.mrf.mxu0
      %v484 = vadd.f32 0.0, %v483
      %485 = vdwg.mxu0
      %v507 = vunpack.c.l.b16 %v212
      %v508 = vunpack.c.h.b16 %v212
      %v509 = vunpack.c.l.b16 %v213
      %v510 = vunpack.c.h.b16 %v213
      %v511 = vunpack.c.l.b16 %v214
      %v512 = vunpack.c.h.b16 %v214
      %v513 = vunpack.c.l.b16 %v215
      %v514 = vunpack.c.h.b16 %v215
      %v515 = vunpack.c.l.b16 %v216
      %v516 = vunpack.c.h.b16 %v216
      %v517 = vunpack.c.l.b16 %v217
      %v518 = vunpack.c.h.b16 %v217
      %v519 = vunpack.c.l.b16 %v218
      %v520 = vunpack.c.h.b16 %v218
      %v521 = vunpack.c.l.b16 %v219
      %v522 = vunpack.c.h.b16 %v219
      %v523 = vunpack.c.l.b16 %v220
      %v524 = vunpack.c.h.b16 %v220
      %v525 = vunpack.c.l.b16 %v221
      %v526 = vunpack.c.h.b16 %v221
      %v527 = vunpack.c.l.b16 %v222
      %v528 = vunpack.c.h.b16 %v222
      %v529 = vunpack.c.l.b16 %v223
      %v530 = vunpack.c.h.b16 %v223
      %v531 = vunpack.c.l.b16 %v224
      %v532 = vunpack.c.h.b16 %v224
      %v533 = vunpack.c.l.b16 %v225
      %v534 = vunpack.c.h.b16 %v225
      %v535 = vunpack.c.l.b16 %v226
      %v536 = vunpack.c.h.b16 %v226
      %v537 = vunpack.c.l.b16 %v227
      %v538 = vunpack.c.h.b16 %v227
      %v539 = vpack.c.b16 %v509, %v507
      %v540 = vpack.c.b16 %v510, %v508
      %v541 = vpack.c.b16 %v513, %v511
      %v542 = vpack.c.b16 %v514, %v512
      %v543 = vpack.c.b16 %v517, %v515
      %v544 = vpack.c.b16 %v518, %v516
      %v545 = vpack.c.b16 %v521, %v519
      %v546 = vpack.c.b16 %v522, %v520
      %v547 = vpack.c.b16 %v525, %v523
      %v548 = vpack.c.b16 %v526, %v524
      %v549 = vpack.c.b16 %v529, %v527
      %v550 = vpack.c.b16 %v530, %v528
      %v551 = vpack.c.b16 %v533, %v531
      %v552 = vpack.c.b16 %v534, %v532
      %v553 = vpack.c.b16 %v537, %v535
      %v554 = vpack.c.b16 %v538, %v536
      %571 = vmatprep.subr.bf16.mxu0 %v554
      %572 = vmatpush1.bf16.msra.mxu0 %v553
      %573 = vmatprep.subr.bf16.mxu0 %v552
      %574 = vmatpush1.bf16.msra.mxu0 %v551
      %575 = vmatprep.subr.bf16.mxu0 %v550
      %576 = vmatpush1.bf16.msra.mxu0 %v549
      %577 = vmatprep.subr.bf16.mxu0 %v548
      %578 = vmatpush1.bf16.msra.mxu0 %v547
      %579 = vmatprep.subr.bf16.mxu0 %v546
      %580 = vmatpush1.bf16.msra.mxu0 %v545
      %581 = vmatprep.subr.bf16.mxu0 %v544
      %582 = vmatpush1.bf16.msra.mxu0 %v543
      %583 = vmatprep.subr.bf16.mxu0 %v542
      %584 = vmatpush1.bf16.msra.mxu0 %v541
      %585 = vmatprep.subr.bf16.mxu0 %v540
      %586 = vmatpush1.bf16.msra.mxu0 %v539
      %587 = vmatprep.subr.bf16.mxu0 0
      %588 = vmatpush2.bf16.msra.mxu0 0
      %589 = vmatprep.subr.bf16.mxu0 0
      %590 = vmatpush2.bf16.msra.mxu0 0
      %591 = vmatprep.subr.bf16.mxu0 0
      %592 = vmatpush2.bf16.msra.mxu0 0
      %593 = vmatprep.subr.bf16.mxu0 0
      %594 = vmatpush2.bf16.msra.mxu0 0
      %595 = vmatprep.subr.bf16.mxu0 0
      %596 = vmatpush2.bf16.msra.mxu0 0
      %597 = vmatprep.subr.bf16.mxu0 0
      %598 = vmatpush2.bf16.msra.mxu0 0
      %599 = vmatprep.subr.bf16.mxu0 0
      %600 = vmatpush2.bf16.msra.mxu0 0
      %601 = vmatprep.subr.bf16.mxu0 0
      %602 = vmatpush2.bf16.msra.mxu0 0
      %603 = vmatprep.mubr.bf16.mxu0 0
      %604 = vmatmul.mubr.bf16.gmra.mxu0 %v267
      %v605 = vpop.f32.mrf.mxu0
      %v606 = vadd.f32 %v438, %v605
      %v607 = vpop.f32.mrf.mxu0
      %v608 = vadd.f32 %v440, %v607
      %v609 = vpop.f32.mrf.mxu0
      %v610 = vadd.f32 %v442, %v609
      %v611 = vpop.f32.mrf.mxu0
      %v612 = vadd.f32 %v444, %v611
      %613 = vmatprep.mubr.bf16.mxu0 0
      %614 = vmatmul.mubr.bf16.gmra.mxu0 %v268
      %v615 = vpop.f32.mrf.mxu0
      %v616 = vadd.f32 %v448, %v615
      %v617 = vpop.f32.mrf.mxu0
      %v618 = vadd.f32 %v450, %v617
      %v619 = vpop.f32.mrf.mxu0
      %v620 = vadd.f32 %v452, %v619
      %v621 = vpop.f32.mrf.mxu0
      %v622 = vadd.f32 %v454, %v621
      %623 = vmatprep.mubr.bf16.mxu0 0
      %624 = vmatmul.mubr.bf16.gmra.mxu0 %v269
      %v625 = vpop.f32.mrf.mxu0
      %v626 = vadd.f32 %v458, %v625
      %v627 = vpop.f32.mrf.mxu0
      %v628 = vadd.f32 %v460, %v627
      %v629 = vpop.f32.mrf.mxu0
      %v630 = vadd.f32 %v462, %v629
      %v631 = vpop.f32.mrf.mxu0
      %v632 = vadd.f32 %v464, %v631
      %633 = vmatprep.mubr.bf16.mxu0 0
      %634 = vmatmul.mubr.bf16.gmra.mxu0 %v270
      %v635 = vpop.f32.mrf.mxu0
      %v636 = vadd.f32 %v468, %v635
      %v637 = vpop.f32.mrf.mxu0
      %v638 = vadd.f32 %v470, %v637
      %v639 = vpop.f32.mrf.mxu0
      %v640 = vadd.f32 %v472, %v639
      %v641 = vpop.f32.mrf.mxu0
      %v642 = vadd.f32 %v474, %v641
      %643 = vmatprep.mubr.bf16.mxu0 0
      %644 = vmatmul.mubr.bf16.gmra.mxu0 %v271
      %v645 = vpop.f32.mrf.mxu0
      %v646 = vadd.f32 %v478, %v645
      %v647 = vpop.f32.mrf.mxu0
      %v648 = vadd.f32 %v480, %v647
      %v649 = vpop.f32.mrf.mxu0
      %v650 = vadd.f32 %v482, %v649
      %v651 = vpop.f32.mrf.mxu0
      %v652 = vadd.f32 %v484, %v651
      %653 = vdwg.mxu0
      %s654 = scalar_lea.vmem %s1, 256
      %v655 = vld [vmem:[%s654] sm:$0xff]
      %v656 = vld [vmem:[%s654 + $0x8] sm:$0xff]
      %v657 = vld [vmem:[%s654 + $0x10] sm:$0xff]
      %v658 = vld [vmem:[%s654 + $0x18] sm:$0xff]
      %v659 = vld [vmem:[%s654 + $0x20] sm:$0xff]
      %v660 = vld [vmem:[%s654 + $0x28] sm:$0xff]
      %v661 = vld [vmem:[%s654 + $0x30] sm:$0xff]
      %v662 = vld [vmem:[%s654 + $0x38] sm:$0xff]
      %v663 = vld [vmem:[%s654 + $0x40] sm:$0xff]
      %v664 = vld [vmem:[%s654 + $0x48] sm:$0xff]
      %v665 = vld [vmem:[%s654 + $0x50] sm:$0xff]
      %v666 = vld [vmem:[%s654 + $0x58] sm:$0xff]
      %v667 = vld [vmem:[%s654 + $0x60] sm:$0xff]
      %v668 = vld [vmem:[%s654 + $0x68] sm:$0xff]
      %v669 = vld [vmem:[%s654 + $0x70] sm:$0xff]
      %v670 = vld [vmem:[%s654 + $0x78] sm:$0xff]
      %vm671 = vcmask 1046528
      %v672 = vrot.slane %v267, 1
      %v673 = vrot.slane %v268, 1
      %v674 = vsel %vm671, %v672, %v673
      %v675 = vrot.slane %v269, 1
      %v676 = vsel %vm671, %v673, %v675
      %v677 = vrot.slane %v270, 1
      %v678 = vsel %vm671, %v675, %v677
      %v679 = vrot.slane %v271, 1
      %v680 = vsel %vm671, %v677, %v679
      %v681 = vrot.slane %v272, 1
      %v682 = vsel %vm671, %v679, %v681
      %v704 = vunpack.c.l.b16 %v655
      %v705 = vunpack.c.h.b16 %v655
      %v706 = vunpack.c.l.b16 %v656
      %v707 = vunpack.c.h.b16 %v656
      %v708 = vunpack.c.l.b16 %v657
      %v709 = vunpack.c.h.b16 %v657
      %v710 = vunpack.c.l.b16 %v658
      %v711 = vunpack.c.h.b16 %v658
      %v712 = vunpack.c.l.b16 %v659
      %v713 = vunpack.c.h.b16 %v659
      %v714 = vunpack.c.l.b16 %v660
      %v715 = vunpack.c.h.b16 %v660
      %v716 = vunpack.c.l.b16 %v661
      %v717 = vunpack.c.h.b16 %v661
      %v718 = vunpack.c.l.b16 %v662
      %v719 = vunpack.c.h.b16 %v662
      %v720 = vunpack.c.l.b16 %v663
      %v721 = vunpack.c.h.b16 %v663
      %v722 = vunpack.c.l.b16 %v664
      %v723 = vunpack.c.h.b16 %v664
      %v724 = vunpack.c.l.b16 %v665
      %v725 = vunpack.c.h.b16 %v665
      %v726 = vunpack.c.l.b16 %v666
      %v727 = vunpack.c.h.b16 %v666
      %v728 = vunpack.c.l.b16 %v667
      %v729 = vunpack.c.h.b16 %v667
      %v730 = vunpack.c.l.b16 %v668
      %v731 = vunpack.c.h.b16 %v668
      %v732 = vunpack.c.l.b16 %v669
      %v733 = vunpack.c.h.b16 %v669
      %v734 = vunpack.c.l.b16 %v670
      %v735 = vunpack.c.h.b16 %v670
      %v736 = vpack.c.b16 %v706, %v704
      %v737 = vpack.c.b16 %v707, %v705
      %v738 = vpack.c.b16 %v710, %v708
      %v739 = vpack.c.b16 %v711, %v709
      %v740 = vpack.c.b16 %v714, %v712
      %v741 = vpack.c.b16 %v715, %v713
      %v742 = vpack.c.b16 %v718, %v716
      %v743 = vpack.c.b16 %v719, %v717
      %v744 = vpack.c.b16 %v722, %v720
      %v745 = vpack.c.b16 %v723, %v721
      %v746 = vpack.c.b16 %v726, %v724
      %v747 = vpack.c.b16 %v727, %v725
      %v748 = vpack.c.b16 %v730, %v728
      %v749 = vpack.c.b16 %v731, %v729
      %v750 = vpack.c.b16 %v734, %v732
      %v751 = vpack.c.b16 %v735, %v733
      %768 = vmatprep.subr.bf16.mxu0 %v751
      %769 = vmatpush1.bf16.msra.mxu0 %v750
      %770 = vmatprep.subr.bf16.mxu0 %v749
      %771 = vmatpush1.bf16.msra.mxu0 %v748
      %772 = vmatprep.subr.bf16.mxu0 %v747
      %773 = vmatpush1.bf16.msra.mxu0 %v746
      %774 = vmatprep.subr.bf16.mxu0 %v745
      %775 = vmatpush1.bf16.msra.mxu0 %v744
      %776 = vmatprep.subr.bf16.mxu0 %v743
      %777 = vmatpush1.bf16.msra.mxu0 %v742
      %778 = vmatprep.subr.bf16.mxu0 %v741
      %779 = vmatpush1.bf16.msra.mxu0 %v740
      %780 = vmatprep.subr.bf16.mxu0 %v739
      %781 = vmatpush1.bf16.msra.mxu0 %v738
      %782 = vmatprep.subr.bf16.mxu0 %v737
      %783 = vmatpush1.bf16.msra.mxu0 %v736
      %784 = vmatprep.subr.bf16.mxu0 0
      %785 = vmatpush2.bf16.msra.mxu0 0
      %786 = vmatprep.subr.bf16.mxu0 0
      %787 = vmatpush2.bf16.msra.mxu0 0
      %788 = vmatprep.subr.bf16.mxu0 0
      %789 = vmatpush2.bf16.msra.mxu0 0
      %790 = vmatprep.subr.bf16.mxu0 0
      %791 = vmatpush2.bf16.msra.mxu0 0
      %792 = vmatprep.subr.bf16.mxu0 0
      %793 = vmatpush2.bf16.msra.mxu0 0
      %794 = vmatprep.subr.bf16.mxu0 0
      %795 = vmatpush2.bf16.msra.mxu0 0
      %796 = vmatprep.subr.bf16.mxu0 0
      %797 = vmatpush2.bf16.msra.mxu0 0
      %798 = vmatprep.subr.bf16.mxu0 0
      %799 = vmatpush2.bf16.msra.mxu0 0
      %800 = vmatprep.mubr.bf16.mxu0 0
      %801 = vmatmul.mubr.bf16.gmra.mxu0 %v674
      %v802 = vpop.f32.mrf.mxu0
      %v803 = vadd.f32 0.0, %v802
      %v804 = vpop.f32.mrf.mxu0
      %v805 = vadd.f32 0.0, %v804
      %v806 = vpop.f32.mrf.mxu0
      %v807 = vadd.f32 0.0, %v806
      %v808 = vpop.f32.mrf.mxu0
      %v809 = vadd.f32 0.0, %v808
      %810 = vmatprep.mubr.bf16.mxu0 0
      %811 = vmatmul.mubr.bf16.gmra.mxu0 %v676
      %v812 = vpop.f32.mrf.mxu0
      %v813 = vadd.f32 0.0, %v812
      %v814 = vpop.f32.mrf.mxu0
      %v815 = vadd.f32 0.0, %v814
      %v816 = vpop.f32.mrf.mxu0
      %v817 = vadd.f32 0.0, %v816
      %v818 = vpop.f32.mrf.mxu0
      %v819 = vadd.f32 0.0, %v818
      %820 = vmatprep.mubr.bf16.mxu0 0
      %821 = vmatmul.mubr.bf16.gmra.mxu0 %v678
      %v822 = vpop.f32.mrf.mxu0
      %v823 = vadd.f32 0.0, %v822
      %v824 = vpop.f32.mrf.mxu0
      %v825 = vadd.f32 0.0, %v824
      %v826 = vpop.f32.mrf.mxu0
      %v827 = vadd.f32 0.0, %v826
      %v828 = vpop.f32.mrf.mxu0
      %v829 = vadd.f32 0.0, %v828
      %830 = vmatprep.mubr.bf16.mxu0 0
      %831 = vmatmul.mubr.bf16.gmra.mxu0 %v680
      %v832 = vpop.f32.mrf.mxu0
      %v833 = vadd.f32 0.0, %v832
      %v834 = vpop.f32.mrf.mxu0
      %v835 = vadd.f32 0.0, %v834
      %v836 = vpop.f32.mrf.mxu0
      %v837 = vadd.f32 0.0, %v836
      %v838 = vpop.f32.mrf.mxu0
      %v839 = vadd.f32 0.0, %v838
      %840 = vmatprep.mubr.bf16.mxu0 0
      %841 = vmatmul.mubr.bf16.gmra.mxu0 %v682
      %v842 = vpop.f32.mrf.mxu0
      %v843 = vadd.f32 0.0, %v842
      %v844 = vpop.f32.mrf.mxu0
      %v845 = vadd.f32 0.0, %v844
      %v846 = vpop.f32.mrf.mxu0
      %v847 = vadd.f32 0.0, %v846
      %v848 = vpop.f32.mrf.mxu0
      %v849 = vadd.f32 0.0, %v848
      %850 = vdwg.mxu0
      %v851 = vadd.f32 %v606, %v803
      %v852 = vadd.f32 %v608, %v805
      %v853 = vadd.f32 %v610, %v807
      %v854 = vadd.f32 %v612, %v809
      %v855 = vadd.f32 %v616, %v813
      %v856 = vadd.f32 %v618, %v815
      %v857 = vadd.f32 %v620, %v817
      %v858 = vadd.f32 %v622, %v819
      %v859 = vadd.f32 %v626, %v823
      %v860 = vadd.f32 %v628, %v825
      %v861 = vadd.f32 %v630, %v827
      %v862 = vadd.f32 %v632, %v829
      %v863 = vadd.f32 %v636, %v833
      %v864 = vadd.f32 %v638, %v835
      %v865 = vadd.f32 %v640, %v837
      %v866 = vadd.f32 %v642, %v839
      %v867 = vadd.f32 %v646, %v843
      %v868 = vadd.f32 %v648, %v845
      %v869 = vadd.f32 %v650, %v847
      %v870 = vadd.f32 %v652, %v849
      %s871 = scalar_lea.vmem %s1, 384
      %v872 = vld [vmem:[%s871] sm:$0xff]
      %v873 = vld [vmem:[%s871 + $0x8] sm:$0xff]
      %v874 = vld [vmem:[%s871 + $0x10] sm:$0xff]
      %v875 = vld [vmem:[%s871 + $0x18] sm:$0xff]
      %v876 = vld [vmem:[%s871 + $0x20] sm:$0xff]
      %v877 = vld [vmem:[%s871 + $0x28] sm:$0xff]
      %v878 = vld [vmem:[%s871 + $0x30] sm:$0xff]
      %v879 = vld [vmem:[%s871 + $0x38] sm:$0xff]
      %v880 = vld [vmem:[%s871 + $0x40] sm:$0xff]
      %v881 = vld [vmem:[%s871 + $0x48] sm:$0xff]
      %v882 = vld [vmem:[%s871 + $0x50] sm:$0xff]
      %v883 = vld [vmem:[%s871 + $0x58] sm:$0xff]
      %v884 = vld [vmem:[%s871 + $0x60] sm:$0xff]
      %v885 = vld [vmem:[%s871 + $0x68] sm:$0xff]
      %v886 = vld [vmem:[%s871 + $0x70] sm:$0xff]
      %v887 = vld [vmem:[%s871 + $0x78] sm:$0xff]
      %v889 = vunpack.c.l.b16 %v210
      %v890 = vpack.c.b16 %v258, %v257
      %v891 = vpack.c.b16 %v260, %v259
      %v892 = vpack.c.b16 %v262, %v261
      %v893 = vpack.c.b16 %v264, %v263
      %v894 = vpack.c.b16 %v266, %v265
      %v895 = vpack.c.b16 %v889, %v889
      %v896 = vrot.slane %v890, 1
      %v897 = vrot.slane %v891, 1
      %v898 = vsel %vm671, %v896, %v897
      %v899 = vrot.slane %v892, 1
      %v900 = vsel %vm671, %v897, %v899
      %v901 = vrot.slane %v893, 1
      %v902 = vsel %vm671, %v899, %v901
      %v903 = vrot.slane %v894, 1
      %v904 = vsel %vm671, %v901, %v903
      %v905 = vrot.slane %v895, 1
      %v906 = vsel %vm671, %v903, %v905
      %v928 = vunpack.c.l.b16 %v872
      %v929 = vunpack.c.h.b16 %v872
      %v930 = vunpack.c.l.b16 %v873
      %v931 = vunpack.c.h.b16 %v873
      %v932 = vunpack.c.l.b16 %v874
      %v933 = vunpack.c.h.b16 %v874
      %v934 = vunpack.c.l.b16 %v875
      %v935 = vunpack.c.h.b16 %v875
      %v936 = vunpack.c.l.b16 %v876
      %v937 = vunpack.c.h.b16 %v876
      %v938 = vunpack.c.l.b16 %v877
      %v939 = vunpack.c.h.b16 %v877
      %v940 = vunpack.c.l.b16 %v878
      %v941 = vunpack.c.h.b16 %v878
      %v942 = vunpack.c.l.b16 %v879
      %v943 = vunpack.c.h.b16 %v879
      %v944 = vunpack.c.l.b16 %v880
      %v945 = vunpack.c.h.b16 %v880
      %v946 = vunpack.c.l.b16 %v881
      %v947 = vunpack.c.h.b16 %v881
      %v948 = vunpack.c.l.b16 %v882
      %v949 = vunpack.c.h.b16 %v882
      %v950 = vunpack.c.l.b16 %v883
      %v951 = vunpack.c.h.b16 %v883
      %v952 = vunpack.c.l.b16 %v884
      %v953 = vunpack.c.h.b16 %v884
      %v954 = vunpack.c.l.b16 %v885
      %v955 = vunpack.c.h.b16 %v885
      %v956 = vunpack.c.l.b16 %v886
      %v957 = vunpack.c.h.b16 %v886
      %v958 = vunpack.c.l.b16 %v887
      %v959 = vunpack.c.h.b16 %v887
      %v960 = vpack.c.b16 %v930, %v928
      %v961 = vpack.c.b16 %v931, %v929
      %v962 = vpack.c.b16 %v934, %v932
      %v963 = vpack.c.b16 %v935, %v933
      %v964 = vpack.c.b16 %v938, %v936
      %v965 = vpack.c.b16 %v939, %v937
      %v966 = vpack.c.b16 %v942, %v940
      %v967 = vpack.c.b16 %v943, %v941
      %v968 = vpack.c.b16 %v946, %v944
      %v969 = vpack.c.b16 %v947, %v945
      %v970 = vpack.c.b16 %v950, %v948
      %v971 = vpack.c.b16 %v951, %v949
      %v972 = vpack.c.b16 %v954, %v952
      %v973 = vpack.c.b16 %v955, %v953
      %v974 = vpack.c.b16 %v958, %v956
      %v975 = vpack.c.b16 %v959, %v957
      %992 = vmatprep.subr.bf16.mxu0 %v975
      %993 = vmatpush1.bf16.msra.mxu0 %v974
      %994 = vmatprep.subr.bf16.mxu0 %v973
      %995 = vmatpush1.bf16.msra.mxu0 %v972
      %996 = vmatprep.subr.bf16.mxu0 %v971
      %997 = vmatpush1.bf16.msra.mxu0 %v970
      %998 = vmatprep.subr.bf16.mxu0 %v969
      %999 = vmatpush1.bf16.msra.mxu0 %v968
      %1000 = vmatprep.subr.bf16.mxu0 %v967
      %1001 = vmatpush1.bf16.msra.mxu0 %v966
      %1002 = vmatprep.subr.bf16.mxu0 %v965
      %1003 = vmatpush1.bf16.msra.mxu0 %v964
      %1004 = vmatprep.subr.bf16.mxu0 %v963
      %1005 = vmatpush1.bf16.msra.mxu0 %v962
      %1006 = vmatprep.subr.bf16.mxu0 %v961
      %1007 = vmatpush1.bf16.msra.mxu0 %v960
      %1008 = vmatprep.subr.bf16.mxu0 0
      %1009 = vmatpush2.bf16.msra.mxu0 0
      %1010 = vmatprep.subr.bf16.mxu0 0
      %1011 = vmatpush2.bf16.msra.mxu0 0
      %1012 = vmatprep.subr.bf16.mxu0 0
      %1013 = vmatpush2.bf16.msra.mxu0 0
      %1014 = vmatprep.subr.bf16.mxu0 0
      %1015 = vmatpush2.bf16.msra.mxu0 0
      %1016 = vmatprep.subr.bf16.mxu0 0
      %1017 = vmatpush2.bf16.msra.mxu0 0
      %1018 = vmatprep.subr.bf16.mxu0 0
      %1019 = vmatpush2.bf16.msra.mxu0 0
      %1020 = vmatprep.subr.bf16.mxu0 0
      %1021 = vmatpush2.bf16.msra.mxu0 0
      %1022 = vmatprep.subr.bf16.mxu0 0
      %1023 = vmatpush2.bf16.msra.mxu0 0
      %1024 = vmatprep.mubr.bf16.mxu0 0
      %1025 = vmatmul.mubr.bf16.gmra.mxu0 %v898
      %v1026 = vpop.f32.mrf.mxu0
      %v1027 = vadd.f32 0.0, %v1026
      %v1028 = vpop.f32.mrf.mxu0
      %v1029 = vadd.f32 0.0, %v1028
      %v1030 = vpop.f32.mrf.mxu0
      %v1031 = vadd.f32 0.0, %v1030
      %v1032 = vpop.f32.mrf.mxu0
      %v1033 = vadd.f32 0.0, %v1032
      %1034 = vmatprep.mubr.bf16.mxu0 0
      %1035 = vmatmul.mubr.bf16.gmra.mxu0 %v900
      %v1036 = vpop.f32.mrf.mxu0
      %v1037 = vadd.f32 0.0, %v1036
      %v1038 = vpop.f32.mrf.mxu0
      %v1039 = vadd.f32 0.0, %v1038
      %v1040 = vpop.f32.mrf.mxu0
      %v1041 = vadd.f32 0.0, %v1040
      %v1042 = vpop.f32.mrf.mxu0
      %v1043 = vadd.f32 0.0, %v1042
      %1044 = vmatprep.mubr.bf16.mxu0 0
      %1045 = vmatmul.mubr.bf16.gmra.mxu0 %v902
      %v1046 = vpop.f32.mrf.mxu0
      %v1047 = vadd.f32 0.0, %v1046
      %v1048 = vpop.f32.mrf.mxu0
      %v1049 = vadd.f32 0.0, %v1048
      %v1050 = vpop.f32.mrf.mxu0
      %v1051 = vadd.f32 0.0, %v1050
      %v1052 = vpop.f32.mrf.mxu0
      %v1053 = vadd.f32 0.0, %v1052
      %1054 = vmatprep.mubr.bf16.mxu0 0
      %1055 = vmatmul.mubr.bf16.gmra.mxu0 %v904
      %v1056 = vpop.f32.mrf.mxu0
      %v1057 = vadd.f32 0.0, %v1056
      %v1058 = vpop.f32.mrf.mxu0
      %v1059 = vadd.f32 0.0, %v1058
      %v1060 = vpop.f32.mrf.mxu0
      %v1061 = vadd.f32 0.0, %v1060
      %v1062 = vpop.f32.mrf.mxu0
      %v1063 = vadd.f32 0.0, %v1062
      %1064 = vmatprep.mubr.bf16.mxu0 0
      %1065 = vmatmul.mubr.bf16.gmra.mxu0 %v906
      %v1066 = vpop.f32.mrf.mxu0
      %v1067 = vadd.f32 0.0, %v1066
      %v1068 = vpop.f32.mrf.mxu0
      %v1069 = vadd.f32 0.0, %v1068
      %v1070 = vpop.f32.mrf.mxu0
      %v1071 = vadd.f32 0.0, %v1070
      %v1072 = vpop.f32.mrf.mxu0
      %v1073 = vadd.f32 0.0, %v1072
      %1074 = vdwg.mxu0
      %v1075 = vadd.f32 %v851, %v1027
      %v1076 = vadd.f32 %v852, %v1029
      %v1077 = vadd.f32 %v853, %v1031
      %v1078 = vadd.f32 %v854, %v1033
      %v1079 = vadd.f32 %v855, %v1037
      %v1080 = vadd.f32 %v856, %v1039
      %v1081 = vadd.f32 %v857, %v1041
      %v1082 = vadd.f32 %v858, %v1043
      %v1083 = vadd.f32 %v859, %v1047
      %v1084 = vadd.f32 %v860, %v1049
      %v1085 = vadd.f32 %v861, %v1051
      %v1086 = vadd.f32 %v862, %v1053
      %v1087 = vadd.f32 %v863, %v1057
      %v1088 = vadd.f32 %v864, %v1059
      %v1089 = vadd.f32 %v865, %v1061
      %v1090 = vadd.f32 %v866, %v1063
      %v1091 = vadd.f32 %v867, %v1067
      %v1092 = vadd.f32 %v868, %v1069
      %v1093 = vadd.f32 %v869, %v1071
      %v1094 = vadd.f32 %v870, %v1073
      %s1095 = scalar_lea.vmem %s1, 512
      %v1096 = vld [vmem:[%s1095] sm:$0xff]
      %v1097 = vld [vmem:[%s1095 + $0x8] sm:$0xff]
      %v1098 = vld [vmem:[%s1095 + $0x10] sm:$0xff]
      %v1099 = vld [vmem:[%s1095 + $0x18] sm:$0xff]
      %v1100 = vld [vmem:[%s1095 + $0x20] sm:$0xff]
      %v1101 = vld [vmem:[%s1095 + $0x28] sm:$0xff]
      %v1102 = vld [vmem:[%s1095 + $0x30] sm:$0xff]
      %v1103 = vld [vmem:[%s1095 + $0x38] sm:$0xff]
      %v1104 = vld [vmem:[%s1095 + $0x40] sm:$0xff]
      %v1105 = vld [vmem:[%s1095 + $0x48] sm:$0xff]
      %v1106 = vld [vmem:[%s1095 + $0x50] sm:$0xff]
      %v1107 = vld [vmem:[%s1095 + $0x58] sm:$0xff]
      %v1108 = vld [vmem:[%s1095 + $0x60] sm:$0xff]
      %v1109 = vld [vmem:[%s1095 + $0x68] sm:$0xff]
      %v1110 = vld [vmem:[%s1095 + $0x70] sm:$0xff]
      %v1111 = vld [vmem:[%s1095 + $0x78] sm:$0xff]
      %vm1112 = vsmask.f32 6400
      %v1114 = vshrl.u32 %v890, 16
      %v1116 = vrot.slane %v1114, 1
      %v1117 = vshll.u32 %v890, 16
      %v1119 = vrot.slane %v1117, 2
      %v1120 = vor.u32 %v1116, %v1119
      %v1122 = vshrl.u32 %v891, 16
      %v1124 = vrot.slane %v1122, 1
      %v1125 = vshll.u32 %v891, 16
      %v1127 = vrot.slane %v1125, 2
      %v1128 = vor.u32 %v1124, %v1127
      %v1129 = vsel %vm1112, %v1120, %v1128
      %v1131 = vshrl.u32 %v892, 16
      %v1133 = vrot.slane %v1131, 1
      %v1134 = vshll.u32 %v892, 16
      %v1136 = vrot.slane %v1134, 2
      %v1137 = vor.u32 %v1133, %v1136
      %v1138 = vsel %vm1112, %v1128, %v1137
      %v1140 = vshrl.u32 %v893, 16
      %v1142 = vrot.slane %v1140, 1
      %v1143 = vshll.u32 %v893, 16
      %v1145 = vrot.slane %v1143, 2
      %v1146 = vor.u32 %v1142, %v1145
      %v1147 = vsel %vm1112, %v1137, %v1146
      %v1149 = vshrl.u32 %v894, 16
      %v1151 = vrot.slane %v1149, 1
      %v1152 = vshll.u32 %v894, 16
      %v1154 = vrot.slane %v1152, 2
      %v1155 = vor.u32 %v1151, %v1154
      %v1156 = vsel %vm1112, %v1146, %v1155
      %v1158 = vshrl.u32 %v895, 16
      %v1160 = vrot.slane %v1158, 1
      %v1161 = vshll.u32 %v895, 16
      %v1163 = vrot.slane %v1161, 2
      %v1164 = vor.u32 %v1160, %v1163
      %v1165 = vsel %vm1112, %v1155, %v1164
      %v1187 = vunpack.c.l.b16 %v1096
      %v1188 = vunpack.c.h.b16 %v1096
      %v1189 = vunpack.c.l.b16 %v1097
      %v1190 = vunpack.c.h.b16 %v1097
      %v1191 = vunpack.c.l.b16 %v1098
      %v1192 = vunpack.c.h.b16 %v1098
      %v1193 = vunpack.c.l.b16 %v1099
      %v1194 = vunpack.c.h.b16 %v1099
      %v1195 = vunpack.c.l.b16 %v1100
      %v1196 = vunpack.c.h.b16 %v1100
      %v1197 = vunpack.c.l.b16 %v1101
      %v1198 = vunpack.c.h.b16 %v1101
      %v1199 = vunpack.c.l.b16 %v1102
      %v1200 = vunpack.c.h.b16 %v1102
      %v1201 = vunpack.c.l.b16 %v1103
      %v1202 = vunpack.c.h.b16 %v1103
      %v1203 = vunpack.c.l.b16 %v1104
      %v1204 = vunpack.c.h.b16 %v1104
      %v1205 = vunpack.c.l.b16 %v1105
      %v1206 = vunpack.c.h.b16 %v1105
      %v1207 = vunpack.c.l.b16 %v1106
      %v1208 = vunpack.c.h.b16 %v1106
      %v1209 = vunpack.c.l.b16 %v1107
      %v1210 = vunpack.c.h.b16 %v1107
      %v1211 = vunpack.c.l.b16 %v1108
      %v1212 = vunpack.c.h.b16 %v1108
      %v1213 = vunpack.c.l.b16 %v1109
      %v1214 = vunpack.c.h.b16 %v1109
      %v1215 = vunpack.c.l.b16 %v1110
      %v1216 = vunpack.c.h.b16 %v1110
      %v1217 = vunpack.c.l.b16 %v1111
      %v1218 = vunpack.c.h.b16 %v1111
      %v1219 = vpack.c.b16 %v1189, %v1187
      %v1220 = vpack.c.b16 %v1190, %v1188
      %v1221 = vpack.c.b16 %v1193, %v1191
      %v1222 = vpack.c.b16 %v1194, %v1192
      %v1223 = vpack.c.b16 %v1197, %v1195
      %v1224 = vpack.c.b16 %v1198, %v1196
      %v1225 = vpack.c.b16 %v1201, %v1199
      %v1226 = vpack.c.b16 %v1202, %v1200
      %v1227 = vpack.c.b16 %v1205, %v1203
      %v1228 = vpack.c.b16 %v1206, %v1204
      %v1229 = vpack.c.b16 %v1209, %v1207
      %v1230 = vpack.c.b16 %v1210, %v1208
      %v1231 = vpack.c.b16 %v1213, %v1211
      %v1232 = vpack.c.b16 %v1214, %v1212
      %v1233 = vpack.c.b16 %v1217, %v1215
      %v1234 = vpack.c.b16 %v1218, %v1216
      %1251 = vmatprep.subr.bf16.mxu0 %v1234
      %1252 = vmatpush1.bf16.msra.mxu0 %v1233
      %1253 = vmatprep.subr.bf16.mxu0 %v1232
      %1254 = vmatpush1.bf16.msra.mxu0 %v1231
      %1255 = vmatprep.subr.bf16.mxu0 %v1230
      %1256 = vmatpush1.bf16.msra.mxu0 %v1229
      %1257 = vmatprep.subr.bf16.mxu0 %v1228
      %1258 = vmatpush1.bf16.msra.mxu0 %v1227
      %1259 = vmatprep.subr.bf16.mxu0 %v1226
      %1260 = vmatpush1.bf16.msra.mxu0 %v1225
      %1261 = vmatprep.subr.bf16.mxu0 %v1224
      %1262 = vmatpush1.bf16.msra.mxu0 %v1223
      %1263 = vmatprep.subr.bf16.mxu0 %v1222
      %1264 = vmatpush1.bf16.msra.mxu0 %v1221
      %1265 = vmatprep.subr.bf16.mxu0 %v1220
      %1266 = vmatpush1.bf16.msra.mxu0 %v1219
      %1267 = vmatprep.subr.bf16.mxu0 0
      %1268 = vmatpush2.bf16.msra.mxu0 0
      %1269 = vmatprep.subr.bf16.mxu0 0
      %1270 = vmatpush2.bf16.msra.mxu0 0
      %1271 = vmatprep.subr.bf16.mxu0 0
      %1272 = vmatpush2.bf16.msra.mxu0 0
      %1273 = vmatprep.subr.bf16.mxu0 0
      %1274 = vmatpush2.bf16.msra.mxu0 0
      %1275 = vmatprep.subr.bf16.mxu0 0
      %1276 = vmatpush2.bf16.msra.mxu0 0
      %1277 = vmatprep.subr.bf16.mxu0 0
      %1278 = vmatpush2.bf16.msra.mxu0 0
      %1279 = vmatprep.subr.bf16.mxu0 0
      %1280 = vmatpush2.bf16.msra.mxu0 0
      %1281 = vmatprep.subr.bf16.mxu0 0
      %1282 = vmatpush2.bf16.msra.mxu0 0
      %1283 = vmatprep.mubr.bf16.mxu0 0
      %1284 = vmatmul.mubr.bf16.gmra.mxu0 %v1129
      %v1285 = vpop.f32.mrf.mxu0
      %v1286 = vadd.f32 0.0, %v1285
      %v1287 = vpop.f32.mrf.mxu0
      %v1288 = vadd.f32 0.0, %v1287
      %v1289 = vpop.f32.mrf.mxu0
      %v1290 = vadd.f32 0.0, %v1289
      %v1291 = vpop.f32.mrf.mxu0
      %v1292 = vadd.f32 0.0, %v1291
      %1293 = vmatprep.mubr.bf16.mxu0 0
      %1294 = vmatmul.mubr.bf16.gmra.mxu0 %v1138
      %v1295 = vpop.f32.mrf.mxu0
      %v1296 = vadd.f32 0.0, %v1295
      %v1297 = vpop.f32.mrf.mxu0
      %v1298 = vadd.f32 0.0, %v1297
      %v1299 = vpop.f32.mrf.mxu0
      %v1300 = vadd.f32 0.0, %v1299
      %v1301 = vpop.f32.mrf.mxu0
      %v1302 = vadd.f32 0.0, %v1301
      %1303 = vmatprep.mubr.bf16.mxu0 0
      %1304 = vmatmul.mubr.bf16.gmra.mxu0 %v1147
      %v1305 = vpop.f32.mrf.mxu0
      %v1306 = vadd.f32 0.0, %v1305
      %v1307 = vpop.f32.mrf.mxu0
      %v1308 = vadd.f32 0.0, %v1307
      %v1309 = vpop.f32.mrf.mxu0
      %v1310 = vadd.f32 0.0, %v1309
      %v1311 = vpop.f32.mrf.mxu0
      %v1312 = vadd.f32 0.0, %v1311
      %1313 = vmatprep.mubr.bf16.mxu0 0
      %1314 = vmatmul.mubr.bf16.gmra.mxu0 %v1156
      %v1315 = vpop.f32.mrf.mxu0
      %v1316 = vadd.f32 0.0, %v1315
      %v1317 = vpop.f32.mrf.mxu0
      %v1318 = vadd.f32 0.0, %v1317
      %v1319 = vpop.f32.mrf.mxu0
      %v1320 = vadd.f32 0.0, %v1319
      %v1321 = vpop.f32.mrf.mxu0
      %v1322 = vadd.f32 0.0, %v1321
      %1323 = vmatprep.mubr.bf16.mxu0 0
      %1324 = vmatmul.mubr.bf16.gmra.mxu0 %v1165
      %v1325 = vpop.f32.mrf.mxu0
      %v1326 = vadd.f32 0.0, %v1325
      %v1327 = vpop.f32.mrf.mxu0
      %v1328 = vadd.f32 0.0, %v1327
      %v1329 = vpop.f32.mrf.mxu0
      %v1330 = vadd.f32 0.0, %v1329
      %v1331 = vpop.f32.mrf.mxu0
      %v1332 = vadd.f32 0.0, %v1331
      %1333 = vdwg.mxu0
      %v1334 = vadd.f32 %v1075, %v1286
      %v1335 = vadd.f32 %v1076, %v1288
      %v1336 = vadd.f32 %v1077, %v1290
      %v1337 = vadd.f32 %v1078, %v1292
      %v1338 = vadd.f32 %v1079, %v1296
      %v1339 = vadd.f32 %v1080, %v1298
      %v1340 = vadd.f32 %v1081, %v1300
      %v1341 = vadd.f32 %v1082, %v1302
      %v1342 = vadd.f32 %v1083, %v1306
      %v1343 = vadd.f32 %v1084, %v1308
      %v1344 = vadd.f32 %v1085, %v1310
      %v1345 = vadd.f32 %v1086, %v1312
      %v1346 = vadd.f32 %v1087, %v1316
      %v1347 = vadd.f32 %v1088, %v1318
      %v1348 = vadd.f32 %v1089, %v1320
      %v1349 = vadd.f32 %v1090, %v1322
      %v1350 = vadd.f32 %v1091, %v1326
      %v1351 = vadd.f32 %v1092, %v1328
      %v1352 = vadd.f32 %v1093, %v1330
      %v1353 = vadd.f32 %v1094, %v1332
      %s1354 = scalar_lea.vmem %s1, 640
      %v1355 = vld [vmem:[%s1354] sm:$0xff]
      %v1356 = vld [vmem:[%s1354 + $0x8] sm:$0xff]
      %v1357 = vld [vmem:[%s1354 + $0x10] sm:$0xff]
      %v1358 = vld [vmem:[%s1354 + $0x18] sm:$0xff]
      %v1359 = vld [vmem:[%s1354 + $0x20] sm:$0xff]
      %v1360 = vld [vmem:[%s1354 + $0x28] sm:$0xff]
      %v1361 = vld [vmem:[%s1354 + $0x30] sm:$0xff]
      %v1362 = vld [vmem:[%s1354 + $0x38] sm:$0xff]
      %v1363 = vld [vmem:[%s1354 + $0x40] sm:$0xff]
      %v1364 = vld [vmem:[%s1354 + $0x48] sm:$0xff]
      %v1365 = vld [vmem:[%s1354 + $0x50] sm:$0xff]
      %v1366 = vld [vmem:[%s1354 + $0x58] sm:$0xff]
      %v1367 = vld [vmem:[%s1354 + $0x60] sm:$0xff]
      %v1368 = vld [vmem:[%s1354 + $0x68] sm:$0xff]
      %v1369 = vld [vmem:[%s1354 + $0x70] sm:$0xff]
      %v1370 = vld [vmem:[%s1354 + $0x78] sm:$0xff]
      %vm1371 = vcmask 1045504
      %v1372 = vrot.slane %v890, 2
      %v1373 = vrot.slane %v891, 2
      %v1374 = vsel %vm1371, %v1372, %v1373
      %v1375 = vrot.slane %v892, 2
      %v1376 = vsel %vm1371, %v1373, %v1375
      %v1377 = vrot.slane %v893, 2
      %v1378 = vsel %vm1371, %v1375, %v1377
      %v1379 = vrot.slane %v894, 2
      %v1380 = vsel %vm1371, %v1377, %v1379
      %v1381 = vrot.slane %v895, 2
      %v1382 = vsel %vm1371, %v1379, %v1381
      %v1404 = vunpack.c.l.b16 %v1355
      %v1405 = vunpack.c.h.b16 %v1355
      %v1406 = vunpack.c.l.b16 %v1356
      %v1407 = vunpack.c.h.b16 %v1356
      %v1408 = vunpack.c.l.b16 %v1357
      %v1409 = vunpack.c.h.b16 %v1357
      %v1410 = vunpack.c.l.b16 %v1358
      %v1411 = vunpack.c.h.b16 %v1358
      %v1412 = vunpack.c.l.b16 %v1359
      %v1413 = vunpack.c.h.b16 %v1359
      %v1414 = vunpack.c.l.b16 %v1360
      %v1415 = vunpack.c.h.b16 %v1360
      %v1416 = vunpack.c.l.b16 %v1361
      %v1417 = vunpack.c.h.b16 %v1361
      %v1418 = vunpack.c.l.b16 %v1362
      %v1419 = vunpack.c.h.b16 %v1362
      %v1420 = vunpack.c.l.b16 %v1363
      %v1421 = vunpack.c.h.b16 %v1363
      %v1422 = vunpack.c.l.b16 %v1364
      %v1423 = vunpack.c.h.b16 %v1364
      %v1424 = vunpack.c.l.b16 %v1365
      %v1425 = vunpack.c.h.b16 %v1365
      %v1426 = vunpack.c.l.b16 %v1366
      %v1427 = vunpack.c.h.b16 %v1366
      %v1428 = vunpack.c.l.b16 %v1367
      %v1429 = vunpack.c.h.b16 %v1367
      %v1430 = vunpack.c.l.b16 %v1368
      %v1431 = vunpack.c.h.b16 %v1368
      %v1432 = vunpack.c.l.b16 %v1369
      %v1433 = vunpack.c.h.b16 %v1369
      %v1434 = vunpack.c.l.b16 %v1370
      %v1435 = vunpack.c.h.b16 %v1370
      %v1436 = vpack.c.b16 %v1406, %v1404
      %v1437 = vpack.c.b16 %v1407, %v1405
      %v1438 = vpack.c.b16 %v1410, %v1408
      %v1439 = vpack.c.b16 %v1411, %v1409
      %v1440 = vpack.c.b16 %v1414, %v1412
      %v1441 = vpack.c.b16 %v1415, %v1413
      %v1442 = vpack.c.b16 %v1418, %v1416
      %v1443 = vpack.c.b16 %v1419, %v1417
      %v1444 = vpack.c.b16 %v1422, %v1420
      %v1445 = vpack.c.b16 %v1423, %v1421
      %v1446 = vpack.c.b16 %v1426, %v1424
      %v1447 = vpack.c.b16 %v1427, %v1425
      %v1448 = vpack.c.b16 %v1430, %v1428
      %v1449 = vpack.c.b16 %v1431, %v1429
      %v1450 = vpack.c.b16 %v1434, %v1432
      %v1451 = vpack.c.b16 %v1435, %v1433
      %1468 = vmatprep.subr.bf16.mxu0 %v1451
      %1469 = vmatpush1.bf16.msra.mxu0 %v1450
      %1470 = vmatprep.subr.bf16.mxu0 %v1449
      %1471 = vmatpush1.bf16.msra.mxu0 %v1448
      %1472 = vmatprep.subr.bf16.mxu0 %v1447
      %1473 = vmatpush1.bf16.msra.mxu0 %v1446
      %1474 = vmatprep.subr.bf16.mxu0 %v1445
      %1475 = vmatpush1.bf16.msra.mxu0 %v1444
      %1476 = vmatprep.subr.bf16.mxu0 %v1443
      %1477 = vmatpush1.bf16.msra.mxu0 %v1442
      %1478 = vmatprep.subr.bf16.mxu0 %v1441
      %1479 = vmatpush1.bf16.msra.mxu0 %v1440
      %1480 = vmatprep.subr.bf16.mxu0 %v1439
      %1481 = vmatpush1.bf16.msra.mxu0 %v1438
      %1482 = vmatprep.subr.bf16.mxu0 %v1437
      %1483 = vmatpush1.bf16.msra.mxu0 %v1436
      %1484 = vmatprep.subr.bf16.mxu0 0
      %1485 = vmatpush2.bf16.msra.mxu0 0
      %1486 = vmatprep.subr.bf16.mxu0 0
      %1487 = vmatpush2.bf16.msra.mxu0 0
      %1488 = vmatprep.subr.bf16.mxu0 0
      %1489 = vmatpush2.bf16.msra.mxu0 0
      %1490 = vmatprep.subr.bf16.mxu0 0
      %1491 = vmatpush2.bf16.msra.mxu0 0
      %1492 = vmatprep.subr.bf16.mxu0 0
      %1493 = vmatpush2.bf16.msra.mxu0 0
      %1494 = vmatprep.subr.bf16.mxu0 0
      %1495 = vmatpush2.bf16.msra.mxu0 0
      %1496 = vmatprep.subr.bf16.mxu0 0
      %1497 = vmatpush2.bf16.msra.mxu0 0
      %1498 = vmatprep.subr.bf16.mxu0 0
      %1499 = vmatpush2.bf16.msra.mxu0 0
      %1500 = vmatprep.mubr.bf16.mxu0 0
      %1501 = vmatmul.mubr.bf16.gmra.mxu0 %v1374
      %v1502 = vpop.f32.mrf.mxu0
      %v1503 = vadd.f32 0.0, %v1502
      %v1504 = vpop.f32.mrf.mxu0
      %v1505 = vadd.f32 0.0, %v1504
      %v1506 = vpop.f32.mrf.mxu0
      %v1507 = vadd.f32 0.0, %v1506
      %v1508 = vpop.f32.mrf.mxu0
      %v1509 = vadd.f32 0.0, %v1508
      %1510 = vmatprep.mubr.bf16.mxu0 0
      %1511 = vmatmul.mubr.bf16.gmra.mxu0 %v1376
      %v1512 = vpop.f32.mrf.mxu0
      %v1513 = vadd.f32 0.0, %v1512
      %v1514 = vpop.f32.mrf.mxu0
      %v1515 = vadd.f32 0.0, %v1514
      %v1516 = vpop.f32.mrf.mxu0
      %v1517 = vadd.f32 0.0, %v1516
      %v1518 = vpop.f32.mrf.mxu0
      %v1519 = vadd.f32 0.0, %v1518
      %1520 = vmatprep.mubr.bf16.mxu0 0
      %1521 = vmatmul.mubr.bf16.gmra.mxu0 %v1378
      %v1522 = vpop.f32.mrf.mxu0
      %v1523 = vadd.f32 0.0, %v1522
      %v1524 = vpop.f32.mrf.mxu0
      %v1525 = vadd.f32 0.0, %v1524
      %v1526 = vpop.f32.mrf.mxu0
      %v1527 = vadd.f32 0.0, %v1526
      %v1528 = vpop.f32.mrf.mxu0
      %v1529 = vadd.f32 0.0, %v1528
      %1530 = vmatprep.mubr.bf16.mxu0 0
      %1531 = vmatmul.mubr.bf16.gmra.mxu0 %v1380
      %v1532 = vpop.f32.mrf.mxu0
      %v1533 = vadd.f32 0.0, %v1532
      %v1534 = vpop.f32.mrf.mxu0
      %v1535 = vadd.f32 0.0, %v1534
      %v1536 = vpop.f32.mrf.mxu0
      %v1537 = vadd.f32 0.0, %v1536
      %v1538 = vpop.f32.mrf.mxu0
      %v1539 = vadd.f32 0.0, %v1538
      %1540 = vmatprep.mubr.bf16.mxu0 0
      %1541 = vmatmul.mubr.bf16.gmra.mxu0 %v1382
      %v1542 = vpop.f32.mrf.mxu0
      %v1543 = vadd.f32 0.0, %v1542
      %v1544 = vpop.f32.mrf.mxu0
      %v1545 = vadd.f32 0.0, %v1544
      %v1546 = vpop.f32.mrf.mxu0
      %v1547 = vadd.f32 0.0, %v1546
      %v1548 = vpop.f32.mrf.mxu0
      %v1549 = vadd.f32 0.0, %v1548
      %1550 = vdwg.mxu0
      %v1551 = vadd.f32 %v1334, %v1503
      %v1552 = vadd.f32 %v1335, %v1505
      %v1553 = vadd.f32 %v1336, %v1507
      %v1554 = vadd.f32 %v1337, %v1509
      %v1555 = vadd.f32 %v1338, %v1513
      %v1556 = vadd.f32 %v1339, %v1515
      %v1557 = vadd.f32 %v1340, %v1517
      %v1558 = vadd.f32 %v1341, %v1519
      %v1559 = vadd.f32 %v1342, %v1523
      %v1560 = vadd.f32 %v1343, %v1525
      %v1561 = vadd.f32 %v1344, %v1527
      %v1562 = vadd.f32 %v1345, %v1529
      %v1563 = vadd.f32 %v1346, %v1533
      %v1564 = vadd.f32 %v1347, %v1535
      %v1565 = vadd.f32 %v1348, %v1537
      %v1566 = vadd.f32 %v1349, %v1539
      %v1567 = vadd.f32 %v1350, %v1543
      %v1568 = vadd.f32 %v1351, %v1545
      %v1569 = vadd.f32 %v1352, %v1547
      %v1570 = vadd.f32 %v1353, %v1549
      %s1571 = scalar_lea.vmem %s1, 768
      %v1572 = vld [vmem:[%s1571] sm:$0xff]
      %v1573 = vld [vmem:[%s1571 + $0x8] sm:$0xff]
      %v1574 = vld [vmem:[%s1571 + $0x10] sm:$0xff]
      %v1575 = vld [vmem:[%s1571 + $0x18] sm:$0xff]
      %v1576 = vld [vmem:[%s1571 + $0x20] sm:$0xff]
      %v1577 = vld [vmem:[%s1571 + $0x28] sm:$0xff]
      %v1578 = vld [vmem:[%s1571 + $0x30] sm:$0xff]
      %v1579 = vld [vmem:[%s1571 + $0x38] sm:$0xff]
      %v1580 = vld [vmem:[%s1571 + $0x40] sm:$0xff]
      %v1581 = vld [vmem:[%s1571 + $0x48] sm:$0xff]
      %v1582 = vld [vmem:[%s1571 + $0x50] sm:$0xff]
      %v1583 = vld [vmem:[%s1571 + $0x58] sm:$0xff]
      %v1584 = vld [vmem:[%s1571 + $0x60] sm:$0xff]
      %v1585 = vld [vmem:[%s1571 + $0x68] sm:$0xff]
      %v1586 = vld [vmem:[%s1571 + $0x70] sm:$0xff]
      %v1587 = vld [vmem:[%s1571 + $0x78] sm:$0xff]
      %v1589 = vunpack.c.l.b16 %v211
      %v1590 = vpack.c.b16 %v889, %v266
      %v1591 = vpack.c.b16 %v1589, %v1589
      %v1592 = vrot.slane %v268, 2
      %v1593 = vrot.slane %v269, 2
      %v1594 = vsel %vm1371, %v1592, %v1593
      %v1595 = vrot.slane %v270, 2
      %v1596 = vsel %vm1371, %v1593, %v1595
      %v1597 = vrot.slane %v271, 2
      %v1598 = vsel %vm1371, %v1595, %v1597
      %v1599 = vrot.slane %v1590, 2
      %v1600 = vsel %vm1371, %v1597, %v1599
      %v1601 = vrot.slane %v1591, 2
      %v1602 = vsel %vm1371, %v1599, %v1601
      %v1624 = vunpack.c.l.b16 %v1572
      %v1625 = vunpack.c.h.b16 %v1572
      %v1626 = vunpack.c.l.b16 %v1573
      %v1627 = vunpack.c.h.b16 %v1573
      %v1628 = vunpack.c.l.b16 %v1574
      %v1629 = vunpack.c.h.b16 %v1574
      %v1630 = vunpack.c.l.b16 %v1575
      %v1631 = vunpack.c.h.b16 %v1575
      %v1632 = vunpack.c.l.b16 %v1576
      %v1633 = vunpack.c.h.b16 %v1576
      %v1634 = vunpack.c.l.b16 %v1577
      %v1635 = vunpack.c.h.b16 %v1577
      %v1636 = vunpack.c.l.b16 %v1578
      %v1637 = vunpack.c.h.b16 %v1578
      %v1638 = vunpack.c.l.b16 %v1579
      %v1639 = vunpack.c.h.b16 %v1579
      %v1640 = vunpack.c.l.b16 %v1580
      %v1641 = vunpack.c.h.b16 %v1580
      %v1642 = vunpack.c.l.b16 %v1581
      %v1643 = vunpack.c.h.b16 %v1581
      %v1644 = vunpack.c.l.b16 %v1582
      %v1645 = vunpack.c.h.b16 %v1582
      %v1646 = vunpack.c.l.b16 %v1583
      %v1647 = vunpack.c.h.b16 %v1583
      %v1648 = vunpack.c.l.b16 %v1584
      %v1649 = vunpack.c.h.b16 %v1584
      %v1650 = vunpack.c.l.b16 %v1585
      %v1651 = vunpack.c.h.b16 %v1585
      %v1652 = vunpack.c.l.b16 %v1586
      %v1653 = vunpack.c.h.b16 %v1586
      %v1654 = vunpack.c.l.b16 %v1587
      %v1655 = vunpack.c.h.b16 %v1587
      %v1656 = vpack.c.b16 %v1626, %v1624
      %v1657 = vpack.c.b16 %v1627, %v1625
      %v1658 = vpack.c.b16 %v1630, %v1628
      %v1659 = vpack.c.b16 %v1631, %v1629
      %v1660 = vpack.c.b16 %v1634, %v1632
      %v1661 = vpack.c.b16 %v1635, %v1633
      %v1662 = vpack.c.b16 %v1638, %v1636
      %v1663 = vpack.c.b16 %v1639, %v1637
      %v1664 = vpack.c.b16 %v1642, %v1640
      %v1665 = vpack.c.b16 %v1643, %v1641
      %v1666 = vpack.c.b16 %v1646, %v1644
      %v1667 = vpack.c.b16 %v1647, %v1645
      %v1668 = vpack.c.b16 %v1650, %v1648
      %v1669 = vpack.c.b16 %v1651, %v1649
      %v1670 = vpack.c.b16 %v1654, %v1652
      %v1671 = vpack.c.b16 %v1655, %v1653
      %1688 = vmatprep.subr.bf16.mxu0 %v1671
      %1689 = vmatpush1.bf16.msra.mxu0 %v1670
      %1690 = vmatprep.subr.bf16.mxu0 %v1669
      %1691 = vmatpush1.bf16.msra.mxu0 %v1668
      %1692 = vmatprep.subr.bf16.mxu0 %v1667
      %1693 = vmatpush1.bf16.msra.mxu0 %v1666
      %1694 = vmatprep.subr.bf16.mxu0 %v1665
      %1695 = vmatpush1.bf16.msra.mxu0 %v1664
      %1696 = vmatprep.subr.bf16.mxu0 %v1663
      %1697 = vmatpush1.bf16.msra.mxu0 %v1662
      %1698 = vmatprep.subr.bf16.mxu0 %v1661
      %1699 = vmatpush1.bf16.msra.mxu0 %v1660
      %1700 = vmatprep.subr.bf16.mxu0 %v1659
      %1701 = vmatpush1.bf16.msra.mxu0 %v1658
      %1702 = vmatprep.subr.bf16.mxu0 %v1657
      %1703 = vmatpush1.bf16.msra.mxu0 %v1656
      %1704 = vmatprep.subr.bf16.mxu0 0
      %1705 = vmatpush2.bf16.msra.mxu0 0
      %1706 = vmatprep.subr.bf16.mxu0 0
      %1707 = vmatpush2.bf16.msra.mxu0 0
      %1708 = vmatprep.subr.bf16.mxu0 0
      %1709 = vmatpush2.bf16.msra.mxu0 0
      %1710 = vmatprep.subr.bf16.mxu0 0
      %1711 = vmatpush2.bf16.msra.mxu0 0
      %1712 = vmatprep.subr.bf16.mxu0 0
      %1713 = vmatpush2.bf16.msra.mxu0 0
      %1714 = vmatprep.subr.bf16.mxu0 0
      %1715 = vmatpush2.bf16.msra.mxu0 0
      %1716 = vmatprep.subr.bf16.mxu0 0
      %1717 = vmatpush2.bf16.msra.mxu0 0
      %1718 = vmatprep.subr.bf16.mxu0 0
      %1719 = vmatpush2.bf16.msra.mxu0 0
      %1720 = vmatprep.mubr.bf16.mxu0 0
      %1721 = vmatmul.mubr.bf16.gmra.mxu0 %v1594
      %v1722 = vpop.f32.mrf.mxu0
      %v1723 = vadd.f32 0.0, %v1722
      %v1724 = vpop.f32.mrf.mxu0
      %v1725 = vadd.f32 0.0, %v1724
      %v1726 = vpop.f32.mrf.mxu0
      %v1727 = vadd.f32 0.0, %v1726
      %v1728 = vpop.f32.mrf.mxu0
      %v1729 = vadd.f32 0.0, %v1728
      %1730 = vmatprep.mubr.bf16.mxu0 0
      %1731 = vmatmul.mubr.bf16.gmra.mxu0 %v1596
      %v1732 = vpop.f32.mrf.mxu0
      %v1733 = vadd.f32 0.0, %v1732
      %v1734 = vpop.f32.mrf.mxu0
      %v1735 = vadd.f32 0.0, %v1734
      %v1736 = vpop.f32.mrf.mxu0
      %v1737 = vadd.f32 0.0, %v1736
      %v1738 = vpop.f32.mrf.mxu0
      %v1739 = vadd.f32 0.0, %v1738
      %1740 = vmatprep.mubr.bf16.mxu0 0
      %1741 = vmatmul.mubr.bf16.gmra.mxu0 %v1598
      %v1742 = vpop.f32.mrf.mxu0
      %v1743 = vadd.f32 0.0, %v1742
      %v1744 = vpop.f32.mrf.mxu0
      %v1745 = vadd.f32 0.0, %v1744
      %v1746 = vpop.f32.mrf.mxu0
      %v1747 = vadd.f32 0.0, %v1746
      %v1748 = vpop.f32.mrf.mxu0
      %v1749 = vadd.f32 0.0, %v1748
      %1750 = vmatprep.mubr.bf16.mxu0 0
      %1751 = vmatmul.mubr.bf16.gmra.mxu0 %v1600
      %v1752 = vpop.f32.mrf.mxu0
      %v1753 = vadd.f32 0.0, %v1752
      %v1754 = vpop.f32.mrf.mxu0
      %v1755 = vadd.f32 0.0, %v1754
      %v1756 = vpop.f32.mrf.mxu0
      %v1757 = vadd.f32 0.0, %v1756
      %v1758 = vpop.f32.mrf.mxu0
      %v1759 = vadd.f32 0.0, %v1758
      %1760 = vmatprep.mubr.bf16.mxu0 0
      %1761 = vmatmul.mubr.bf16.gmra.mxu0 %v1602
      %v1762 = vpop.f32.mrf.mxu0
      %v1763 = vadd.f32 0.0, %v1762
      %v1764 = vpop.f32.mrf.mxu0
      %v1765 = vadd.f32 0.0, %v1764
      %v1766 = vpop.f32.mrf.mxu0
      %v1767 = vadd.f32 0.0, %v1766
      %v1768 = vpop.f32.mrf.mxu0
      %v1769 = vadd.f32 0.0, %v1768
      %1770 = vdwg.mxu0
      %v1771 = vadd.f32 %v1551, %v1723
      %v1772 = vadd.f32 %v1552, %v1725
      %v1773 = vadd.f32 %v1553, %v1727
      %v1774 = vadd.f32 %v1554, %v1729
      %v1775 = vadd.f32 %v1555, %v1733
      %v1776 = vadd.f32 %v1556, %v1735
      %v1777 = vadd.f32 %v1557, %v1737
      %v1778 = vadd.f32 %v1558, %v1739
      %v1779 = vadd.f32 %v1559, %v1743
      %v1780 = vadd.f32 %v1560, %v1745
      %v1781 = vadd.f32 %v1561, %v1747
      %v1782 = vadd.f32 %v1562, %v1749
      %v1783 = vadd.f32 %v1563, %v1753
      %v1784 = vadd.f32 %v1564, %v1755
      %v1785 = vadd.f32 %v1565, %v1757
      %v1786 = vadd.f32 %v1566, %v1759
      %v1787 = vadd.f32 %v1567, %v1763
      %v1788 = vadd.f32 %v1568, %v1765
      %v1789 = vadd.f32 %v1569, %v1767
      %v1790 = vadd.f32 %v1570, %v1769
      %s1791 = scalar_lea.vmem %s1, 896
      %v1792 = vld [vmem:[%s1791] sm:$0xff]
      %v1793 = vld [vmem:[%s1791 + $0x8] sm:$0xff]
      %v1794 = vld [vmem:[%s1791 + $0x10] sm:$0xff]
      %v1795 = vld [vmem:[%s1791 + $0x18] sm:$0xff]
      %v1796 = vld [vmem:[%s1791 + $0x20] sm:$0xff]
      %v1797 = vld [vmem:[%s1791 + $0x28] sm:$0xff]
      %v1798 = vld [vmem:[%s1791 + $0x30] sm:$0xff]
      %v1799 = vld [vmem:[%s1791 + $0x38] sm:$0xff]
      %v1800 = vld [vmem:[%s1791 + $0x40] sm:$0xff]
      %v1801 = vld [vmem:[%s1791 + $0x48] sm:$0xff]
      %v1802 = vld [vmem:[%s1791 + $0x50] sm:$0xff]
      %v1803 = vld [vmem:[%s1791 + $0x58] sm:$0xff]
      %v1804 = vld [vmem:[%s1791 + $0x60] sm:$0xff]
      %v1805 = vld [vmem:[%s1791 + $0x68] sm:$0xff]
      %v1806 = vld [vmem:[%s1791 + $0x70] sm:$0xff]
      %v1807 = vld [vmem:[%s1791 + $0x78] sm:$0xff]
      %vm1808 = vsmask.f32 5376
      %v1809 = vrot.slane %v286, 2
      %v1810 = vrot.slane %v282, 3
      %v1811 = vor.u32 %v1809, %v1810
      %v1812 = vrot.slane %v294, 2
      %v1813 = vrot.slane %v290, 3
      %v1814 = vor.u32 %v1812, %v1813
      %v1815 = vsel %vm1808, %v1811, %v1814
      %v1816 = vrot.slane %v302, 2
      %v1817 = vrot.slane %v298, 3
      %v1818 = vor.u32 %v1816, %v1817
      %v1819 = vsel %vm1808, %v1814, %v1818
      %v1820 = vrot.slane %v310, 2
      %v1821 = vrot.slane %v306, 3
      %v1822 = vor.u32 %v1820, %v1821
      %v1823 = vsel %vm1808, %v1818, %v1822
      %v1825 = vshrl.u32 %v1590, 16
      %v1827 = vrot.slane %v1825, 2
      %v1828 = vshll.u32 %v1590, 16
      %v1830 = vrot.slane %v1828, 3
      %v1831 = vor.u32 %v1827, %v1830
      %v1832 = vsel %vm1808, %v1822, %v1831
      %v1834 = vshrl.u32 %v1591, 16
      %v1836 = vrot.slane %v1834, 2
      %v1837 = vshll.u32 %v1591, 16
      %v1839 = vrot.slane %v1837, 3
      %v1840 = vor.u32 %v1836, %v1839
      %v1841 = vsel %vm1808, %v1831, %v1840
      %v1863 = vunpack.c.l.b16 %v1792
      %v1864 = vunpack.c.h.b16 %v1792
      %v1865 = vunpack.c.l.b16 %v1793
      %v1866 = vunpack.c.h.b16 %v1793
      %v1867 = vunpack.c.l.b16 %v1794
      %v1868 = vunpack.c.h.b16 %v1794
      %v1869 = vunpack.c.l.b16 %v1795
      %v1870 = vunpack.c.h.b16 %v1795
      %v1871 = vunpack.c.l.b16 %v1796
      %v1872 = vunpack.c.h.b16 %v1796
      %v1873 = vunpack.c.l.b16 %v1797
      %v1874 = vunpack.c.h.b16 %v1797
      %v1875 = vunpack.c.l.b16 %v1798
      %v1876 = vunpack.c.h.b16 %v1798
      %v1877 = vunpack.c.l.b16 %v1799
      %v1878 = vunpack.c.h.b16 %v1799
      %v1879 = vunpack.c.l.b16 %v1800
      %v1880 = vunpack.c.h.b16 %v1800
      %v1881 = vunpack.c.l.b16 %v1801
      %v1882 = vunpack.c.h.b16 %v1801
      %v1883 = vunpack.c.l.b16 %v1802
      %v1884 = vunpack.c.h.b16 %v1802
      %v1885 = vunpack.c.l.b16 %v1803
      %v1886 = vunpack.c.h.b16 %v1803
      %v1887 = vunpack.c.l.b16 %v1804
      %v1888 = vunpack.c.h.b16 %v1804
      %v1889 = vunpack.c.l.b16 %v1805
      %v1890 = vunpack.c.h.b16 %v1805
      %v1891 = vunpack.c.l.b16 %v1806
      %v1892 = vunpack.c.h.b16 %v1806
      %v1893 = vunpack.c.l.b16 %v1807
      %v1894 = vunpack.c.h.b16 %v1807
      %v1895 = vpack.c.b16 %v1865, %v1863
      %v1896 = vpack.c.b16 %v1866, %v1864
      %v1897 = vpack.c.b16 %v1869, %v1867
      %v1898 = vpack.c.b16 %v1870, %v1868
      %v1899 = vpack.c.b16 %v1873, %v1871
      %v1900 = vpack.c.b16 %v1874, %v1872
      %v1901 = vpack.c.b16 %v1877, %v1875
      %v1902 = vpack.c.b16 %v1878, %v1876
      %v1903 = vpack.c.b16 %v1881, %v1879
      %v1904 = vpack.c.b16 %v1882, %v1880
      %v1905 = vpack.c.b16 %v1885, %v1883
      %v1906 = vpack.c.b16 %v1886, %v1884
      %v1907 = vpack.c.b16 %v1889, %v1887
      %v1908 = vpack.c.b16 %v1890, %v1888
      %v1909 = vpack.c.b16 %v1893, %v1891
      %v1910 = vpack.c.b16 %v1894, %v1892
      %1927 = vmatprep.subr.bf16.mxu0 %v1910
      %1928 = vmatpush1.bf16.msra.mxu0 %v1909
      %1929 = vmatprep.subr.bf16.mxu0 %v1908
      %1930 = vmatpush1.bf16.msra.mxu0 %v1907
      %1931 = vmatprep.subr.bf16.mxu0 %v1906
      %1932 = vmatpush1.bf16.msra.mxu0 %v1905
      %1933 = vmatprep.subr.bf16.mxu0 %v1904
      %1934 = vmatpush1.bf16.msra.mxu0 %v1903
      %1935 = vmatprep.subr.bf16.mxu0 %v1902
      %1936 = vmatpush1.bf16.msra.mxu0 %v1901
      %1937 = vmatprep.subr.bf16.mxu0 %v1900
      %1938 = vmatpush1.bf16.msra.mxu0 %v1899
      %1939 = vmatprep.subr.bf16.mxu0 %v1898
      %1940 = vmatpush1.bf16.msra.mxu0 %v1897
      %1941 = vmatprep.subr.bf16.mxu0 %v1896
      %1942 = vmatpush1.bf16.msra.mxu0 %v1895
      %1943 = vmatprep.subr.bf16.mxu0 0
      %1944 = vmatpush2.bf16.msra.mxu0 0
      %1945 = vmatprep.subr.bf16.mxu0 0
      %1946 = vmatpush2.bf16.msra.mxu0 0
      %1947 = vmatprep.subr.bf16.mxu0 0
      %1948 = vmatpush2.bf16.msra.mxu0 0
      %1949 = vmatprep.subr.bf16.mxu0 0
      %1950 = vmatpush2.bf16.msra.mxu0 0
      %1951 = vmatprep.subr.bf16.mxu0 0
      %1952 = vmatpush2.bf16.msra.mxu0 0
      %1953 = vmatprep.subr.bf16.mxu0 0
      %1954 = vmatpush2.bf16.msra.mxu0 0
      %1955 = vmatprep.subr.bf16.mxu0 0
      %1956 = vmatpush2.bf16.msra.mxu0 0
      %1957 = vmatprep.subr.bf16.mxu0 0
      %1958 = vmatpush2.bf16.msra.mxu0 0
      %1959 = vmatprep.mubr.bf16.mxu0 0
      %1960 = vmatmul.mubr.bf16.gmra.mxu0 %v1815
      %v1961 = vpop.f32.mrf.mxu0
      %v1962 = vadd.f32 0.0, %v1961
      %v1963 = vpop.f32.mrf.mxu0
      %v1964 = vadd.f32 0.0, %v1963
      %v1965 = vpop.f32.mrf.mxu0
      %v1966 = vadd.f32 0.0, %v1965
      %v1967 = vpop.f32.mrf.mxu0
      %v1968 = vadd.f32 0.0, %v1967
      %1969 = vmatprep.mubr.bf16.mxu0 0
      %1970 = vmatmul.mubr.bf16.gmra.mxu0 %v1819
      %v1971 = vpop.f32.mrf.mxu0
      %v1972 = vadd.f32 0.0, %v1971
      %v1973 = vpop.f32.mrf.mxu0
      %v1974 = vadd.f32 0.0, %v1973
      %v1975 = vpop.f32.mrf.mxu0
      %v1976 = vadd.f32 0.0, %v1975
      %v1977 = vpop.f32.mrf.mxu0
      %v1978 = vadd.f32 0.0, %v1977
      %1979 = vmatprep.mubr.bf16.mxu0 0
      %1980 = vmatmul.mubr.bf16.gmra.mxu0 %v1823
      %v1981 = vpop.f32.mrf.mxu0
      %v1982 = vadd.f32 0.0, %v1981
      %v1983 = vpop.f32.mrf.mxu0
      %v1984 = vadd.f32 0.0, %v1983
      %v1985 = vpop.f32.mrf.mxu0
      %v1986 = vadd.f32 0.0, %v1985
      %v1987 = vpop.f32.mrf.mxu0
      %v1988 = vadd.f32 0.0, %v1987
      %1989 = vmatprep.mubr.bf16.mxu0 0
      %1990 = vmatmul.mubr.bf16.gmra.mxu0 %v1832
      %v1991 = vpop.f32.mrf.mxu0
      %v1992 = vadd.f32 0.0, %v1991
      %v1993 = vpop.f32.mrf.mxu0
      %v1994 = vadd.f32 0.0, %v1993
      %v1995 = vpop.f32.mrf.mxu0
      %v1996 = vadd.f32 0.0, %v1995
      %v1997 = vpop.f32.mrf.mxu0
      %v1998 = vadd.f32 0.0, %v1997
      %1999 = vmatprep.mubr.bf16.mxu0 0
      %2000 = vmatmul.mubr.bf16.gmra.mxu0 %v1841
      %v2001 = vpop.f32.mrf.mxu0
      %v2002 = vadd.f32 0.0, %v2001
      %v2003 = vpop.f32.mrf.mxu0
      %v2004 = vadd.f32 0.0, %v2003
      %v2005 = vpop.f32.mrf.mxu0
      %v2006 = vadd.f32 0.0, %v2005
      %v2007 = vpop.f32.mrf.mxu0
      %v2008 = vadd.f32 0.0, %v2007
      %2009 = vdwg.mxu0
      %v2010 = vadd.f32 %v1771, %v1962
      %v2011 = vadd.f32 %v1772, %v1964
      %v2012 = vadd.f32 %v1773, %v1966
      %v2013 = vadd.f32 %v1774, %v1968
      %v2014 = vadd.f32 %v1775, %v1972
      %v2015 = vadd.f32 %v1776, %v1974
      %v2016 = vadd.f32 %v1777, %v1976
      %v2017 = vadd.f32 %v1778, %v1978
      %v2018 = vadd.f32 %v1779, %v1982
      %v2019 = vadd.f32 %v1780, %v1984
      %v2020 = vadd.f32 %v1781, %v1986
      %v2021 = vadd.f32 %v1782, %v1988
      %v2022 = vadd.f32 %v1783, %v1992
      %v2023 = vadd.f32 %v1784, %v1994
      %v2024 = vadd.f32 %v1785, %v1996
      %v2025 = vadd.f32 %v1786, %v1998
      %v2026 = vadd.f32 %v1787, %v2002
      %v2027 = vadd.f32 %v1788, %v2004
      %v2028 = vadd.f32 %v1789, %v2006
      %v2029 = vadd.f32 %v1790, %v2008
      %s2030 = scalar_lea.vmem %s1, 1024
      %v2031 = vld [vmem:[%s2030] sm:$0xff]
      %v2032 = vld [vmem:[%s2030 + $0x8] sm:$0xff]
      %v2033 = vld [vmem:[%s2030 + $0x10] sm:$0xff]
      %v2034 = vld [vmem:[%s2030 + $0x18] sm:$0xff]
      %v2035 = vld [vmem:[%s2030 + $0x20] sm:$0xff]
      %v2036 = vld [vmem:[%s2030 + $0x28] sm:$0xff]
      %v2037 = vld [vmem:[%s2030 + $0x30] sm:$0xff]
      %v2038 = vld [vmem:[%s2030 + $0x38] sm:$0xff]
      %v2039 = vld [vmem:[%s2030 + $0x40] sm:$0xff]
      %v2040 = vld [vmem:[%s2030 + $0x48] sm:$0xff]
      %v2041 = vld [vmem:[%s2030 + $0x50] sm:$0xff]
      %v2042 = vld [vmem:[%s2030 + $0x58] sm:$0xff]
      %v2043 = vld [vmem:[%s2030 + $0x60] sm:$0xff]
      %v2044 = vld [vmem:[%s2030 + $0x68] sm:$0xff]
      %v2045 = vld [vmem:[%s2030 + $0x70] sm:$0xff]
      %v2046 = vld [vmem:[%s2030 + $0x78] sm:$0xff]
      %vm2047 = vcmask 1044480
      %v2048 = vrot.slane %v268, 3
      %v2049 = vrot.slane %v269, 3
      %v2050 = vsel %vm2047, %v2048, %v2049
      %v2051 = vrot.slane %v270, 3
      %v2052 = vsel %vm2047, %v2049, %v2051
      %v2053 = vrot.slane %v271, 3
      %v2054 = vsel %vm2047, %v2051, %v2053
      %v2055 = vrot.slane %v1590, 3
      %v2056 = vsel %vm2047, %v2053, %v2055
      %v2057 = vrot.slane %v1591, 3
      %v2058 = vsel %vm2047, %v2055, %v2057
      %v2080 = vunpack.c.l.b16 %v2031
      %v2081 = vunpack.c.h.b16 %v2031
      %v2082 = vunpack.c.l.b16 %v2032
      %v2083 = vunpack.c.h.b16 %v2032
      %v2084 = vunpack.c.l.b16 %v2033
      %v2085 = vunpack.c.h.b16 %v2033
      %v2086 = vunpack.c.l.b16 %v2034
      %v2087 = vunpack.c.h.b16 %v2034
      %v2088 = vunpack.c.l.b16 %v2035
      %v2089 = vunpack.c.h.b16 %v2035
      %v2090 = vunpack.c.l.b16 %v2036
      %v2091 = vunpack.c.h.b16 %v2036
      %v2092 = vunpack.c.l.b16 %v2037
      %v2093 = vunpack.c.h.b16 %v2037
      %v2094 = vunpack.c.l.b16 %v2038
      %v2095 = vunpack.c.h.b16 %v2038
      %v2096 = vunpack.c.l.b16 %v2039
      %v2097 = vunpack.c.h.b16 %v2039
      %v2098 = vunpack.c.l.b16 %v2040
      %v2099 = vunpack.c.h.b16 %v2040
      %v2100 = vunpack.c.l.b16 %v2041
      %v2101 = vunpack.c.h.b16 %v2041
      %v2102 = vunpack.c.l.b16 %v2042
      %v2103 = vunpack.c.h.b16 %v2042
      %v2104 = vunpack.c.l.b16 %v2043
      %v2105 = vunpack.c.h.b16 %v2043
      %v2106 = vunpack.c.l.b16 %v2044
      %v2107 = vunpack.c.h.b16 %v2044
      %v2108 = vunpack.c.l.b16 %v2045
      %v2109 = vunpack.c.h.b16 %v2045
      %v2110 = vunpack.c.l.b16 %v2046
      %v2111 = vunpack.c.h.b16 %v2046
      %v2112 = vpack.c.b16 %v2082, %v2080
      %v2113 = vpack.c.b16 %v2083, %v2081
      %v2114 = vpack.c.b16 %v2086, %v2084
      %v2115 = vpack.c.b16 %v2087, %v2085
      %v2116 = vpack.c.b16 %v2090, %v2088
      %v2117 = vpack.c.b16 %v2091, %v2089
      %v2118 = vpack.c.b16 %v2094, %v2092
      %v2119 = vpack.c.b16 %v2095, %v2093
      %v2120 = vpack.c.b16 %v2098, %v2096
      %v2121 = vpack.c.b16 %v2099, %v2097
      %v2122 = vpack.c.b16 %v2102, %v2100
      %v2123 = vpack.c.b16 %v2103, %v2101
      %v2124 = vpack.c.b16 %v2106, %v2104
      %v2125 = vpack.c.b16 %v2107, %v2105
      %v2126 = vpack.c.b16 %v2110, %v2108
      %v2127 = vpack.c.b16 %v2111, %v2109
      %2144 = vmatprep.subr.bf16.mxu0 %v2127
      %2145 = vmatpush1.bf16.msra.mxu0 %v2126
      %2146 = vmatprep.subr.bf16.mxu0 %v2125
      %2147 = vmatpush1.bf16.msra.mxu0 %v2124
      %2148 = vmatprep.subr.bf16.mxu0 %v2123
      %2149 = vmatpush1.bf16.msra.mxu0 %v2122
      %2150 = vmatprep.subr.bf16.mxu0 %v2121
      %2151 = vmatpush1.bf16.msra.mxu0 %v2120
      %2152 = vmatprep.subr.bf16.mxu0 %v2119
      %2153 = vmatpush1.bf16.msra.mxu0 %v2118
      %2154 = vmatprep.subr.bf16.mxu0 %v2117
      %2155 = vmatpush1.bf16.msra.mxu0 %v2116
      %2156 = vmatprep.subr.bf16.mxu0 %v2115
      %2157 = vmatpush1.bf16.msra.mxu0 %v2114
      %2158 = vmatprep.subr.bf16.mxu0 %v2113
      %2159 = vmatpush1.bf16.msra.mxu0 %v2112
      %2160 = vmatprep.subr.bf16.mxu0 0
      %2161 = vmatpush2.bf16.msra.mxu0 0
      %2162 = vmatprep.subr.bf16.mxu0 0
      %2163 = vmatpush2.bf16.msra.mxu0 0
      %2164 = vmatprep.subr.bf16.mxu0 0
      %2165 = vmatpush2.bf16.msra.mxu0 0
      %2166 = vmatprep.subr.bf16.mxu0 0
      %2167 = vmatpush2.bf16.msra.mxu0 0
      %2168 = vmatprep.subr.bf16.mxu0 0
      %2169 = vmatpush2.bf16.msra.mxu0 0
      %2170 = vmatprep.subr.bf16.mxu0 0
      %2171 = vmatpush2.bf16.msra.mxu0 0
      %2172 = vmatprep.subr.bf16.mxu0 0
      %2173 = vmatpush2.bf16.msra.mxu0 0
      %2174 = vmatprep.subr.bf16.mxu0 0
      %2175 = vmatpush2.bf16.msra.mxu0 0
      %2176 = vmatprep.mubr.bf16.mxu0 0
      %2177 = vmatmul.mubr.bf16.gmra.mxu0 %v2050
      %v2178 = vpop.f32.mrf.mxu0
      %v2179 = vadd.f32 0.0, %v2178
      %v2180 = vpop.f32.mrf.mxu0
      %v2181 = vadd.f32 0.0, %v2180
      %v2182 = vpop.f32.mrf.mxu0
      %v2183 = vadd.f32 0.0, %v2182
      %v2184 = vpop.f32.mrf.mxu0
      %v2185 = vadd.f32 0.0, %v2184
      %2186 = vmatprep.mubr.bf16.mxu0 0
      %2187 = vmatmul.mubr.bf16.gmra.mxu0 %v2052
      %v2188 = vpop.f32.mrf.mxu0
      %v2189 = vadd.f32 0.0, %v2188
      %v2190 = vpop.f32.mrf.mxu0
      %v2191 = vadd.f32 0.0, %v2190
      %v2192 = vpop.f32.mrf.mxu0
      %v2193 = vadd.f32 0.0, %v2192
      %v2194 = vpop.f32.mrf.mxu0
      %v2195 = vadd.f32 0.0, %v2194
      %2196 = vmatprep.mubr.bf16.mxu0 0
      %2197 = vmatmul.mubr.bf16.gmra.mxu0 %v2054
      %v2198 = vpop.f32.mrf.mxu0
      %v2199 = vadd.f32 0.0, %v2198
      %v2200 = vpop.f32.mrf.mxu0
      %v2201 = vadd.f32 0.0, %v2200
      %v2202 = vpop.f32.mrf.mxu0
      %v2203 = vadd.f32 0.0, %v2202
      %v2204 = vpop.f32.mrf.mxu0
      %v2205 = vadd.f32 0.0, %v2204
      %2206 = vmatprep.mubr.bf16.mxu0 0
      %2207 = vmatmul.mubr.bf16.gmra.mxu0 %v2056
      %v2208 = vpop.f32.mrf.mxu0
      %v2209 = vadd.f32 0.0, %v2208
      %v2210 = vpop.f32.mrf.mxu0
      %v2211 = vadd.f32 0.0, %v2210
      %v2212 = vpop.f32.mrf.mxu0
      %v2213 = vadd.f32 0.0, %v2212
      %v2214 = vpop.f32.mrf.mxu0
      %v2215 = vadd.f32 0.0, %v2214
      %2216 = vmatprep.mubr.bf16.mxu0 0
      %2217 = vmatmul.mubr.bf16.gmra.mxu0 %v2058
      %v2218 = vpop.f32.mrf.mxu0
      %v2219 = vadd.f32 0.0, %v2218
      %v2220 = vpop.f32.mrf.mxu0
      %v2221 = vadd.f32 0.0, %v2220
      %v2222 = vpop.f32.mrf.mxu0
      %v2223 = vadd.f32 0.0, %v2222
      %v2224 = vpop.f32.mrf.mxu0
      %v2225 = vadd.f32 0.0, %v2224
      %2226 = vdwg.mxu0
      %v2227 = vadd.f32 %v2010, %v2179
      %v2228 = vadd.f32 %v2011, %v2181
      %v2229 = vadd.f32 %v2012, %v2183
      %v2230 = vadd.f32 %v2013, %v2185
      %v2231 = vadd.f32 %v2014, %v2189
      %v2232 = vadd.f32 %v2015, %v2191
      %v2233 = vadd.f32 %v2016, %v2193
      %v2234 = vadd.f32 %v2017, %v2195
      %v2235 = vadd.f32 %v2018, %v2199
      %v2236 = vadd.f32 %v2019, %v2201
      %v2237 = vadd.f32 %v2020, %v2203
      %v2238 = vadd.f32 %v2021, %v2205
      %v2239 = vadd.f32 %v2022, %v2209
      %v2240 = vadd.f32 %v2023, %v2211
      %v2241 = vadd.f32 %v2024, %v2213
      %v2242 = vadd.f32 %v2025, %v2215
      %v2243 = vadd.f32 %v2026, %v2219
      %v2244 = vadd.f32 %v2027, %v2221
      %v2245 = vadd.f32 %v2028, %v2223
      %v2246 = vadd.f32 %v2029, %v2225
      %v2247 = vld [vmem:[%s2] sm:$0x3]
      %v2249 = vlaneseq
      %v2250 = vshrl.u32 %v2249, 7
      %v2251 = vsub.s32 0, %v2250
      %v2252 = vrot.slane %v2247, %v2251
      %v2253 = vlaneseq
      %v2254 = vshrl.u32 %v2253, 7
      %v2255 = vsub.s32 1, %v2254
      %v2256 = vrot.slane %v2247, %v2255
      %v2259 = vadd.f32 %v2227, %v2252
      %v2260 = vadd.f32 %v2228, %v2256
      %v2261 = vadd.f32 %v2229, %v2252
      %v2262 = vadd.f32 %v2230, %v2256
      %v2263 = vadd.f32 %v2231, %v2252
      %v2264 = vadd.f32 %v2232, %v2256
      %v2265 = vadd.f32 %v2233, %v2252
      %v2266 = vadd.f32 %v2234, %v2256
      %v2267 = vadd.f32 %v2235, %v2252
      %v2268 = vadd.f32 %v2236, %v2256
      %v2269 = vadd.f32 %v2237, %v2252
      %v2270 = vadd.f32 %v2238, %v2256
      %v2271 = vadd.f32 %v2239, %v2252
      %v2272 = vadd.f32 %v2240, %v2256
      %v2273 = vadd.f32 %v2241, %v2252
      %v2274 = vadd.f32 %v2242, %v2256
      %v2275 = vadd.f32 %v2243, %v2252
      %v2276 = vadd.f32 %v2244, %v2256
      %v2277 = vadd.f32 %v2245, %v2252
      %v2278 = vadd.f32 %v2246, %v2256
      %v2279 = vmax.f32 %v2259, 0.0
      %v2280 = vmax.f32 %v2260, 0.0
      %v2281 = vmax.f32 %v2261, 0.0
      %v2282 = vmax.f32 %v2262, 0.0
      %v2283 = vmax.f32 %v2263, 0.0
      %v2284 = vmax.f32 %v2264, 0.0
      %v2285 = vmax.f32 %v2265, 0.0
      %v2286 = vmax.f32 %v2266, 0.0
      %v2287 = vmax.f32 %v2267, 0.0
      %v2288 = vmax.f32 %v2268, 0.0
      %v2289 = vmax.f32 %v2269, 0.0
      %v2290 = vmax.f32 %v2270, 0.0
      %v2291 = vmax.f32 %v2271, 0.0
      %v2292 = vmax.f32 %v2272, 0.0
      %v2293 = vmax.f32 %v2273, 0.0
      %v2294 = vmax.f32 %v2274, 0.0
      %v2295 = vmax.f32 %v2275, 0.0
      %v2296 = vmax.f32 %v2276, 0.0
      %v2297 = vmax.f32 %v2277, 0.0
      %v2298 = vmax.f32 %v2278, 0.0
      %vm2319 = vcmask 1046528
      %v2320 = vrot.slane %v2279, 1
      %v2321 = vrot.slane %v2281, 1
      %v2322 = vsel %vm2319, %v2320, %v2321
      %v2323 = vrot.slane %v2280, 1
      %v2324 = vrot.slane %v2282, 1
      %v2325 = vsel %vm2319, %v2323, %v2324
      %v2326 = vrot.slane %v2283, 1
      %v2327 = vsel %vm2319, %v2321, %v2326
      %v2328 = vrot.slane %v2284, 1
      %v2329 = vsel %vm2319, %v2324, %v2328
      %v2330 = vrot.slane %v2285, 1
      %v2331 = vsel %vm2319, %v2326, %v2330
      %v2332 = vrot.slane %v2286, 1
      %v2333 = vsel %vm2319, %v2328, %v2332
      %v2334 = vrot.slane %v2287, 1
      %v2335 = vsel %vm2319, %v2330, %v2334
      %v2336 = vrot.slane %v2288, 1
      %v2337 = vsel %vm2319, %v2332, %v2336
      %v2338 = vrot.slane %v2289, 1
      %v2339 = vsel %vm2319, %v2334, %v2338
      %v2340 = vrot.slane %v2290, 1
      %v2341 = vsel %vm2319, %v2336, %v2340
      %v2342 = vrot.slane %v2291, 1
      %v2343 = vsel %vm2319, %v2338, %v2342
      %v2344 = vrot.slane %v2292, 1
      %v2345 = vsel %vm2319, %v2340, %v2344
      %v2346 = vrot.slane %v2293, 1
      %v2347 = vsel %vm2319, %v2342, %v2346
      %v2348 = vrot.slane %v2294, 1
      %v2349 = vsel %vm2319, %v2344, %v2348
      %v2350 = vrot.slane %v2295, 1
      %v2351 = vsel %vm2319, %v2346, %v2350
      %v2352 = vrot.slane %v2296, 1
      %v2353 = vsel %vm2319, %v2348, %v2352
      %v2354 = vrot.slane %v2297, 1
      %v2355 = vsel %vm2319, %v2350, %v2354
      %v2356 = vrot.slane %v2298, 1
      %v2357 = vsel %vm2319, %v2352, %v2356
      %v2378 = vmax.f32 %v2279, %v2322
      %v2379 = vmax.f32 %v2280, %v2325
      %v2380 = vmax.f32 %v2281, %v2327
      %v2381 = vmax.f32 %v2282, %v2329
      %v2382 = vmax.f32 %v2283, %v2331
      %v2383 = vmax.f32 %v2284, %v2333
      %v2384 = vmax.f32 %v2285, %v2335
      %v2385 = vmax.f32 %v2286, %v2337
      %v2386 = vmax.f32 %v2287, %v2339
      %v2387 = vmax.f32 %v2288, %v2341
      %v2388 = vmax.f32 %v2289, %v2343
      %v2389 = vmax.f32 %v2290, %v2345
      %v2390 = vmax.f32 %v2291, %v2347
      %v2391 = vmax.f32 %v2292, %v2349
      %v2392 = vmax.f32 %v2293, %v2351
      %v2393 = vmax.f32 %v2294, %v2353
      %v2394 = vmax.f32 %v2295, %v2355
      %v2395 = vmax.f32 %v2296, %v2357
      %v2396 = vmax.f32 %v2297, %v2354
      %v2397 = vmax.f32 %v2298, %v2356
      %vm2416 = vcmask 1045504
      %v2417 = vrot.slane %v2380, 2
      %v2418 = vrot.slane %v2382, 2
      %v2419 = vsel %vm2416, %v2417, %v2418
      %v2420 = vrot.slane %v2381, 2
      %v2421 = vrot.slane %v2383, 2
      %v2422 = vsel %vm2416, %v2420, %v2421
      %v2423 = vrot.slane %v2384, 2
      %v2424 = vsel %vm2416, %v2418, %v2423
      %v2425 = vrot.slane %v2385, 2
      %v2426 = vsel %vm2416, %v2421, %v2425
      %v2427 = vrot.slane %v2386, 2
      %v2428 = vsel %vm2416, %v2423, %v2427
      %v2429 = vrot.slane %v2387, 2
      %v2430 = vsel %vm2416, %v2425, %v2429
      %v2431 = vrot.slane %v2388, 2
      %v2432 = vsel %vm2416, %v2427, %v2431
      %v2433 = vrot.slane %v2389, 2
      %v2434 = vsel %vm2416, %v2429, %v2433
      %v2435 = vrot.slane %v2390, 2
      %v2436 = vsel %vm2416, %v2431, %v2435
      %v2437 = vrot.slane %v2391, 2
      %v2438 = vsel %vm2416, %v2433, %v2437
      %v2439 = vrot.slane %v2392, 2
      %v2440 = vsel %vm2416, %v2435, %v2439
      %v2441 = vrot.slane %v2393, 2
      %v2442 = vsel %vm2416, %v2437, %v2441
      %v2443 = vrot.slane %v2394, 2
      %v2444 = vsel %vm2416, %v2439, %v2443
      %v2445 = vrot.slane %v2395, 2
      %v2446 = vsel %vm2416, %v2441, %v2445
      %v2447 = vrot.slane %v2396, 2
      %v2448 = vsel %vm2416, %v2443, %v2447
      %v2449 = vrot.slane %v2397, 2
      %v2450 = vsel %vm2416, %v2445, %v2449
      %v2469 = vmax.f32 %v2378, %v2419
      %v2470 = vmax.f32 %v2379, %v2422
      %v2471 = vmax.f32 %v2380, %v2424
      %v2472 = vmax.f32 %v2381, %v2426
      %v2473 = vmax.f32 %v2382, %v2428
      %v2474 = vmax.f32 %v2383, %v2430
      %v2475 = vmax.f32 %v2384, %v2432
      %v2476 = vmax.f32 %v2385, %v2434
      %v2477 = vmax.f32 %v2386, %v2436
      %v2478 = vmax.f32 %v2387, %v2438
      %v2479 = vmax.f32 %v2388, %v2440
      %v2480 = vmax.f32 %v2389, %v2442
      %v2481 = vmax.f32 %v2390, %v2444
      %v2482 = vmax.f32 %v2391, %v2446
      %v2483 = vmax.f32 %v2392, %v2448
      %v2484 = vmax.f32 %v2393, %v2450
      %v2485 = vmax.f32 %v2394, %v2447
      %v2486 = vmax.f32 %v2395, %v2449
      %v2487 = vld [vmem:[%s3] sm:$0xf]
      %v2488 = vld [vmem:[%s3 + $0x4] sm:$0xf]
      %v2489 = vpack.c.bf16 %v2471, %v2469
      %v2490 = vpack.c.bf16 %v2472, %v2470
      %v2491 = vpack.c.bf16 %v2475, %v2473
      %v2492 = vpack.c.bf16 %v2476, %v2474
      %v2493 = vpack.c.bf16 %v2479, %v2477
      %v2494 = vpack.c.bf16 %v2480, %v2478
      %v2495 = vpack.c.bf16 %v2483, %v2481
      %v2496 = vpack.c.bf16 %v2484, %v2482
      %v2497 = vpack.c.bf16 %v2485, %v2485
      %v2498 = vpack.c.bf16 %v2486, %v2486
      %v2501 = vunpack.c.l.b16 %v2487
      %v2502 = vunpack.c.l.b16 %v2488
      %v2503 = vpack.c.b16 %v2502, %v2501
      %vm2504 = vcmask 564224
      %v2506 = vsel %vm2504, %v2503, 0
      %vm2508 = vcmask 1041408
      %vm2509 = vcmask 1042432
      %v2510 = vsel %vm2508, 4294967295, 65535
      %v2511 = vsel %vm2509, %v2510, 0
      %v2513 = vand.u32 %v2497, %v2511
      %v2516 = vand.u32 %v2498, %v2511
      %2518 = vmatprep.subr.bf16.mxu0 0
      %2519 = vmatpush1.bf16.msra.mxu0 0
      %2520 = vmatprep.subr.bf16.mxu0 0
      %2521 = vmatpush1.bf16.msra.mxu0 0
      %2522 = vmatprep.subr.bf16.mxu0 0
      %2523 = vmatpush1.bf16.msra.mxu0 0
      %2524 = vmatprep.subr.bf16.mxu0 %v2516
      %2525 = vmatpush1.bf16.msra.mxu0 %v2513
      %2526 = vmatprep.subr.bf16.mxu0 %v2496
      %2527 = vmatpush1.bf16.msra.mxu0 %v2495
      %2528 = vmatprep.subr.bf16.mxu0 %v2494
      %2529 = vmatpush1.bf16.msra.mxu0 %v2493
      %2530 = vmatprep.subr.bf16.mxu0 %v2492
      %2531 = vmatpush1.bf16.msra.mxu0 %v2491
      %2532 = vmatprep.subr.bf16.mxu0 %v2490
      %2533 = vmatpush1.bf16.msra.mxu0 %v2489
      %2534 = vmatprep.subr.bf16.mxu0 0
      %2535 = vmatpush2.bf16.msra.mxu0 0
      %2536 = vmatprep.subr.bf16.mxu0 0
      %2537 = vmatpush2.bf16.msra.mxu0 0
      %2538 = vmatprep.subr.bf16.mxu0 0
      %2539 = vmatpush2.bf16.msra.mxu0 0
      %2540 = vmatprep.subr.bf16.mxu0 0
      %2541 = vmatpush2.bf16.msra.mxu0 0
      %2542 = vmatprep.subr.bf16.mxu0 0
      %2543 = vmatpush2.bf16.msra.mxu0 0
      %2544 = vmatprep.subr.bf16.mxu0 0
      %2545 = vmatpush2.bf16.msra.mxu0 0
      %2546 = vmatprep.subr.bf16.mxu0 0
      %2547 = vmatpush2.bf16.msra.mxu0 0
      %2548 = vmatprep.subr.bf16.mxu0 0
      %2549 = vmatpush2.bf16.msra.mxu0 0
      %2550 = vmatprep.mubr.bf16.mxu0 0
      %2551 = vmatmul.mubr.bf16.gmra.mxu0 %v2506
      %v2552 = vpop.f32.mrf.mxu0
      %v2553 = vadd.f32 0.0, %v2552
      %v2554 = vpop.f32.mrf.mxu0
      %v2555 = vadd.f32 0.0, %v2554
      %v2556 = vpop.f32.mrf.mxu0
      %v2557 = vadd.f32 0.0, %v2556
      %v2558 = vpop.f32.mrf.mxu0
      %v2559 = vadd.f32 0.0, %v2558
      %2560 = vdwg.mxu0
      %v2561 = vpack.c.bf16 %v2557, %v2553
      %v2562 = vpack.c.bf16 %v2559, %v2555
      %v2565 = vunpack.c.l.b16 %v2561
      %v2566 = vunpack.c.l.b16 %v2562
      %v2567 = vunpack.c.h.b16 %v2561
      %v2568 = vunpack.c.h.b16 %v2562
      %v2569 = vpack.c.b16 %v2566, %v2565
      %v2570 = vpack.c.b16 %v2568, %v2567
      %2573 = vst [vmem:[%s197] sm:$0xff] %v2569
      %2574 = vst [vmem:[%s197 + $0x8] sm:$0xff] %v2570
      %p2575 = scmp.lt.s32.totalorder %s15, 1
      %s2576 = scalar_select %p2575, %s15, 1
      %s2577 = smul.addr %s2576, 4
      %s2578 = smul.addr %s2577, 4
      %s2579 = scalar_lea.vmem %s4, %s2578
      // Predicated region
      $region37: #{lstm_cnn_forward.6} parent=35 // pred_check
        %p2580 = pneg %p122
      $region38: #{lstm_cnn_forward.6} parent=35 // pred_check_branch
        %2582 = sbr.rel (%p2580) target = $region40
      $region39: #{lstm_cnn_forward.6} parent=35 // pred_region
        _
      $region40: #{lstm_cnn_forward.6} parent=35 // pred_fallthru
        _
    $region36: #{lstm_cnn_forward.6} parent=5 // pred_fallthru
      _
    %p2583 = scmp.le.s32.totalorder 2, %s10
    // Predicated region
    $region41: #{lstm_cnn_forward.6} parent=5 // pred_check
      %p2584 = pneg %p2583
    $region42: #{lstm_cnn_forward.6} parent=5 // pred_check_branch
      %2586 = sbr.rel (%p2584) target = $region44
    $region43: #{lstm_cnn_forward.6} parent=5 // pred_region
      %s2587 = ssub.s32 %s10, 2
      // Predicated region
      $region45: #{lstm_cnn_forward.6} parent=43 // pred_check
        %p2588 = pneg %p128
      $region46: #{lstm_cnn_forward.6} parent=43 // pred_check_branch
        %2590 = sbr.rel (%p2588) target = $region48
      $region47: #{lstm_cnn_forward.6} parent=43 // pred_region
        %p2591 = scmp.lt.s32.totalorder %s16, 1
        %s2592 = scalar_select %p2591, %s16, 1
        %s2593 = smul.addr %s2592, 4
        %s2594 = smul.addr %s2593, 4
        %s2595 = scalar_lea.vmem %s4, %s2594
      $region48: #{lstm_cnn_forward.6} parent=43 // pred_fallthru
        _
    $region44: #{lstm_cnn_forward.6} parent=5 // pred_fallthru
      _
  $region6: #{lstm_cnn_forward.6} parent=0 // loop_footer
    %s14 = sadd.s32 1, %s10
  $region7: #{lstm_cnn_forward.6} parent=0 // loop_footer_branch
    %9 = sbr.rel target = $region3
  $region8: #{lstm_cnn_forward.6} parent=0 // loop_exit
    _

// kernel: lstm_cnn_forward.7
$region0: #{lstm_cnn_forward.7}
  #allocation0 [shape = 'u32[]', space=smem, size = 0x4, offset = 0x4, fixed_abs, tag = 'smem constant byte address 0x4 - core index']
  #allocation1 [shape = 'u32[144,128]{1,0:T(1,128)}', space=vmem, size = 0x12000, scoped, tag = 'internal scratch']
  #allocation2 [shape = 'f32[2,512]{1,0:T(2,128)}', space=vmem, size = 0x1000, scoped, tag = 'scratch operand']
  %s0 = inlined_call_operand.vmem [shape: bf16[2,4096], index: 0, kind: input, shape index: {}]
  %s1 = inlined_call_operand.vmem [shape: bf16[4096,512], index: 1, kind: input, shape index: {}]
  %s2 = inlined_call_operand.vmem [shape: f32[1,512], index: 2, kind: input, shape index: {}]
  %s3 = inlined_call_operand.vmem [shape: bf16[128,512], index: 3, kind: input, shape index: {}]
  %s4 = inlined_call_operand.vmem [shape: f32[1,512], index: 4, kind: input, shape index: {}]
  %s5 = inlined_call_operand.vmem [shape: bf16[512,10], index: 5, kind: input, shape index: {}]
  %s6 = inlined_call_operand.vmem [shape: f32[1,10], index: 6, kind: input, shape index: {}]
  %s7 = inlined_call_operand.hbm [shape: f32[2,10], index: 7, kind: output, shape index: {}]
  %s8 = sld [smem:[#allocation0]]
  $region69: #{lstm_cnn_forward.7} parent=0
    _
  %s10 = ssub.s32 1, %s8
  %s11 = scalar_select 0, %s10, %s8
  $region1: #{lstm_cnn_forward.7} parent=0
    #allocation3 [shape = 'u8[1024]{0}', space=vmem, size = 0x400, scoped, tag = 'output window, operand 0, single buffered']
    #allocation4 [shape = 's32[2]{0}', space=sflag, size = 0x8, scoped, tag = 'scoped memory for lstm_cnn_forward.7']
    %12 = vsyncpa [#allocation4], 0
    loop: start=0, step=1, limit=4
    $region2: #{lstm_cnn_forward.7} parent=1 // loop_pre_header
      _
    $region3: #{lstm_cnn_forward.7} parent=1 // loop_header
      %s14 = sphi 0, %s18
      %p15 = scmp.ge.s32.totalorder %s14, 4
      %s24 = sphi 0, %s26
      %s27 = sphi 0, %s24
      %s28 = sphi 0, %s27
      %s44 = sphi 0, %s28
      %s50 = sphi 0, %s52
      %s53 = sphi 0, %s50
      %s54 = sphi 0, %s53
      %s70 = sphi 0, %s54
      %s74 = sphi 0, %s74
      %s76 = sphi 0, %s74
      %s77 = sphi 0, %s76
      %s91 = sphi 0, %s77
      %s95 = sphi 0, %s95
      %s97 = sphi 0, %s95
      %s98 = sphi 0, %s97
      %s112 = sphi 0, %s98
      %s116 = sphi 0, %s116
      %s118 = sphi 0, %s116
      %s119 = sphi 0, %s118
      %s133 = sphi 0, %s119
      %s137 = sphi 0, %s137
      %s139 = sphi 0, %s137
      %s140 = sphi 0, %s139
      %s154 = sphi 0, %s140
      %s158 = sphi 0, %s158
      %s160 = sphi 0, %s158
      %s161 = sphi 0, %s160
      %s175 = sphi 0, %s161
      %s179 = sphi 0, %s179
      %s181 = sphi 0, %s179
      %s182 = sphi 0, %s181
      %s196 = sphi 0, %s182
    $region4: #{lstm_cnn_forward.7} parent=1 // loop_header_branch
      %17 = sbr.rel (%p15) target = $region8
    $region5: #{lstm_cnn_forward.7} parent=1 // loop_body
      %s19 = ssub.s32 %s14, 1
      %s20 = ssub.s32 %s14, 2
      %s21 = sadd.s32 %s14, 1
      %s22 = ssub.s32 %s14, %s21
      %p23 = scmp.eq.s32.totalorder %s22, 0
      %s25 = sadd.s32 %s24, 1
      %s26 = scalar_select %p23, %s24, %s25
      %p29 = pneg %p23
      %p30 = scmp.eq.s32.totalorder %s14, 1
      %p31 = por %p29, %p30
      %p32 = scmp.ne.s32.totalorder %s24, %s27
      %p33 = scmp.eq.s32.totalorder %s14, 0
      %p34 = por %p32, %p33
      %p35 = scmp.ne.s32.totalorder %s24, %s27
      %p36 = scmp.eq.s32.totalorder %s19, 1
      %p37 = por %p35, %p36
      %p38 = scmp.ne.s32.totalorder %s27, %s28
      %p39 = scmp.eq.s32.totalorder %s19, 0
      %p40 = por %p38, %p39
      %p41 = scmp.ne.s32.totalorder %s27, %s28
      %p42 = scmp.eq.s32.totalorder %s20, 1
      %p43 = por %p41, %p42
      %p45 = scmp.ne.s32.totalorder %s28, %s44
      %p46 = scmp.eq.s32.totalorder %s20, 0
      %p47 = por %p45, %p46
      %s48 = ssub.s32 %s14, %s21
      %p49 = scmp.eq.s32.totalorder %s48, 0
      %s51 = sadd.s32 %s50, 1
      %s52 = scalar_select %p49, %s50, %s51
      %p55 = pneg %p49
      %p56 = scmp.eq.s32.totalorder %s14, 1
      %p57 = por %p55, %p56
      %p58 = scmp.ne.s32.totalorder %s50, %s53
      %p59 = scmp.eq.s32.totalorder %s14, 0
      %p60 = por %p58, %p59
      %p61 = scmp.ne.s32.totalorder %s50, %s53
      %p62 = scmp.eq.s32.totalorder %s19, 1
      %p63 = por %p61, %p62
      %p64 = scmp.ne.s32.totalorder %s53, %s54
      %p65 = scmp.eq.s32.totalorder %s19, 0
      %p66 = por %p64, %p65
      %p67 = scmp.ne.s32.totalorder %s53, %s54
      %p68 = scmp.eq.s32.totalorder %s20, 1
      %p69 = por %p67, %p68
      %p71 = scmp.ne.s32.totalorder %s54, %s70
      %p72 = scmp.eq.s32.totalorder %s20, 0
      %p73 = por %p71, %p72
      %s75 = sadd.s32 %s74, 1
      %p78 = scmp.eq.s32.totalorder %s14, 1
      %p79 = scmp.ne.s32.totalorder %s74, %s76
      %p80 = scmp.eq.s32.totalorder %s14, 0
      %p81 = por %p79, %p80
      %p82 = scmp.ne.s32.totalorder %s74, %s76
      %p83 = scmp.eq.s32.totalorder %s19, 1
      %p84 = por %p82, %p83
      %p85 = scmp.ne.s32.totalorder %s76, %s77
      %p86 = scmp.eq.s32.totalorder %s19, 0
      %p87 = por %p85, %p86
      %p88 = scmp.ne.s32.totalorder %s76, %s77
      %p89 = scmp.eq.s32.totalorder %s20, 1
      %p90 = por %p88, %p89
      %p92 = scmp.ne.s32.totalorder %s77, %s91
      %p93 = scmp.eq.s32.totalorder %s20, 0
      %p94 = por %p92, %p93
      %s96 = sadd.s32 %s95, 1
      %p99 = scmp.eq.s32.totalorder %s14, 1
      %p100 = scmp.ne.s32.totalorder %s95, %s97
      %p101 = scmp.eq.s32.totalorder %s14, 0
      %p102 = por %p100, %p101
      %p103 = scmp.ne.s32.totalorder %s95, %s97
      %p104 = scmp.eq.s32.totalorder %s19, 1
      %p105 = por %p103, %p104
      %p106 = scmp.ne.s32.totalorder %s97, %s98
      %p107 = scmp.eq.s32.totalorder %s19, 0
      %p108 = por %p106, %p107
      %p109 = scmp.ne.s32.totalorder %s97, %s98
      %p110 = scmp.eq.s32.totalorder %s20, 1
      %p111 = por %p109, %p110
      %p113 = scmp.ne.s32.totalorder %s98, %s112
      %p114 = scmp.eq.s32.totalorder %s20, 0
      %p115 = por %p113, %p114
      %s117 = sadd.s32 %s116, 1
      %p120 = scmp.eq.s32.totalorder %s14, 1
      %p121 = scmp.ne.s32.totalorder %s116, %s118
      %p122 = scmp.eq.s32.totalorder %s14, 0
      %p123 = por %p121, %p122
      %p124 = scmp.ne.s32.totalorder %s116, %s118
      %p125 = scmp.eq.s32.totalorder %s19, 1
      %p126 = por %p124, %p125
      %p127 = scmp.ne.s32.totalorder %s118, %s119
      %p128 = scmp.eq.s32.totalorder %s19, 0
      %p129 = por %p127, %p128
      %p130 = scmp.ne.s32.totalorder %s118, %s119
      %p131 = scmp.eq.s32.totalorder %s20, 1
      %p132 = por %p130, %p131
      %p134 = scmp.ne.s32.totalorder %s119, %s133
      %p135 = scmp.eq.s32.totalorder %s20, 0
      %p136 = por %p134, %p135
      %s138 = sadd.s32 %s137, 1
      %p141 = scmp.eq.s32.totalorder %s14, 1
      %p142 = scmp.ne.s32.totalorder %s137, %s139
      %p143 = scmp.eq.s32.totalorder %s14, 0
      %p144 = por %p142, %p143
      %p145 = scmp.ne.s32.totalorder %s137, %s139
      %p146 = scmp.eq.s32.totalorder %s19, 1
      %p147 = por %p145, %p146
      %p148 = scmp.ne.s32.totalorder %s139, %s140
      %p149 = scmp.eq.s32.totalorder %s19, 0
      %p150 = por %p148, %p149
      %p151 = scmp.ne.s32.totalorder %s139, %s140
      %p152 = scmp.eq.s32.totalorder %s20, 1
      %p153 = por %p151, %p152
      %p155 = scmp.ne.s32.totalorder %s140, %s154
      %p156 = scmp.eq.s32.totalorder %s20, 0
      %p157 = por %p155, %p156
      %s159 = sadd.s32 %s158, 1
      %p162 = scmp.eq.s32.totalorder %s14, 1
      %p163 = scmp.ne.s32.totalorder %s158, %s160
      %p164 = scmp.eq.s32.totalorder %s14, 0
      %p165 = por %p163, %p164
      %p166 = scmp.ne.s32.totalorder %s158, %s160
      %p167 = scmp.eq.s32.totalorder %s19, 1
      %p168 = por %p166, %p167
      %p169 = scmp.ne.s32.totalorder %s160, %s161
      %p170 = scmp.eq.s32.totalorder %s19, 0
      %p171 = por %p169, %p170
      %p172 = scmp.ne.s32.totalorder %s160, %s161
      %p173 = scmp.eq.s32.totalorder %s20, 1
      %p174 = por %p172, %p173
      %p176 = scmp.ne.s32.totalorder %s161, %s175
      %p177 = scmp.eq.s32.totalorder %s20, 0
      %p178 = por %p176, %p177
      %s180 = sadd.s32 %s179, 1
      %p183 = scmp.eq.s32.totalorder %s14, 1
      %p184 = scmp.ne.s32.totalorder %s179, %s181
      %p185 = scmp.eq.s32.totalorder %s14, 0
      %p186 = por %p184, %p185
      %p187 = scmp.ne.s32.totalorder %s179, %s181
      %p188 = scmp.eq.s32.totalorder %s19, 1
      %p189 = por %p187, %p188
      %p190 = scmp.ne.s32.totalorder %s181, %s182
      %p191 = scmp.eq.s32.totalorder %s19, 0
      %p192 = por %p190, %p191
      %p193 = scmp.ne.s32.totalorder %s181, %s182
      %p194 = scmp.eq.s32.totalorder %s20, 1
      %p195 = por %p193, %p194
      %p197 = scmp.ne.s32.totalorder %s182, %s196
      %p198 = scmp.eq.s32.totalorder %s20, 0
      %p199 = por %p197, %p198
      %p200 = scmp.le.s32.totalorder 1, %s14
      %p201 = scmp.lt.s32.totalorder %s14, 3
      %p202 = pnand %p200, %p201
      %p203 = pneg %p202
      // Predicated region
      $region9: #{lstm_cnn_forward.7} parent=5 // pred_check
        _
      $region10: #{lstm_cnn_forward.7} parent=5 // pred_check_branch
        %205 = sbr.rel (%p202) target = $region12
      $region11: #{lstm_cnn_forward.7} parent=5 // pred_region
        %s206 = ssub.s32 %s14, 1
        // Predicated region
        $region13: #{lstm_cnn_forward.7} parent=11 // pred_check
          %p207 = pneg %p87
        $region14: #{lstm_cnn_forward.7} parent=11 // pred_check_branch
          %209 = sbr.rel (%p207) target = $region16
        $region15: #{lstm_cnn_forward.7} parent=11 // pred_region
          _
        $region16: #{lstm_cnn_forward.7} parent=11 // pred_fallthru
          _
        // Predicated region
        $region17: #{lstm_cnn_forward.7} parent=11 // pred_check
          %p210 = pneg %p108
        $region18: #{lstm_cnn_forward.7} parent=11 // pred_check_branch
          %212 = sbr.rel (%p210) target = $region20
        $region19: #{lstm_cnn_forward.7} parent=11 // pred_region
          _
        $region20: #{lstm_cnn_forward.7} parent=11 // pred_fallthru
          _
        // Predicated region
        $region21: #{lstm_cnn_forward.7} parent=11 // pred_check
          %p213 = pneg %p129
        $region22: #{lstm_cnn_forward.7} parent=11 // pred_check_branch
          %215 = sbr.rel (%p213) target = $region24
        $region23: #{lstm_cnn_forward.7} parent=11 // pred_region
          _
        $region24: #{lstm_cnn_forward.7} parent=11 // pred_fallthru
          _
        // Predicated region
        $region25: #{lstm_cnn_forward.7} parent=11 // pred_check
          %p216 = pneg %p150
        $region26: #{lstm_cnn_forward.7} parent=11 // pred_check_branch
          %218 = sbr.rel (%p216) target = $region28
        $region27: #{lstm_cnn_forward.7} parent=11 // pred_region
          _
        $region28: #{lstm_cnn_forward.7} parent=11 // pred_fallthru
          _
        // Predicated region
        $region29: #{lstm_cnn_forward.7} parent=11 // pred_check
          %p219 = pneg %p171
        $region30: #{lstm_cnn_forward.7} parent=11 // pred_check_branch
          %221 = sbr.rel (%p219) target = $region32
        $region31: #{lstm_cnn_forward.7} parent=11 // pred_region
          _
        $region32: #{lstm_cnn_forward.7} parent=11 // pred_fallthru
          _
      $region12: #{lstm_cnn_forward.7} parent=5 // pred_fallthru
        _
      %p222 = scmp.lt.s32.totalorder %s14, 2
      // Predicated region
      $region33: #{lstm_cnn_forward.7} parent=5 // pred_check
        %p223 = pneg %p222
      $region34: #{lstm_cnn_forward.7} parent=5 // pred_check_branch
        %225 = sbr.rel (%p223) target = $region36
      $region35: #{lstm_cnn_forward.7} parent=5 // pred_region
        // Predicated region
        $region37: #{lstm_cnn_forward.7} parent=35 // pred_check
          %p226 = pneg %p34
        $region38: #{lstm_cnn_forward.7} parent=35 // pred_check_branch
          %228 = sbr.rel (%p226) target = $region40
        $region39: #{lstm_cnn_forward.7} parent=35 // pred_region
          %s229 = smul.u32 16, %s14
          %p230 = scmp.lt.s32.totalorder %s229, 31
          %s231 = scalar_select %p230, %s229, 31
          %s232 = scalar_lea.vmem %s0, %s231
          %s233 = smul.u32 16, %s14
        $region40: #{lstm_cnn_forward.7} parent=35 // pred_fallthru
          _
        // Predicated region
        $region41: #{lstm_cnn_forward.7} parent=35 // pred_check
          %p234 = pneg %p60
        $region42: #{lstm_cnn_forward.7} parent=35 // pred_check_branch
          %236 = sbr.rel (%p234) target = $region44
        $region43: #{lstm_cnn_forward.7} parent=35 // pred_region
          %s237 = smul.u32 256, %s14
          %p238 = scmp.lt.s32.totalorder %s237, 511
          %s239 = scalar_select %p238, %s237, 511
          %s240 = smul.addr %s239, 4
          %s241 = smul.addr %s240, 4
          %s242 = scalar_lea.vmem %s1, %s241
          %s243 = smul.u32 256, %s14
        $region44: #{lstm_cnn_forward.7} parent=35 // pred_fallthru
          _
      $region36: #{lstm_cnn_forward.7} parent=5 // pred_fallthru
        _
      %p244 = scmp.le.s32.totalorder 1, %s14
      %p245 = scmp.lt.s32.totalorder %s14, 3
      %p246 = pnand %p244, %p245
      %p247 = pneg %p246
      // Predicated region
      $region45: #{lstm_cnn_forward.7} parent=5 // pred_check
        _
      $region46: #{lstm_cnn_forward.7} parent=5 // pred_check_branch
        %249 = sbr.rel (%p246) target = $region48
      $region47: #{lstm_cnn_forward.7} parent=5 // pred_region
        %s250 = ssub.s32 %s14, 1
        %s251 = smul.u32 16, %s19
        %p252 = scmp.lt.s32.totalorder %s251, 31
        %s253 = scalar_select %p252, %s251, 31
        %s254 = scalar_lea.vmem %s0, %s253
        %p255 = pneg %p40
        %p256 = pneg %p37
        %s257 = smul.u32 256, %s19
        %p258 = scmp.lt.s32.totalorder %s257, 511
        %s259 = scalar_select %p258, %s257, 511
        %s260 = smul.addr %s259, 4
        %s261 = smul.addr %s260, 4
        %s262 = scalar_lea.vmem %s1, %s261
        %p263 = pneg %p66
        %p264 = pneg %p63
        %p265 = pneg %p87
        %p266 = pneg %p84
        %p267 = pneg %p108
        %p268 = pneg %p105
        %p269 = pneg %p129
        %p270 = pneg %p126
        %p271 = pneg %p150
        %p272 = pneg %p147
        %p273 = pneg %p171
        %p274 = pneg %p168
        %p275 = pneg %p192
        %p276 = pneg %p189
        %s277 = smul.u32 16, %s19
        %p278 = scmp.lt.s32.totalorder %s277, 31
        %s279 = scalar_select %p278, %s277, 31
        %s280 = scalar_lea.vmem %s0, %s279
        %s281 = smul.u32 16, %s19
        %s282 = smul.u32 256, %s19
        %p283 = scmp.lt.s32.totalorder %s282, 511
        %s284 = scalar_select %p283, %s282, 511
        %s285 = smul.addr %s284, 4
        %s286 = smul.addr %s285, 4
        %s287 = scalar_lea.vmem %s1, %s286
        %s288 = smul.u32 256, %s19
        %p290 = scmp.eq.s32.totalorder %s19, 0
        // Predicated region
        $region49: #{lstm_cnn_forward.7} parent=47 // pred_check
          %p291 = pneg %p290
        $region50: #{lstm_cnn_forward.7} parent=47 // pred_check_branch
          %293 = sbr.rel (%p291) target = $region52
        $region51: #{lstm_cnn_forward.7} parent=47 // pred_region
          %294 = vst [vmem:[#allocation2] sm:$0xff] 0.0
        $region52: #{lstm_cnn_forward.7} parent=47 // pred_fallthru
          _
        %v295 = vld [vmem:[#allocation2] sm:$0xff]
        %v296 = vld [vmem:[%s280] sm:$0xff]
        %v297 = vld [vmem:[%s280 + $0x8] sm:$0xff]
        %v298 = vld [vmem:[%s287] sm:$0xff]
        %v299 = vld [vmem:[%s287 + $0x8] sm:$0xff]
        %v300 = vld [vmem:[%s287 + $0x10] sm:$0xff]
        %v301 = vld [vmem:[%s287 + $0x18] sm:$0xff]
        %v302 = vld [vmem:[%s287 + $0x20] sm:$0xff]
        %v303 = vld [vmem:[%s287 + $0x28] sm:$0xff]
        %v304 = vld [vmem:[%s287 + $0x30] sm:$0xff]
        %v305 = vld [vmem:[%s287 + $0x38] sm:$0xff]
        %v306 = vld [vmem:[%s287 + $0x40] sm:$0xff]
        %v307 = vld [vmem:[%s287 + $0x48] sm:$0xff]
        %v308 = vld [vmem:[%s287 + $0x50] sm:$0xff]
        %v309 = vld [vmem:[%s287 + $0x58] sm:$0xff]
        %v310 = vld [vmem:[%s287 + $0x60] sm:$0xff]
        %v311 = vld [vmem:[%s287 + $0x68] sm:$0xff]
        %v312 = vld [vmem:[%s287 + $0x70] sm:$0xff]
        %v313 = vld [vmem:[%s287 + $0x78] sm:$0xff]
        %v314 = vld [vmem:[%s287 + $0x80] sm:$0xff]
        %v315 = vld [vmem:[%s287 + $0x88] sm:$0xff]
        %v316 = vld [vmem:[%s287 + $0x90] sm:$0xff]
        %v317 = vld [vmem:[%s287 + $0x98] sm:$0xff]
        %v318 = vld [vmem:[%s287 + $0xa0] sm:$0xff]
        %v319 = vld [vmem:[%s287 + $0xa8] sm:$0xff]
        %v320 = vld [vmem:[%s287 + $0xb0] sm:$0xff]
        %v321 = vld [vmem:[%s287 + $0xb8] sm:$0xff]
        %v322 = vld [vmem:[%s287 + $0xc0] sm:$0xff]
        %v323 = vld [vmem:[%s287 + $0xc8] sm:$0xff]
        %v324 = vld [vmem:[%s287 + $0xd0] sm:$0xff]
        %v325 = vld [vmem:[%s287 + $0xd8] sm:$0xff]
        %v326 = vld [vmem:[%s287 + $0xe0] sm:$0xff]
        %v327 = vld [vmem:[%s287 + $0xe8] sm:$0xff]
        %v328 = vld [vmem:[%s287 + $0xf0] sm:$0xff]
        %v329 = vld [vmem:[%s287 + $0xf8] sm:$0xff]
        %v330 = vld [vmem:[%s287 + $0x100] sm:$0xff]
        %v331 = vld [vmem:[%s287 + $0x108] sm:$0xff]
        %v332 = vld [vmem:[%s287 + $0x110] sm:$0xff]
        %v333 = vld [vmem:[%s287 + $0x118] sm:$0xff]
        %v334 = vld [vmem:[%s287 + $0x120] sm:$0xff]
        %v335 = vld [vmem:[%s287 + $0x128] sm:$0xff]
        %v336 = vld [vmem:[%s287 + $0x130] sm:$0xff]
        %v337 = vld [vmem:[%s287 + $0x138] sm:$0xff]
        %v338 = vld [vmem:[%s287 + $0x140] sm:$0xff]
        %v339 = vld [vmem:[%s287 + $0x148] sm:$0xff]
        %v340 = vld [vmem:[%s287 + $0x150] sm:$0xff]
        %v341 = vld [vmem:[%s287 + $0x158] sm:$0xff]
        %v342 = vld [vmem:[%s287 + $0x160] sm:$0xff]
        %v343 = vld [vmem:[%s287 + $0x168] sm:$0xff]
        %v344 = vld [vmem:[%s287 + $0x170] sm:$0xff]
        %v345 = vld [vmem:[%s287 + $0x178] sm:$0xff]
        %v346 = vld [vmem:[%s287 + $0x180] sm:$0xff]
        %v347 = vld [vmem:[%s287 + $0x188] sm:$0xff]
        %v348 = vld [vmem:[%s287 + $0x190] sm:$0xff]
        %v349 = vld [vmem:[%s287 + $0x198] sm:$0xff]
        %v350 = vld [vmem:[%s287 + $0x1a0] sm:$0xff]
        %v351 = vld [vmem:[%s287 + $0x1a8] sm:$0xff]
        %v352 = vld [vmem:[%s287 + $0x1b0] sm:$0xff]
        %v353 = vld [vmem:[%s287 + $0x1b8] sm:$0xff]
        %v354 = vld [vmem:[%s287 + $0x1c0] sm:$0xff]
        %v355 = vld [vmem:[%s287 + $0x1c8] sm:$0xff]
        %v356 = vld [vmem:[%s287 + $0x1d0] sm:$0xff]
        %v357 = vld [vmem:[%s287 + $0x1d8] sm:$0xff]
        %v358 = vld [vmem:[%s287 + $0x1e0] sm:$0xff]
        %v359 = vld [vmem:[%s287 + $0x1e8] sm:$0xff]
        %v360 = vld [vmem:[%s287 + $0x1f0] sm:$0xff]
        %v361 = vld [vmem:[%s287 + $0x1f8] sm:$0xff]
        %v362 = vld [vmem:[%s287 + $0x200] sm:$0xff]
        %v363 = vld [vmem:[%s287 + $0x208] sm:$0xff]
        %v364 = vld [vmem:[%s287 + $0x210] sm:$0xff]
        %v365 = vld [vmem:[%s287 + $0x218] sm:$0xff]
        %v366 = vld [vmem:[%s287 + $0x220] sm:$0xff]
        %v367 = vld [vmem:[%s287 + $0x228] sm:$0xff]
        %v368 = vld [vmem:[%s287 + $0x230] sm:$0xff]
        %v369 = vld [vmem:[%s287 + $0x238] sm:$0xff]
        %v370 = vld [vmem:[%s287 + $0x240] sm:$0xff]
        %v371 = vld [vmem:[%s287 + $0x248] sm:$0xff]
        %v372 = vld [vmem:[%s287 + $0x250] sm:$0xff]
        %v373 = vld [vmem:[%s287 + $0x258] sm:$0xff]
        %v374 = vld [vmem:[%s287 + $0x260] sm:$0xff]
        %v375 = vld [vmem:[%s287 + $0x268] sm:$0xff]
        %v376 = vld [vmem:[%s287 + $0x270] sm:$0xff]
        %v377 = vld [vmem:[%s287 + $0x278] sm:$0xff]
        %v378 = vld [vmem:[%s287 + $0x280] sm:$0xff]
        %v379 = vld [vmem:[%s287 + $0x288] sm:$0xff]
        %v380 = vld [vmem:[%s287 + $0x290] sm:$0xff]
        %v381 = vld [vmem:[%s287 + $0x298] sm:$0xff]
        %v382 = vld [vmem:[%s287 + $0x2a0] sm:$0xff]
        %v383 = vld [vmem:[%s287 + $0x2a8] sm:$0xff]
        %v384 = vld [vmem:[%s287 + $0x2b0] sm:$0xff]
        %v385 = vld [vmem:[%s287 + $0x2b8] sm:$0xff]
        %v386 = vld [vmem:[%s287 + $0x2c0] sm:$0xff]
        %v387 = vld [vmem:[%s287 + $0x2c8] sm:$0xff]
        %v388 = vld [vmem:[%s287 + $0x2d0] sm:$0xff]
        %v389 = vld [vmem:[%s287 + $0x2d8] sm:$0xff]
        %v390 = vld [vmem:[%s287 + $0x2e0] sm:$0xff]
        %v391 = vld [vmem:[%s287 + $0x2e8] sm:$0xff]
        %v392 = vld [vmem:[%s287 + $0x2f0] sm:$0xff]
        %v393 = vld [vmem:[%s287 + $0x2f8] sm:$0xff]
        %v394 = vld [vmem:[%s287 + $0x300] sm:$0xff]
        %v395 = vld [vmem:[%s287 + $0x308] sm:$0xff]
        %v396 = vld [vmem:[%s287 + $0x310] sm:$0xff]
        %v397 = vld [vmem:[%s287 + $0x318] sm:$0xff]
        %v398 = vld [vmem:[%s287 + $0x320] sm:$0xff]
        %v399 = vld [vmem:[%s287 + $0x328] sm:$0xff]
        %v400 = vld [vmem:[%s287 + $0x330] sm:$0xff]
        %v401 = vld [vmem:[%s287 + $0x338] sm:$0xff]
        %v402 = vld [vmem:[%s287 + $0x340] sm:$0xff]
        %v403 = vld [vmem:[%s287 + $0x348] sm:$0xff]
        %v404 = vld [vmem:[%s287 + $0x350] sm:$0xff]
        %v405 = vld [vmem:[%s287 + $0x358] sm:$0xff]
        %v406 = vld [vmem:[%s287 + $0x360] sm:$0xff]
        %v407 = vld [vmem:[%s287 + $0x368] sm:$0xff]
        %v408 = vld [vmem:[%s287 + $0x370] sm:$0xff]
        %v409 = vld [vmem:[%s287 + $0x378] sm:$0xff]
        %v410 = vld [vmem:[%s287 + $0x380] sm:$0xff]
        %v411 = vld [vmem:[%s287 + $0x388] sm:$0xff]
        %v412 = vld [vmem:[%s287 + $0x390] sm:$0xff]
        %v413 = vld [vmem:[%s287 + $0x398] sm:$0xff]
        %v414 = vld [vmem:[%s287 + $0x3a0] sm:$0xff]
        %v415 = vld [vmem:[%s287 + $0x3a8] sm:$0xff]
        %v416 = vld [vmem:[%s287 + $0x3b0] sm:$0xff]
        %v417 = vld [vmem:[%s287 + $0x3b8] sm:$0xff]
        %v418 = vld [vmem:[%s287 + $0x3c0] sm:$0xff]
        %v419 = vld [vmem:[%s287 + $0x3c8] sm:$0xff]
        %v420 = vld [vmem:[%s287 + $0x3d0] sm:$0xff]
        %v421 = vld [vmem:[%s287 + $0x3d8] sm:$0xff]
        %v422 = vld [vmem:[%s287 + $0x3e0] sm:$0xff]
        %v423 = vld [vmem:[%s287 + $0x3e8] sm:$0xff]
        %v424 = vld [vmem:[%s287 + $0x3f0] sm:$0xff]
        %v425 = vld [vmem:[%s287 + $0x3f8] sm:$0xff]
        %v426 = vld [vmem:[%s287 + $0x400] sm:$0xff]
        %v427 = vld [vmem:[%s287 + $0x408] sm:$0xff]
        %v428 = vld [vmem:[%s287 + $0x410] sm:$0xff]
        %v429 = vld [vmem:[%s287 + $0x418] sm:$0xff]
        %v430 = vld [vmem:[%s287 + $0x420] sm:$0xff]
        %v431 = vld [vmem:[%s287 + $0x428] sm:$0xff]
        %v432 = vld [vmem:[%s287 + $0x430] sm:$0xff]
        %v433 = vld [vmem:[%s287 + $0x438] sm:$0xff]
        %v434 = vld [vmem:[%s287 + $0x440] sm:$0xff]
        %v435 = vld [vmem:[%s287 + $0x448] sm:$0xff]
        %v436 = vld [vmem:[%s287 + $0x450] sm:$0xff]
        %v437 = vld [vmem:[%s287 + $0x458] sm:$0xff]
        %v438 = vld [vmem:[%s287 + $0x460] sm:$0xff]
        %v439 = vld [vmem:[%s287 + $0x468] sm:$0xff]
        %v440 = vld [vmem:[%s287 + $0x470] sm:$0xff]
        %v441 = vld [vmem:[%s287 + $0x478] sm:$0xff]
        %v442 = vld [vmem:[%s287 + $0x480] sm:$0xff]
        %v443 = vld [vmem:[%s287 + $0x488] sm:$0xff]
        %v444 = vld [vmem:[%s287 + $0x490] sm:$0xff]
        %v445 = vld [vmem:[%s287 + $0x498] sm:$0xff]
        %v446 = vld [vmem:[%s287 + $0x4a0] sm:$0xff]
        %v447 = vld [vmem:[%s287 + $0x4a8] sm:$0xff]
        %v448 = vld [vmem:[%s287 + $0x4b0] sm:$0xff]
        %v449 = vld [vmem:[%s287 + $0x4b8] sm:$0xff]
        %v450 = vld [vmem:[%s287 + $0x4c0] sm:$0xff]
        %v451 = vld [vmem:[%s287 + $0x4c8] sm:$0xff]
        %v452 = vld [vmem:[%s287 + $0x4d0] sm:$0xff]
        %v453 = vld [vmem:[%s287 + $0x4d8] sm:$0xff]
        %v454 = vld [vmem:[%s287 + $0x4e0] sm:$0xff]
        %v455 = vld [vmem:[%s287 + $0x4e8] sm:$0xff]
        %v456 = vld [vmem:[%s287 + $0x4f0] sm:$0xff]
        %v457 = vld [vmem:[%s287 + $0x4f8] sm:$0xff]
        %v458 = vld [vmem:[%s287 + $0x500] sm:$0xff]
        %v459 = vld [vmem:[%s287 + $0x508] sm:$0xff]
        %v460 = vld [vmem:[%s287 + $0x510] sm:$0xff]
        %v461 = vld [vmem:[%s287 + $0x518] sm:$0xff]
        %v462 = vld [vmem:[%s287 + $0x520] sm:$0xff]
        %v463 = vld [vmem:[%s287 + $0x528] sm:$0xff]
        %v464 = vld [vmem:[%s287 + $0x530] sm:$0xff]
        %v465 = vld [vmem:[%s287 + $0x538] sm:$0xff]
        %v466 = vld [vmem:[%s287 + $0x540] sm:$0xff]
        %v467 = vld [vmem:[%s287 + $0x548] sm:$0xff]
        %v468 = vld [vmem:[%s287 + $0x550] sm:$0xff]
        %v469 = vld [vmem:[%s287 + $0x558] sm:$0xff]
        %v470 = vld [vmem:[%s287 + $0x560] sm:$0xff]
        %v471 = vld [vmem:[%s287 + $0x568] sm:$0xff]
        %v472 = vld [vmem:[%s287 + $0x570] sm:$0xff]
        %v473 = vld [vmem:[%s287 + $0x578] sm:$0xff]
        %v474 = vld [vmem:[%s287 + $0x580] sm:$0xff]
        %v475 = vld [vmem:[%s287 + $0x588] sm:$0xff]
        %v476 = vld [vmem:[%s287 + $0x590] sm:$0xff]
        %v477 = vld [vmem:[%s287 + $0x598] sm:$0xff]
        %v478 = vld [vmem:[%s287 + $0x5a0] sm:$0xff]
        %v479 = vld [vmem:[%s287 + $0x5a8] sm:$0xff]
        %v480 = vld [vmem:[%s287 + $0x5b0] sm:$0xff]
        %v481 = vld [vmem:[%s287 + $0x5b8] sm:$0xff]
        %v482 = vld [vmem:[%s287 + $0x5c0] sm:$0xff]
        %v483 = vld [vmem:[%s287 + $0x5c8] sm:$0xff]
        %v484 = vld [vmem:[%s287 + $0x5d0] sm:$0xff]
        %v485 = vld [vmem:[%s287 + $0x5d8] sm:$0xff]
        %v486 = vld [vmem:[%s287 + $0x5e0] sm:$0xff]
        %v487 = vld [vmem:[%s287 + $0x5e8] sm:$0xff]
        %v488 = vld [vmem:[%s287 + $0x5f0] sm:$0xff]
        %v489 = vld [vmem:[%s287 + $0x5f8] sm:$0xff]
        %v490 = vld [vmem:[%s287 + $0x600] sm:$0xff]
        %v491 = vld [vmem:[%s287 + $0x608] sm:$0xff]
        %v492 = vld [vmem:[%s287 + $0x610] sm:$0xff]
        %v493 = vld [vmem:[%s287 + $0x618] sm:$0xff]
        %v494 = vld [vmem:[%s287 + $0x620] sm:$0xff]
        %v495 = vld [vmem:[%s287 + $0x628] sm:$0xff]
        %v496 = vld [vmem:[%s287 + $0x630] sm:$0xff]
        %v497 = vld [vmem:[%s287 + $0x638] sm:$0xff]
        %v498 = vld [vmem:[%s287 + $0x640] sm:$0xff]
        %v499 = vld [vmem:[%s287 + $0x648] sm:$0xff]
        %v500 = vld [vmem:[%s287 + $0x650] sm:$0xff]
        %v501 = vld [vmem:[%s287 + $0x658] sm:$0xff]
        %v502 = vld [vmem:[%s287 + $0x660] sm:$0xff]
        %v503 = vld [vmem:[%s287 + $0x668] sm:$0xff]
        %v504 = vld [vmem:[%s287 + $0x670] sm:$0xff]
        %v505 = vld [vmem:[%s287 + $0x678] sm:$0xff]
        %v506 = vld [vmem:[%s287 + $0x680] sm:$0xff]
        %v507 = vld [vmem:[%s287 + $0x688] sm:$0xff]
        %v508 = vld [vmem:[%s287 + $0x690] sm:$0xff]
        %v509 = vld [vmem:[%s287 + $0x698] sm:$0xff]
        %v510 = vld [vmem:[%s287 + $0x6a0] sm:$0xff]
        %v511 = vld [vmem:[%s287 + $0x6a8] sm:$0xff]
        %v512 = vld [vmem:[%s287 + $0x6b0] sm:$0xff]
        %v513 = vld [vmem:[%s287 + $0x6b8] sm:$0xff]
        %v514 = vld [vmem:[%s287 + $0x6c0] sm:$0xff]
        %v515 = vld [vmem:[%s287 + $0x6c8] sm:$0xff]
        %v516 = vld [vmem:[%s287 + $0x6d0] sm:$0xff]
        %v517 = vld [vmem:[%s287 + $0x6d8] sm:$0xff]
        %v518 = vld [vmem:[%s287 + $0x6e0] sm:$0xff]
        %v519 = vld [vmem:[%s287 + $0x6e8] sm:$0xff]
        %v520 = vld [vmem:[%s287 + $0x6f0] sm:$0xff]
        %v521 = vld [vmem:[%s287 + $0x6f8] sm:$0xff]
        %v522 = vld [vmem:[%s287 + $0x700] sm:$0xff]
        %v523 = vld [vmem:[%s287 + $0x708] sm:$0xff]
        %v524 = vld [vmem:[%s287 + $0x710] sm:$0xff]
        %v525 = vld [vmem:[%s287 + $0x718] sm:$0xff]
        %v526 = vld [vmem:[%s287 + $0x720] sm:$0xff]
        %v527 = vld [vmem:[%s287 + $0x728] sm:$0xff]
        %v528 = vld [vmem:[%s287 + $0x730] sm:$0xff]
        %v529 = vld [vmem:[%s287 + $0x738] sm:$0xff]
        %v530 = vld [vmem:[%s287 + $0x740] sm:$0xff]
        %v531 = vld [vmem:[%s287 + $0x748] sm:$0xff]
        %v532 = vld [vmem:[%s287 + $0x750] sm:$0xff]
        %v533 = vld [vmem:[%s287 + $0x758] sm:$0xff]
        %v534 = vld [vmem:[%s287 + $0x760] sm:$0xff]
        %v535 = vld [vmem:[%s287 + $0x768] sm:$0xff]
        %v536 = vld [vmem:[%s287 + $0x770] sm:$0xff]
        %v537 = vld [vmem:[%s287 + $0x778] sm:$0xff]
        %v538 = vld [vmem:[%s287 + $0x780] sm:$0xff]
        %v539 = vld [vmem:[%s287 + $0x788] sm:$0xff]
        %v540 = vld [vmem:[%s287 + $0x790] sm:$0xff]
        %v541 = vld [vmem:[%s287 + $0x798] sm:$0xff]
        %v542 = vld [vmem:[%s287 + $0x7a0] sm:$0xff]
        %v543 = vld [vmem:[%s287 + $0x7a8] sm:$0xff]
        %v544 = vld [vmem:[%s287 + $0x7b0] sm:$0xff]
        %v545 = vld [vmem:[%s287 + $0x7b8] sm:$0xff]
        %v546 = vld [vmem:[%s287 + $0x7c0] sm:$0xff]
        %v547 = vld [vmem:[%s287 + $0x7c8] sm:$0xff]
        %v548 = vld [vmem:[%s287 + $0x7d0] sm:$0xff]
        %v549 = vld [vmem:[%s287 + $0x7d8] sm:$0xff]
        %v550 = vld [vmem:[%s287 + $0x7e0] sm:$0xff]
        %v551 = vld [vmem:[%s287 + $0x7e8] sm:$0xff]
        %v552 = vld [vmem:[%s287 + $0x7f0] sm:$0xff]
        %v553 = vld [vmem:[%s287 + $0x7f8] sm:$0xff]
        %v554 = vld [vmem:[%s287 + $0x800] sm:$0xff]
        %v555 = vld [vmem:[%s287 + $0x808] sm:$0xff]
        %v556 = vld [vmem:[%s287 + $0x810] sm:$0xff]
        %v557 = vld [vmem:[%s287 + $0x818] sm:$0xff]
        %v558 = vld [vmem:[%s287 + $0x820] sm:$0xff]
        %v559 = vld [vmem:[%s287 + $0x828] sm:$0xff]
        %v560 = vld [vmem:[%s287 + $0x830] sm:$0xff]
        %v561 = vld [vmem:[%s287 + $0x838] sm:$0xff]
        %v562 = vld [vmem:[%s287 + $0x840] sm:$0xff]
        %v563 = vld [vmem:[%s287 + $0x848] sm:$0xff]
        %v564 = vld [vmem:[%s287 + $0x850] sm:$0xff]
        %v565 = vld [vmem:[%s287 + $0x858] sm:$0xff]
        %v566 = vld [vmem:[%s287 + $0x860] sm:$0xff]
        %v567 = vld [vmem:[%s287 + $0x868] sm:$0xff]
        %v568 = vld [vmem:[%s287 + $0x870] sm:$0xff]
        %v569 = vld [vmem:[%s287 + $0x878] sm:$0xff]
        %v570 = vld [vmem:[%s287 + $0x880] sm:$0xff]
        %v571 = vld [vmem:[%s287 + $0x888] sm:$0xff]
        %v572 = vld [vmem:[%s287 + $0x890] sm:$0xff]
        %v573 = vld [vmem:[%s287 + $0x898] sm:$0xff]
        %v574 = vld [vmem:[%s287 + $0x8a0] sm:$0xff]
        %v575 = vld [vmem:[%s287 + $0x8a8] sm:$0xff]
        %v576 = vld [vmem:[%s287 + $0x8b0] sm:$0xff]
        %v577 = vld [vmem:[%s287 + $0x8b8] sm:$0xff]
        %v578 = vld [vmem:[%s287 + $0x8c0] sm:$0xff]
        %v579 = vld [vmem:[%s287 + $0x8c8] sm:$0xff]
        %v580 = vld [vmem:[%s287 + $0x8d0] sm:$0xff]
        %v581 = vld [vmem:[%s287 + $0x8d8] sm:$0xff]
        %v582 = vld [vmem:[%s287 + $0x8e0] sm:$0xff]
        %v583 = vld [vmem:[%s287 + $0x8e8] sm:$0xff]
        %v584 = vld [vmem:[%s287 + $0x8f0] sm:$0xff]
        %v585 = vld [vmem:[%s287 + $0x8f8] sm:$0xff]
        %v586 = vld [vmem:[%s287 + $0x900] sm:$0xff]
        %v587 = vld [vmem:[%s287 + $0x908] sm:$0xff]
        %v588 = vld [vmem:[%s287 + $0x910] sm:$0xff]
        %v589 = vld [vmem:[%s287 + $0x918] sm:$0xff]
        %v590 = vld [vmem:[%s287 + $0x920] sm:$0xff]
        %v591 = vld [vmem:[%s287 + $0x928] sm:$0xff]
        %v592 = vld [vmem:[%s287 + $0x930] sm:$0xff]
        %v593 = vld [vmem:[%s287 + $0x938] sm:$0xff]
        %v594 = vld [vmem:[%s287 + $0x940] sm:$0xff]
        %v595 = vld [vmem:[%s287 + $0x948] sm:$0xff]
        %v596 = vld [vmem:[%s287 + $0x950] sm:$0xff]
        %v597 = vld [vmem:[%s287 + $0x958] sm:$0xff]
        %v598 = vld [vmem:[%s287 + $0x960] sm:$0xff]
        %v599 = vld [vmem:[%s287 + $0x968] sm:$0xff]
        %v600 = vld [vmem:[%s287 + $0x970] sm:$0xff]
        %v601 = vld [vmem:[%s287 + $0x978] sm:$0xff]
        %v602 = vld [vmem:[%s287 + $0x980] sm:$0xff]
        %v603 = vld [vmem:[%s287 + $0x988] sm:$0xff]
        %v604 = vld [vmem:[%s287 + $0x990] sm:$0xff]
        %v605 = vld [vmem:[%s287 + $0x998] sm:$0xff]
        %v606 = vld [vmem:[%s287 + $0x9a0] sm:$0xff]
        %v607 = vld [vmem:[%s287 + $0x9a8] sm:$0xff]
        %v608 = vld [vmem:[%s287 + $0x9b0] sm:$0xff]
        %v609 = vld [vmem:[%s287 + $0x9b8] sm:$0xff]
        %v610 = vld [vmem:[%s287 + $0x9c0] sm:$0xff]
        %v611 = vld [vmem:[%s287 + $0x9c8] sm:$0xff]
        %v612 = vld [vmem:[%s287 + $0x9d0] sm:$0xff]
        %v613 = vld [vmem:[%s287 + $0x9d8] sm:$0xff]
        %v614 = vld [vmem:[%s287 + $0x9e0] sm:$0xff]
        %v615 = vld [vmem:[%s287 + $0x9e8] sm:$0xff]
        %v616 = vld [vmem:[%s287 + $0x9f0] sm:$0xff]
        %v617 = vld [vmem:[%s287 + $0x9f8] sm:$0xff]
        %v618 = vld [vmem:[%s287 + $0xa00] sm:$0xff]
        %v619 = vld [vmem:[%s287 + $0xa08] sm:$0xff]
        %v620 = vld [vmem:[%s287 + $0xa10] sm:$0xff]
        %v621 = vld [vmem:[%s287 + $0xa18] sm:$0xff]
        %v622 = vld [vmem:[%s287 + $0xa20] sm:$0xff]
        %v623 = vld [vmem:[%s287 + $0xa28] sm:$0xff]
        %v624 = vld [vmem:[%s287 + $0xa30] sm:$0xff]
        %v625 = vld [vmem:[%s287 + $0xa38] sm:$0xff]
        %v626 = vld [vmem:[%s287 + $0xa40] sm:$0xff]
        %v627 = vld [vmem:[%s287 + $0xa48] sm:$0xff]
        %v628 = vld [vmem:[%s287 + $0xa50] sm:$0xff]
        %v629 = vld [vmem:[%s287 + $0xa58] sm:$0xff]
        %v630 = vld [vmem:[%s287 + $0xa60] sm:$0xff]
        %v631 = vld [vmem:[%s287 + $0xa68] sm:$0xff]
        %v632 = vld [vmem:[%s287 + $0xa70] sm:$0xff]
        %v633 = vld [vmem:[%s287 + $0xa78] sm:$0xff]
        %v634 = vld [vmem:[%s287 + $0xa80] sm:$0xff]
        %v635 = vld [vmem:[%s287 + $0xa88] sm:$0xff]
        %v636 = vld [vmem:[%s287 + $0xa90] sm:$0xff]
        %v637 = vld [vmem:[%s287 + $0xa98] sm:$0xff]
        %v638 = vld [vmem:[%s287 + $0xaa0] sm:$0xff]
        %v639 = vld [vmem:[%s287 + $0xaa8] sm:$0xff]
        %v640 = vld [vmem:[%s287 + $0xab0] sm:$0xff]
        %v641 = vld [vmem:[%s287 + $0xab8] sm:$0xff]
        %v642 = vld [vmem:[%s287 + $0xac0] sm:$0xff]
        %v643 = vld [vmem:[%s287 + $0xac8] sm:$0xff]
        %v644 = vld [vmem:[%s287 + $0xad0] sm:$0xff]
        %v645 = vld [vmem:[%s287 + $0xad8] sm:$0xff]
        %v646 = vld [vmem:[%s287 + $0xae0] sm:$0xff]
        %v647 = vld [vmem:[%s287 + $0xae8] sm:$0xff]
        %v648 = vld [vmem:[%s287 + $0xaf0] sm:$0xff]
        %v649 = vld [vmem:[%s287 + $0xaf8] sm:$0xff]
        %v650 = vld [vmem:[%s287 + $0xb00] sm:$0xff]
        %v651 = vld [vmem:[%s287 + $0xb08] sm:$0xff]
        %v652 = vld [vmem:[%s287 + $0xb10] sm:$0xff]
        %v653 = vld [vmem:[%s287 + $0xb18] sm:$0xff]
        %v654 = vld [vmem:[%s287 + $0xb20] sm:$0xff]
        %v655 = vld [vmem:[%s287 + $0xb28] sm:$0xff]
        %v656 = vld [vmem:[%s287 + $0xb30] sm:$0xff]
        %v657 = vld [vmem:[%s287 + $0xb38] sm:$0xff]
        %v658 = vld [vmem:[%s287 + $0xb40] sm:$0xff]
        %v659 = vld [vmem:[%s287 + $0xb48] sm:$0xff]
        %v660 = vld [vmem:[%s287 + $0xb50] sm:$0xff]
        %v661 = vld [vmem:[%s287 + $0xb58] sm:$0xff]
        %v662 = vld [vmem:[%s287 + $0xb60] sm:$0xff]
        %v663 = vld [vmem:[%s287 + $0xb68] sm:$0xff]
        %v664 = vld [vmem:[%s287 + $0xb70] sm:$0xff]
        %v665 = vld [vmem:[%s287 + $0xb78] sm:$0xff]
        %v666 = vld [vmem:[%s287 + $0xb80] sm:$0xff]
        %v667 = vld [vmem:[%s287 + $0xb88] sm:$0xff]
        %v668 = vld [vmem:[%s287 + $0xb90] sm:$0xff]
        %v669 = vld [vmem:[%s287 + $0xb98] sm:$0xff]
        %v670 = vld [vmem:[%s287 + $0xba0] sm:$0xff]
        %v671 = vld [vmem:[%s287 + $0xba8] sm:$0xff]
        %v672 = vld [vmem:[%s287 + $0xbb0] sm:$0xff]
        %v673 = vld [vmem:[%s287 + $0xbb8] sm:$0xff]
        %v674 = vld [vmem:[%s287 + $0xbc0] sm:$0xff]
        %v675 = vld [vmem:[%s287 + $0xbc8] sm:$0xff]
        %v676 = vld [vmem:[%s287 + $0xbd0] sm:$0xff]
        %v677 = vld [vmem:[%s287 + $0xbd8] sm:$0xff]
        %v678 = vld [vmem:[%s287 + $0xbe0] sm:$0xff]
        %v679 = vld [vmem:[%s287 + $0xbe8] sm:$0xff]
        %v680 = vld [vmem:[%s287 + $0xbf0] sm:$0xff]
        %v681 = vld [vmem:[%s287 + $0xbf8] sm:$0xff]
        %v682 = vld [vmem:[%s287 + $0xc00] sm:$0xff]
        %v683 = vld [vmem:[%s287 + $0xc08] sm:$0xff]
        %v684 = vld [vmem:[%s287 + $0xc10] sm:$0xff]
        %v685 = vld [vmem:[%s287 + $0xc18] sm:$0xff]
        %v686 = vld [vmem:[%s287 + $0xc20] sm:$0xff]
        %v687 = vld [vmem:[%s287 + $0xc28] sm:$0xff]
        %v688 = vld [vmem:[%s287 + $0xc30] sm:$0xff]
        %v689 = vld [vmem:[%s287 + $0xc38] sm:$0xff]
        %v690 = vld [vmem:[%s287 + $0xc40] sm:$0xff]
        %v691 = vld [vmem:[%s287 + $0xc48] sm:$0xff]
        %v692 = vld [vmem:[%s287 + $0xc50] sm:$0xff]
        %v693 = vld [vmem:[%s287 + $0xc58] sm:$0xff]
        %v694 = vld [vmem:[%s287 + $0xc60] sm:$0xff]
        %v695 = vld [vmem:[%s287 + $0xc68] sm:$0xff]
        %v696 = vld [vmem:[%s287 + $0xc70] sm:$0xff]
        %v697 = vld [vmem:[%s287 + $0xc78] sm:$0xff]
        %v698 = vld [vmem:[%s287 + $0xc80] sm:$0xff]
        %v699 = vld [vmem:[%s287 + $0xc88] sm:$0xff]
        %v700 = vld [vmem:[%s287 + $0xc90] sm:$0xff]
        %v701 = vld [vmem:[%s287 + $0xc98] sm:$0xff]
        %v702 = vld [vmem:[%s287 + $0xca0] sm:$0xff]
        %v703 = vld [vmem:[%s287 + $0xca8] sm:$0xff]
        %v704 = vld [vmem:[%s287 + $0xcb0] sm:$0xff]
        %v705 = vld [vmem:[%s287 + $0xcb8] sm:$0xff]
        %v706 = vld [vmem:[%s287 + $0xcc0] sm:$0xff]
        %v707 = vld [vmem:[%s287 + $0xcc8] sm:$0xff]
        %v708 = vld [vmem:[%s287 + $0xcd0] sm:$0xff]
        %v709 = vld [vmem:[%s287 + $0xcd8] sm:$0xff]
        %v710 = vld [vmem:[%s287 + $0xce0] sm:$0xff]
        %v711 = vld [vmem:[%s287 + $0xce8] sm:$0xff]
        %v712 = vld [vmem:[%s287 + $0xcf0] sm:$0xff]
        %v713 = vld [vmem:[%s287 + $0xcf8] sm:$0xff]
        %v714 = vld [vmem:[%s287 + $0xd00] sm:$0xff]
        %v715 = vld [vmem:[%s287 + $0xd08] sm:$0xff]
        %v716 = vld [vmem:[%s287 + $0xd10] sm:$0xff]
        %v717 = vld [vmem:[%s287 + $0xd18] sm:$0xff]
        %v718 = vld [vmem:[%s287 + $0xd20] sm:$0xff]
        %v719 = vld [vmem:[%s287 + $0xd28] sm:$0xff]
        %v720 = vld [vmem:[%s287 + $0xd30] sm:$0xff]
        %v721 = vld [vmem:[%s287 + $0xd38] sm:$0xff]
        %v722 = vld [vmem:[%s287 + $0xd40] sm:$0xff]
        %v723 = vld [vmem:[%s287 + $0xd48] sm:$0xff]
        %v724 = vld [vmem:[%s287 + $0xd50] sm:$0xff]
        %v725 = vld [vmem:[%s287 + $0xd58] sm:$0xff]
        %v726 = vld [vmem:[%s287 + $0xd60] sm:$0xff]
        %v727 = vld [vmem:[%s287 + $0xd68] sm:$0xff]
        %v728 = vld [vmem:[%s287 + $0xd70] sm:$0xff]
        %v729 = vld [vmem:[%s287 + $0xd78] sm:$0xff]
        %v730 = vld [vmem:[%s287 + $0xd80] sm:$0xff]
        %v731 = vld [vmem:[%s287 + $0xd88] sm:$0xff]
        %v732 = vld [vmem:[%s287 + $0xd90] sm:$0xff]
        %v733 = vld [vmem:[%s287 + $0xd98] sm:$0xff]
        %v734 = vld [vmem:[%s287 + $0xda0] sm:$0xff]
        %v735 = vld [vmem:[%s287 + $0xda8] sm:$0xff]
        %v736 = vld [vmem:[%s287 + $0xdb0] sm:$0xff]
        %v737 = vld [vmem:[%s287 + $0xdb8] sm:$0xff]
        %v738 = vld [vmem:[%s287 + $0xdc0] sm:$0xff]
        %v739 = vld [vmem:[%s287 + $0xdc8] sm:$0xff]
        %v740 = vld [vmem:[%s287 + $0xdd0] sm:$0xff]
        %v741 = vld [vmem:[%s287 + $0xdd8] sm:$0xff]
        %v742 = vld [vmem:[%s287 + $0xde0] sm:$0xff]
        %v743 = vld [vmem:[%s287 + $0xde8] sm:$0xff]
        %v744 = vld [vmem:[%s287 + $0xdf0] sm:$0xff]
        %v745 = vld [vmem:[%s287 + $0xdf8] sm:$0xff]
        %v746 = vld [vmem:[%s287 + $0xe00] sm:$0xff]
        %v747 = vld [vmem:[%s287 + $0xe08] sm:$0xff]
        %v748 = vld [vmem:[%s287 + $0xe10] sm:$0xff]
        %v749 = vld [vmem:[%s287 + $0xe18] sm:$0xff]
        %v750 = vld [vmem:[%s287 + $0xe20] sm:$0xff]
        %v751 = vld [vmem:[%s287 + $0xe28] sm:$0xff]
        %v752 = vld [vmem:[%s287 + $0xe30] sm:$0xff]
        %v753 = vld [vmem:[%s287 + $0xe38] sm:$0xff]
        %v754 = vld [vmem:[%s287 + $0xe40] sm:$0xff]
        %v755 = vld [vmem:[%s287 + $0xe48] sm:$0xff]
        %v756 = vld [vmem:[%s287 + $0xe50] sm:$0xff]
        %v757 = vld [vmem:[%s287 + $0xe58] sm:$0xff]
        %v758 = vld [vmem:[%s287 + $0xe60] sm:$0xff]
        %v759 = vld [vmem:[%s287 + $0xe68] sm:$0xff]
        %v760 = vld [vmem:[%s287 + $0xe70] sm:$0xff]
        %v761 = vld [vmem:[%s287 + $0xe78] sm:$0xff]
        %v762 = vld [vmem:[%s287 + $0xe80] sm:$0xff]
        %v763 = vld [vmem:[%s287 + $0xe88] sm:$0xff]
        %v764 = vld [vmem:[%s287 + $0xe90] sm:$0xff]
        %v765 = vld [vmem:[%s287 + $0xe98] sm:$0xff]
        %v766 = vld [vmem:[%s287 + $0xea0] sm:$0xff]
        %v767 = vld [vmem:[%s287 + $0xea8] sm:$0xff]
        %v768 = vld [vmem:[%s287 + $0xeb0] sm:$0xff]
        %v769 = vld [vmem:[%s287 + $0xeb8] sm:$0xff]
        %v770 = vld [vmem:[%s287 + $0xec0] sm:$0xff]
        %v771 = vld [vmem:[%s287 + $0xec8] sm:$0xff]
        %v772 = vld [vmem:[%s287 + $0xed0] sm:$0xff]
        %v773 = vld [vmem:[%s287 + $0xed8] sm:$0xff]
        %v774 = vld [vmem:[%s287 + $0xee0] sm:$0xff]
        %v775 = vld [vmem:[%s287 + $0xee8] sm:$0xff]
        %v776 = vld [vmem:[%s287 + $0xef0] sm:$0xff]
        %v777 = vld [vmem:[%s287 + $0xef8] sm:$0xff]
        %v778 = vld [vmem:[%s287 + $0xf00] sm:$0xff]
        %v779 = vld [vmem:[%s287 + $0xf08] sm:$0xff]
        %v780 = vld [vmem:[%s287 + $0xf10] sm:$0xff]
        %v781 = vld [vmem:[%s287 + $0xf18] sm:$0xff]
        %v782 = vld [vmem:[%s287 + $0xf20] sm:$0xff]
        %v783 = vld [vmem:[%s287 + $0xf28] sm:$0xff]
        %v784 = vld [vmem:[%s287 + $0xf30] sm:$0xff]
        %v785 = vld [vmem:[%s287 + $0xf38] sm:$0xff]
        %v786 = vld [vmem:[%s287 + $0xf40] sm:$0xff]
        %v787 = vld [vmem:[%s287 + $0xf48] sm:$0xff]
        %v788 = vld [vmem:[%s287 + $0xf50] sm:$0xff]
        %v789 = vld [vmem:[%s287 + $0xf58] sm:$0xff]
        %v790 = vld [vmem:[%s287 + $0xf60] sm:$0xff]
        %v791 = vld [vmem:[%s287 + $0xf68] sm:$0xff]
        %v792 = vld [vmem:[%s287 + $0xf70] sm:$0xff]
        %v793 = vld [vmem:[%s287 + $0xf78] sm:$0xff]
        %v794 = vld [vmem:[%s287 + $0xf80] sm:$0xff]
        %v795 = vld [vmem:[%s287 + $0xf88] sm:$0xff]
        %v796 = vld [vmem:[%s287 + $0xf90] sm:$0xff]
        %v797 = vld [vmem:[%s287 + $0xf98] sm:$0xff]
        %v798 = vld [vmem:[%s287 + $0xfa0] sm:$0xff]
        %v799 = vld [vmem:[%s287 + $0xfa8] sm:$0xff]
        %v800 = vld [vmem:[%s287 + $0xfb0] sm:$0xff]
        %v801 = vld [vmem:[%s287 + $0xfb8] sm:$0xff]
        %v802 = vld [vmem:[%s287 + $0xfc0] sm:$0xff]
        %v803 = vld [vmem:[%s287 + $0xfc8] sm:$0xff]
        %v804 = vld [vmem:[%s287 + $0xfd0] sm:$0xff]
        %v805 = vld [vmem:[%s287 + $0xfd8] sm:$0xff]
        %v806 = vld [vmem:[%s287 + $0xfe0] sm:$0xff]
        %v807 = vld [vmem:[%s287 + $0xfe8] sm:$0xff]
        %v808 = vld [vmem:[%s287 + $0xff0] sm:$0xff]
        %v809 = vld [vmem:[%s287 + $0xff8] sm:$0xff]
        %v812 = vcombine.high %v296, %v296
        %v814 = vunpack.c.l.s4 1966171168
        %v815 = vunpack.c.0.s8 %v814
        %v816 = vlaneseq
        %v817 = vshrl.u32 %v816, 7
        %v818 = vsub.s32 %v815, %v817
        %v819 = vrot.slane %v296, %v818
        %v821 = vunpack.c.l.s4 1966171168
        %v822 = vunpack.c.0.s8 %v821
        %v823 = vlaneseq
        %v824 = vshrl.u32 %v823, 7
        %v825 = vsub.s32 %v822, %v824
        %v826 = vrot.slane %v812, %v825
        %v827 = vcombine.high %v819, %v819
        %v828 = vcombine.high %v826, %v826
        %v830 = vunpack.c.l.s4 1966171168
        %v831 = vunpack.c.0.s8 %v830
        %v832 = vlaneseq
        %v833 = vshrl.u32 %v832, 7
        %v834 = vsub.s32 %v831, %v833
        %v835 = vrot.slane %v819, %v834
        %v837 = vunpack.c.l.s4 1966171168
        %v838 = vunpack.c.0.s8 %v837
        %v839 = vlaneseq
        %v840 = vshrl.u32 %v839, 7
        %v841 = vsub.s32 %v838, %v840
        %v842 = vrot.slane %v826, %v841
        %v844 = vunpack.c.l.s4 1966171168
        %v845 = vunpack.c.0.s8 %v844
        %v846 = vlaneseq
        %v847 = vshrl.u32 %v846, 7
        %v848 = vsub.s32 %v845, %v847
        %v849 = vrot.slane %v827, %v848
        %v851 = vunpack.c.l.s4 1966171168
        %v852 = vunpack.c.0.s8 %v851
        %v853 = vlaneseq
        %v854 = vshrl.u32 %v853, 7
        %v855 = vsub.s32 %v852, %v854
        %v856 = vrot.slane %v828, %v855
        %v857 = vcombine.high %v835, %v835
        %v858 = vcombine.high %v842, %v842
        %v859 = vcombine.high %v849, %v849
        %v860 = vcombine.high %v856, %v856
        %v861 = vcombine.high %v297, %v297
        %v863 = vunpack.c.l.s4 1966171168
        %v864 = vunpack.c.0.s8 %v863
        %v865 = vlaneseq
        %v866 = vshrl.u32 %v865, 7
        %v867 = vsub.s32 %v864, %v866
        %v868 = vrot.slane %v297, %v867
        %v870 = vunpack.c.l.s4 1966171168
        %v871 = vunpack.c.0.s8 %v870
        %v872 = vlaneseq
        %v873 = vshrl.u32 %v872, 7
        %v874 = vsub.s32 %v871, %v873
        %v875 = vrot.slane %v861, %v874
        %v876 = vcombine.high %v868, %v868
        %v877 = vcombine.high %v875, %v875
        %v879 = vunpack.c.l.s4 1966171168
        %v880 = vunpack.c.0.s8 %v879
        %v881 = vlaneseq
        %v882 = vshrl.u32 %v881, 7
        %v883 = vsub.s32 %v880, %v882
        %v884 = vrot.slane %v868, %v883
        %v886 = vunpack.c.l.s4 1966171168
        %v887 = vunpack.c.0.s8 %v886
        %v888 = vlaneseq
        %v889 = vshrl.u32 %v888, 7
        %v890 = vsub.s32 %v887, %v889
        %v891 = vrot.slane %v875, %v890
        %v893 = vunpack.c.l.s4 1966171168
        %v894 = vunpack.c.0.s8 %v893
        %v895 = vlaneseq
        %v896 = vshrl.u32 %v895, 7
        %v897 = vsub.s32 %v894, %v896
        %v898 = vrot.slane %v876, %v897
        %v900 = vunpack.c.l.s4 1966171168
        %v901 = vunpack.c.0.s8 %v900
        %v902 = vlaneseq
        %v903 = vshrl.u32 %v902, 7
        %v904 = vsub.s32 %v901, %v903
        %v905 = vrot.slane %v877, %v904
        %v906 = vcombine.high %v884, %v884
        %v907 = vcombine.high %v891, %v891
        %v908 = vcombine.high %v898, %v898
        %v909 = vcombine.high %v905, %v905
        %v1438 = vunpack.c.l.b16 %v298
        %v1439 = vunpack.c.h.b16 %v298
        %v1440 = vunpack.c.l.b16 %v299
        %v1441 = vunpack.c.h.b16 %v299
        %v1442 = vunpack.c.l.b16 %v300
        %v1443 = vunpack.c.h.b16 %v300
        %v1444 = vunpack.c.l.b16 %v301
        %v1445 = vunpack.c.h.b16 %v301
        %v1446 = vunpack.c.l.b16 %v302
        %v1447 = vunpack.c.h.b16 %v302
        %v1448 = vunpack.c.l.b16 %v303
        %v1449 = vunpack.c.h.b16 %v303
        %v1450 = vunpack.c.l.b16 %v304
        %v1451 = vunpack.c.h.b16 %v304
        %v1452 = vunpack.c.l.b16 %v305
        %v1453 = vunpack.c.h.b16 %v305
        %v1454 = vunpack.c.l.b16 %v306
        %v1455 = vunpack.c.h.b16 %v306
        %v1456 = vunpack.c.l.b16 %v307
        %v1457 = vunpack.c.h.b16 %v307
        %v1458 = vunpack.c.l.b16 %v308
        %v1459 = vunpack.c.h.b16 %v308
        %v1460 = vunpack.c.l.b16 %v309
        %v1461 = vunpack.c.h.b16 %v309
        %v1462 = vunpack.c.l.b16 %v310
        %v1463 = vunpack.c.h.b16 %v310
        %v1464 = vunpack.c.l.b16 %v311
        %v1465 = vunpack.c.h.b16 %v311
        %v1466 = vunpack.c.l.b16 %v312
        %v1467 = vunpack.c.h.b16 %v312
        %v1468 = vunpack.c.l.b16 %v313
        %v1469 = vunpack.c.h.b16 %v313
        %v1470 = vunpack.c.l.b16 %v314
        %v1471 = vunpack.c.h.b16 %v314
        %v1472 = vunpack.c.l.b16 %v315
        %v1473 = vunpack.c.h.b16 %v315
        %v1474 = vunpack.c.l.b16 %v316
        %v1475 = vunpack.c.h.b16 %v316
        %v1476 = vunpack.c.l.b16 %v317
        %v1477 = vunpack.c.h.b16 %v317
        %v1478 = vunpack.c.l.b16 %v318
        %v1479 = vunpack.c.h.b16 %v318
        %v1480 = vunpack.c.l.b16 %v319
        %v1481 = vunpack.c.h.b16 %v319
        %v1482 = vunpack.c.l.b16 %v320
        %v1483 = vunpack.c.h.b16 %v320
        %v1484 = vunpack.c.l.b16 %v321
        %v1485 = vunpack.c.h.b16 %v321
        %v1486 = vunpack.c.l.b16 %v322
        %v1487 = vunpack.c.h.b16 %v322
        %v1488 = vunpack.c.l.b16 %v323
        %v1489 = vunpack.c.h.b16 %v323
        %v1490 = vunpack.c.l.b16 %v324
        %v1491 = vunpack.c.h.b16 %v324
        %v1492 = vunpack.c.l.b16 %v325
        %v1493 = vunpack.c.h.b16 %v325
        %v1494 = vunpack.c.l.b16 %v326
        %v1495 = vunpack.c.h.b16 %v326
        %v1496 = vunpack.c.l.b16 %v327
        %v1497 = vunpack.c.h.b16 %v327
        %v1498 = vunpack.c.l.b16 %v328
        %v1499 = vunpack.c.h.b16 %v328
        %v1500 = vunpack.c.l.b16 %v329
        %v1501 = vunpack.c.h.b16 %v329
        %v1502 = vunpack.c.l.b16 %v330
        %v1503 = vunpack.c.h.b16 %v330
        %v1504 = vunpack.c.l.b16 %v331
        %v1505 = vunpack.c.h.b16 %v331
        %v1506 = vunpack.c.l.b16 %v332
        %v1507 = vunpack.c.h.b16 %v332
        %v1508 = vunpack.c.l.b16 %v333
        %v1509 = vunpack.c.h.b16 %v333
        %v1510 = vunpack.c.l.b16 %v334
        %v1511 = vunpack.c.h.b16 %v334
        %v1512 = vunpack.c.l.b16 %v335
        %v1513 = vunpack.c.h.b16 %v335
        %v1514 = vunpack.c.l.b16 %v336
        %v1515 = vunpack.c.h.b16 %v336
        %v1516 = vunpack.c.l.b16 %v337
        %v1517 = vunpack.c.h.b16 %v337
        %v1518 = vunpack.c.l.b16 %v338
        %v1519 = vunpack.c.h.b16 %v338
        %v1520 = vunpack.c.l.b16 %v339
        %v1521 = vunpack.c.h.b16 %v339
        %v1522 = vunpack.c.l.b16 %v340
        %v1523 = vunpack.c.h.b16 %v340
        %v1524 = vunpack.c.l.b16 %v341
        %v1525 = vunpack.c.h.b16 %v341
        %v1526 = vunpack.c.l.b16 %v342
        %v1527 = vunpack.c.h.b16 %v342
        %v1528 = vunpack.c.l.b16 %v343
        %v1529 = vunpack.c.h.b16 %v343
        %v1530 = vunpack.c.l.b16 %v344
        %v1531 = vunpack.c.h.b16 %v344
        %v1532 = vunpack.c.l.b16 %v345
        %v1533 = vunpack.c.h.b16 %v345
        %v1534 = vunpack.c.l.b16 %v346
        %v1535 = vunpack.c.h.b16 %v346
        %v1536 = vunpack.c.l.b16 %v347
        %v1537 = vunpack.c.h.b16 %v347
        %v1538 = vunpack.c.l.b16 %v348
        %v1539 = vunpack.c.h.b16 %v348
        %v1540 = vunpack.c.l.b16 %v349
        %v1541 = vunpack.c.h.b16 %v349
        %v1542 = vunpack.c.l.b16 %v350
        %v1543 = vunpack.c.h.b16 %v350
        %v1544 = vunpack.c.l.b16 %v351
        %v1545 = vunpack.c.h.b16 %v351
        %v1546 = vunpack.c.l.b16 %v352
        %v1547 = vunpack.c.h.b16 %v352
        %v1548 = vunpack.c.l.b16 %v353
        %v1549 = vunpack.c.h.b16 %v353
        %v1550 = vunpack.c.l.b16 %v354
        %v1551 = vunpack.c.h.b16 %v354
        %v1552 = vunpack.c.l.b16 %v355
        %v1553 = vunpack.c.h.b16 %v355
        %v1554 = vunpack.c.l.b16 %v356
        %v1555 = vunpack.c.h.b16 %v356
        %v1556 = vunpack.c.l.b16 %v357
        %v1557 = vunpack.c.h.b16 %v357
        %v1558 = vunpack.c.l.b16 %v358
        %v1559 = vunpack.c.h.b16 %v358
        %v1560 = vunpack.c.l.b16 %v359
        %v1561 = vunpack.c.h.b16 %v359
        %v1562 = vunpack.c.l.b16 %v360
        %v1563 = vunpack.c.h.b16 %v360
        %v1564 = vunpack.c.l.b16 %v361
        %v1565 = vunpack.c.h.b16 %v361
        %v1566 = vunpack.c.l.b16 %v362
        %v1567 = vunpack.c.h.b16 %v362
        %v1568 = vunpack.c.l.b16 %v363
        %v1569 = vunpack.c.h.b16 %v363
        %v1570 = vunpack.c.l.b16 %v364
        %v1571 = vunpack.c.h.b16 %v364
        %v1572 = vunpack.c.l.b16 %v365
        %v1573 = vunpack.c.h.b16 %v365
        %v1574 = vunpack.c.l.b16 %v366
        %v1575 = vunpack.c.h.b16 %v366
        %v1576 = vunpack.c.l.b16 %v367
        %v1577 = vunpack.c.h.b16 %v367
        %v1578 = vunpack.c.l.b16 %v368
        %v1579 = vunpack.c.h.b16 %v368
        %v1580 = vunpack.c.l.b16 %v369
        %v1581 = vunpack.c.h.b16 %v369
        %v1582 = vunpack.c.l.b16 %v370
        %v1583 = vunpack.c.h.b16 %v370
        %v1584 = vunpack.c.l.b16 %v371
        %v1585 = vunpack.c.h.b16 %v371
        %v1586 = vunpack.c.l.b16 %v372
        %v1587 = vunpack.c.h.b16 %v372
        %v1588 = vunpack.c.l.b16 %v373
        %v1589 = vunpack.c.h.b16 %v373
        %v1590 = vunpack.c.l.b16 %v374
        %v1591 = vunpack.c.h.b16 %v374
        %v1592 = vunpack.c.l.b16 %v375
        %v1593 = vunpack.c.h.b16 %v375
        %v1594 = vunpack.c.l.b16 %v376
        %v1595 = vunpack.c.h.b16 %v376
        %v1596 = vunpack.c.l.b16 %v377
        %v1597 = vunpack.c.h.b16 %v377
        %v1598 = vunpack.c.l.b16 %v378
        %v1599 = vunpack.c.h.b16 %v378
        %v1600 = vunpack.c.l.b16 %v379
        %v1601 = vunpack.c.h.b16 %v379
        %v1602 = vunpack.c.l.b16 %v380
        %v1603 = vunpack.c.h.b16 %v380
        %v1604 = vunpack.c.l.b16 %v381
        %v1605 = vunpack.c.h.b16 %v381
        %v1606 = vunpack.c.l.b16 %v382
        %v1607 = vunpack.c.h.b16 %v382
        %v1608 = vunpack.c.l.b16 %v383
        %v1609 = vunpack.c.h.b16 %v383
        %v1610 = vunpack.c.l.b16 %v384
        %v1611 = vunpack.c.h.b16 %v384
        %v1612 = vunpack.c.l.b16 %v385
        %v1613 = vunpack.c.h.b16 %v385
        %v1614 = vunpack.c.l.b16 %v386
        %v1615 = vunpack.c.h.b16 %v386
        %v1616 = vunpack.c.l.b16 %v387
        %v1617 = vunpack.c.h.b16 %v387
        %v1618 = vunpack.c.l.b16 %v388
        %v1619 = vunpack.c.h.b16 %v388
        %v1620 = vunpack.c.l.b16 %v389
        %v1621 = vunpack.c.h.b16 %v389
        %v1622 = vunpack.c.l.b16 %v390
        %v1623 = vunpack.c.h.b16 %v390
        %v1624 = vunpack.c.l.b16 %v391
        %v1625 = vunpack.c.h.b16 %v391
        %v1626 = vunpack.c.l.b16 %v392
        %v1627 = vunpack.c.h.b16 %v392
        %v1628 = vunpack.c.l.b16 %v393
        %v1629 = vunpack.c.h.b16 %v393
        %v1630 = vunpack.c.l.b16 %v394
        %v1631 = vunpack.c.h.b16 %v394
        %v1632 = vunpack.c.l.b16 %v395
        %v1633 = vunpack.c.h.b16 %v395
        %v1634 = vunpack.c.l.b16 %v396
        %v1635 = vunpack.c.h.b16 %v396
        %v1636 = vunpack.c.l.b16 %v397
        %v1637 = vunpack.c.h.b16 %v397
        %v1638 = vunpack.c.l.b16 %v398
        %v1639 = vunpack.c.h.b16 %v398
        %v1640 = vunpack.c.l.b16 %v399
        %v1641 = vunpack.c.h.b16 %v399
        %v1642 = vunpack.c.l.b16 %v400
        %v1643 = vunpack.c.h.b16 %v400
        %v1644 = vunpack.c.l.b16 %v401
        %v1645 = vunpack.c.h.b16 %v401
        %v1646 = vunpack.c.l.b16 %v402
        %v1647 = vunpack.c.h.b16 %v402
        %v1648 = vunpack.c.l.b16 %v403
        %v1649 = vunpack.c.h.b16 %v403
        %v1650 = vunpack.c.l.b16 %v404
        %v1651 = vunpack.c.h.b16 %v404
        %v1652 = vunpack.c.l.b16 %v405
        %v1653 = vunpack.c.h.b16 %v405
        %v1654 = vunpack.c.l.b16 %v406
        %v1655 = vunpack.c.h.b16 %v406
        %v1656 = vunpack.c.l.b16 %v407
        %v1657 = vunpack.c.h.b16 %v407
        %v1658 = vunpack.c.l.b16 %v408
        %v1659 = vunpack.c.h.b16 %v408
        %v1660 = vunpack.c.l.b16 %v409
        %v1661 = vunpack.c.h.b16 %v409
        %v1662 = vunpack.c.l.b16 %v410
        %v1663 = vunpack.c.h.b16 %v410
        %v1664 = vunpack.c.l.b16 %v411
        %v1665 = vunpack.c.h.b16 %v411
        %v1666 = vunpack.c.l.b16 %v412
        %v1667 = vunpack.c.h.b16 %v412
        %v1668 = vunpack.c.l.b16 %v413
        %v1669 = vunpack.c.h.b16 %v413
        %v1670 = vunpack.c.l.b16 %v414
        %v1671 = vunpack.c.h.b16 %v414
        %v1672 = vunpack.c.l.b16 %v415
        %v1673 = vunpack.c.h.b16 %v415
        %v1674 = vunpack.c.l.b16 %v416
        %v1675 = vunpack.c.h.b16 %v416
        %v1676 = vunpack.c.l.b16 %v417
        %v1677 = vunpack.c.h.b16 %v417
        %v1678 = vunpack.c.l.b16 %v418
        %v1679 = vunpack.c.h.b16 %v418
        %v1680 = vunpack.c.l.b16 %v419
        %v1681 = vunpack.c.h.b16 %v419
        %v1682 = vunpack.c.l.b16 %v420
        %v1683 = vunpack.c.h.b16 %v420
        %v1684 = vunpack.c.l.b16 %v421
        %v1685 = vunpack.c.h.b16 %v421
        %v1686 = vunpack.c.l.b16 %v422
        %v1687 = vunpack.c.h.b16 %v422
        %v1688 = vunpack.c.l.b16 %v423
        %v1689 = vunpack.c.h.b16 %v423
        %v1690 = vunpack.c.l.b16 %v424
        %v1691 = vunpack.c.h.b16 %v424
        %v1692 = vunpack.c.l.b16 %v425
        %v1693 = vunpack.c.h.b16 %v425
        %v1694 = vunpack.c.l.b16 %v426
        %v1695 = vunpack.c.h.b16 %v426
        %v1696 = vunpack.c.l.b16 %v427
        %v1697 = vunpack.c.h.b16 %v427
        %v1698 = vunpack.c.l.b16 %v428
        %v1699 = vunpack.c.h.b16 %v428
        %v1700 = vunpack.c.l.b16 %v429
        %v1701 = vunpack.c.h.b16 %v429
        %v1702 = vunpack.c.l.b16 %v430
        %v1703 = vunpack.c.h.b16 %v430
        %v1704 = vunpack.c.l.b16 %v431
        %v1705 = vunpack.c.h.b16 %v431
        %v1706 = vunpack.c.l.b16 %v432
        %v1707 = vunpack.c.h.b16 %v432
        %v1708 = vunpack.c.l.b16 %v433
        %v1709 = vunpack.c.h.b16 %v433
        %v1710 = vunpack.c.l.b16 %v434
        %v1711 = vunpack.c.h.b16 %v434
        %v1712 = vunpack.c.l.b16 %v435
        %v1713 = vunpack.c.h.b16 %v435
        %v1714 = vunpack.c.l.b16 %v436
        %v1715 = vunpack.c.h.b16 %v436
        %v1716 = vunpack.c.l.b16 %v437
        %v1717 = vunpack.c.h.b16 %v437
        %v1718 = vunpack.c.l.b16 %v438
        %v1719 = vunpack.c.h.b16 %v438
        %v1720 = vunpack.c.l.b16 %v439
        %v1721 = vunpack.c.h.b16 %v439
        %v1722 = vunpack.c.l.b16 %v440
        %v1723 = vunpack.c.h.b16 %v440
        %v1724 = vunpack.c.l.b16 %v441
        %v1725 = vunpack.c.h.b16 %v441
        %v1726 = vunpack.c.l.b16 %v442
        %v1727 = vunpack.c.h.b16 %v442
        %v1728 = vunpack.c.l.b16 %v443
        %v1729 = vunpack.c.h.b16 %v443
        %v1730 = vunpack.c.l.b16 %v444
        %v1731 = vunpack.c.h.b16 %v444
        %v1732 = vunpack.c.l.b16 %v445
        %v1733 = vunpack.c.h.b16 %v445
        %v1734 = vunpack.c.l.b16 %v446
        %v1735 = vunpack.c.h.b16 %v446
        %v1736 = vunpack.c.l.b16 %v447
        %v1737 = vunpack.c.h.b16 %v447
        %v1738 = vunpack.c.l.b16 %v448
        %v1739 = vunpack.c.h.b16 %v448
        %v1740 = vunpack.c.l.b16 %v449
        %v1741 = vunpack.c.h.b16 %v449
        %v1742 = vunpack.c.l.b16 %v450
        %v1743 = vunpack.c.h.b16 %v450
        %v1744 = vunpack.c.l.b16 %v451
        %v1745 = vunpack.c.h.b16 %v451
        %v1746 = vunpack.c.l.b16 %v452
        %v1747 = vunpack.c.h.b16 %v452
        %v1748 = vunpack.c.l.b16 %v453
        %v1749 = vunpack.c.h.b16 %v453
        %v1750 = vunpack.c.l.b16 %v454
        %v1751 = vunpack.c.h.b16 %v454
        %v1752 = vunpack.c.l.b16 %v455
        %v1753 = vunpack.c.h.b16 %v455
        %v1754 = vunpack.c.l.b16 %v456
        %v1755 = vunpack.c.h.b16 %v456
        %v1756 = vunpack.c.l.b16 %v457
        %v1757 = vunpack.c.h.b16 %v457
        %v1758 = vunpack.c.l.b16 %v458
        %v1759 = vunpack.c.h.b16 %v458
        %v1760 = vunpack.c.l.b16 %v459
        %v1761 = vunpack.c.h.b16 %v459
        %v1762 = vunpack.c.l.b16 %v460
        %v1763 = vunpack.c.h.b16 %v460
        %v1764 = vunpack.c.l.b16 %v461
        %v1765 = vunpack.c.h.b16 %v461
        %v1766 = vunpack.c.l.b16 %v462
        %v1767 = vunpack.c.h.b16 %v462
        %v1768 = vunpack.c.l.b16 %v463
        %v1769 = vunpack.c.h.b16 %v463
        %v1770 = vunpack.c.l.b16 %v464
        %v1771 = vunpack.c.h.b16 %v464
        %v1772 = vunpack.c.l.b16 %v465
        %v1773 = vunpack.c.h.b16 %v465
        %v1774 = vunpack.c.l.b16 %v466
        %v1775 = vunpack.c.h.b16 %v466
        %v1776 = vunpack.c.l.b16 %v467
        %v1777 = vunpack.c.h.b16 %v467
        %v1778 = vunpack.c.l.b16 %v468
        %v1779 = vunpack.c.h.b16 %v468
        %v1780 = vunpack.c.l.b16 %v469
        %v1781 = vunpack.c.h.b16 %v469
        %v1782 = vunpack.c.l.b16 %v470
        %v1783 = vunpack.c.h.b16 %v470
        %v1784 = vunpack.c.l.b16 %v471
        %v1785 = vunpack.c.h.b16 %v471
        %v1786 = vunpack.c.l.b16 %v472
        %v1787 = vunpack.c.h.b16 %v472
        %v1788 = vunpack.c.l.b16 %v473
        %v1789 = vunpack.c.h.b16 %v473
        %v1790 = vunpack.c.l.b16 %v474
        %v1791 = vunpack.c.h.b16 %v474
        %v1792 = vunpack.c.l.b16 %v475
        %v1793 = vunpack.c.h.b16 %v475
        %v1794 = vunpack.c.l.b16 %v476
        %v1795 = vunpack.c.h.b16 %v476
        %v1796 = vunpack.c.l.b16 %v477
        %v1797 = vunpack.c.h.b16 %v477
        %v1798 = vunpack.c.l.b16 %v478
        %v1799 = vunpack.c.h.b16 %v478
        %v1800 = vunpack.c.l.b16 %v479
        %v1801 = vunpack.c.h.b16 %v479
        %v1802 = vunpack.c.l.b16 %v480
        %v1803 = vunpack.c.h.b16 %v480
        %v1804 = vunpack.c.l.b16 %v481
        %v1805 = vunpack.c.h.b16 %v481
        %v1806 = vunpack.c.l.b16 %v482
        %v1807 = vunpack.c.h.b16 %v482
        %v1808 = vunpack.c.l.b16 %v483
        %v1809 = vunpack.c.h.b16 %v483
        %v1810 = vunpack.c.l.b16 %v484
        %v1811 = vunpack.c.h.b16 %v484
        %v1812 = vunpack.c.l.b16 %v485
        %v1813 = vunpack.c.h.b16 %v485
        %v1814 = vunpack.c.l.b16 %v486
        %v1815 = vunpack.c.h.b16 %v486
        %v1816 = vunpack.c.l.b16 %v487
        %v1817 = vunpack.c.h.b16 %v487
        %v1818 = vunpack.c.l.b16 %v488
        %v1819 = vunpack.c.h.b16 %v488
        %v1820 = vunpack.c.l.b16 %v489
        %v1821 = vunpack.c.h.b16 %v489
        %v1822 = vunpack.c.l.b16 %v490
        %v1823 = vunpack.c.h.b16 %v490
        %v1824 = vunpack.c.l.b16 %v491
        %v1825 = vunpack.c.h.b16 %v491
        %v1826 = vunpack.c.l.b16 %v492
        %v1827 = vunpack.c.h.b16 %v492
        %v1828 = vunpack.c.l.b16 %v493
        %v1829 = vunpack.c.h.b16 %v493
        %v1830 = vunpack.c.l.b16 %v494
        %v1831 = vunpack.c.h.b16 %v494
        %v1832 = vunpack.c.l.b16 %v495
        %v1833 = vunpack.c.h.b16 %v495
        %v1834 = vunpack.c.l.b16 %v496
        %v1835 = vunpack.c.h.b16 %v496
        %v1836 = vunpack.c.l.b16 %v497
        %v1837 = vunpack.c.h.b16 %v497
        %v1838 = vunpack.c.l.b16 %v498
        %v1839 = vunpack.c.h.b16 %v498
        %v1840 = vunpack.c.l.b16 %v499
        %v1841 = vunpack.c.h.b16 %v499
        %v1842 = vunpack.c.l.b16 %v500
        %v1843 = vunpack.c.h.b16 %v500
        %v1844 = vunpack.c.l.b16 %v501
        %v1845 = vunpack.c.h.b16 %v501
        %v1846 = vunpack.c.l.b16 %v502
        %v1847 = vunpack.c.h.b16 %v502
        %v1848 = vunpack.c.l.b16 %v503
        %v1849 = vunpack.c.h.b16 %v503
        %v1850 = vunpack.c.l.b16 %v504
        %v1851 = vunpack.c.h.b16 %v504
        %v1852 = vunpack.c.l.b16 %v505
        %v1853 = vunpack.c.h.b16 %v505
        %v1854 = vunpack.c.l.b16 %v506
        %v1855 = vunpack.c.h.b16 %v506
        %v1856 = vunpack.c.l.b16 %v507
        %v1857 = vunpack.c.h.b16 %v507
        %v1858 = vunpack.c.l.b16 %v508
        %v1859 = vunpack.c.h.b16 %v508
        %v1860 = vunpack.c.l.b16 %v509
        %v1861 = vunpack.c.h.b16 %v509
        %v1862 = vunpack.c.l.b16 %v510
        %v1863 = vunpack.c.h.b16 %v510
        %v1864 = vunpack.c.l.b16 %v511
        %v1865 = vunpack.c.h.b16 %v511
        %v1866 = vunpack.c.l.b16 %v512
        %v1867 = vunpack.c.h.b16 %v512
        %v1868 = vunpack.c.l.b16 %v513
        %v1869 = vunpack.c.h.b16 %v513
        %v1870 = vunpack.c.l.b16 %v514
        %v1871 = vunpack.c.h.b16 %v514
        %v1872 = vunpack.c.l.b16 %v515
        %v1873 = vunpack.c.h.b16 %v515
        %v1874 = vunpack.c.l.b16 %v516
        %v1875 = vunpack.c.h.b16 %v516
        %v1876 = vunpack.c.l.b16 %v517
        %v1877 = vunpack.c.h.b16 %v517
        %v1878 = vunpack.c.l.b16 %v518
        %v1879 = vunpack.c.h.b16 %v518
        %v1880 = vunpack.c.l.b16 %v519
        %v1881 = vunpack.c.h.b16 %v519
        %v1882 = vunpack.c.l.b16 %v520
        %v1883 = vunpack.c.h.b16 %v520
        %v1884 = vunpack.c.l.b16 %v521
        %v1885 = vunpack.c.h.b16 %v521
        %v1886 = vunpack.c.l.b16 %v522
        %v1887 = vunpack.c.h.b16 %v522
        %v1888 = vunpack.c.l.b16 %v523
        %v1889 = vunpack.c.h.b16 %v523
        %v1890 = vunpack.c.l.b16 %v524
        %v1891 = vunpack.c.h.b16 %v524
        %v1892 = vunpack.c.l.b16 %v525
        %v1893 = vunpack.c.h.b16 %v525
        %v1894 = vunpack.c.l.b16 %v526
        %v1895 = vunpack.c.h.b16 %v526
        %v1896 = vunpack.c.l.b16 %v527
        %v1897 = vunpack.c.h.b16 %v527
        %v1898 = vunpack.c.l.b16 %v528
        %v1899 = vunpack.c.h.b16 %v528
        %v1900 = vunpack.c.l.b16 %v529
        %v1901 = vunpack.c.h.b16 %v529
        %v1902 = vunpack.c.l.b16 %v530
        %v1903 = vunpack.c.h.b16 %v530
        %v1904 = vunpack.c.l.b16 %v531
        %v1905 = vunpack.c.h.b16 %v531
        %v1906 = vunpack.c.l.b16 %v532
        %v1907 = vunpack.c.h.b16 %v532
        %v1908 = vunpack.c.l.b16 %v533
        %v1909 = vunpack.c.h.b16 %v533
        %v1910 = vunpack.c.l.b16 %v534
        %v1911 = vunpack.c.h.b16 %v534
        %v1912 = vunpack.c.l.b16 %v535
        %v1913 = vunpack.c.h.b16 %v535
        %v1914 = vunpack.c.l.b16 %v536
        %v1915 = vunpack.c.h.b16 %v536
        %v1916 = vunpack.c.l.b16 %v537
        %v1917 = vunpack.c.h.b16 %v537
        %v1918 = vunpack.c.l.b16 %v538
        %v1919 = vunpack.c.h.b16 %v538
        %v1920 = vunpack.c.l.b16 %v539
        %v1921 = vunpack.c.h.b16 %v539
        %v1922 = vunpack.c.l.b16 %v540
        %v1923 = vunpack.c.h.b16 %v540
        %v1924 = vunpack.c.l.b16 %v541
        %v1925 = vunpack.c.h.b16 %v541
        %v1926 = vunpack.c.l.b16 %v542
        %v1927 = vunpack.c.h.b16 %v542
        %v1928 = vunpack.c.l.b16 %v543
        %v1929 = vunpack.c.h.b16 %v543
        %v1930 = vunpack.c.l.b16 %v544
        %v1931 = vunpack.c.h.b16 %v544
        %v1932 = vunpack.c.l.b16 %v545
        %v1933 = vunpack.c.h.b16 %v545
        %v1934 = vunpack.c.l.b16 %v546
        %v1935 = vunpack.c.h.b16 %v546
        %v1936 = vunpack.c.l.b16 %v547
        %v1937 = vunpack.c.h.b16 %v547
        %v1938 = vunpack.c.l.b16 %v548
        %v1939 = vunpack.c.h.b16 %v548
        %v1940 = vunpack.c.l.b16 %v549
        %v1941 = vunpack.c.h.b16 %v549
        %v1942 = vunpack.c.l.b16 %v550
        %v1943 = vunpack.c.h.b16 %v550
        %v1944 = vunpack.c.l.b16 %v551
        %v1945 = vunpack.c.h.b16 %v551
        %v1946 = vunpack.c.l.b16 %v552
        %v1947 = vunpack.c.h.b16 %v552
        %v1948 = vunpack.c.l.b16 %v553
        %v1949 = vunpack.c.h.b16 %v553
        %v1950 = vunpack.c.l.b16 %v554
        %v1951 = vunpack.c.h.b16 %v554
        %v1952 = vunpack.c.l.b16 %v555
        %v1953 = vunpack.c.h.b16 %v555
        %v1954 = vunpack.c.l.b16 %v556
        %v1955 = vunpack.c.h.b16 %v556
        %v1956 = vunpack.c.l.b16 %v557
        %v1957 = vunpack.c.h.b16 %v557
        %v1958 = vunpack.c.l.b16 %v558
        %v1959 = vunpack.c.h.b16 %v558
        %v1960 = vunpack.c.l.b16 %v559
        %v1961 = vunpack.c.h.b16 %v559
        %v1962 = vunpack.c.l.b16 %v560
        %v1963 = vunpack.c.h.b16 %v560
        %v1964 = vunpack.c.l.b16 %v561
        %v1965 = vunpack.c.h.b16 %v561
        %v1966 = vunpack.c.l.b16 %v562
        %v1967 = vunpack.c.h.b16 %v562
        %v1968 = vunpack.c.l.b16 %v563
        %v1969 = vunpack.c.h.b16 %v563
        %v1970 = vunpack.c.l.b16 %v564
        %v1971 = vunpack.c.h.b16 %v564
        %v1972 = vunpack.c.l.b16 %v565
        %v1973 = vunpack.c.h.b16 %v565
        %v1974 = vunpack.c.l.b16 %v566
        %v1975 = vunpack.c.h.b16 %v566
        %v1976 = vunpack.c.l.b16 %v567
        %v1977 = vunpack.c.h.b16 %v567
        %v1978 = vunpack.c.l.b16 %v568
        %v1979 = vunpack.c.h.b16 %v568
        %v1980 = vunpack.c.l.b16 %v569
        %v1981 = vunpack.c.h.b16 %v569
        %v1982 = vunpack.c.l.b16 %v570
        %v1983 = vunpack.c.h.b16 %v570
        %v1984 = vunpack.c.l.b16 %v571
        %v1985 = vunpack.c.h.b16 %v571
        %v1986 = vunpack.c.l.b16 %v572
        %v1987 = vunpack.c.h.b16 %v572
        %v1988 = vunpack.c.l.b16 %v573
        %v1989 = vunpack.c.h.b16 %v573
        %v1990 = vunpack.c.l.b16 %v574
        %v1991 = vunpack.c.h.b16 %v574
        %v1992 = vunpack.c.l.b16 %v575
        %v1993 = vunpack.c.h.b16 %v575
        %v1994 = vunpack.c.l.b16 %v576
        %v1995 = vunpack.c.h.b16 %v576
        %v1996 = vunpack.c.l.b16 %v577
        %v1997 = vunpack.c.h.b16 %v577
        %v1998 = vunpack.c.l.b16 %v578
        %v1999 = vunpack.c.h.b16 %v578
        %v2000 = vunpack.c.l.b16 %v579
        %v2001 = vunpack.c.h.b16 %v579
        %v2002 = vunpack.c.l.b16 %v580
        %v2003 = vunpack.c.h.b16 %v580
        %v2004 = vunpack.c.l.b16 %v581
        %v2005 = vunpack.c.h.b16 %v581
        %v2006 = vunpack.c.l.b16 %v582
        %v2007 = vunpack.c.h.b16 %v582
        %v2008 = vunpack.c.l.b16 %v583
        %v2009 = vunpack.c.h.b16 %v583
        %v2010 = vunpack.c.l.b16 %v584
        %v2011 = vunpack.c.h.b16 %v584
        %v2012 = vunpack.c.l.b16 %v585
        %v2013 = vunpack.c.h.b16 %v585
        %v2014 = vunpack.c.l.b16 %v586
        %v2015 = vunpack.c.h.b16 %v586
        %v2016 = vunpack.c.l.b16 %v587
        %v2017 = vunpack.c.h.b16 %v587
        %v2018 = vunpack.c.l.b16 %v588
        %v2019 = vunpack.c.h.b16 %v588
        %v2020 = vunpack.c.l.b16 %v589
        %v2021 = vunpack.c.h.b16 %v589
        %v2022 = vunpack.c.l.b16 %v590
        %v2023 = vunpack.c.h.b16 %v590
        %v2024 = vunpack.c.l.b16 %v591
        %v2025 = vunpack.c.h.b16 %v591
        %v2026 = vunpack.c.l.b16 %v592
        %v2027 = vunpack.c.h.b16 %v592
        %v2028 = vunpack.c.l.b16 %v593
        %v2029 = vunpack.c.h.b16 %v593
        %v2030 = vunpack.c.l.b16 %v594
        %v2031 = vunpack.c.h.b16 %v594
        %v2032 = vunpack.c.l.b16 %v595
        %v2033 = vunpack.c.h.b16 %v595
        %v2034 = vunpack.c.l.b16 %v596
        %v2035 = vunpack.c.h.b16 %v596
        %v2036 = vunpack.c.l.b16 %v597
        %v2037 = vunpack.c.h.b16 %v597
        %v2038 = vunpack.c.l.b16 %v598
        %v2039 = vunpack.c.h.b16 %v598
        %v2040 = vunpack.c.l.b16 %v599
        %v2041 = vunpack.c.h.b16 %v599
        %v2042 = vunpack.c.l.b16 %v600
        %v2043 = vunpack.c.h.b16 %v600
        %v2044 = vunpack.c.l.b16 %v601
        %v2045 = vunpack.c.h.b16 %v601
        %v2046 = vunpack.c.l.b16 %v602
        %v2047 = vunpack.c.h.b16 %v602
        %v2048 = vunpack.c.l.b16 %v603
        %v2049 = vunpack.c.h.b16 %v603
        %v2050 = vunpack.c.l.b16 %v604
        %v2051 = vunpack.c.h.b16 %v604
        %v2052 = vunpack.c.l.b16 %v605
        %v2053 = vunpack.c.h.b16 %v605
        %v2054 = vunpack.c.l.b16 %v606
        %v2055 = vunpack.c.h.b16 %v606
        %v2056 = vunpack.c.l.b16 %v607
        %v2057 = vunpack.c.h.b16 %v607
        %v2058 = vunpack.c.l.b16 %v608
        %v2059 = vunpack.c.h.b16 %v608
        %v2060 = vunpack.c.l.b16 %v609
        %v2061 = vunpack.c.h.b16 %v609
        %v2062 = vunpack.c.l.b16 %v610
        %v2063 = vunpack.c.h.b16 %v610
        %v2064 = vunpack.c.l.b16 %v611
        %v2065 = vunpack.c.h.b16 %v611
        %v2066 = vunpack.c.l.b16 %v612
        %v2067 = vunpack.c.h.b16 %v612
        %v2068 = vunpack.c.l.b16 %v613
        %v2069 = vunpack.c.h.b16 %v613
        %v2070 = vunpack.c.l.b16 %v614
        %v2071 = vunpack.c.h.b16 %v614
        %v2072 = vunpack.c.l.b16 %v615
        %v2073 = vunpack.c.h.b16 %v615
        %v2074 = vunpack.c.l.b16 %v616
        %v2075 = vunpack.c.h.b16 %v616
        %v2076 = vunpack.c.l.b16 %v617
        %v2077 = vunpack.c.h.b16 %v617
        %v2078 = vunpack.c.l.b16 %v618
        %v2079 = vunpack.c.h.b16 %v618
        %v2080 = vunpack.c.l.b16 %v619
        %v2081 = vunpack.c.h.b16 %v619
        %v2082 = vunpack.c.l.b16 %v620
        %v2083 = vunpack.c.h.b16 %v620
        %v2084 = vunpack.c.l.b16 %v621
        %v2085 = vunpack.c.h.b16 %v621
        %v2086 = vunpack.c.l.b16 %v622
        %v2087 = vunpack.c.h.b16 %v622
        %v2088 = vunpack.c.l.b16 %v623
        %v2089 = vunpack.c.h.b16 %v623
        %v2090 = vunpack.c.l.b16 %v624
        %v2091 = vunpack.c.h.b16 %v624
        %v2092 = vunpack.c.l.b16 %v625
        %v2093 = vunpack.c.h.b16 %v625
        %v2094 = vunpack.c.l.b16 %v626
        %v2095 = vunpack.c.h.b16 %v626
        %v2096 = vunpack.c.l.b16 %v627
        %v2097 = vunpack.c.h.b16 %v627
        %v2098 = vunpack.c.l.b16 %v628
        %v2099 = vunpack.c.h.b16 %v628
        %v2100 = vunpack.c.l.b16 %v629
        %v2101 = vunpack.c.h.b16 %v629
        %v2102 = vunpack.c.l.b16 %v630
        %v2103 = vunpack.c.h.b16 %v630
        %v2104 = vunpack.c.l.b16 %v631
        %v2105 = vunpack.c.h.b16 %v631
        %v2106 = vunpack.c.l.b16 %v632
        %v2107 = vunpack.c.h.b16 %v632
        %v2108 = vunpack.c.l.b16 %v633
        %v2109 = vunpack.c.h.b16 %v633
        %v2110 = vunpack.c.l.b16 %v634
        %v2111 = vunpack.c.h.b16 %v634
        %v2112 = vunpack.c.l.b16 %v635
        %v2113 = vunpack.c.h.b16 %v635
        %v2114 = vunpack.c.l.b16 %v636
        %v2115 = vunpack.c.h.b16 %v636
        %v2116 = vunpack.c.l.b16 %v637
        %v2117 = vunpack.c.h.b16 %v637
        %v2118 = vunpack.c.l.b16 %v638
        %v2119 = vunpack.c.h.b16 %v638
        %v2120 = vunpack.c.l.b16 %v639
        %v2121 = vunpack.c.h.b16 %v639
        %v2122 = vunpack.c.l.b16 %v640
        %v2123 = vunpack.c.h.b16 %v640
        %v2124 = vunpack.c.l.b16 %v641
        %v2125 = vunpack.c.h.b16 %v641
        %v2126 = vunpack.c.l.b16 %v642
        %v2127 = vunpack.c.h.b16 %v642
        %v2128 = vunpack.c.l.b16 %v643
        %v2129 = vunpack.c.h.b16 %v643
        %v2130 = vunpack.c.l.b16 %v644
        %v2131 = vunpack.c.h.b16 %v644
        %v2132 = vunpack.c.l.b16 %v645
        %v2133 = vunpack.c.h.b16 %v645
        %v2134 = vunpack.c.l.b16 %v646
        %v2135 = vunpack.c.h.b16 %v646
        %v2136 = vunpack.c.l.b16 %v647
        %v2137 = vunpack.c.h.b16 %v647
        %v2138 = vunpack.c.l.b16 %v648
        %v2139 = vunpack.c.h.b16 %v648
        %v2140 = vunpack.c.l.b16 %v649
        %v2141 = vunpack.c.h.b16 %v649
        %v2142 = vunpack.c.l.b16 %v650
        %v2143 = vunpack.c.h.b16 %v650
        %v2144 = vunpack.c.l.b16 %v651
        %v2145 = vunpack.c.h.b16 %v651
        %v2146 = vunpack.c.l.b16 %v652
        %v2147 = vunpack.c.h.b16 %v652
        %v2148 = vunpack.c.l.b16 %v653
        %v2149 = vunpack.c.h.b16 %v653
        %v2150 = vunpack.c.l.b16 %v654
        %v2151 = vunpack.c.h.b16 %v654
        %v2152 = vunpack.c.l.b16 %v655
        %v2153 = vunpack.c.h.b16 %v655
        %v2154 = vunpack.c.l.b16 %v656
        %v2155 = vunpack.c.h.b16 %v656
        %v2156 = vunpack.c.l.b16 %v657
        %v2157 = vunpack.c.h.b16 %v657
        %v2158 = vunpack.c.l.b16 %v658
        %v2159 = vunpack.c.h.b16 %v658
        %v2160 = vunpack.c.l.b16 %v659
        %v2161 = vunpack.c.h.b16 %v659
        %v2162 = vunpack.c.l.b16 %v660
        %v2163 = vunpack.c.h.b16 %v660
        %v2164 = vunpack.c.l.b16 %v661
        %v2165 = vunpack.c.h.b16 %v661
        %v2166 = vunpack.c.l.b16 %v662
        %v2167 = vunpack.c.h.b16 %v662
        %v2168 = vunpack.c.l.b16 %v663
        %v2169 = vunpack.c.h.b16 %v663
        %v2170 = vunpack.c.l.b16 %v664
        %v2171 = vunpack.c.h.b16 %v664
        %v2172 = vunpack.c.l.b16 %v665
        %v2173 = vunpack.c.h.b16 %v665
        %v2174 = vunpack.c.l.b16 %v666
        %v2175 = vunpack.c.h.b16 %v666
        %v2176 = vunpack.c.l.b16 %v667
        %v2177 = vunpack.c.h.b16 %v667
        %v2178 = vunpack.c.l.b16 %v668
        %v2179 = vunpack.c.h.b16 %v668
        %v2180 = vunpack.c.l.b16 %v669
        %v2181 = vunpack.c.h.b16 %v669
        %v2182 = vunpack.c.l.b16 %v670
        %v2183 = vunpack.c.h.b16 %v670
        %v2184 = vunpack.c.l.b16 %v671
        %v2185 = vunpack.c.h.b16 %v671
        %v2186 = vunpack.c.l.b16 %v672
        %v2187 = vunpack.c.h.b16 %v672
        %v2188 = vunpack.c.l.b16 %v673
        %v2189 = vunpack.c.h.b16 %v673
        %v2190 = vunpack.c.l.b16 %v674
        %v2191 = vunpack.c.h.b16 %v674
        %v2192 = vunpack.c.l.b16 %v675
        %v2193 = vunpack.c.h.b16 %v675
        %v2194 = vunpack.c.l.b16 %v676
        %v2195 = vunpack.c.h.b16 %v676
        %v2196 = vunpack.c.l.b16 %v677
        %v2197 = vunpack.c.h.b16 %v677
        %v2198 = vunpack.c.l.b16 %v678
        %v2199 = vunpack.c.h.b16 %v678
        %v2200 = vunpack.c.l.b16 %v679
        %v2201 = vunpack.c.h.b16 %v679
        %v2202 = vunpack.c.l.b16 %v680
        %v2203 = vunpack.c.h.b16 %v680
        %v2204 = vunpack.c.l.b16 %v681
        %v2205 = vunpack.c.h.b16 %v681
        %v2206 = vunpack.c.l.b16 %v682
        %v2207 = vunpack.c.h.b16 %v682
        %v2208 = vunpack.c.l.b16 %v683
        %v2209 = vunpack.c.h.b16 %v683
        %v2210 = vunpack.c.l.b16 %v684
        %v2211 = vunpack.c.h.b16 %v684
        %v2212 = vunpack.c.l.b16 %v685
        %v2213 = vunpack.c.h.b16 %v685
        %v2214 = vunpack.c.l.b16 %v686
        %v2215 = vunpack.c.h.b16 %v686
        %v2216 = vunpack.c.l.b16 %v687
        %v2217 = vunpack.c.h.b16 %v687
        %v2218 = vunpack.c.l.b16 %v688
        %v2219 = vunpack.c.h.b16 %v688
        %v2220 = vunpack.c.l.b16 %v689
        %v2221 = vunpack.c.h.b16 %v689
        %v2222 = vunpack.c.l.b16 %v690
        %v2223 = vunpack.c.h.b16 %v690
        %v2224 = vunpack.c.l.b16 %v691
        %v2225 = vunpack.c.h.b16 %v691
        %v2226 = vunpack.c.l.b16 %v692
        %v2227 = vunpack.c.h.b16 %v692
        %v2228 = vunpack.c.l.b16 %v693
        %v2229 = vunpack.c.h.b16 %v693
        %v2230 = vunpack.c.l.b16 %v694
        %v2231 = vunpack.c.h.b16 %v694
        %v2232 = vunpack.c.l.b16 %v695
        %v2233 = vunpack.c.h.b16 %v695
        %v2234 = vunpack.c.l.b16 %v696
        %v2235 = vunpack.c.h.b16 %v696
        %v2236 = vunpack.c.l.b16 %v697
        %v2237 = vunpack.c.h.b16 %v697
        %v2238 = vunpack.c.l.b16 %v698
        %v2239 = vunpack.c.h.b16 %v698
        %v2240 = vunpack.c.l.b16 %v699
        %v2241 = vunpack.c.h.b16 %v699
        %v2242 = vunpack.c.l.b16 %v700
        %v2243 = vunpack.c.h.b16 %v700
        %v2244 = vunpack.c.l.b16 %v701
        %v2245 = vunpack.c.h.b16 %v701
        %v2246 = vunpack.c.l.b16 %v702
        %v2247 = vunpack.c.h.b16 %v702
        %v2248 = vunpack.c.l.b16 %v703
        %v2249 = vunpack.c.h.b16 %v703
        %v2250 = vunpack.c.l.b16 %v704
        %v2251 = vunpack.c.h.b16 %v704
        %v2252 = vunpack.c.l.b16 %v705
        %v2253 = vunpack.c.h.b16 %v705
        %v2254 = vunpack.c.l.b16 %v706
        %v2255 = vunpack.c.h.b16 %v706
        %v2256 = vunpack.c.l.b16 %v707
        %v2257 = vunpack.c.h.b16 %v707
        %v2258 = vunpack.c.l.b16 %v708
        %v2259 = vunpack.c.h.b16 %v708
        %v2260 = vunpack.c.l.b16 %v709
        %v2261 = vunpack.c.h.b16 %v709
        %v2262 = vunpack.c.l.b16 %v710
        %v2263 = vunpack.c.h.b16 %v710
        %v2264 = vunpack.c.l.b16 %v711
        %v2265 = vunpack.c.h.b16 %v711
        %v2266 = vunpack.c.l.b16 %v712
        %v2267 = vunpack.c.h.b16 %v712
        %v2268 = vunpack.c.l.b16 %v713
        %v2269 = vunpack.c.h.b16 %v713
        %v2270 = vunpack.c.l.b16 %v714
        %v2271 = vunpack.c.h.b16 %v714
        %v2272 = vunpack.c.l.b16 %v715
        %v2273 = vunpack.c.h.b16 %v715
        %v2274 = vunpack.c.l.b16 %v716
        %v2275 = vunpack.c.h.b16 %v716
        %v2276 = vunpack.c.l.b16 %v717
        %v2277 = vunpack.c.h.b16 %v717
        %v2278 = vunpack.c.l.b16 %v718
        %v2279 = vunpack.c.h.b16 %v718
        %v2280 = vunpack.c.l.b16 %v719
        %v2281 = vunpack.c.h.b16 %v719
        %v2282 = vunpack.c.l.b16 %v720
        %v2283 = vunpack.c.h.b16 %v720
        %v2284 = vunpack.c.l.b16 %v721
        %v2285 = vunpack.c.h.b16 %v721
        %v2286 = vunpack.c.l.b16 %v722
        %v2287 = vunpack.c.h.b16 %v722
        %v2288 = vunpack.c.l.b16 %v723
        %v2289 = vunpack.c.h.b16 %v723
        %v2290 = vunpack.c.l.b16 %v724
        %v2291 = vunpack.c.h.b16 %v724
        %v2292 = vunpack.c.l.b16 %v725
        %v2293 = vunpack.c.h.b16 %v725
        %v2294 = vunpack.c.l.b16 %v726
        %v2295 = vunpack.c.h.b16 %v726
        %v2296 = vunpack.c.l.b16 %v727
        %v2297 = vunpack.c.h.b16 %v727
        %v2298 = vunpack.c.l.b16 %v728
        %v2299 = vunpack.c.h.b16 %v728
        %v2300 = vunpack.c.l.b16 %v729
        %v2301 = vunpack.c.h.b16 %v729
        %v2302 = vunpack.c.l.b16 %v730
        %v2303 = vunpack.c.h.b16 %v730
        %v2304 = vunpack.c.l.b16 %v731
        %v2305 = vunpack.c.h.b16 %v731
        %v2306 = vunpack.c.l.b16 %v732
        %v2307 = vunpack.c.h.b16 %v732
        %v2308 = vunpack.c.l.b16 %v733
        %v2309 = vunpack.c.h.b16 %v733
        %v2310 = vunpack.c.l.b16 %v734
        %v2311 = vunpack.c.h.b16 %v734
        %v2312 = vunpack.c.l.b16 %v735
        %v2313 = vunpack.c.h.b16 %v735
        %v2314 = vunpack.c.l.b16 %v736
        %v2315 = vunpack.c.h.b16 %v736
        %v2316 = vunpack.c.l.b16 %v737
        %v2317 = vunpack.c.h.b16 %v737
        %v2318 = vunpack.c.l.b16 %v738
        %v2319 = vunpack.c.h.b16 %v738
        %v2320 = vunpack.c.l.b16 %v739
        %v2321 = vunpack.c.h.b16 %v739
        %v2322 = vunpack.c.l.b16 %v740
        %v2323 = vunpack.c.h.b16 %v740
        %v2324 = vunpack.c.l.b16 %v741
        %v2325 = vunpack.c.h.b16 %v741
        %v2326 = vunpack.c.l.b16 %v742
        %v2327 = vunpack.c.h.b16 %v742
        %v2328 = vunpack.c.l.b16 %v743
        %v2329 = vunpack.c.h.b16 %v743
        %v2330 = vunpack.c.l.b16 %v744
        %v2331 = vunpack.c.h.b16 %v744
        %v2332 = vunpack.c.l.b16 %v745
        %v2333 = vunpack.c.h.b16 %v745
        %v2334 = vunpack.c.l.b16 %v746
        %v2335 = vunpack.c.h.b16 %v746
        %v2336 = vunpack.c.l.b16 %v747
        %v2337 = vunpack.c.h.b16 %v747
        %v2338 = vunpack.c.l.b16 %v748
        %v2339 = vunpack.c.h.b16 %v748
        %v2340 = vunpack.c.l.b16 %v749
        %v2341 = vunpack.c.h.b16 %v749
        %v2342 = vunpack.c.l.b16 %v750
        %v2343 = vunpack.c.h.b16 %v750
        %v2344 = vunpack.c.l.b16 %v751
        %v2345 = vunpack.c.h.b16 %v751
        %v2346 = vunpack.c.l.b16 %v752
        %v2347 = vunpack.c.h.b16 %v752
        %v2348 = vunpack.c.l.b16 %v753
        %v2349 = vunpack.c.h.b16 %v753
        %v2350 = vunpack.c.l.b16 %v754
        %v2351 = vunpack.c.h.b16 %v754
        %v2352 = vunpack.c.l.b16 %v755
        %v2353 = vunpack.c.h.b16 %v755
        %v2354 = vunpack.c.l.b16 %v756
        %v2355 = vunpack.c.h.b16 %v756
        %v2356 = vunpack.c.l.b16 %v757
        %v2357 = vunpack.c.h.b16 %v757
        %v2358 = vunpack.c.l.b16 %v758
        %v2359 = vunpack.c.h.b16 %v758
        %v2360 = vunpack.c.l.b16 %v759
        %v2361 = vunpack.c.h.b16 %v759
        %v2362 = vunpack.c.l.b16 %v760
        %v2363 = vunpack.c.h.b16 %v760
        %v2364 = vunpack.c.l.b16 %v761
        %v2365 = vunpack.c.h.b16 %v761
        %v2366 = vunpack.c.l.b16 %v762
        %v2367 = vunpack.c.h.b16 %v762
        %v2368 = vunpack.c.l.b16 %v763
        %v2369 = vunpack.c.h.b16 %v763
        %v2370 = vunpack.c.l.b16 %v764
        %v2371 = vunpack.c.h.b16 %v764
        %v2372 = vunpack.c.l.b16 %v765
        %v2373 = vunpack.c.h.b16 %v765
        %v2374 = vunpack.c.l.b16 %v766
        %v2375 = vunpack.c.h.b16 %v766
        %v2376 = vunpack.c.l.b16 %v767
        %v2377 = vunpack.c.h.b16 %v767
        %v2378 = vunpack.c.l.b16 %v768
        %v2379 = vunpack.c.h.b16 %v768
        %v2380 = vunpack.c.l.b16 %v769
        %v2381 = vunpack.c.h.b16 %v769
        %v2382 = vunpack.c.l.b16 %v770
        %v2383 = vunpack.c.h.b16 %v770
        %v2384 = vunpack.c.l.b16 %v771
        %v2385 = vunpack.c.h.b16 %v771
        %v2386 = vunpack.c.l.b16 %v772
        %v2387 = vunpack.c.h.b16 %v772
        %v2388 = vunpack.c.l.b16 %v773
        %v2389 = vunpack.c.h.b16 %v773
        %v2390 = vunpack.c.l.b16 %v774
        %v2391 = vunpack.c.h.b16 %v774
        %v2392 = vunpack.c.l.b16 %v775
        %v2393 = vunpack.c.h.b16 %v775
        %v2394 = vunpack.c.l.b16 %v776
        %v2395 = vunpack.c.h.b16 %v776
        %v2396 = vunpack.c.l.b16 %v777
        %v2397 = vunpack.c.h.b16 %v777
        %v2398 = vunpack.c.l.b16 %v778
        %v2399 = vunpack.c.h.b16 %v778
        %v2400 = vunpack.c.l.b16 %v779
        %v2401 = vunpack.c.h.b16 %v779
        %v2402 = vunpack.c.l.b16 %v780
        %v2403 = vunpack.c.h.b16 %v780
        %v2404 = vunpack.c.l.b16 %v781
        %v2405 = vunpack.c.h.b16 %v781
        %v2406 = vunpack.c.l.b16 %v782
        %v2407 = vunpack.c.h.b16 %v782
        %v2408 = vunpack.c.l.b16 %v783
        %v2409 = vunpack.c.h.b16 %v783
        %v2410 = vunpack.c.l.b16 %v784
        %v2411 = vunpack.c.h.b16 %v784
        %v2412 = vunpack.c.l.b16 %v785
        %v2413 = vunpack.c.h.b16 %v785
        %v2414 = vunpack.c.l.b16 %v786
        %v2415 = vunpack.c.h.b16 %v786
        %v2416 = vunpack.c.l.b16 %v787
        %v2417 = vunpack.c.h.b16 %v787
        %v2418 = vunpack.c.l.b16 %v788
        %v2419 = vunpack.c.h.b16 %v788
        %v2420 = vunpack.c.l.b16 %v789
        %v2421 = vunpack.c.h.b16 %v789
        %v2422 = vunpack.c.l.b16 %v790
        %v2423 = vunpack.c.h.b16 %v790
        %v2424 = vunpack.c.l.b16 %v791
        %v2425 = vunpack.c.h.b16 %v791
        %v2426 = vunpack.c.l.b16 %v792
        %v2427 = vunpack.c.h.b16 %v792
        %v2428 = vunpack.c.l.b16 %v793
        %v2429 = vunpack.c.h.b16 %v793
        %v2430 = vunpack.c.l.b16 %v794
        %v2431 = vunpack.c.h.b16 %v794
        %v2432 = vunpack.c.l.b16 %v795
        %v2433 = vunpack.c.h.b16 %v795
        %v2434 = vunpack.c.l.b16 %v796
        %v2435 = vunpack.c.h.b16 %v796
        %v2436 = vunpack.c.l.b16 %v797
        %v2437 = vunpack.c.h.b16 %v797
        %v2438 = vunpack.c.l.b16 %v798
        %v2439 = vunpack.c.h.b16 %v798
        %v2440 = vunpack.c.l.b16 %v799
        %v2441 = vunpack.c.h.b16 %v799
        %v2442 = vunpack.c.l.b16 %v800
        %v2443 = vunpack.c.h.b16 %v800
        %v2444 = vunpack.c.l.b16 %v801
        %v2445 = vunpack.c.h.b16 %v801
        %v2446 = vunpack.c.l.b16 %v802
        %v2447 = vunpack.c.h.b16 %v802
        %v2448 = vunpack.c.l.b16 %v803
        %v2449 = vunpack.c.h.b16 %v803
        %v2450 = vunpack.c.l.b16 %v804
        %v2451 = vunpack.c.h.b16 %v804
        %v2452 = vunpack.c.l.b16 %v805
        %v2453 = vunpack.c.h.b16 %v805
        %v2454 = vunpack.c.l.b16 %v806
        %v2455 = vunpack.c.h.b16 %v806
        %v2456 = vunpack.c.l.b16 %v807
        %v2457 = vunpack.c.h.b16 %v807
        %v2458 = vunpack.c.l.b16 %v808
        %v2459 = vunpack.c.h.b16 %v808
        %v2460 = vunpack.c.l.b16 %v809
        %v2461 = vunpack.c.h.b16 %v809
        %v2462 = vpack.c.b16 %v1442, %v1438
        %v2463 = vpack.c.b16 %v1443, %v1439
        %v2464 = vpack.c.b16 %v1444, %v1440
        %v2465 = vpack.c.b16 %v1445, %v1441
        %v2466 = vpack.c.b16 %v1450, %v1446
        %v2467 = vpack.c.b16 %v1451, %v1447
        %v2468 = vpack.c.b16 %v1452, %v1448
        %v2469 = vpack.c.b16 %v1453, %v1449
        %v2470 = vpack.c.b16 %v1458, %v1454
        %v2471 = vpack.c.b16 %v1459, %v1455
        %v2472 = vpack.c.b16 %v1460, %v1456
        %v2473 = vpack.c.b16 %v1461, %v1457
        %v2474 = vpack.c.b16 %v1466, %v1462
        %v2475 = vpack.c.b16 %v1467, %v1463
        %v2476 = vpack.c.b16 %v1468, %v1464
        %v2477 = vpack.c.b16 %v1469, %v1465
        %v2478 = vpack.c.b16 %v1474, %v1470
        %v2479 = vpack.c.b16 %v1475, %v1471
        %v2480 = vpack.c.b16 %v1476, %v1472
        %v2481 = vpack.c.b16 %v1477, %v1473
        %v2482 = vpack.c.b16 %v1482, %v1478
        %v2483 = vpack.c.b16 %v1483, %v1479
        %v2484 = vpack.c.b16 %v1484, %v1480
        %v2485 = vpack.c.b16 %v1485, %v1481
        %v2486 = vpack.c.b16 %v1490, %v1486
        %v2487 = vpack.c.b16 %v1491, %v1487
        %v2488 = vpack.c.b16 %v1492, %v1488
        %v2489 = vpack.c.b16 %v1493, %v1489
        %v2490 = vpack.c.b16 %v1498, %v1494
        %v2491 = vpack.c.b16 %v1499, %v1495
        %v2492 = vpack.c.b16 %v1500, %v1496
        %v2493 = vpack.c.b16 %v1501, %v1497
        %v2494 = vpack.c.b16 %v1506, %v1502
        %v2495 = vpack.c.b16 %v1507, %v1503
        %v2496 = vpack.c.b16 %v1508, %v1504
        %v2497 = vpack.c.b16 %v1509, %v1505
        %v2498 = vpack.c.b16 %v1514, %v1510
        %v2499 = vpack.c.b16 %v1515, %v1511
        %v2500 = vpack.c.b16 %v1516, %v1512
        %v2501 = vpack.c.b16 %v1517, %v1513
        %v2502 = vpack.c.b16 %v1522, %v1518
        %v2503 = vpack.c.b16 %v1523, %v1519
        %v2504 = vpack.c.b16 %v1524, %v1520
        %v2505 = vpack.c.b16 %v1525, %v1521
        %v2506 = vpack.c.b16 %v1530, %v1526
        %v2507 = vpack.c.b16 %v1531, %v1527
        %v2508 = vpack.c.b16 %v1532, %v1528
        %v2509 = vpack.c.b16 %v1533, %v1529
        %v2510 = vpack.c.b16 %v1538, %v1534
        %v2511 = vpack.c.b16 %v1539, %v1535
        %v2512 = vpack.c.b16 %v1540, %v1536
        %v2513 = vpack.c.b16 %v1541, %v1537
        %v2514 = vpack.c.b16 %v1546, %v1542
        %v2515 = vpack.c.b16 %v1547, %v1543
        %v2516 = vpack.c.b16 %v1548, %v1544
        %v2517 = vpack.c.b16 %v1549, %v1545
        %v2518 = vpack.c.b16 %v1554, %v1550
        %v2519 = vpack.c.b16 %v1555, %v1551
        %v2520 = vpack.c.b16 %v1556, %v1552
        %v2521 = vpack.c.b16 %v1557, %v1553
        %v2522 = vpack.c.b16 %v1562, %v1558
        %v2523 = vpack.c.b16 %v1563, %v1559
        %v2524 = vpack.c.b16 %v1564, %v1560
        %v2525 = vpack.c.b16 %v1565, %v1561
        %v2526 = vpack.c.b16 %v1570, %v1566
        %v2527 = vpack.c.b16 %v1571, %v1567
        %v2528 = vpack.c.b16 %v1572, %v1568
        %v2529 = vpack.c.b16 %v1573, %v1569
        %v2530 = vpack.c.b16 %v1578, %v1574
        %v2531 = vpack.c.b16 %v1579, %v1575
        %v2532 = vpack.c.b16 %v1580, %v1576
        %v2533 = vpack.c.b16 %v1581, %v1577
        %v2534 = vpack.c.b16 %v1586, %v1582
        %v2535 = vpack.c.b16 %v1587, %v1583
        %v2536 = vpack.c.b16 %v1588, %v1584
        %v2537 = vpack.c.b16 %v1589, %v1585
        %v2538 = vpack.c.b16 %v1594, %v1590
        %v2539 = vpack.c.b16 %v1595, %v1591
        %v2540 = vpack.c.b16 %v1596, %v1592
        %v2541 = vpack.c.b16 %v1597, %v1593
        %v2542 = vpack.c.b16 %v1602, %v1598
        %v2543 = vpack.c.b16 %v1603, %v1599
        %v2544 = vpack.c.b16 %v1604, %v1600
        %v2545 = vpack.c.b16 %v1605, %v1601
        %v2546 = vpack.c.b16 %v1610, %v1606
        %v2547 = vpack.c.b16 %v1611, %v1607
        %v2548 = vpack.c.b16 %v1612, %v1608
        %v2549 = vpack.c.b16 %v1613, %v1609
        %v2550 = vpack.c.b16 %v1618, %v1614
        %v2551 = vpack.c.b16 %v1619, %v1615
        %v2552 = vpack.c.b16 %v1620, %v1616
        %v2553 = vpack.c.b16 %v1621, %v1617
        %v2554 = vpack.c.b16 %v1626, %v1622
        %v2555 = vpack.c.b16 %v1627, %v1623
        %v2556 = vpack.c.b16 %v1628, %v1624
        %v2557 = vpack.c.b16 %v1629, %v1625
        %v2558 = vpack.c.b16 %v1634, %v1630
        %v2559 = vpack.c.b16 %v1635, %v1631
        %v2560 = vpack.c.b16 %v1636, %v1632
        %v2561 = vpack.c.b16 %v1637, %v1633
        %v2562 = vpack.c.b16 %v1642, %v1638
        %v2563 = vpack.c.b16 %v1643, %v1639
        %v2564 = vpack.c.b16 %v1644, %v1640
        %v2565 = vpack.c.b16 %v1645, %v1641
        %v2566 = vpack.c.b16 %v1650, %v1646
        %v2567 = vpack.c.b16 %v1651, %v1647
        %v2568 = vpack.c.b16 %v1652, %v1648
        %v2569 = vpack.c.b16 %v1653, %v1649
        %v2570 = vpack.c.b16 %v1658, %v1654
        %v2571 = vpack.c.b16 %v1659, %v1655
        %v2572 = vpack.c.b16 %v1660, %v1656
        %v2573 = vpack.c.b16 %v1661, %v1657
        %v2574 = vpack.c.b16 %v1666, %v1662
        %v2575 = vpack.c.b16 %v1667, %v1663
        %v2576 = vpack.c.b16 %v1668, %v1664
        %v2577 = vpack.c.b16 %v1669, %v1665
        %v2578 = vpack.c.b16 %v1674, %v1670
        %v2579 = vpack.c.b16 %v1675, %v1671
        %v2580 = vpack.c.b16 %v1676, %v1672
        %v2581 = vpack.c.b16 %v1677, %v1673
        %v2582 = vpack.c.b16 %v1682, %v1678
        %v2583 = vpack.c.b16 %v1683, %v1679
        %v2584 = vpack.c.b16 %v1684, %v1680
        %v2585 = vpack.c.b16 %v1685, %v1681
        %v2586 = vpack.c.b16 %v1690, %v1686
        %v2587 = vpack.c.b16 %v1691, %v1687
        %v2588 = vpack.c.b16 %v1692, %v1688
        %v2589 = vpack.c.b16 %v1693, %v1689
        %v2590 = vpack.c.b16 %v1698, %v1694
        %v2591 = vpack.c.b16 %v1699, %v1695
        %v2592 = vpack.c.b16 %v1700, %v1696
        %v2593 = vpack.c.b16 %v1701, %v1697
        %v2594 = vpack.c.b16 %v1706, %v1702
        %v2595 = vpack.c.b16 %v1707, %v1703
        %v2596 = vpack.c.b16 %v1708, %v1704
        %v2597 = vpack.c.b16 %v1709, %v1705
        %v2598 = vpack.c.b16 %v1714, %v1710
        %v2599 = vpack.c.b16 %v1715, %v1711
        %v2600 = vpack.c.b16 %v1716, %v1712
        %v2601 = vpack.c.b16 %v1717, %v1713
        %v2602 = vpack.c.b16 %v1722, %v1718
        %v2603 = vpack.c.b16 %v1723, %v1719
        %v2604 = vpack.c.b16 %v1724, %v1720
        %v2605 = vpack.c.b16 %v1725, %v1721
        %v2606 = vpack.c.b16 %v1730, %v1726
        %v2607 = vpack.c.b16 %v1731, %v1727
        %v2608 = vpack.c.b16 %v1732, %v1728
        %v2609 = vpack.c.b16 %v1733, %v1729
        %v2610 = vpack.c.b16 %v1738, %v1734
        %v2611 = vpack.c.b16 %v1739, %v1735
        %v2612 = vpack.c.b16 %v1740, %v1736
        %v2613 = vpack.c.b16 %v1741, %v1737
        %v2614 = vpack.c.b16 %v1746, %v1742
        %v2615 = vpack.c.b16 %v1747, %v1743
        %v2616 = vpack.c.b16 %v1748, %v1744
        %v2617 = vpack.c.b16 %v1749, %v1745
        %v2618 = vpack.c.b16 %v1754, %v1750
        %v2619 = vpack.c.b16 %v1755, %v1751
        %v2620 = vpack.c.b16 %v1756, %v1752
        %v2621 = vpack.c.b16 %v1757, %v1753
        %v2622 = vpack.c.b16 %v1762, %v1758
        %v2623 = vpack.c.b16 %v1763, %v1759
        %v2624 = vpack.c.b16 %v1764, %v1760
        %v2625 = vpack.c.b16 %v1765, %v1761
        %v2626 = vpack.c.b16 %v1770, %v1766
        %v2627 = vpack.c.b16 %v1771, %v1767
        %v2628 = vpack.c.b16 %v1772, %v1768
        %v2629 = vpack.c.b16 %v1773, %v1769
        %v2630 = vpack.c.b16 %v1778, %v1774
        %v2631 = vpack.c.b16 %v1779, %v1775
        %v2632 = vpack.c.b16 %v1780, %v1776
        %v2633 = vpack.c.b16 %v1781, %v1777
        %v2634 = vpack.c.b16 %v1786, %v1782
        %v2635 = vpack.c.b16 %v1787, %v1783
        %v2636 = vpack.c.b16 %v1788, %v1784
        %v2637 = vpack.c.b16 %v1789, %v1785
        %v2638 = vpack.c.b16 %v1794, %v1790
        %v2639 = vpack.c.b16 %v1795, %v1791
        %v2640 = vpack.c.b16 %v1796, %v1792
        %v2641 = vpack.c.b16 %v1797, %v1793
        %v2642 = vpack.c.b16 %v1802, %v1798
        %v2643 = vpack.c.b16 %v1803, %v1799
        %v2644 = vpack.c.b16 %v1804, %v1800
        %v2645 = vpack.c.b16 %v1805, %v1801
        %v2646 = vpack.c.b16 %v1810, %v1806
        %v2647 = vpack.c.b16 %v1811, %v1807
        %v2648 = vpack.c.b16 %v1812, %v1808
        %v2649 = vpack.c.b16 %v1813, %v1809
        %v2650 = vpack.c.b16 %v1818, %v1814
        %v2651 = vpack.c.b16 %v1819, %v1815
        %v2652 = vpack.c.b16 %v1820, %v1816
        %v2653 = vpack.c.b16 %v1821, %v1817
        %v2654 = vpack.c.b16 %v1826, %v1822
        %v2655 = vpack.c.b16 %v1827, %v1823
        %v2656 = vpack.c.b16 %v1828, %v1824
        %v2657 = vpack.c.b16 %v1829, %v1825
        %v2658 = vpack.c.b16 %v1834, %v1830
        %v2659 = vpack.c.b16 %v1835, %v1831
        %v2660 = vpack.c.b16 %v1836, %v1832
        %v2661 = vpack.c.b16 %v1837, %v1833
        %v2662 = vpack.c.b16 %v1842, %v1838
        %v2663 = vpack.c.b16 %v1843, %v1839
        %v2664 = vpack.c.b16 %v1844, %v1840
        %v2665 = vpack.c.b16 %v1845, %v1841
        %v2666 = vpack.c.b16 %v1850, %v1846
        %v2667 = vpack.c.b16 %v1851, %v1847
        %v2668 = vpack.c.b16 %v1852, %v1848
        %v2669 = vpack.c.b16 %v1853, %v1849
        %v2670 = vpack.c.b16 %v1858, %v1854
        %v2671 = vpack.c.b16 %v1859, %v1855
        %v2672 = vpack.c.b16 %v1860, %v1856
        %v2673 = vpack.c.b16 %v1861, %v1857
        %v2674 = vpack.c.b16 %v1866, %v1862
        %v2675 = vpack.c.b16 %v1867, %v1863
        %v2676 = vpack.c.b16 %v1868, %v1864
        %v2677 = vpack.c.b16 %v1869, %v1865
        %v2678 = vpack.c.b16 %v1874, %v1870
        %v2679 = vpack.c.b16 %v1875, %v1871
        %v2680 = vpack.c.b16 %v1876, %v1872
        %v2681 = vpack.c.b16 %v1877, %v1873
        %v2682 = vpack.c.b16 %v1882, %v1878
        %v2683 = vpack.c.b16 %v1883, %v1879
        %v2684 = vpack.c.b16 %v1884, %v1880
        %v2685 = vpack.c.b16 %v1885, %v1881
        %v2686 = vpack.c.b16 %v1890, %v1886
        %v2687 = vpack.c.b16 %v1891, %v1887
        %v2688 = vpack.c.b16 %v1892, %v1888
        %v2689 = vpack.c.b16 %v1893, %v1889
        %v2690 = vpack.c.b16 %v1898, %v1894
        %v2691 = vpack.c.b16 %v1899, %v1895
        %v2692 = vpack.c.b16 %v1900, %v1896
        %v2693 = vpack.c.b16 %v1901, %v1897
        %v2694 = vpack.c.b16 %v1906, %v1902
        %v2695 = vpack.c.b16 %v1907, %v1903
        %v2696 = vpack.c.b16 %v1908, %v1904
        %v2697 = vpack.c.b16 %v1909, %v1905
        %v2698 = vpack.c.b16 %v1914, %v1910
        %v2699 = vpack.c.b16 %v1915, %v1911
        %v2700 = vpack.c.b16 %v1916, %v1912
        %v2701 = vpack.c.b16 %v1917, %v1913
        %v2702 = vpack.c.b16 %v1922, %v1918
        %v2703 = vpack.c.b16 %v1923, %v1919
        %v2704 = vpack.c.b16 %v1924, %v1920
        %v2705 = vpack.c.b16 %v1925, %v1921
        %v2706 = vpack.c.b16 %v1930, %v1926
        %v2707 = vpack.c.b16 %v1931, %v1927
        %v2708 = vpack.c.b16 %v1932, %v1928
        %v2709 = vpack.c.b16 %v1933, %v1929
        %v2710 = vpack.c.b16 %v1938, %v1934
        %v2711 = vpack.c.b16 %v1939, %v1935
        %v2712 = vpack.c.b16 %v1940, %v1936
        %v2713 = vpack.c.b16 %v1941, %v1937
        %v2714 = vpack.c.b16 %v1946, %v1942
        %v2715 = vpack.c.b16 %v1947, %v1943
        %v2716 = vpack.c.b16 %v1948, %v1944
        %v2717 = vpack.c.b16 %v1949, %v1945
        %v2718 = vpack.c.b16 %v1954, %v1950
        %v2719 = vpack.c.b16 %v1955, %v1951
        %v2720 = vpack.c.b16 %v1956, %v1952
        %v2721 = vpack.c.b16 %v1957, %v1953
        %v2722 = vpack.c.b16 %v1962, %v1958
        %v2723 = vpack.c.b16 %v1963, %v1959
        %v2724 = vpack.c.b16 %v1964, %v1960
        %v2725 = vpack.c.b16 %v1965, %v1961
        %v2726 = vpack.c.b16 %v1970, %v1966
        %v2727 = vpack.c.b16 %v1971, %v1967
        %v2728 = vpack.c.b16 %v1972, %v1968
        %v2729 = vpack.c.b16 %v1973, %v1969
        %v2730 = vpack.c.b16 %v1978, %v1974
        %v2731 = vpack.c.b16 %v1979, %v1975
        %v2732 = vpack.c.b16 %v1980, %v1976
        %v2733 = vpack.c.b16 %v1981, %v1977
        %v2734 = vpack.c.b16 %v1986, %v1982
        %v2735 = vpack.c.b16 %v1987, %v1983
        %v2736 = vpack.c.b16 %v1988, %v1984
        %v2737 = vpack.c.b16 %v1989, %v1985
        %v2738 = vpack.c.b16 %v1994, %v1990
        %v2739 = vpack.c.b16 %v1995, %v1991
        %v2740 = vpack.c.b16 %v1996, %v1992
        %v2741 = vpack.c.b16 %v1997, %v1993
        %v2742 = vpack.c.b16 %v2002, %v1998
        %v2743 = vpack.c.b16 %v2003, %v1999
        %v2744 = vpack.c.b16 %v2004, %v2000
        %v2745 = vpack.c.b16 %v2005, %v2001
        %v2746 = vpack.c.b16 %v2010, %v2006
        %v2747 = vpack.c.b16 %v2011, %v2007
        %v2748 = vpack.c.b16 %v2012, %v2008
        %v2749 = vpack.c.b16 %v2013, %v2009
        %v2750 = vpack.c.b16 %v2018, %v2014
        %v2751 = vpack.c.b16 %v2019, %v2015
        %v2752 = vpack.c.b16 %v2020, %v2016
        %v2753 = vpack.c.b16 %v2021, %v2017
        %v2754 = vpack.c.b16 %v2026, %v2022
        %v2755 = vpack.c.b16 %v2027, %v2023
        %v2756 = vpack.c.b16 %v2028, %v2024
        %v2757 = vpack.c.b16 %v2029, %v2025
        %v2758 = vpack.c.b16 %v2034, %v2030
        %v2759 = vpack.c.b16 %v2035, %v2031
        %v2760 = vpack.c.b16 %v2036, %v2032
        %v2761 = vpack.c.b16 %v2037, %v2033
        %v2762 = vpack.c.b16 %v2042, %v2038
        %v2763 = vpack.c.b16 %v2043, %v2039
        %v2764 = vpack.c.b16 %v2044, %v2040
        %v2765 = vpack.c.b16 %v2045, %v2041
        %v2766 = vpack.c.b16 %v2050, %v2046
        %v2767 = vpack.c.b16 %v2051, %v2047
        %v2768 = vpack.c.b16 %v2052, %v2048
        %v2769 = vpack.c.b16 %v2053, %v2049
        %v2770 = vpack.c.b16 %v2058, %v2054
        %v2771 = vpack.c.b16 %v2059, %v2055
        %v2772 = vpack.c.b16 %v2060, %v2056
        %v2773 = vpack.c.b16 %v2061, %v2057
        %v2774 = vpack.c.b16 %v2066, %v2062
        %v2775 = vpack.c.b16 %v2067, %v2063
        %v2776 = vpack.c.b16 %v2068, %v2064
        %v2777 = vpack.c.b16 %v2069, %v2065
        %v2778 = vpack.c.b16 %v2074, %v2070
        %v2779 = vpack.c.b16 %v2075, %v2071
        %v2780 = vpack.c.b16 %v2076, %v2072
        %v2781 = vpack.c.b16 %v2077, %v2073
        %v2782 = vpack.c.b16 %v2082, %v2078
        %v2783 = vpack.c.b16 %v2083, %v2079
        %v2784 = vpack.c.b16 %v2084, %v2080
        %v2785 = vpack.c.b16 %v2085, %v2081
        %v2786 = vpack.c.b16 %v2090, %v2086
        %v2787 = vpack.c.b16 %v2091, %v2087
        %v2788 = vpack.c.b16 %v2092, %v2088
        %v2789 = vpack.c.b16 %v2093, %v2089
        %v2790 = vpack.c.b16 %v2098, %v2094
        %v2791 = vpack.c.b16 %v2099, %v2095
        %v2792 = vpack.c.b16 %v2100, %v2096
        %v2793 = vpack.c.b16 %v2101, %v2097
        %v2794 = vpack.c.b16 %v2106, %v2102
        %v2795 = vpack.c.b16 %v2107, %v2103
        %v2796 = vpack.c.b16 %v2108, %v2104
        %v2797 = vpack.c.b16 %v2109, %v2105
        %v2798 = vpack.c.b16 %v2114, %v2110
        %v2799 = vpack.c.b16 %v2115, %v2111
        %v2800 = vpack.c.b16 %v2116, %v2112
        %v2801 = vpack.c.b16 %v2117, %v2113
        %v2802 = vpack.c.b16 %v2122, %v2118
        %v2803 = vpack.c.b16 %v2123, %v2119
        %v2804 = vpack.c.b16 %v2124, %v2120
        %v2805 = vpack.c.b16 %v2125, %v2121
        %v2806 = vpack.c.b16 %v2130, %v2126
        %v2807 = vpack.c.b16 %v2131, %v2127
        %v2808 = vpack.c.b16 %v2132, %v2128
        %v2809 = vpack.c.b16 %v2133, %v2129
        %v2810 = vpack.c.b16 %v2138, %v2134
        %v2811 = vpack.c.b16 %v2139, %v2135
        %v2812 = vpack.c.b16 %v2140, %v2136
        %v2813 = vpack.c.b16 %v2141, %v2137
        %v2814 = vpack.c.b16 %v2146, %v2142
        %v2815 = vpack.c.b16 %v2147, %v2143
        %v2816 = vpack.c.b16 %v2148, %v2144
        %v2817 = vpack.c.b16 %v2149, %v2145
        %v2818 = vpack.c.b16 %v2154, %v2150
        %v2819 = vpack.c.b16 %v2155, %v2151
        %v2820 = vpack.c.b16 %v2156, %v2152
        %v2821 = vpack.c.b16 %v2157, %v2153
        %v2822 = vpack.c.b16 %v2162, %v2158
        %v2823 = vpack.c.b16 %v2163, %v2159
        %v2824 = vpack.c.b16 %v2164, %v2160
        %v2825 = vpack.c.b16 %v2165, %v2161
        %v2826 = vpack.c.b16 %v2170, %v2166
        %v2827 = vpack.c.b16 %v2171, %v2167
        %v2828 = vpack.c.b16 %v2172, %v2168
        %v2829 = vpack.c.b16 %v2173, %v2169
        %v2830 = vpack.c.b16 %v2178, %v2174
        %v2831 = vpack.c.b16 %v2179, %v2175
        %v2832 = vpack.c.b16 %v2180, %v2176
        %v2833 = vpack.c.b16 %v2181, %v2177
        %v2834 = vpack.c.b16 %v2186, %v2182
        %v2835 = vpack.c.b16 %v2187, %v2183
        %v2836 = vpack.c.b16 %v2188, %v2184
        %v2837 = vpack.c.b16 %v2189, %v2185
        %v2838 = vpack.c.b16 %v2194, %v2190
        %v2839 = vpack.c.b16 %v2195, %v2191
        %v2840 = vpack.c.b16 %v2196, %v2192
        %v2841 = vpack.c.b16 %v2197, %v2193
        %v2842 = vpack.c.b16 %v2202, %v2198
        %v2843 = vpack.c.b16 %v2203, %v2199
        %v2844 = vpack.c.b16 %v2204, %v2200
        %v2845 = vpack.c.b16 %v2205, %v2201
        %v2846 = vpack.c.b16 %v2210, %v2206
        %v2847 = vpack.c.b16 %v2211, %v2207
        %v2848 = vpack.c.b16 %v2212, %v2208
        %v2849 = vpack.c.b16 %v2213, %v2209
        %v2850 = vpack.c.b16 %v2218, %v2214
        %v2851 = vpack.c.b16 %v2219, %v2215
        %v2852 = vpack.c.b16 %v2220, %v2216
        %v2853 = vpack.c.b16 %v2221, %v2217
        %v2854 = vpack.c.b16 %v2226, %v2222
        %v2855 = vpack.c.b16 %v2227, %v2223
        %v2856 = vpack.c.b16 %v2228, %v2224
        %v2857 = vpack.c.b16 %v2229, %v2225
        %v2858 = vpack.c.b16 %v2234, %v2230
        %v2859 = vpack.c.b16 %v2235, %v2231
        %v2860 = vpack.c.b16 %v2236, %v2232
        %v2861 = vpack.c.b16 %v2237, %v2233
        %v2862 = vpack.c.b16 %v2242, %v2238
        %v2863 = vpack.c.b16 %v2243, %v2239
        %v2864 = vpack.c.b16 %v2244, %v2240
        %v2865 = vpack.c.b16 %v2245, %v2241
        %v2866 = vpack.c.b16 %v2250, %v2246
        %v2867 = vpack.c.b16 %v2251, %v2247
        %v2868 = vpack.c.b16 %v2252, %v2248
        %v2869 = vpack.c.b16 %v2253, %v2249
        %v2870 = vpack.c.b16 %v2258, %v2254
        %v2871 = vpack.c.b16 %v2259, %v2255
        %v2872 = vpack.c.b16 %v2260, %v2256
        %v2873 = vpack.c.b16 %v2261, %v2257
        %v2874 = vpack.c.b16 %v2266, %v2262
        %v2875 = vpack.c.b16 %v2267, %v2263
        %v2876 = vpack.c.b16 %v2268, %v2264
        %v2877 = vpack.c.b16 %v2269, %v2265
        %v2878 = vpack.c.b16 %v2274, %v2270
        %v2879 = vpack.c.b16 %v2275, %v2271
        %v2880 = vpack.c.b16 %v2276, %v2272
        %v2881 = vpack.c.b16 %v2277, %v2273
        %v2882 = vpack.c.b16 %v2282, %v2278
        %v2883 = vpack.c.b16 %v2283, %v2279
        %v2884 = vpack.c.b16 %v2284, %v2280
        %v2885 = vpack.c.b16 %v2285, %v2281
        %v2886 = vpack.c.b16 %v2290, %v2286
        %v2887 = vpack.c.b16 %v2291, %v2287
        %v2888 = vpack.c.b16 %v2292, %v2288
        %v2889 = vpack.c.b16 %v2293, %v2289
        %v2890 = vpack.c.b16 %v2298, %v2294
        %v2891 = vpack.c.b16 %v2299, %v2295
        %v2892 = vpack.c.b16 %v2300, %v2296
        %v2893 = vpack.c.b16 %v2301, %v2297
        %v2894 = vpack.c.b16 %v2306, %v2302
        %v2895 = vpack.c.b16 %v2307, %v2303
        %v2896 = vpack.c.b16 %v2308, %v2304
        %v2897 = vpack.c.b16 %v2309, %v2305
        %v2898 = vpack.c.b16 %v2314, %v2310
        %v2899 = vpack.c.b16 %v2315, %v2311
        %v2900 = vpack.c.b16 %v2316, %v2312
        %v2901 = vpack.c.b16 %v2317, %v2313
        %v2902 = vpack.c.b16 %v2322, %v2318
        %v2903 = vpack.c.b16 %v2323, %v2319
        %v2904 = vpack.c.b16 %v2324, %v2320
        %v2905 = vpack.c.b16 %v2325, %v2321
        %v2906 = vpack.c.b16 %v2330, %v2326
        %v2907 = vpack.c.b16 %v2331, %v2327
        %v2908 = vpack.c.b16 %v2332, %v2328
        %v2909 = vpack.c.b16 %v2333, %v2329
        %v2910 = vpack.c.b16 %v2338, %v2334
        %v2911 = vpack.c.b16 %v2339, %v2335
        %v2912 = vpack.c.b16 %v2340, %v2336
        %v2913 = vpack.c.b16 %v2341, %v2337
        %v2914 = vpack.c.b16 %v2346, %v2342
        %v2915 = vpack.c.b16 %v2347, %v2343
        %v2916 = vpack.c.b16 %v2348, %v2344
        %v2917 = vpack.c.b16 %v2349, %v2345
        %v2918 = vpack.c.b16 %v2354, %v2350
        %v2919 = vpack.c.b16 %v2355, %v2351
        %v2920 = vpack.c.b16 %v2356, %v2352
        %v2921 = vpack.c.b16 %v2357, %v2353
        %v2922 = vpack.c.b16 %v2362, %v2358
        %v2923 = vpack.c.b16 %v2363, %v2359
        %v2924 = vpack.c.b16 %v2364, %v2360
        %v2925 = vpack.c.b16 %v2365, %v2361
        %v2926 = vpack.c.b16 %v2370, %v2366
        %v2927 = vpack.c.b16 %v2371, %v2367
        %v2928 = vpack.c.b16 %v2372, %v2368
        %v2929 = vpack.c.b16 %v2373, %v2369
        %v2930 = vpack.c.b16 %v2378, %v2374
        %v2931 = vpack.c.b16 %v2379, %v2375
        %v2932 = vpack.c.b16 %v2380, %v2376
        %v2933 = vpack.c.b16 %v2381, %v2377
        %v2934 = vpack.c.b16 %v2386, %v2382
        %v2935 = vpack.c.b16 %v2387, %v2383
        %v2936 = vpack.c.b16 %v2388, %v2384
        %v2937 = vpack.c.b16 %v2389, %v2385
        %v2938 = vpack.c.b16 %v2394, %v2390
        %v2939 = vpack.c.b16 %v2395, %v2391
        %v2940 = vpack.c.b16 %v2396, %v2392
        %v2941 = vpack.c.b16 %v2397, %v2393
        %v2942 = vpack.c.b16 %v2402, %v2398
        %v2943 = vpack.c.b16 %v2403, %v2399
        %v2944 = vpack.c.b16 %v2404, %v2400
        %v2945 = vpack.c.b16 %v2405, %v2401
        %v2946 = vpack.c.b16 %v2410, %v2406
        %v2947 = vpack.c.b16 %v2411, %v2407
        %v2948 = vpack.c.b16 %v2412, %v2408
        %v2949 = vpack.c.b16 %v2413, %v2409
        %v2950 = vpack.c.b16 %v2418, %v2414
        %v2951 = vpack.c.b16 %v2419, %v2415
        %v2952 = vpack.c.b16 %v2420, %v2416
        %v2953 = vpack.c.b16 %v2421, %v2417
        %v2954 = vpack.c.b16 %v2426, %v2422
        %v2955 = vpack.c.b16 %v2427, %v2423
        %v2956 = vpack.c.b16 %v2428, %v2424
        %v2957 = vpack.c.b16 %v2429, %v2425
        %v2958 = vpack.c.b16 %v2434, %v2430
        %v2959 = vpack.c.b16 %v2435, %v2431
        %v2960 = vpack.c.b16 %v2436, %v2432
        %v2961 = vpack.c.b16 %v2437, %v2433
        %v2962 = vpack.c.b16 %v2442, %v2438
        %v2963 = vpack.c.b16 %v2443, %v2439
        %v2964 = vpack.c.b16 %v2444, %v2440
        %v2965 = vpack.c.b16 %v2445, %v2441
        %v2966 = vpack.c.b16 %v2450, %v2446
        %v2967 = vpack.c.b16 %v2451, %v2447
        %v2968 = vpack.c.b16 %v2452, %v2448
        %v2969 = vpack.c.b16 %v2453, %v2449
        %v2970 = vpack.c.b16 %v2458, %v2454
        %v2971 = vpack.c.b16 %v2459, %v2455
        %v2972 = vpack.c.b16 %v2460, %v2456
        %v2973 = vpack.c.b16 %v2461, %v2457
        %3486 = vmatprep.subr.bf16.mxu0 %v2491
        %3487 = vmatpush1.bf16.msra.mxu0 %v2490
        %3488 = vmatprep.subr.bf16.mxu0 %v2487
        %3489 = vmatpush1.bf16.msra.mxu0 %v2486
        %3490 = vmatprep.subr.bf16.mxu0 %v2483
        %3491 = vmatpush1.bf16.msra.mxu0 %v2482
        %3492 = vmatprep.subr.bf16.mxu0 %v2479
        %3493 = vmatpush1.bf16.msra.mxu0 %v2478
        %3494 = vmatprep.subr.bf16.mxu0 %v2475
        %3495 = vmatpush1.bf16.msra.mxu0 %v2474
        %3496 = vmatprep.subr.bf16.mxu0 %v2471
        %3497 = vmatpush1.bf16.msra.mxu0 %v2470
        %3498 = vmatprep.subr.bf16.mxu0 %v2467
        %3499 = vmatpush1.bf16.msra.mxu0 %v2466
        %3500 = vmatprep.subr.bf16.mxu0 %v2463
        %3501 = vmatpush1.bf16.msra.mxu0 %v2462
        %3502 = vmatprep.subr.bf16.mxu0 %v2523
        %3503 = vmatpush2.bf16.msra.mxu0 %v2522
        %3504 = vmatprep.subr.bf16.mxu0 %v2519
        %3505 = vmatpush2.bf16.msra.mxu0 %v2518
        %3506 = vmatprep.subr.bf16.mxu0 %v2515
        %3507 = vmatpush2.bf16.msra.mxu0 %v2514
        %3508 = vmatprep.subr.bf16.mxu0 %v2511
        %3509 = vmatpush2.bf16.msra.mxu0 %v2510
        %3510 = vmatprep.subr.bf16.mxu0 %v2507
        %3511 = vmatpush2.bf16.msra.mxu0 %v2506
        %3512 = vmatprep.subr.bf16.mxu0 %v2503
        %3513 = vmatpush2.bf16.msra.mxu0 %v2502
        %3514 = vmatprep.subr.bf16.mxu0 %v2499
        %3515 = vmatpush2.bf16.msra.mxu0 %v2498
        %3516 = vmatprep.subr.bf16.mxu0 %v2495
        %3517 = vmatpush2.bf16.msra.mxu0 %v2494
        %3518 = vmatprep.mubr.bf16.mxu0 %v849
        %3519 = vmatmul.mubr.bf16.gmra.mxu0 %v835
        %v3520 = vpop.f32.mrf.mxu0
        %v3521 = vadd.f32 0.0, %v3520
        %v3522 = vpop.f32.mrf.mxu0
        %v3523 = vadd.f32 0.0, %v3522
        %v3524 = vpop.f32.mrf.mxu0
        %v3525 = vpop.f32.mrf.mxu0
        %3526 = vdwg.mxu0
        %3527 = vmatprep.subr.bf16.mxu0 %v2555
        %3528 = vmatpush1.bf16.msra.mxu0 %v2554
        %3529 = vmatprep.subr.bf16.mxu0 %v2551
        %3530 = vmatpush1.bf16.msra.mxu0 %v2550
        %3531 = vmatprep.subr.bf16.mxu0 %v2547
        %3532 = vmatpush1.bf16.msra.mxu0 %v2546
        %3533 = vmatprep.subr.bf16.mxu0 %v2543
        %3534 = vmatpush1.bf16.msra.mxu0 %v2542
        %3535 = vmatprep.subr.bf16.mxu0 %v2539
        %3536 = vmatpush1.bf16.msra.mxu0 %v2538
        %3537 = vmatprep.subr.bf16.mxu0 %v2535
        %3538 = vmatpush1.bf16.msra.mxu0 %v2534
        %3539 = vmatprep.subr.bf16.mxu0 %v2531
        %3540 = vmatpush1.bf16.msra.mxu0 %v2530
        %3541 = vmatprep.subr.bf16.mxu0 %v2527
        %3542 = vmatpush1.bf16.msra.mxu0 %v2526
        %3543 = vmatprep.subr.bf16.mxu0 %v2587
        %3544 = vmatpush2.bf16.msra.mxu0 %v2586
        %3545 = vmatprep.subr.bf16.mxu0 %v2583
        %3546 = vmatpush2.bf16.msra.mxu0 %v2582
        %3547 = vmatprep.subr.bf16.mxu0 %v2579
        %3548 = vmatpush2.bf16.msra.mxu0 %v2578
        %3549 = vmatprep.subr.bf16.mxu0 %v2575
        %3550 = vmatpush2.bf16.msra.mxu0 %v2574
        %3551 = vmatprep.subr.bf16.mxu0 %v2571
        %3552 = vmatpush2.bf16.msra.mxu0 %v2570
        %3553 = vmatprep.subr.bf16.mxu0 %v2567
        %3554 = vmatpush2.bf16.msra.mxu0 %v2566
        %3555 = vmatprep.subr.bf16.mxu0 %v2563
        %3556 = vmatpush2.bf16.msra.mxu0 %v2562
        %3557 = vmatprep.subr.bf16.mxu0 %v2559
        %3558 = vmatpush2.bf16.msra.mxu0 %v2558
        %3559 = vmatprep.mubr.bf16.mxu0 %v859
        %3560 = vmatmul.mubr.bf16.gmra.mxu0 %v857
        %v3561 = vpop.f32.mrf.mxu0
        %v3562 = vadd.f32 %v3521, %v3561
        %v3563 = vpop.f32.mrf.mxu0
        %v3564 = vadd.f32 %v3523, %v3563
        %v3565 = vpop.f32.mrf.mxu0
        %v3566 = vpop.f32.mrf.mxu0
        %3567 = vdwg.mxu0
        %3568 = vmatprep.subr.bf16.mxu0 %v2619
        %3569 = vmatpush1.bf16.msra.mxu0 %v2618
        %3570 = vmatprep.subr.bf16.mxu0 %v2615
        %3571 = vmatpush1.bf16.msra.mxu0 %v2614
        %3572 = vmatprep.subr.bf16.mxu0 %v2611
        %3573 = vmatpush1.bf16.msra.mxu0 %v2610
        %3574 = vmatprep.subr.bf16.mxu0 %v2607
        %3575 = vmatpush1.bf16.msra.mxu0 %v2606
        %3576 = vmatprep.subr.bf16.mxu0 %v2603
        %3577 = vmatpush1.bf16.msra.mxu0 %v2602
        %3578 = vmatprep.subr.bf16.mxu0 %v2599
        %3579 = vmatpush1.bf16.msra.mxu0 %v2598
        %3580 = vmatprep.subr.bf16.mxu0 %v2595
        %3581 = vmatpush1.bf16.msra.mxu0 %v2594
        %3582 = vmatprep.subr.bf16.mxu0 %v2591
        %3583 = vmatpush1.bf16.msra.mxu0 %v2590
        %3584 = vmatprep.subr.bf16.mxu0 %v2651
        %3585 = vmatpush2.bf16.msra.mxu0 %v2650
        %3586 = vmatprep.subr.bf16.mxu0 %v2647
        %3587 = vmatpush2.bf16.msra.mxu0 %v2646
        %3588 = vmatprep.subr.bf16.mxu0 %v2643
        %3589 = vmatpush2.bf16.msra.mxu0 %v2642
        %3590 = vmatprep.subr.bf16.mxu0 %v2639
        %3591 = vmatpush2.bf16.msra.mxu0 %v2638
        %3592 = vmatprep.subr.bf16.mxu0 %v2635
        %3593 = vmatpush2.bf16.msra.mxu0 %v2634
        %3594 = vmatprep.subr.bf16.mxu0 %v2631
        %3595 = vmatpush2.bf16.msra.mxu0 %v2630
        %3596 = vmatprep.subr.bf16.mxu0 %v2627
        %3597 = vmatpush2.bf16.msra.mxu0 %v2626
        %3598 = vmatprep.subr.bf16.mxu0 %v2623
        %3599 = vmatpush2.bf16.msra.mxu0 %v2622
        %3600 = vmatprep.mubr.bf16.mxu0 %v856
        %3601 = vmatmul.mubr.bf16.gmra.mxu0 %v842
        %v3602 = vpop.f32.mrf.mxu0
        %v3603 = vadd.f32 %v3562, %v3602
        %v3604 = vpop.f32.mrf.mxu0
        %v3605 = vadd.f32 %v3564, %v3604
        %v3606 = vpop.f32.mrf.mxu0
        %v3607 = vpop.f32.mrf.mxu0
        %3608 = vdwg.mxu0
        %3609 = vmatprep.subr.bf16.mxu0 %v2683
        %3610 = vmatpush1.bf16.msra.mxu0 %v2682
        %3611 = vmatprep.subr.bf16.mxu0 %v2679
        %3612 = vmatpush1.bf16.msra.mxu0 %v2678
        %3613 = vmatprep.subr.bf16.mxu0 %v2675
        %3614 = vmatpush1.bf16.msra.mxu0 %v2674
        %3615 = vmatprep.subr.bf16.mxu0 %v2671
        %3616 = vmatpush1.bf16.msra.mxu0 %v2670
        %3617 = vmatprep.subr.bf16.mxu0 %v2667
        %3618 = vmatpush1.bf16.msra.mxu0 %v2666
        %3619 = vmatprep.subr.bf16.mxu0 %v2663
        %3620 = vmatpush1.bf16.msra.mxu0 %v2662
        %3621 = vmatprep.subr.bf16.mxu0 %v2659
        %3622 = vmatpush1.bf16.msra.mxu0 %v2658
        %3623 = vmatprep.subr.bf16.mxu0 %v2655
        %3624 = vmatpush1.bf16.msra.mxu0 %v2654
        %3625 = vmatprep.subr.bf16.mxu0 %v2715
        %3626 = vmatpush2.bf16.msra.mxu0 %v2714
        %3627 = vmatprep.subr.bf16.mxu0 %v2711
        %3628 = vmatpush2.bf16.msra.mxu0 %v2710
        %3629 = vmatprep.subr.bf16.mxu0 %v2707
        %3630 = vmatpush2.bf16.msra.mxu0 %v2706
        %3631 = vmatprep.subr.bf16.mxu0 %v2703
        %3632 = vmatpush2.bf16.msra.mxu0 %v2702
        %3633 = vmatprep.subr.bf16.mxu0 %v2699
        %3634 = vmatpush2.bf16.msra.mxu0 %v2698
        %3635 = vmatprep.subr.bf16.mxu0 %v2695
        %3636 = vmatpush2.bf16.msra.mxu0 %v2694
        %3637 = vmatprep.subr.bf16.mxu0 %v2691
        %3638 = vmatpush2.bf16.msra.mxu0 %v2690
        %3639 = vmatprep.subr.bf16.mxu0 %v2687
        %3640 = vmatpush2.bf16.msra.mxu0 %v2686
        %3641 = vmatprep.mubr.bf16.mxu0 %v860
        %3642 = vmatmul.mubr.bf16.gmra.mxu0 %v858
        %v3643 = vpop.f32.mrf.mxu0
        %v3644 = vadd.f32 %v3603, %v3643
        %v3645 = vpop.f32.mrf.mxu0
        %v3646 = vadd.f32 %v3605, %v3645
        %v3647 = vpop.f32.mrf.mxu0
        %v3648 = vpop.f32.mrf.mxu0
        %3649 = vdwg.mxu0
        %3650 = vmatprep.subr.bf16.mxu0 %v2747
        %3651 = vmatpush1.bf16.msra.mxu0 %v2746
        %3652 = vmatprep.subr.bf16.mxu0 %v2743
        %3653 = vmatpush1.bf16.msra.mxu0 %v2742
        %3654 = vmatprep.subr.bf16.mxu0 %v2739
        %3655 = vmatpush1.bf16.msra.mxu0 %v2738
        %3656 = vmatprep.subr.bf16.mxu0 %v2735
        %3657 = vmatpush1.bf16.msra.mxu0 %v2734
        %3658 = vmatprep.subr.bf16.mxu0 %v2731
        %3659 = vmatpush1.bf16.msra.mxu0 %v2730
        %3660 = vmatprep.subr.bf16.mxu0 %v2727
        %3661 = vmatpush1.bf16.msra.mxu0 %v2726
        %3662 = vmatprep.subr.bf16.mxu0 %v2723
        %3663 = vmatpush1.bf16.msra.mxu0 %v2722
        %3664 = vmatprep.subr.bf16.mxu0 %v2719
        %3665 = vmatpush1.bf16.msra.mxu0 %v2718
        %3666 = vmatprep.subr.bf16.mxu0 %v2779
        %3667 = vmatpush2.bf16.msra.mxu0 %v2778
        %3668 = vmatprep.subr.bf16.mxu0 %v2775
        %3669 = vmatpush2.bf16.msra.mxu0 %v2774
        %3670 = vmatprep.subr.bf16.mxu0 %v2771
        %3671 = vmatpush2.bf16.msra.mxu0 %v2770
        %3672 = vmatprep.subr.bf16.mxu0 %v2767
        %3673 = vmatpush2.bf16.msra.mxu0 %v2766
        %3674 = vmatprep.subr.bf16.mxu0 %v2763
        %3675 = vmatpush2.bf16.msra.mxu0 %v2762
        %3676 = vmatprep.subr.bf16.mxu0 %v2759
        %3677 = vmatpush2.bf16.msra.mxu0 %v2758
        %3678 = vmatprep.subr.bf16.mxu0 %v2755
        %3679 = vmatpush2.bf16.msra.mxu0 %v2754
        %3680 = vmatprep.subr.bf16.mxu0 %v2751
        %3681 = vmatpush2.bf16.msra.mxu0 %v2750
        %3682 = vmatprep.mubr.bf16.mxu0 %v898
        %3683 = vmatmul.mubr.bf16.gmra.mxu0 %v884
        %v3684 = vpop.f32.mrf.mxu0
        %v3685 = vadd.f32 %v3644, %v3684
        %v3686 = vpop.f32.mrf.mxu0
        %v3687 = vadd.f32 %v3646, %v3686
        %v3688 = vpop.f32.mrf.mxu0
        %v3689 = vpop.f32.mrf.mxu0
        %3690 = vdwg.mxu0
        %3691 = vmatprep.subr.bf16.mxu0 %v2811
        %3692 = vmatpush1.bf16.msra.mxu0 %v2810
        %3693 = vmatprep.subr.bf16.mxu0 %v2807
        %3694 = vmatpush1.bf16.msra.mxu0 %v2806
        %3695 = vmatprep.subr.bf16.mxu0 %v2803
        %3696 = vmatpush1.bf16.msra.mxu0 %v2802
        %3697 = vmatprep.subr.bf16.mxu0 %v2799
        %3698 = vmatpush1.bf16.msra.mxu0 %v2798
        %3699 = vmatprep.subr.bf16.mxu0 %v2795
        %3700 = vmatpush1.bf16.msra.mxu0 %v2794
        %3701 = vmatprep.subr.bf16.mxu0 %v2791
        %3702 = vmatpush1.bf16.msra.mxu0 %v2790
        %3703 = vmatprep.subr.bf16.mxu0 %v2787
        %3704 = vmatpush1.bf16.msra.mxu0 %v2786
        %3705 = vmatprep.subr.bf16.mxu0 %v2783
        %3706 = vmatpush1.bf16.msra.mxu0 %v2782
        %3707 = vmatprep.subr.bf16.mxu0 %v2843
        %3708 = vmatpush2.bf16.msra.mxu0 %v2842
        %3709 = vmatprep.subr.bf16.mxu0 %v2839
        %3710 = vmatpush2.bf16.msra.mxu0 %v2838
        %3711 = vmatprep.subr.bf16.mxu0 %v2835
        %3712 = vmatpush2.bf16.msra.mxu0 %v2834
        %3713 = vmatprep.subr.bf16.mxu0 %v2831
        %3714 = vmatpush2.bf16.msra.mxu0 %v2830
        %3715 = vmatprep.subr.bf16.mxu0 %v2827
        %3716 = vmatpush2.bf16.msra.mxu0 %v2826
        %3717 = vmatprep.subr.bf16.mxu0 %v2823
        %3718 = vmatpush2.bf16.msra.mxu0 %v2822
        %3719 = vmatprep.subr.bf16.mxu0 %v2819
        %3720 = vmatpush2.bf16.msra.mxu0 %v2818
        %3721 = vmatprep.subr.bf16.mxu0 %v2815
        %3722 = vmatpush2.bf16.msra.mxu0 %v2814
        %3723 = vmatprep.mubr.bf16.mxu0 %v908
        %3724 = vmatmul.mubr.bf16.gmra.mxu0 %v906
        %v3725 = vpop.f32.mrf.mxu0
        %v3726 = vadd.f32 %v3685, %v3725
        %v3727 = vpop.f32.mrf.mxu0
        %v3728 = vadd.f32 %v3687, %v3727
        %v3729 = vpop.f32.mrf.mxu0
        %v3730 = vpop.f32.mrf.mxu0
        %3731 = vdwg.mxu0
        %3732 = vmatprep.subr.bf16.mxu0 %v2875
        %3733 = vmatpush1.bf16.msra.mxu0 %v2874
        %3734 = vmatprep.subr.bf16.mxu0 %v2871
        %3735 = vmatpush1.bf16.msra.mxu0 %v2870
        %3736 = vmatprep.subr.bf16.mxu0 %v2867
        %3737 = vmatpush1.bf16.msra.mxu0 %v2866
        %3738 = vmatprep.subr.bf16.mxu0 %v2863
        %3739 = vmatpush1.bf16.msra.mxu0 %v2862
        %3740 = vmatprep.subr.bf16.mxu0 %v2859
        %3741 = vmatpush1.bf16.msra.mxu0 %v2858
        %3742 = vmatprep.subr.bf16.mxu0 %v2855
        %3743 = vmatpush1.bf16.msra.mxu0 %v2854
        %3744 = vmatprep.subr.bf16.mxu0 %v2851
        %3745 = vmatpush1.bf16.msra.mxu0 %v2850
        %3746 = vmatprep.subr.bf16.mxu0 %v2847
        %3747 = vmatpush1.bf16.msra.mxu0 %v2846
        %3748 = vmatprep.subr.bf16.mxu0 %v2907
        %3749 = vmatpush2.bf16.msra.mxu0 %v2906
        %3750 = vmatprep.subr.bf16.mxu0 %v2903
        %3751 = vmatpush2.bf16.msra.mxu0 %v2902
        %3752 = vmatprep.subr.bf16.mxu0 %v2899
        %3753 = vmatpush2.bf16.msra.mxu0 %v2898
        %3754 = vmatprep.subr.bf16.mxu0 %v2895
        %3755 = vmatpush2.bf16.msra.mxu0 %v2894
        %3756 = vmatprep.subr.bf16.mxu0 %v2891
        %3757 = vmatpush2.bf16.msra.mxu0 %v2890
        %3758 = vmatprep.subr.bf16.mxu0 %v2887
        %3759 = vmatpush2.bf16.msra.mxu0 %v2886
        %3760 = vmatprep.subr.bf16.mxu0 %v2883
        %3761 = vmatpush2.bf16.msra.mxu0 %v2882
        %3762 = vmatprep.subr.bf16.mxu0 %v2879
        %3763 = vmatpush2.bf16.msra.mxu0 %v2878
        %3764 = vmatprep.mubr.bf16.mxu0 %v905
        %3765 = vmatmul.mubr.bf16.gmra.mxu0 %v891
        %v3766 = vpop.f32.mrf.mxu0
        %v3767 = vadd.f32 %v3726, %v3766
        %v3768 = vpop.f32.mrf.mxu0
        %v3769 = vadd.f32 %v3728, %v3768
        %v3770 = vpop.f32.mrf.mxu0
        %v3771 = vpop.f32.mrf.mxu0
        %3772 = vdwg.mxu0
        %3773 = vmatprep.subr.bf16.mxu0 %v2939
        %3774 = vmatpush1.bf16.msra.mxu0 %v2938
        %3775 = vmatprep.subr.bf16.mxu0 %v2935
        %3776 = vmatpush1.bf16.msra.mxu0 %v2934
        %3777 = vmatprep.subr.bf16.mxu0 %v2931
        %3778 = vmatpush1.bf16.msra.mxu0 %v2930
        %3779 = vmatprep.subr.bf16.mxu0 %v2927
        %3780 = vmatpush1.bf16.msra.mxu0 %v2926
        %3781 = vmatprep.subr.bf16.mxu0 %v2923
        %3782 = vmatpush1.bf16.msra.mxu0 %v2922
        %3783 = vmatprep.subr.bf16.mxu0 %v2919
        %3784 = vmatpush1.bf16.msra.mxu0 %v2918
        %3785 = vmatprep.subr.bf16.mxu0 %v2915
        %3786 = vmatpush1.bf16.msra.mxu0 %v2914
        %3787 = vmatprep.subr.bf16.mxu0 %v2911
        %3788 = vmatpush1.bf16.msra.mxu0 %v2910
        %3789 = vmatprep.subr.bf16.mxu0 %v2971
        %3790 = vmatpush2.bf16.msra.mxu0 %v2970
        %3791 = vmatprep.subr.bf16.mxu0 %v2967
        %3792 = vmatpush2.bf16.msra.mxu0 %v2966
        %3793 = vmatprep.subr.bf16.mxu0 %v2963
        %3794 = vmatpush2.bf16.msra.mxu0 %v2962
        %3795 = vmatprep.subr.bf16.mxu0 %v2959
        %3796 = vmatpush2.bf16.msra.mxu0 %v2958
        %3797 = vmatprep.subr.bf16.mxu0 %v2955
        %3798 = vmatpush2.bf16.msra.mxu0 %v2954
        %3799 = vmatprep.subr.bf16.mxu0 %v2951
        %3800 = vmatpush2.bf16.msra.mxu0 %v2950
        %3801 = vmatprep.subr.bf16.mxu0 %v2947
        %3802 = vmatpush2.bf16.msra.mxu0 %v2946
        %3803 = vmatprep.subr.bf16.mxu0 %v2943
        %3804 = vmatpush2.bf16.msra.mxu0 %v2942
        %3805 = vmatprep.mubr.bf16.mxu0 %v909
        %3806 = vmatmul.mubr.bf16.gmra.mxu0 %v907
        %v3807 = vpop.f32.mrf.mxu0
        %v3808 = vadd.f32 %v3767, %v3807
        %v3809 = vpop.f32.mrf.mxu0
        %v3810 = vadd.f32 %v3769, %v3809
        %v3811 = vpop.f32.mrf.mxu0
        %v3812 = vpop.f32.mrf.mxu0
        %3813 = vdwg.mxu0
        %3814 = vmatprep.subr.bf16.mxu0 %v2493
        %3815 = vmatpush1.bf16.msra.mxu0 %v2492
        %3816 = vmatprep.subr.bf16.mxu0 %v2489
        %3817 = vmatpush1.bf16.msra.mxu0 %v2488
        %3818 = vmatprep.subr.bf16.mxu0 %v2485
        %3819 = vmatpush1.bf16.msra.mxu0 %v2484
        %3820 = vmatprep.subr.bf16.mxu0 %v2481
        %3821 = vmatpush1.bf16.msra.mxu0 %v2480
        %3822 = vmatprep.subr.bf16.mxu0 %v2477
        %3823 = vmatpush1.bf16.msra.mxu0 %v2476
        %3824 = vmatprep.subr.bf16.mxu0 %v2473
        %3825 = vmatpush1.bf16.msra.mxu0 %v2472
        %3826 = vmatprep.subr.bf16.mxu0 %v2469
        %3827 = vmatpush1.bf16.msra.mxu0 %v2468
        %3828 = vmatprep.subr.bf16.mxu0 %v2465
        %3829 = vmatpush1.bf16.msra.mxu0 %v2464
        %3830 = vmatprep.subr.bf16.mxu0 %v2525
        %3831 = vmatpush2.bf16.msra.mxu0 %v2524
        %3832 = vmatprep.subr.bf16.mxu0 %v2521
        %3833 = vmatpush2.bf16.msra.mxu0 %v2520
        %3834 = vmatprep.subr.bf16.mxu0 %v2517
        %3835 = vmatpush2.bf16.msra.mxu0 %v2516
        %3836 = vmatprep.subr.bf16.mxu0 %v2513
        %3837 = vmatpush2.bf16.msra.mxu0 %v2512
        %3838 = vmatprep.subr.bf16.mxu0 %v2509
        %3839 = vmatpush2.bf16.msra.mxu0 %v2508
        %3840 = vmatprep.subr.bf16.mxu0 %v2505
        %3841 = vmatpush2.bf16.msra.mxu0 %v2504
        %3842 = vmatprep.subr.bf16.mxu0 %v2501
        %3843 = vmatpush2.bf16.msra.mxu0 %v2500
        %3844 = vmatprep.subr.bf16.mxu0 %v2497
        %3845 = vmatpush2.bf16.msra.mxu0 %v2496
        %3846 = vmatprep.mubr.bf16.mxu0 %v849
        %3847 = vmatmul.mubr.bf16.gmra.mxu0 %v835
        %v3848 = vpop.f32.mrf.mxu0
        %v3849 = vadd.f32 0.0, %v3848
        %v3850 = vpop.f32.mrf.mxu0
        %v3851 = vadd.f32 0.0, %v3850
        %v3852 = vpop.f32.mrf.mxu0
        %v3853 = vpop.f32.mrf.mxu0
        %3854 = vdwg.mxu0
        %3855 = vmatprep.subr.bf16.mxu0 %v2557
        %3856 = vmatpush1.bf16.msra.mxu0 %v2556
        %3857 = vmatprep.subr.bf16.mxu0 %v2553
        %3858 = vmatpush1.bf16.msra.mxu0 %v2552
        %3859 = vmatprep.subr.bf16.mxu0 %v2549
        %3860 = vmatpush1.bf16.msra.mxu0 %v2548
        %3861 = vmatprep.subr.bf16.mxu0 %v2545
        %3862 = vmatpush1.bf16.msra.mxu0 %v2544
        %3863 = vmatprep.subr.bf16.mxu0 %v2541
        %3864 = vmatpush1.bf16.msra.mxu0 %v2540
        %3865 = vmatprep.subr.bf16.mxu0 %v2537
        %3866 = vmatpush1.bf16.msra.mxu0 %v2536
        %3867 = vmatprep.subr.bf16.mxu0 %v2533
        %3868 = vmatpush1.bf16.msra.mxu0 %v2532
        %3869 = vmatprep.subr.bf16.mxu0 %v2529
        %3870 = vmatpush1.bf16.msra.mxu0 %v2528
        %3871 = vmatprep.subr.bf16.mxu0 %v2589
        %3872 = vmatpush2.bf16.msra.mxu0 %v2588
        %3873 = vmatprep.subr.bf16.mxu0 %v2585
        %3874 = vmatpush2.bf16.msra.mxu0 %v2584
        %3875 = vmatprep.subr.bf16.mxu0 %v2581
        %3876 = vmatpush2.bf16.msra.mxu0 %v2580
        %3877 = vmatprep.subr.bf16.mxu0 %v2577
        %3878 = vmatpush2.bf16.msra.mxu0 %v2576
        %3879 = vmatprep.subr.bf16.mxu0 %v2573
        %3880 = vmatpush2.bf16.msra.mxu0 %v2572
        %3881 = vmatprep.subr.bf16.mxu0 %v2569
        %3882 = vmatpush2.bf16.msra.mxu0 %v2568
        %3883 = vmatprep.subr.bf16.mxu0 %v2565
        %3884 = vmatpush2.bf16.msra.mxu0 %v2564
        %3885 = vmatprep.subr.bf16.mxu0 %v2561
        %3886 = vmatpush2.bf16.msra.mxu0 %v2560
        %3887 = vmatprep.mubr.bf16.mxu0 %v859
        %3888 = vmatmul.mubr.bf16.gmra.mxu0 %v857
        %v3889 = vpop.f32.mrf.mxu0
        %v3890 = vadd.f32 %v3849, %v3889
        %v3891 = vpop.f32.mrf.mxu0
        %v3892 = vadd.f32 %v3851, %v3891
        %v3893 = vpop.f32.mrf.mxu0
        %v3894 = vpop.f32.mrf.mxu0
        %3895 = vdwg.mxu0
        %3896 = vmatprep.subr.bf16.mxu0 %v2621
        %3897 = vmatpush1.bf16.msra.mxu0 %v2620
        %3898 = vmatprep.subr.bf16.mxu0 %v2617
        %3899 = vmatpush1.bf16.msra.mxu0 %v2616
        %3900 = vmatprep.subr.bf16.mxu0 %v2613
        %3901 = vmatpush1.bf16.msra.mxu0 %v2612
        %3902 = vmatprep.subr.bf16.mxu0 %v2609
        %3903 = vmatpush1.bf16.msra.mxu0 %v2608
        %3904 = vmatprep.subr.bf16.mxu0 %v2605
        %3905 = vmatpush1.bf16.msra.mxu0 %v2604
        %3906 = vmatprep.subr.bf16.mxu0 %v2601
        %3907 = vmatpush1.bf16.msra.mxu0 %v2600
        %3908 = vmatprep.subr.bf16.mxu0 %v2597
        %3909 = vmatpush1.bf16.msra.mxu0 %v2596
        %3910 = vmatprep.subr.bf16.mxu0 %v2593
        %3911 = vmatpush1.bf16.msra.mxu0 %v2592
        %3912 = vmatprep.subr.bf16.mxu0 %v2653
        %3913 = vmatpush2.bf16.msra.mxu0 %v2652
        %3914 = vmatprep.subr.bf16.mxu0 %v2649
        %3915 = vmatpush2.bf16.msra.mxu0 %v2648
        %3916 = vmatprep.subr.bf16.mxu0 %v2645
        %3917 = vmatpush2.bf16.msra.mxu0 %v2644
        %3918 = vmatprep.subr.bf16.mxu0 %v2641
        %3919 = vmatpush2.bf16.msra.mxu0 %v2640
        %3920 = vmatprep.subr.bf16.mxu0 %v2637
        %3921 = vmatpush2.bf16.msra.mxu0 %v2636
        %3922 = vmatprep.subr.bf16.mxu0 %v2633
        %3923 = vmatpush2.bf16.msra.mxu0 %v2632
        %3924 = vmatprep.subr.bf16.mxu0 %v2629
        %3925 = vmatpush2.bf16.msra.mxu0 %v2628
        %3926 = vmatprep.subr.bf16.mxu0 %v2625
        %3927 = vmatpush2.bf16.msra.mxu0 %v2624
        %3928 = vmatprep.mubr.bf16.mxu0 %v856
        %3929 = vmatmul.mubr.bf16.gmra.mxu0 %v842
        %v3930 = vpop.f32.mrf.mxu0
        %v3931 = vadd.f32 %v3890, %v3930
        %v3932 = vpop.f32.mrf.mxu0
        %v3933 = vadd.f32 %v3892, %v3932
        %v3934 = vpop.f32.mrf.mxu0
        %v3935 = vpop.f32.mrf.mxu0
        %3936 = vdwg.mxu0
        %3937 = vmatprep.subr.bf16.mxu0 %v2685
        %3938 = vmatpush1.bf16.msra.mxu0 %v2684
        %3939 = vmatprep.subr.bf16.mxu0 %v2681
        %3940 = vmatpush1.bf16.msra.mxu0 %v2680
        %3941 = vmatprep.subr.bf16.mxu0 %v2677
        %3942 = vmatpush1.bf16.msra.mxu0 %v2676
        %3943 = vmatprep.subr.bf16.mxu0 %v2673
        %3944 = vmatpush1.bf16.msra.mxu0 %v2672
        %3945 = vmatprep.subr.bf16.mxu0 %v2669
        %3946 = vmatpush1.bf16.msra.mxu0 %v2668
        %3947 = vmatprep.subr.bf16.mxu0 %v2665
        %3948 = vmatpush1.bf16.msra.mxu0 %v2664
        %3949 = vmatprep.subr.bf16.mxu0 %v2661
        %3950 = vmatpush1.bf16.msra.mxu0 %v2660
        %3951 = vmatprep.subr.bf16.mxu0 %v2657
        %3952 = vmatpush1.bf16.msra.mxu0 %v2656
        %3953 = vmatprep.subr.bf16.mxu0 %v2717
        %3954 = vmatpush2.bf16.msra.mxu0 %v2716
        %3955 = vmatprep.subr.bf16.mxu0 %v2713
        %3956 = vmatpush2.bf16.msra.mxu0 %v2712
        %3957 = vmatprep.subr.bf16.mxu0 %v2709
        %3958 = vmatpush2.bf16.msra.mxu0 %v2708
        %3959 = vmatprep.subr.bf16.mxu0 %v2705
        %3960 = vmatpush2.bf16.msra.mxu0 %v2704
        %3961 = vmatprep.subr.bf16.mxu0 %v2701
        %3962 = vmatpush2.bf16.msra.mxu0 %v2700
        %3963 = vmatprep.subr.bf16.mxu0 %v2697
        %3964 = vmatpush2.bf16.msra.mxu0 %v2696
        %3965 = vmatprep.subr.bf16.mxu0 %v2693
        %3966 = vmatpush2.bf16.msra.mxu0 %v2692
        %3967 = vmatprep.subr.bf16.mxu0 %v2689
        %3968 = vmatpush2.bf16.msra.mxu0 %v2688
        %3969 = vmatprep.mubr.bf16.mxu0 %v860
        %3970 = vmatmul.mubr.bf16.gmra.mxu0 %v858
        %v3971 = vpop.f32.mrf.mxu0
        %v3972 = vadd.f32 %v3931, %v3971
        %v3973 = vpop.f32.mrf.mxu0
        %v3974 = vadd.f32 %v3933, %v3973
        %v3975 = vpop.f32.mrf.mxu0
        %v3976 = vpop.f32.mrf.mxu0
        %3977 = vdwg.mxu0
        %3978 = vmatprep.subr.bf16.mxu0 %v2749
        %3979 = vmatpush1.bf16.msra.mxu0 %v2748
        %3980 = vmatprep.subr.bf16.mxu0 %v2745
        %3981 = vmatpush1.bf16.msra.mxu0 %v2744
        %3982 = vmatprep.subr.bf16.mxu0 %v2741
        %3983 = vmatpush1.bf16.msra.mxu0 %v2740
        %3984 = vmatprep.subr.bf16.mxu0 %v2737
        %3985 = vmatpush1.bf16.msra.mxu0 %v2736
        %3986 = vmatprep.subr.bf16.mxu0 %v2733
        %3987 = vmatpush1.bf16.msra.mxu0 %v2732
        %3988 = vmatprep.subr.bf16.mxu0 %v2729
        %3989 = vmatpush1.bf16.msra.mxu0 %v2728
        %3990 = vmatprep.subr.bf16.mxu0 %v2725
        %3991 = vmatpush1.bf16.msra.mxu0 %v2724
        %3992 = vmatprep.subr.bf16.mxu0 %v2721
        %3993 = vmatpush1.bf16.msra.mxu0 %v2720
        %3994 = vmatprep.subr.bf16.mxu0 %v2781
        %3995 = vmatpush2.bf16.msra.mxu0 %v2780
        %3996 = vmatprep.subr.bf16.mxu0 %v2777
        %3997 = vmatpush2.bf16.msra.mxu0 %v2776
        %3998 = vmatprep.subr.bf16.mxu0 %v2773
        %3999 = vmatpush2.bf16.msra.mxu0 %v2772
        %4000 = vmatprep.subr.bf16.mxu0 %v2769
        %4001 = vmatpush2.bf16.msra.mxu0 %v2768
        %4002 = vmatprep.subr.bf16.mxu0 %v2765
        %4003 = vmatpush2.bf16.msra.mxu0 %v2764
        %4004 = vmatprep.subr.bf16.mxu0 %v2761
        %4005 = vmatpush2.bf16.msra.mxu0 %v2760
        %4006 = vmatprep.subr.bf16.mxu0 %v2757
        %4007 = vmatpush2.bf16.msra.mxu0 %v2756
        %4008 = vmatprep.subr.bf16.mxu0 %v2753
        %4009 = vmatpush2.bf16.msra.mxu0 %v2752
        %4010 = vmatprep.mubr.bf16.mxu0 %v898
        %4011 = vmatmul.mubr.bf16.gmra.mxu0 %v884
        %v4012 = vpop.f32.mrf.mxu0
        %v4013 = vadd.f32 %v3972, %v4012
        %v4014 = vpop.f32.mrf.mxu0
        %v4015 = vadd.f32 %v3974, %v4014
        %v4016 = vpop.f32.mrf.mxu0
        %v4017 = vpop.f32.mrf.mxu0
        %4018 = vdwg.mxu0
        %4019 = vmatprep.subr.bf16.mxu0 %v2813
        %4020 = vmatpush1.bf16.msra.mxu0 %v2812
        %4021 = vmatprep.subr.bf16.mxu0 %v2809
        %4022 = vmatpush1.bf16.msra.mxu0 %v2808
        %4023 = vmatprep.subr.bf16.mxu0 %v2805
        %4024 = vmatpush1.bf16.msra.mxu0 %v2804
        %4025 = vmatprep.subr.bf16.mxu0 %v2801
        %4026 = vmatpush1.bf16.msra.mxu0 %v2800
        %4027 = vmatprep.subr.bf16.mxu0 %v2797
        %4028 = vmatpush1.bf16.msra.mxu0 %v2796
        %4029 = vmatprep.subr.bf16.mxu0 %v2793
        %4030 = vmatpush1.bf16.msra.mxu0 %v2792
        %4031 = vmatprep.subr.bf16.mxu0 %v2789
        %4032 = vmatpush1.bf16.msra.mxu0 %v2788
        %4033 = vmatprep.subr.bf16.mxu0 %v2785
        %4034 = vmatpush1.bf16.msra.mxu0 %v2784
        %4035 = vmatprep.subr.bf16.mxu0 %v2845
        %4036 = vmatpush2.bf16.msra.mxu0 %v2844
        %4037 = vmatprep.subr.bf16.mxu0 %v2841
        %4038 = vmatpush2.bf16.msra.mxu0 %v2840
        %4039 = vmatprep.subr.bf16.mxu0 %v2837
        %4040 = vmatpush2.bf16.msra.mxu0 %v2836
        %4041 = vmatprep.subr.bf16.mxu0 %v2833
        %4042 = vmatpush2.bf16.msra.mxu0 %v2832
        %4043 = vmatprep.subr.bf16.mxu0 %v2829
        %4044 = vmatpush2.bf16.msra.mxu0 %v2828
        %4045 = vmatprep.subr.bf16.mxu0 %v2825
        %4046 = vmatpush2.bf16.msra.mxu0 %v2824
        %4047 = vmatprep.subr.bf16.mxu0 %v2821
        %4048 = vmatpush2.bf16.msra.mxu0 %v2820
        %4049 = vmatprep.subr.bf16.mxu0 %v2817
        %4050 = vmatpush2.bf16.msra.mxu0 %v2816
        %4051 = vmatprep.mubr.bf16.mxu0 %v908
        %4052 = vmatmul.mubr.bf16.gmra.mxu0 %v906
        %v4053 = vpop.f32.mrf.mxu0
        %v4054 = vadd.f32 %v4013, %v4053
        %v4055 = vpop.f32.mrf.mxu0
        %v4056 = vadd.f32 %v4015, %v4055
        %v4057 = vpop.f32.mrf.mxu0
        %v4058 = vpop.f32.mrf.mxu0
        %4059 = vdwg.mxu0
        %4060 = vmatprep.subr.bf16.mxu0 %v2877
        %4061 = vmatpush1.bf16.msra.mxu0 %v2876
        %4062 = vmatprep.subr.bf16.mxu0 %v2873
        %4063 = vmatpush1.bf16.msra.mxu0 %v2872
        %4064 = vmatprep.subr.bf16.mxu0 %v2869
        %4065 = vmatpush1.bf16.msra.mxu0 %v2868
        %4066 = vmatprep.subr.bf16.mxu0 %v2865
        %4067 = vmatpush1.bf16.msra.mxu0 %v2864
        %4068 = vmatprep.subr.bf16.mxu0 %v2861
        %4069 = vmatpush1.bf16.msra.mxu0 %v2860
        %4070 = vmatprep.subr.bf16.mxu0 %v2857
        %4071 = vmatpush1.bf16.msra.mxu0 %v2856
        %4072 = vmatprep.subr.bf16.mxu0 %v2853
        %4073 = vmatpush1.bf16.msra.mxu0 %v2852
        %4074 = vmatprep.subr.bf16.mxu0 %v2849
        %4075 = vmatpush1.bf16.msra.mxu0 %v2848
        %4076 = vmatprep.subr.bf16.mxu0 %v2909
        %4077 = vmatpush2.bf16.msra.mxu0 %v2908
        %4078 = vmatprep.subr.bf16.mxu0 %v2905
        %4079 = vmatpush2.bf16.msra.mxu0 %v2904
        %4080 = vmatprep.subr.bf16.mxu0 %v2901
        %4081 = vmatpush2.bf16.msra.mxu0 %v2900
        %4082 = vmatprep.subr.bf16.mxu0 %v2897
        %4083 = vmatpush2.bf16.msra.mxu0 %v2896
        %4084 = vmatprep.subr.bf16.mxu0 %v2893
        %4085 = vmatpush2.bf16.msra.mxu0 %v2892
        %4086 = vmatprep.subr.bf16.mxu0 %v2889
        %4087 = vmatpush2.bf16.msra.mxu0 %v2888
        %4088 = vmatprep.subr.bf16.mxu0 %v2885
        %4089 = vmatpush2.bf16.msra.mxu0 %v2884
        %4090 = vmatprep.subr.bf16.mxu0 %v2881
        %4091 = vmatpush2.bf16.msra.mxu0 %v2880
        %4092 = vmatprep.mubr.bf16.mxu0 %v905
        %4093 = vmatmul.mubr.bf16.gmra.mxu0 %v891
        %v4094 = vpop.f32.mrf.mxu0
        %v4095 = vadd.f32 %v4054, %v4094
        %v4096 = vpop.f32.mrf.mxu0
        %v4097 = vadd.f32 %v4056, %v4096
        %v4098 = vpop.f32.mrf.mxu0
        %v4099 = vpop.f32.mrf.mxu0
        %4100 = vdwg.mxu0
        %4101 = vmatprep.subr.bf16.mxu0 %v2941
        %4102 = vmatpush1.bf16.msra.mxu0 %v2940
        %4103 = vmatprep.subr.bf16.mxu0 %v2937
        %4104 = vmatpush1.bf16.msra.mxu0 %v2936
        %4105 = vmatprep.subr.bf16.mxu0 %v2933
        %4106 = vmatpush1.bf16.msra.mxu0 %v2932
        %4107 = vmatprep.subr.bf16.mxu0 %v2929
        %4108 = vmatpush1.bf16.msra.mxu0 %v2928
        %4109 = vmatprep.subr.bf16.mxu0 %v2925
        %4110 = vmatpush1.bf16.msra.mxu0 %v2924
        %4111 = vmatprep.subr.bf16.mxu0 %v2921
        %4112 = vmatpush1.bf16.msra.mxu0 %v2920
        %4113 = vmatprep.subr.bf16.mxu0 %v2917
        %4114 = vmatpush1.bf16.msra.mxu0 %v2916
        %4115 = vmatprep.subr.bf16.mxu0 %v2913
        %4116 = vmatpush1.bf16.msra.mxu0 %v2912
        %4117 = vmatprep.subr.bf16.mxu0 %v2973
        %4118 = vmatpush2.bf16.msra.mxu0 %v2972
        %4119 = vmatprep.subr.bf16.mxu0 %v2969
        %4120 = vmatpush2.bf16.msra.mxu0 %v2968
        %4121 = vmatprep.subr.bf16.mxu0 %v2965
        %4122 = vmatpush2.bf16.msra.mxu0 %v2964
        %4123 = vmatprep.subr.bf16.mxu0 %v2961
        %4124 = vmatpush2.bf16.msra.mxu0 %v2960
        %4125 = vmatprep.subr.bf16.mxu0 %v2957
        %4126 = vmatpush2.bf16.msra.mxu0 %v2956
        %4127 = vmatprep.subr.bf16.mxu0 %v2953
        %4128 = vmatpush2.bf16.msra.mxu0 %v2952
        %4129 = vmatprep.subr.bf16.mxu0 %v2949
        %4130 = vmatpush2.bf16.msra.mxu0 %v2948
        %4131 = vmatprep.subr.bf16.mxu0 %v2945
        %4132 = vmatpush2.bf16.msra.mxu0 %v2944
        %4133 = vmatprep.mubr.bf16.mxu0 %v909
        %4134 = vmatmul.mubr.bf16.gmra.mxu0 %v907
        %v4135 = vpop.f32.mrf.mxu0
        %v4136 = vadd.f32 %v4095, %v4135
        %v4137 = vpop.f32.mrf.mxu0
        %v4138 = vadd.f32 %v4097, %v4137
        %v4139 = vpop.f32.mrf.mxu0
        %v4140 = vpop.f32.mrf.mxu0
        %4141 = vdwg.mxu0
        %v4146 = vcombine.low %v3808, %v3810
        %v4147 = vcombine.low %v4136, %v4138
        %v4149 = vunpack.c.l.s4 1983009808
        %v4150 = vunpack.c.0.s8 %v4149
        %v4151 = vlaneseq
        %v4152 = vshrl.u32 %v4151, 7
        %v4153 = vsub.s32 %v4150, %v4152
        %v4154 = vrot.slane %v4146, %v4153
        %v4156 = vunpack.c.l.s4 1983009808
        %v4157 = vunpack.c.0.s8 %v4156
        %v4158 = vlaneseq
        %v4159 = vshrl.u32 %v4158, 7
        %v4160 = vsub.s32 %v4157, %v4159
        %v4161 = vrot.slane %v4147, %v4160
        %v4162 = vcombine.low %v4154, %v4161
        %v4164 = vadd.f32 %v295, %v4162
        %4165 = vst [vmem:[#allocation2] sm:$0xff] %v4164
        %p4166 = scmp.eq.s32.totalorder %s19, 1
        // Predicated region
        $region53: #{lstm_cnn_forward.7} parent=47 // pred_check
          %p4167 = pneg %p4166
        $region54: #{lstm_cnn_forward.7} parent=47 // pred_check_branch
          %4169 = sbr.rel (%p4167) target = $region56
        $region55: #{lstm_cnn_forward.7} parent=47 // pred_region
          %v4170 = vld [vmem:[#allocation2] sm:$0xff]
          %v4171 = vld [vmem:[%s2] sm:$0xf]
          %v4173 = vlaneseq
          %v4174 = vshrl.u32 %v4173, 7
          %v4175 = vsub.s32 0, %v4174
          %v4176 = vrot.slane %v4171, %v4175
          %v4177 = vlaneseq
          %v4178 = vshrl.u32 %v4177, 7
          %v4179 = vsub.s32 1, %v4178
          %v4180 = vrot.slane %v4171, %v4179
          %v4181 = vlaneseq
          %v4182 = vshrl.u32 %v4181, 7
          %v4183 = vsub.s32 2, %v4182
          %v4184 = vrot.slane %v4171, %v4183
          %v4185 = vlaneseq
          %v4186 = vshrl.u32 %v4185, 7
          %v4187 = vsub.s32 3, %v4186
          %v4188 = vrot.slane %v4171, %v4187
          %v4189 = vcombine.low %v4176, %v4180
          %v4190 = vcombine.low %v4184, %v4188
          %v4192 = vunpack.c.l.s4 1983009808
          %v4193 = vunpack.c.0.s8 %v4192
          %v4194 = vlaneseq
          %v4195 = vshrl.u32 %v4194, 7
          %v4196 = vsub.s32 %v4193, %v4195
          %v4197 = vrot.slane %v4189, %v4196
          %v4199 = vunpack.c.l.s4 1983009808
          %v4200 = vunpack.c.0.s8 %v4199
          %v4201 = vlaneseq
          %v4202 = vshrl.u32 %v4201, 7
          %v4203 = vsub.s32 %v4200, %v4202
          %v4204 = vrot.slane %v4190, %v4203
          %v4205 = vcombine.low %v4197, %v4204
          %v4207 = vadd.f32 %v4170, %v4205
          %v4208 = vxor.u32 %v4207, 2147483648
          %v4209 = vmul.f32 %v4208, 1.442695
          %v4210 = vpow.pop %v4209
          %v4211 = vadd.f32 %v4210, 1.0
          %v4212 = vrcp.pop %v4211
          %v4213 = vmul.f32 1.0, %v4212
          %v4215 = vrot.slane %v4207, 4
          %v4217 = vtanh.pop %v4215
          %v4218 = vrot.slane %v4207, 6
          %v4220 = vxor.u32 %v4218, 2147483648
          %v4221 = vmul.f32 %v4220, 1.442695
          %v4222 = vpow.pop %v4221
          %v4223 = vadd.f32 %v4222, 1.0
          %v4224 = vrcp.pop %v4223
          %v4225 = vmul.f32 1.0, %v4224
          %v4226 = vmul.f32 %v4213, %v4217
          %v4227 = vtanh.pop %v4226
          %v4228 = vmul.f32 %v4225, %v4227
          %v4229 = vpack.c.bf16 %v4228, %v4228
          %v4230 = vld [vmem:[%s3] sm:$0xff]
          %v4231 = vld [vmem:[%s3 + $0x8] sm:$0xff]
          %v4232 = vld [vmem:[%s3 + $0x10] sm:$0xff]
          %v4233 = vld [vmem:[%s3 + $0x18] sm:$0xff]
          %v4234 = vld [vmem:[%s3 + $0x20] sm:$0xff]
          %v4235 = vld [vmem:[%s3 + $0x28] sm:$0xff]
          %v4236 = vld [vmem:[%s3 + $0x30] sm:$0xff]
          %v4237 = vld [vmem:[%s3 + $0x38] sm:$0xff]
          %v4238 = vld [vmem:[%s3 + $0x40] sm:$0xff]
          %v4239 = vld [vmem:[%s3 + $0x48] sm:$0xff]
          %v4240 = vld [vmem:[%s3 + $0x50] sm:$0xff]
          %v4241 = vld [vmem:[%s3 + $0x58] sm:$0xff]
          %v4242 = vld [vmem:[%s3 + $0x60] sm:$0xff]
          %v4243 = vld [vmem:[%s3 + $0x68] sm:$0xff]
          %v4244 = vld [vmem:[%s3 + $0x70] sm:$0xff]
          %v4245 = vld [vmem:[%s3 + $0x78] sm:$0xff]
          %v4246 = vld [vmem:[%s3 + $0x80] sm:$0xff]
          %v4247 = vld [vmem:[%s3 + $0x88] sm:$0xff]
          %v4248 = vld [vmem:[%s3 + $0x90] sm:$0xff]
          %v4249 = vld [vmem:[%s3 + $0x98] sm:$0xff]
          %v4250 = vld [vmem:[%s3 + $0xa0] sm:$0xff]
          %v4251 = vld [vmem:[%s3 + $0xa8] sm:$0xff]
          %v4252 = vld [vmem:[%s3 + $0xb0] sm:$0xff]
          %v4253 = vld [vmem:[%s3 + $0xb8] sm:$0xff]
          %v4254 = vld [vmem:[%s3 + $0xc0] sm:$0xff]
          %v4255 = vld [vmem:[%s3 + $0xc8] sm:$0xff]
          %v4256 = vld [vmem:[%s3 + $0xd0] sm:$0xff]
          %v4257 = vld [vmem:[%s3 + $0xd8] sm:$0xff]
          %v4258 = vld [vmem:[%s3 + $0xe0] sm:$0xff]
          %v4259 = vld [vmem:[%s3 + $0xe8] sm:$0xff]
          %v4260 = vld [vmem:[%s3 + $0xf0] sm:$0xff]
          %v4261 = vld [vmem:[%s3 + $0xf8] sm:$0xff]
          %v4262 = vld [vmem:[%s4] sm:$0xf]
          %v4264 = vlaneseq
          %v4265 = vshrl.u32 %v4264, 7
          %v4266 = vsub.s32 0, %v4265
          %v4267 = vrot.slane %v4262, %v4266
          %v4268 = vlaneseq
          %v4269 = vshrl.u32 %v4268, 7
          %v4270 = vsub.s32 1, %v4269
          %v4271 = vrot.slane %v4262, %v4270
          %v4272 = vlaneseq
          %v4273 = vshrl.u32 %v4272, 7
          %v4274 = vsub.s32 2, %v4273
          %v4275 = vrot.slane %v4262, %v4274
          %v4276 = vlaneseq
          %v4277 = vshrl.u32 %v4276, 7
          %v4278 = vsub.s32 3, %v4277
          %v4279 = vrot.slane %v4262, %v4278
          %v4316 = vunpack.c.l.b16 %v4230
          %v4317 = vunpack.c.h.b16 %v4230
          %v4318 = vunpack.c.l.b16 %v4231
          %v4319 = vunpack.c.h.b16 %v4231
          %v4320 = vunpack.c.l.b16 %v4232
          %v4321 = vunpack.c.h.b16 %v4232
          %v4322 = vunpack.c.l.b16 %v4233
          %v4323 = vunpack.c.h.b16 %v4233
          %v4324 = vunpack.c.l.b16 %v4234
          %v4325 = vunpack.c.h.b16 %v4234
          %v4326 = vunpack.c.l.b16 %v4235
          %v4327 = vunpack.c.h.b16 %v4235
          %v4328 = vunpack.c.l.b16 %v4236
          %v4329 = vunpack.c.h.b16 %v4236
          %v4330 = vunpack.c.l.b16 %v4237
          %v4331 = vunpack.c.h.b16 %v4237
          %v4332 = vunpack.c.l.b16 %v4238
          %v4333 = vunpack.c.h.b16 %v4238
          %v4334 = vunpack.c.l.b16 %v4239
          %v4335 = vunpack.c.h.b16 %v4239
          %v4336 = vunpack.c.l.b16 %v4240
          %v4337 = vunpack.c.h.b16 %v4240
          %v4338 = vunpack.c.l.b16 %v4241
          %v4339 = vunpack.c.h.b16 %v4241
          %v4340 = vunpack.c.l.b16 %v4242
          %v4341 = vunpack.c.h.b16 %v4242
          %v4342 = vunpack.c.l.b16 %v4243
          %v4343 = vunpack.c.h.b16 %v4243
          %v4344 = vunpack.c.l.b16 %v4244
          %v4345 = vunpack.c.h.b16 %v4244
          %v4346 = vunpack.c.l.b16 %v4245
          %v4347 = vunpack.c.h.b16 %v4245
          %v4348 = vunpack.c.l.b16 %v4246
          %v4349 = vunpack.c.h.b16 %v4246
          %v4350 = vunpack.c.l.b16 %v4247
          %v4351 = vunpack.c.h.b16 %v4247
          %v4352 = vunpack.c.l.b16 %v4248
          %v4353 = vunpack.c.h.b16 %v4248
          %v4354 = vunpack.c.l.b16 %v4249
          %v4355 = vunpack.c.h.b16 %v4249
          %v4356 = vunpack.c.l.b16 %v4250
          %v4357 = vunpack.c.h.b16 %v4250
          %v4358 = vunpack.c.l.b16 %v4251
          %v4359 = vunpack.c.h.b16 %v4251
          %v4360 = vunpack.c.l.b16 %v4252
          %v4361 = vunpack.c.h.b16 %v4252
          %v4362 = vunpack.c.l.b16 %v4253
          %v4363 = vunpack.c.h.b16 %v4253
          %v4364 = vunpack.c.l.b16 %v4254
          %v4365 = vunpack.c.h.b16 %v4254
          %v4366 = vunpack.c.l.b16 %v4255
          %v4367 = vunpack.c.h.b16 %v4255
          %v4368 = vunpack.c.l.b16 %v4256
          %v4369 = vunpack.c.h.b16 %v4256
          %v4370 = vunpack.c.l.b16 %v4257
          %v4371 = vunpack.c.h.b16 %v4257
          %v4372 = vunpack.c.l.b16 %v4258
          %v4373 = vunpack.c.h.b16 %v4258
          %v4374 = vunpack.c.l.b16 %v4259
          %v4375 = vunpack.c.h.b16 %v4259
          %v4376 = vunpack.c.l.b16 %v4260
          %v4377 = vunpack.c.h.b16 %v4260
          %v4378 = vunpack.c.l.b16 %v4261
          %v4379 = vunpack.c.h.b16 %v4261
          %v4380 = vpack.c.b16 %v4320, %v4316
          %v4381 = vpack.c.b16 %v4321, %v4317
          %v4382 = vpack.c.b16 %v4322, %v4318
          %v4383 = vpack.c.b16 %v4323, %v4319
          %v4384 = vpack.c.b16 %v4328, %v4324
          %v4385 = vpack.c.b16 %v4329, %v4325
          %v4386 = vpack.c.b16 %v4330, %v4326
          %v4387 = vpack.c.b16 %v4331, %v4327
          %v4388 = vpack.c.b16 %v4336, %v4332
          %v4389 = vpack.c.b16 %v4337, %v4333
          %v4390 = vpack.c.b16 %v4338, %v4334
          %v4391 = vpack.c.b16 %v4339, %v4335
          %v4392 = vpack.c.b16 %v4344, %v4340
          %v4393 = vpack.c.b16 %v4345, %v4341
          %v4394 = vpack.c.b16 %v4346, %v4342
          %v4395 = vpack.c.b16 %v4347, %v4343
          %v4396 = vpack.c.b16 %v4352, %v4348
          %v4397 = vpack.c.b16 %v4353, %v4349
          %v4398 = vpack.c.b16 %v4354, %v4350
          %v4399 = vpack.c.b16 %v4355, %v4351
          %v4400 = vpack.c.b16 %v4360, %v4356
          %v4401 = vpack.c.b16 %v4361, %v4357
          %v4402 = vpack.c.b16 %v4362, %v4358
          %v4403 = vpack.c.b16 %v4363, %v4359
          %v4404 = vpack.c.b16 %v4368, %v4364
          %v4405 = vpack.c.b16 %v4369, %v4365
          %v4406 = vpack.c.b16 %v4370, %v4366
          %v4407 = vpack.c.b16 %v4371, %v4367
          %v4408 = vpack.c.b16 %v4376, %v4372
          %v4409 = vpack.c.b16 %v4377, %v4373
          %v4410 = vpack.c.b16 %v4378, %v4374
          %v4411 = vpack.c.b16 %v4379, %v4375
          %4444 = vmatprep.subr.bf16.mxu0 %v4409
          %4445 = vmatpush1.bf16.msra.mxu0 %v4408
          %4446 = vmatprep.subr.bf16.mxu0 %v4405
          %4447 = vmatpush1.bf16.msra.mxu0 %v4404
          %4448 = vmatprep.subr.bf16.mxu0 %v4401
          %4449 = vmatpush1.bf16.msra.mxu0 %v4400
          %4450 = vmatprep.subr.bf16.mxu0 %v4397
          %4451 = vmatpush1.bf16.msra.mxu0 %v4396
          %4452 = vmatprep.subr.bf16.mxu0 %v4393
          %4453 = vmatpush1.bf16.msra.mxu0 %v4392
          %4454 = vmatprep.subr.bf16.mxu0 %v4389
          %4455 = vmatpush1.bf16.msra.mxu0 %v4388
          %4456 = vmatprep.subr.bf16.mxu0 %v4385
          %4457 = vmatpush1.bf16.msra.mxu0 %v4384
          %4458 = vmatprep.subr.bf16.mxu0 %v4381
          %4459 = vmatpush1.bf16.msra.mxu0 %v4380
          %4460 = vmatprep.subr.bf16.mxu0 0
          %4461 = vmatpush2.bf16.msra.mxu0 0
          %4462 = vmatprep.subr.bf16.mxu0 0
          %4463 = vmatpush2.bf16.msra.mxu0 0
          %4464 = vmatprep.subr.bf16.mxu0 0
          %4465 = vmatpush2.bf16.msra.mxu0 0
          %4466 = vmatprep.subr.bf16.mxu0 0
          %4467 = vmatpush2.bf16.msra.mxu0 0
          %4468 = vmatprep.subr.bf16.mxu0 0
          %4469 = vmatpush2.bf16.msra.mxu0 0
          %4470 = vmatprep.subr.bf16.mxu0 0
          %4471 = vmatpush2.bf16.msra.mxu0 0
          %4472 = vmatprep.subr.bf16.mxu0 0
          %4473 = vmatpush2.bf16.msra.mxu0 0
          %4474 = vmatprep.subr.bf16.mxu0 0
          %4475 = vmatpush2.bf16.msra.mxu0 0
          %4476 = vmatprep.mubr.bf16.mxu0 0
          %4477 = vmatmul.mubr.bf16.gmra.mxu0 %v4229
          %v4478 = vpop.f32.mrf.mxu0
          %v4479 = vadd.f32 %v4267, %v4478
          %v4480 = vpop.f32.mrf.mxu0
          %v4481 = vadd.f32 %v4271, %v4480
          %v4482 = vpop.f32.mrf.mxu0
          %v4483 = vpop.f32.mrf.mxu0
          %4484 = vdwg.mxu0
          %4485 = vmatprep.subr.bf16.mxu0 %v4411
          %4486 = vmatpush1.bf16.msra.mxu0 %v4410
          %4487 = vmatprep.subr.bf16.mxu0 %v4407
          %4488 = vmatpush1.bf16.msra.mxu0 %v4406
          %4489 = vmatprep.subr.bf16.mxu0 %v4403
          %4490 = vmatpush1.bf16.msra.mxu0 %v4402
          %4491 = vmatprep.subr.bf16.mxu0 %v4399
          %4492 = vmatpush1.bf16.msra.mxu0 %v4398
          %4493 = vmatprep.subr.bf16.mxu0 %v4395
          %4494 = vmatpush1.bf16.msra.mxu0 %v4394
          %4495 = vmatprep.subr.bf16.mxu0 %v4391
          %4496 = vmatpush1.bf16.msra.mxu0 %v4390
          %4497 = vmatprep.subr.bf16.mxu0 %v4387
          %4498 = vmatpush1.bf16.msra.mxu0 %v4386
          %4499 = vmatprep.subr.bf16.mxu0 %v4383
          %4500 = vmatpush1.bf16.msra.mxu0 %v4382
          %4501 = vmatprep.subr.bf16.mxu0 0
          %4502 = vmatpush2.bf16.msra.mxu0 0
          %4503 = vmatprep.subr.bf16.mxu0 0
          %4504 = vmatpush2.bf16.msra.mxu0 0
          %4505 = vmatprep.subr.bf16.mxu0 0
          %4506 = vmatpush2.bf16.msra.mxu0 0
          %4507 = vmatprep.subr.bf16.mxu0 0
          %4508 = vmatpush2.bf16.msra.mxu0 0
          %4509 = vmatprep.subr.bf16.mxu0 0
          %4510 = vmatpush2.bf16.msra.mxu0 0
          %4511 = vmatprep.subr.bf16.mxu0 0
          %4512 = vmatpush2.bf16.msra.mxu0 0
          %4513 = vmatprep.subr.bf16.mxu0 0
          %4514 = vmatpush2.bf16.msra.mxu0 0
          %4515 = vmatprep.subr.bf16.mxu0 0
          %4516 = vmatpush2.bf16.msra.mxu0 0
          %4517 = vmatprep.mubr.bf16.mxu0 0
          %4518 = vmatmul.mubr.bf16.gmra.mxu0 %v4229
          %v4519 = vpop.f32.mrf.mxu0
          %v4520 = vadd.f32 %v4275, %v4519
          %v4521 = vpop.f32.mrf.mxu0
          %v4522 = vadd.f32 %v4279, %v4521
          %v4523 = vpop.f32.mrf.mxu0
          %v4524 = vpop.f32.mrf.mxu0
          %4525 = vdwg.mxu0
          %v4526 = vmax.f32 %v4479, 0.0
          %v4527 = vmax.f32 %v4481, 0.0
          %v4528 = vmax.f32 %v4520, 0.0
          %v4529 = vmax.f32 %v4522, 0.0
          %v4530 = vpack.c.bf16 %v4526, %v4526
          %v4531 = vpack.c.bf16 %v4527, %v4527
          %v4532 = vpack.c.bf16 %v4528, %v4528
          %v4533 = vpack.c.bf16 %v4529, %v4529
          %v4534 = vld [vmem:[%s5] sm:$0xf]
          %v4535 = vld [vmem:[%s5 + $0x4] sm:$0xf]
          %v4536 = vld [vmem:[%s5 + $0x8] sm:$0xf]
          %v4537 = vld [vmem:[%s5 + $0xc] sm:$0xf]
          %v4538 = vld [vmem:[%s5 + $0x10] sm:$0xf]
          %v4539 = vld [vmem:[%s5 + $0x14] sm:$0xf]
          %v4540 = vld [vmem:[%s5 + $0x18] sm:$0xf]
          %v4541 = vld [vmem:[%s5 + $0x1c] sm:$0xf]
          %v4542 = vld [vmem:[%s5 + $0x20] sm:$0xf]
          %v4543 = vld [vmem:[%s5 + $0x24] sm:$0xf]
          %v4544 = vld [vmem:[%s5 + $0x28] sm:$0xf]
          %v4545 = vld [vmem:[%s5 + $0x2c] sm:$0xf]
          %v4546 = vld [vmem:[%s5 + $0x30] sm:$0xf]
          %v4547 = vld [vmem:[%s5 + $0x34] sm:$0xf]
          %v4548 = vld [vmem:[%s5 + $0x38] sm:$0xf]
          %v4549 = vld [vmem:[%s5 + $0x3c] sm:$0xf]
          %v4550 = vld [vmem:[%s5 + $0x40] sm:$0xf]
          %v4551 = vld [vmem:[%s5 + $0x44] sm:$0xf]
          %v4552 = vld [vmem:[%s5 + $0x48] sm:$0xf]
          %v4553 = vld [vmem:[%s5 + $0x4c] sm:$0xf]
          %v4554 = vld [vmem:[%s5 + $0x50] sm:$0xf]
          %v4555 = vld [vmem:[%s5 + $0x54] sm:$0xf]
          %v4556 = vld [vmem:[%s5 + $0x58] sm:$0xf]
          %v4557 = vld [vmem:[%s5 + $0x5c] sm:$0xf]
          %v4558 = vld [vmem:[%s5 + $0x60] sm:$0xf]
          %v4559 = vld [vmem:[%s5 + $0x64] sm:$0xf]
          %v4560 = vld [vmem:[%s5 + $0x68] sm:$0xf]
          %v4561 = vld [vmem:[%s5 + $0x6c] sm:$0xf]
          %v4562 = vld [vmem:[%s5 + $0x70] sm:$0xf]
          %v4563 = vld [vmem:[%s5 + $0x74] sm:$0xf]
          %v4564 = vld [vmem:[%s5 + $0x78] sm:$0xf]
          %v4565 = vld [vmem:[%s5 + $0x7c] sm:$0xf]
          %v4566 = vld [vmem:[%s5 + $0x80] sm:$0xf]
          %v4567 = vld [vmem:[%s5 + $0x84] sm:$0xf]
          %v4568 = vld [vmem:[%s5 + $0x88] sm:$0xf]
          %v4569 = vld [vmem:[%s5 + $0x8c] sm:$0xf]
          %v4570 = vld [vmem:[%s5 + $0x90] sm:$0xf]
          %v4571 = vld [vmem:[%s5 + $0x94] sm:$0xf]
          %v4572 = vld [vmem:[%s5 + $0x98] sm:$0xf]
          %v4573 = vld [vmem:[%s5 + $0x9c] sm:$0xf]
          %v4574 = vld [vmem:[%s5 + $0xa0] sm:$0xf]
          %v4575 = vld [vmem:[%s5 + $0xa4] sm:$0xf]
          %v4576 = vld [vmem:[%s5 + $0xa8] sm:$0xf]
          %v4577 = vld [vmem:[%s5 + $0xac] sm:$0xf]
          %v4578 = vld [vmem:[%s5 + $0xb0] sm:$0xf]
          %v4579 = vld [vmem:[%s5 + $0xb4] sm:$0xf]
          %v4580 = vld [vmem:[%s5 + $0xb8] sm:$0xf]
          %v4581 = vld [vmem:[%s5 + $0xbc] sm:$0xf]
          %v4582 = vld [vmem:[%s5 + $0xc0] sm:$0xf]
          %v4583 = vld [vmem:[%s5 + $0xc4] sm:$0xf]
          %v4584 = vld [vmem:[%s5 + $0xc8] sm:$0xf]
          %v4585 = vld [vmem:[%s5 + $0xcc] sm:$0xf]
          %v4586 = vld [vmem:[%s5 + $0xd0] sm:$0xf]
          %v4587 = vld [vmem:[%s5 + $0xd4] sm:$0xf]
          %v4588 = vld [vmem:[%s5 + $0xd8] sm:$0xf]
          %v4589 = vld [vmem:[%s5 + $0xdc] sm:$0xf]
          %v4590 = vld [vmem:[%s5 + $0xe0] sm:$0xf]
          %v4591 = vld [vmem:[%s5 + $0xe4] sm:$0xf]
          %v4592 = vld [vmem:[%s5 + $0xe8] sm:$0xf]
          %v4593 = vld [vmem:[%s5 + $0xec] sm:$0xf]
          %v4594 = vld [vmem:[%s5 + $0xf0] sm:$0xf]
          %v4595 = vld [vmem:[%s5 + $0xf4] sm:$0xf]
          %v4596 = vld [vmem:[%s5 + $0xf8] sm:$0xf]
          %v4597 = vld [vmem:[%s5 + $0xfc] sm:$0xf]
          %v4598 = vld [vmem:[%s6] sm:$0x1]
          %v4600 = vlaneseq
          %v4601 = vshrl.u32 %v4600, 7
          %v4602 = vsub.s32 0, %v4601
          %v4603 = vrot.slane %v4598, %v4602
          %v4669 = vunpack.c.l.b16 %v4534
          %v4670 = vunpack.c.l.b16 %v4535
          %v4671 = vunpack.c.l.b16 %v4536
          %v4672 = vunpack.c.l.b16 %v4537
          %v4673 = vunpack.c.l.b16 %v4538
          %v4674 = vunpack.c.l.b16 %v4539
          %v4675 = vunpack.c.l.b16 %v4540
          %v4676 = vunpack.c.l.b16 %v4541
          %v4677 = vunpack.c.l.b16 %v4542
          %v4678 = vunpack.c.l.b16 %v4543
          %v4679 = vunpack.c.l.b16 %v4544
          %v4680 = vunpack.c.l.b16 %v4545
          %v4681 = vunpack.c.l.b16 %v4546
          %v4682 = vunpack.c.l.b16 %v4547
          %v4683 = vunpack.c.l.b16 %v4548
          %v4684 = vunpack.c.l.b16 %v4549
          %v4685 = vunpack.c.l.b16 %v4550
          %v4686 = vunpack.c.l.b16 %v4551
          %v4687 = vunpack.c.l.b16 %v4552
          %v4688 = vunpack.c.l.b16 %v4553
          %v4689 = vunpack.c.l.b16 %v4554
          %v4690 = vunpack.c.l.b16 %v4555
          %v4691 = vunpack.c.l.b16 %v4556
          %v4692 = vunpack.c.l.b16 %v4557
          %v4693 = vunpack.c.l.b16 %v4558
          %v4694 = vunpack.c.l.b16 %v4559
          %v4695 = vunpack.c.l.b16 %v4560
          %v4696 = vunpack.c.l.b16 %v4561
          %v4697 = vunpack.c.l.b16 %v4562
          %v4698 = vunpack.c.l.b16 %v4563
          %v4699 = vunpack.c.l.b16 %v4564
          %v4700 = vunpack.c.l.b16 %v4565
          %v4701 = vunpack.c.l.b16 %v4566
          %v4702 = vunpack.c.l.b16 %v4567
          %v4703 = vunpack.c.l.b16 %v4568
          %v4704 = vunpack.c.l.b16 %v4569
          %v4705 = vunpack.c.l.b16 %v4570
          %v4706 = vunpack.c.l.b16 %v4571
          %v4707 = vunpack.c.l.b16 %v4572
          %v4708 = vunpack.c.l.b16 %v4573
          %v4709 = vunpack.c.l.b16 %v4574
          %v4710 = vunpack.c.l.b16 %v4575
          %v4711 = vunpack.c.l.b16 %v4576
          %v4712 = vunpack.c.l.b16 %v4577
          %v4713 = vunpack.c.l.b16 %v4578
          %v4714 = vunpack.c.l.b16 %v4579
          %v4715 = vunpack.c.l.b16 %v4580
          %v4716 = vunpack.c.l.b16 %v4581
          %v4717 = vunpack.c.l.b16 %v4582
          %v4718 = vunpack.c.l.b16 %v4583
          %v4719 = vunpack.c.l.b16 %v4584
          %v4720 = vunpack.c.l.b16 %v4585
          %v4721 = vunpack.c.l.b16 %v4586
          %v4722 = vunpack.c.l.b16 %v4587
          %v4723 = vunpack.c.l.b16 %v4588
          %v4724 = vunpack.c.l.b16 %v4589
          %v4725 = vunpack.c.l.b16 %v4590
          %v4726 = vunpack.c.l.b16 %v4591
          %v4727 = vunpack.c.l.b16 %v4592
          %v4728 = vunpack.c.l.b16 %v4593
          %v4729 = vunpack.c.l.b16 %v4594
          %v4730 = vunpack.c.l.b16 %v4595
          %v4731 = vunpack.c.l.b16 %v4596
          %v4732 = vunpack.c.l.b16 %v4597
          %v4733 = vpack.c.b16 %v4670, %v4669
          %v4734 = vpack.c.b16 %v4672, %v4671
          %v4735 = vpack.c.b16 %v4674, %v4673
          %v4736 = vpack.c.b16 %v4676, %v4675
          %v4737 = vpack.c.b16 %v4678, %v4677
          %v4738 = vpack.c.b16 %v4680, %v4679
          %v4739 = vpack.c.b16 %v4682, %v4681
          %v4740 = vpack.c.b16 %v4684, %v4683
          %v4741 = vpack.c.b16 %v4686, %v4685
          %v4742 = vpack.c.b16 %v4688, %v4687
          %v4743 = vpack.c.b16 %v4690, %v4689
          %v4744 = vpack.c.b16 %v4692, %v4691
          %v4745 = vpack.c.b16 %v4694, %v4693
          %v4746 = vpack.c.b16 %v4696, %v4695
          %v4747 = vpack.c.b16 %v4698, %v4697
          %v4748 = vpack.c.b16 %v4700, %v4699
          %v4749 = vpack.c.b16 %v4702, %v4701
          %v4750 = vpack.c.b16 %v4704, %v4703
          %v4751 = vpack.c.b16 %v4706, %v4705
          %v4752 = vpack.c.b16 %v4708, %v4707
          %v4753 = vpack.c.b16 %v4710, %v4709
          %v4754 = vpack.c.b16 %v4712, %v4711
          %v4755 = vpack.c.b16 %v4714, %v4713
          %v4756 = vpack.c.b16 %v4716, %v4715
          %v4757 = vpack.c.b16 %v4718, %v4717
          %v4758 = vpack.c.b16 %v4720, %v4719
          %v4759 = vpack.c.b16 %v4722, %v4721
          %v4760 = vpack.c.b16 %v4724, %v4723
          %v4761 = vpack.c.b16 %v4726, %v4725
          %v4762 = vpack.c.b16 %v4728, %v4727
          %v4763 = vpack.c.b16 %v4730, %v4729
          %v4764 = vpack.c.b16 %v4732, %v4731
          %4797 = vmatprep.subr.bf16.mxu0 0
          %4798 = vmatpush1.bf16.msra.mxu0 %v4740
          %4799 = vmatprep.subr.bf16.mxu0 0
          %4800 = vmatpush1.bf16.msra.mxu0 %v4739
          %4801 = vmatprep.subr.bf16.mxu0 0
          %4802 = vmatpush1.bf16.msra.mxu0 %v4738
          %4803 = vmatprep.subr.bf16.mxu0 0
          %4804 = vmatpush1.bf16.msra.mxu0 %v4737
          %4805 = vmatprep.subr.bf16.mxu0 0
          %4806 = vmatpush1.bf16.msra.mxu0 %v4736
          %4807 = vmatprep.subr.bf16.mxu0 0
          %4808 = vmatpush1.bf16.msra.mxu0 %v4735
          %4809 = vmatprep.subr.bf16.mxu0 0
          %4810 = vmatpush1.bf16.msra.mxu0 %v4734
          %4811 = vmatprep.subr.bf16.mxu0 0
          %4812 = vmatpush1.bf16.msra.mxu0 %v4733
          %4813 = vmatprep.subr.bf16.mxu0 0
          %4814 = vmatpush2.bf16.msra.mxu0 %v4748
          %4815 = vmatprep.subr.bf16.mxu0 0
          %4816 = vmatpush2.bf16.msra.mxu0 %v4747
          %4817 = vmatprep.subr.bf16.mxu0 0
          %4818 = vmatpush2.bf16.msra.mxu0 %v4746
          %4819 = vmatprep.subr.bf16.mxu0 0
          %4820 = vmatpush2.bf16.msra.mxu0 %v4745
          %4821 = vmatprep.subr.bf16.mxu0 0
          %4822 = vmatpush2.bf16.msra.mxu0 %v4744
          %4823 = vmatprep.subr.bf16.mxu0 0
          %4824 = vmatpush2.bf16.msra.mxu0 %v4743
          %4825 = vmatprep.subr.bf16.mxu0 0
          %4826 = vmatpush2.bf16.msra.mxu0 %v4742
          %4827 = vmatprep.subr.bf16.mxu0 0
          %4828 = vmatpush2.bf16.msra.mxu0 %v4741
          %4829 = vmatprep.mubr.bf16.mxu0 %v4531
          %4830 = vmatmul.mubr.bf16.gmra.mxu0 %v4530
          %v4831 = vpop.f32.mrf.mxu0
          %v4832 = vadd.f32 %v4603, %v4831
          %v4833 = vpop.f32.mrf.mxu0
          %v4834 = vpop.f32.mrf.mxu0
          %v4835 = vpop.f32.mrf.mxu0
          %4836 = vdwg.mxu0
          %4837 = vmatprep.subr.bf16.mxu0 0
          %4838 = vmatpush1.bf16.msra.mxu0 %v4756
          %4839 = vmatprep.subr.bf16.mxu0 0
          %4840 = vmatpush1.bf16.msra.mxu0 %v4755
          %4841 = vmatprep.subr.bf16.mxu0 0
          %4842 = vmatpush1.bf16.msra.mxu0 %v4754
          %4843 = vmatprep.subr.bf16.mxu0 0
          %4844 = vmatpush1.bf16.msra.mxu0 %v4753
          %4845 = vmatprep.subr.bf16.mxu0 0
          %4846 = vmatpush1.bf16.msra.mxu0 %v4752
          %4847 = vmatprep.subr.bf16.mxu0 0
          %4848 = vmatpush1.bf16.msra.mxu0 %v4751
          %4849 = vmatprep.subr.bf16.mxu0 0
          %4850 = vmatpush1.bf16.msra.mxu0 %v4750
          %4851 = vmatprep.subr.bf16.mxu0 0
          %4852 = vmatpush1.bf16.msra.mxu0 %v4749
          %4853 = vmatprep.subr.bf16.mxu0 0
          %4854 = vmatpush2.bf16.msra.mxu0 %v4764
          %4855 = vmatprep.subr.bf16.mxu0 0
          %4856 = vmatpush2.bf16.msra.mxu0 %v4763
          %4857 = vmatprep.subr.bf16.mxu0 0
          %4858 = vmatpush2.bf16.msra.mxu0 %v4762
          %4859 = vmatprep.subr.bf16.mxu0 0
          %4860 = vmatpush2.bf16.msra.mxu0 %v4761
          %4861 = vmatprep.subr.bf16.mxu0 0
          %4862 = vmatpush2.bf16.msra.mxu0 %v4760
          %4863 = vmatprep.subr.bf16.mxu0 0
          %4864 = vmatpush2.bf16.msra.mxu0 %v4759
          %4865 = vmatprep.subr.bf16.mxu0 0
          %4866 = vmatpush2.bf16.msra.mxu0 %v4758
          %4867 = vmatprep.subr.bf16.mxu0 0
          %4868 = vmatpush2.bf16.msra.mxu0 %v4757
          %4869 = vmatprep.mubr.bf16.mxu0 %v4533
          %4870 = vmatmul.mubr.bf16.gmra.mxu0 %v4532
          %v4871 = vpop.f32.mrf.mxu0
          %v4872 = vadd.f32 %v4832, %v4871
          %v4873 = vpop.f32.mrf.mxu0
          %v4874 = vpop.f32.mrf.mxu0
          %v4875 = vpop.f32.mrf.mxu0
          %4876 = vdwg.mxu0
          %vm4877 = vcmask 74752
          %4878 = vst.msk [vmem:[#allocation3] sm:$0x3] %vm4877, %v4872
        $region56: #{lstm_cnn_forward.7} parent=47 // pred_fallthru
          _
        // Predicated region
        $region57: #{lstm_cnn_forward.7} parent=47 // pred_check
          %p4879 = pneg %p189
        $region58: #{lstm_cnn_forward.7} parent=47 // pred_check_branch
          %4881 = sbr.rel (%p4879) target = $region60
        $region59: #{lstm_cnn_forward.7} parent=47 // pred_region
          %s4883 = ssub.s32 32, 32
          %4884 = vsyncadd [#allocation4], %s4883
          %s4886 = sshll.u32 [#allocation3], 4
          %s4887 = int_to_ptr.vmem [resolvable:$true] %s4886
          %4889 = dma.vmem_to_hbm [thread:$0]  %s4887, 32, %s7, [#allocation4]
        $region60: #{lstm_cnn_forward.7} parent=47 // pred_fallthru
          _
        // Predicated region
        $region61: #{lstm_cnn_forward.7} parent=47 // pred_check
          %p4890 = pneg %p189
        $region62: #{lstm_cnn_forward.7} parent=47 // pred_check_branch
          %4892 = sbr.rel (%p4890) target = $region64
        $region63: #{lstm_cnn_forward.7} parent=47 // pred_region
          %4893 = dma.done [#allocation4], 32
        $region64: #{lstm_cnn_forward.7} parent=47 // pred_fallthru
          _
      $region48: #{lstm_cnn_forward.7} parent=5 // pred_fallthru
        _
      %p4894 = scmp.le.s32.totalorder 2, %s14
      // Predicated region
      $region65: #{lstm_cnn_forward.7} parent=5 // pred_check
        %p4895 = pneg %p4894
      $region66: #{lstm_cnn_forward.7} parent=5 // pred_check_branch
        %4897 = sbr.rel (%p4895) target = $region68
      $region67: #{lstm_cnn_forward.7} parent=5 // pred_region
        %s4898 = ssub.s32 %s14, 2
      $region68: #{lstm_cnn_forward.7} parent=5 // pred_fallthru
        _
    $region6: #{lstm_cnn_forward.7} parent=1 // loop_footer
      %s18 = sadd.s32 1, %s14
    $region7: #{lstm_cnn_forward.7} parent=1 // loop_footer_branch
      %13 = sbr.rel target = $region3
    $region8: #{lstm_cnn_forward.7} parent=1 // loop_exit
      _
    %4899 = vsyncpa [#allocation4], 1
    %s4900 = scalar_lea.sflag [#allocation4], 1
    %4901 = vsyncpa %s4900, 1

</llo_original>
